<compile_context>
chip_gen: v5e
topology: v5e:2x2
jax: 0.10.0
libtpu: 0.0.40
codegen_flags: <defaults>
</compile_context>

<pallas_src>
import functools

import jax
import jax.numpy as jnp
from jax import lax
from jax.experimental import pallas as pl
from jax.experimental.pallas import tpu as pltpu

LEAKY_SLOPE = 0.2
BN_EPS = 0.8          # torch.nn.BatchNorm1d(n, 0.8): second positional arg is eps
CONV_K = 9
CONV_PAD = 4
N_CH = 16


def _lrelu(h):
    return jnp.where(h > 0, h, LEAKY_SLOPE * h)


def _bn_train(h, gamma, beta):
    # BatchNorm1d in training mode: batch mean / biased batch variance (single pass).
    m = jnp.mean(h, axis=0, keepdims=True)
    m2 = jnp.mean(h * h, axis=0, keepdims=True)
    var = m2 - m * m
    return (h - m) * lax.rsqrt(var + BN_EPS) * gamma + beta


def _shift_lanes(v, s):
    """y[:, j] = v[:, j + s], zero-filled outside the array.  s is a static int."""
    if s == 0:
        return v
    rows, width = v.shape
    z = jnp.zeros((rows, abs(s)), v.dtype)
    if s > 0:
        return jnp.concatenate([v[:, s:], z], axis=1)
    return jnp.concatenate([z, v[:, :width + s]], axis=1)


def generator_kernel(x_ref,
                     w1_ref, b1_ref,
                     w2_ref, b2_ref, g2_ref, be2_ref,
                     w3_ref, b3_ref, g3_ref, be3_ref,
                     w4_hbm, b4_ref, g4_ref, be4_ref,
                     w5_hbm, b5_ref,
                     cw1_ref, cb1_ref, cw2_ref, cb2_ref, cw3_ref, cb3_ref,
                     out_ref,
                     w4_vmem, w5_vmem, dma_sem,
                     *, L, Lpseg):
    f32 = jnp.float32
    bf16 = jnp.bfloat16

    # Prefetch the two big weight matrices (kept in HBM) so their DMA overlaps the
    # first three MLP layers' compute.
    cp4 = pltpu.make_async_copy(w4_hbm, w4_vmem, dma_sem.at[0])
    cp5 = pltpu.make_async_copy(w5_hbm, w5_vmem, dma_sem.at[1])
    cp4.start()
    cp5.start()

    # ------------------------------- MLP -------------------------------
    x = x_ref[...]                                                       # (B, 100) f32
    h = _lrelu(jnp.dot(x, w1_ref[...], preferred_element_type=f32) + b1_ref[...])
    h = _lrelu(_bn_train(
        jnp.dot(h.astype(bf16), w2_ref[...], preferred_element_type=f32) + b2_ref[...],
        g2_ref[...], be2_ref[...]))
    h = _lrelu(_bn_train(
        jnp.dot(h.astype(bf16), w3_ref[...], preferred_element_type=f32) + b3_ref[...],
        g3_ref[...], be3_ref[...]))
    cp4.wait()
    h = _lrelu(_bn_train(
        jnp.dot(h.astype(bf16), w4_vmem[...], preferred_element_type=f32) + b4_ref[...],
        g4_ref[...], be4_ref[...]))
    cp5.wait()
    h = jnp.tanh(jnp.dot(h.astype(bf16), w5_vmem[...], preferred_element_type=f32)
                 + b5_ref[...])
    # h : (B, L) f32  -- L == discriminator_input_size

    B = h.shape[0]
    W = B * Lpseg

    cw1 = cw1_ref[...]     # (16, 9)      conv1 weights  [c, k]
    cb1 = cb1_ref[...]     # (16, 1)
    cw2 = cw2_ref[...]     # (16, 144)    conv2 weights  [o, k*16 + c]
    cb2 = cb2_ref[...]     # (16, 1)
    cw3 = cw3_ref[...]     # (16, 9)      conv3 weights  [c, k]
    cb3 = cb3_ref[...]     # (1, 1)

    # ------------- conv stage: batched, lane-dense (C, B*Lpseg) layout -------------
    # Segment b occupies lanes [b*Lpseg, (b+1)*Lpseg); the signal sits at offsets
    # [0, L) and the >= 8 trailing lanes stay zero.  Those zeros act as the conv
    # "same" padding between examples; zero-filled shifts handle the global edges.
    zseg = jnp.zeros((1, Lpseg - L), f32)
    pieces = []
    for b in range(B):
        pieces.append(h[b:b + 1, :])
        pieces.append(zseg)
    big = jnp.concatenate(pieces, axis=1)                                # (1, W)

    # Mask (1, W): 1 on signal columns, 0 on per-segment padding columns.
    ones_blk = jnp.ones((1, L), f32)
    zeros_blk = jnp.zeros((1, Lpseg - L), f32)
    seg_mask = jnp.concatenate(
        [m for _ in range(B) for m in (ones_blk, zeros_blk)], axis=1)    # (1, W)

    # Conv1d(1 -> 16): per-tap broadcast multiply-accumulate on the VPU,
    # bias folded into the accumulator init.
    acc1 = cb1 + jnp.zeros((N_CH, W), f32)
    for k in range(CONV_K):
        acc1 = acc1 + cw1[:, k:k + 1] * _shift_lanes(big, k - CONV_PAD)
    y1 = jnp.tanh(acc1) * seg_mask                                       # (16, W)

    # Conv1d(16 -> 16): im2col -> one (16,144)@(144,W) MXU matmul.
    stacked = jnp.concatenate(
        [_shift_lanes(y1, k - CONV_PAD) for k in range(CONV_K)], axis=0)  # (144, W)
    y2 = jnp.tanh(jnp.dot(cw2, stacked, preferred_element_type=f32) + cb2) * seg_mask

    # Conv1d(16 -> 1): per-tap VPU multiply-accumulate + one sublane reduction (XLU).
    acc3 = jnp.zeros((N_CH, W), f32)
    for k in range(CONV_K):
        acc3 = acc3 + cw3[:, k:k + 1] * _shift_lanes(y2, k - CONV_PAD)
    y3 = jnp.sum(acc3, axis=0, keepdims=True) + cb3                      # (1, W)

    # Gather the per-example signal columns (lane-aligned slices) and store once.
    out = jnp.concatenate([y3[:, b * Lpseg: b * Lpseg + L] for b in range(B)], axis=0)
    out_ref[...] = out                                                   # (B, L)


@functools.partial(jax.jit, static_argnames=("disc_input_size",))
def denoised_generator_forward(x, kparams, disc_input_size):
    B = x.shape[0]
    L = disc_input_size
    Lpseg = ((L + 2 * CONV_PAD + 127) // 128) * 128   # lane-aligned per-example segment

    kp = kparams
    VMEM = pl.BlockSpec(memory_space=pltpu.MemorySpace.VMEM)
    HBM = pl.BlockSpec(memory_space=pl.ANY)           # stays in HBM, DMA'd manually

    args_specs = [
        (x, VMEM),
        (kp["w1"], VMEM), (kp["b1"], VMEM),
        (kp["w2"], VMEM), (kp["b2"], VMEM), (kp["g2"], VMEM), (kp["be2"], VMEM),
        (kp["w3"], VMEM), (kp["b3"], VMEM), (kp["g3"], VMEM), (kp["be3"], VMEM),
        (kp["w4"], HBM),  (kp["b4"], VMEM), (kp["g4"], VMEM), (kp["be4"], VMEM),
        (kp["w5"], HBM),  (kp["b5"], VMEM),
        (kp["cw1"], VMEM), (kp["cb1"], VMEM),
        (kp["cw2m"], VMEM), (kp["cb2"], VMEM),
        (kp["cw3"], VMEM), (kp["cb3"], VMEM),
    ]
    args = tuple(a for a, _ in args_specs)
    in_specs = [s for _, s in args_specs]

    kernel = functools.partial(generator_kernel, L=L, Lpseg=Lpseg)

    # TODO(synk): for very large disc_input_size / batch, add a real grid over
    # batch halves with dimension_semantics=("parallel",) so v7x's 2 TensorCores
    # both do work; unnecessary at these sizes.
    return pl.pallas_call(
        kernel,
        out_shape=jax.ShapeDtypeStruct((B, L), jnp.float32),
        in_specs=in_specs,
        out_specs=pl.BlockSpec(memory_space=pltpu.MemorySpace.VMEM),
        scratch_shapes=[
            pltpu.VMEM(kp["w4"].shape, kp["w4"].dtype),     # prefetched w4
            pltpu.VMEM(kp["w5"].shape, kp["w5"].dtype),     # prefetched w5
            pltpu.SemaphoreType.DMA((2,)),
        ],
        compiler_params=pltpu.CompilerParams(vmem_limit_bytes=32 << 20),
    )(*args)


def init_params(key, disc_input_size):
    ks = iter(jax.random.split(key, 32))

    def nrm(shape, scale=0.1):
        return scale * jax.random.normal(next(ks), shape, dtype=jnp.float32)

    p = {}
    p["w1"], p["b1"] = nrm((100, 128)), nrm((1, 128))
    p["w2"], p["b2"] = nrm((128, 256)), nrm((1, 256))
    p["g2"], p["be2"] = 1.0 + nrm((1, 256)), nrm((1, 256))
    p["w3"], p["b3"] = nrm((256, 512)), nrm((1, 512))
    p["g3"], p["be3"] = 1.0 + nrm((1, 512)), nrm((1, 512))
    p["w4"], p["b4"] = nrm((512, 1024)), nrm((1, 1024))
    p["g4"], p["be4"] = 1.0 + nrm((1, 1024)), nrm((1, 1024))
    p["w5"], p["b5"] = nrm((1024, disc_input_size)), nrm((1, disc_input_size))
    # Conv weights in the PyTorch Conv1d layout (out_ch, in_ch, k); 1-D biases.
    p["cw1"], p["cb1"] = nrm((N_CH, 1, CONV_K)), nrm((N_CH,))
    p["cw2"], p["cb2"] = nrm((N_CH, N_CH, CONV_K)), nrm((N_CH,))
    p["cw3"], p["cb3"] = nrm((1, N_CH, CONV_K)), nrm((1,))
    return p


def prepare_kernel_params(p):
    """Re-pack the f32 parameters into the forms the kernel consumes."""
    bf16 = jnp.bfloat16
    return {
        "w1": p["w1"], "b1": p["b1"],                     # small; keep f32
        "w2": p["w2"].astype(bf16), "b2": p["b2"], "g2": p["g2"], "be2": p["be2"],
        "w3": p["w3"].astype(bf16), "b3": p["b3"], "g3": p["g3"], "be3": p["be3"],
        "w4": p["w4"].astype(bf16), "b4": p["b4"], "g4": p["g4"], "be4": p["be4"],
        "w5": p["w5"].astype(bf16), "b5": p["b5"],
        # conv1: (16,1,9) -> (16,9) taps on lanes; bias -> (16,1)
        "cw1": p["cw1"][:, 0, :], "cb1": p["cb1"][:, None],
        # conv2: (O,I,K) -> (O,K,I) -> (16,144) so column k*16+i holds w[o,i,k]
        "cw2m": jnp.transpose(p["cw2"], (0, 2, 1)).reshape(N_CH, CONV_K * N_CH),
        "cb2": p["cb2"][:, None],
        # conv3: (1,16,9) -> (16,9); bias -> (1,1)
        "cw3": p["cw3"][0], "cb3": p["cb3"][:, None],
    }


def reference_forward(x, p):
    """Pure-JAX reference mirroring the PyTorch forward (train mode).  MLP layers
    2-5 use bf16 operands / f32 accumulation to match the kernel's mixed precision;
    everything else is f32."""
    hp = lax.Precision.HIGHEST
    bf16 = jnp.bfloat16

    def bn(h, g, b):
        mu = jnp.mean(h, axis=0, keepdims=True)
        var = jnp.mean((h - mu) ** 2, axis=0, keepdims=True)
        return (h - mu) / jnp.sqrt(var + BN_EPS) * g + b

    def mm_bf16(a, w):
        return jnp.dot(a.astype(bf16), w.astype(bf16), preferred_element_type=jnp.float32)

    h = _lrelu(jnp.dot(x, p["w1"], precision=hp) + p["b1"])
    h = _lrelu(bn(mm_bf16(h, p["w2"]) + p["b2"], p["g2"], p["be2"]))
    h = _lrelu(bn(mm_bf16(h, p["w3"]) + p["b3"], p["g3"], p["be3"]))
    h = _lrelu(bn(mm_bf16(h, p["w4"]) + p["b4"], p["g4"], p["be4"]))
    h = jnp.tanh(mm_bf16(h, p["w5"]) + p["b5"])

    z = h[:, None, :]                                          # (B, 1, L)  NCW
    dn = ("NCH", "OIH", "NCH")

    def conv(inp, w_oik, bias):
        y = lax.conv_general_dilated(inp, w_oik, (1,), [(CONV_PAD, CONV_PAD)],
                                     dimension_numbers=dn, precision=hp)
        return y + bias[None, :, None]

    y = jnp.tanh(conv(z, p["cw1"], p["cb1"]))
    y = jnp.tanh(conv(y, p["cw2"], p["cb2"]))
    y = conv(y, p["cw3"], p["cb3"])
    return y[:, 0, :]


if __name__ == "__main__":
    B = 8
    DISC_INPUT_SIZE = 128

    key = jax.random.PRNGKey(0)
    k_x, k_p = jax.random.split(key)
    x = jax.random.normal(k_x, (B, 100), dtype=jnp.float32)
    params = init_params(k_p, DISC_INPUT_SIZE)
    kparams = prepare_kernel_params(params)

    out = denoised_generator_forward(x, kparams, disc_input_size=DISC_INPUT_SIZE)
    out = jax.block_until_ready(out)

    assert out.shape == (B, DISC_INPUT_SIZE), out.shape
    assert bool(jnp.all(jnp.isfinite(out)))

    ref = jax.block_until_ready(reference_forward(x, params))
    max_diff = float(jnp.max(jnp.abs(out - ref)))
    assert max_diff < 2e-2, f"kernel/reference mismatch: {max_diff}"

    print("KERNEL_OK")
</pallas_src>

<mosaic_0001>
module attributes {stable_mosaic.version = 11 : i64} {
  func.func @generator_kernel(%arg0: memref<8x100xf32, #tpu.memory_space<vmem>>, %arg1: memref<100x128xf32, #tpu.memory_space<vmem>>, %arg2: memref<1x128xf32, #tpu.memory_space<vmem>>, %arg3: memref<128x256xbf16, #tpu.memory_space<vmem>>, %arg4: memref<1x256xf32, #tpu.memory_space<vmem>>, %arg5: memref<1x256xf32, #tpu.memory_space<vmem>>, %arg6: memref<1x256xf32, #tpu.memory_space<vmem>>, %arg7: memref<256x512xbf16, #tpu.memory_space<vmem>>, %arg8: memref<1x512xf32, #tpu.memory_space<vmem>>, %arg9: memref<1x512xf32, #tpu.memory_space<vmem>>, %arg10: memref<1x512xf32, #tpu.memory_space<vmem>>, %arg11: memref<512x1024xbf16, #tpu.memory_space<any>>, %arg12: memref<1x1024xf32, #tpu.memory_space<vmem>>, %arg13: memref<1x1024xf32, #tpu.memory_space<vmem>>, %arg14: memref<1x1024xf32, #tpu.memory_space<vmem>>, %arg15: memref<1024x128xbf16, #tpu.memory_space<any>>, %arg16: memref<1x128xf32, #tpu.memory_space<vmem>>, %arg17: memref<16x9xf32, #tpu.memory_space<vmem>>, %arg18: memref<16x1xf32, #tpu.memory_space<vmem>>, %arg19: memref<16x144xf32, #tpu.memory_space<vmem>>, %arg20: memref<16x1xf32, #tpu.memory_space<vmem>>, %arg21: memref<16x9xf32, #tpu.memory_space<vmem>>, %arg22: memref<1x1xf32, #tpu.memory_space<vmem>>, %arg23: memref<8x128xf32, #tpu.memory_space<vmem>>, %arg24: memref<512x1024xbf16, #tpu.memory_space<vmem>>, %arg25: memref<1024x128xbf16, #tpu.memory_space<vmem>>, %arg26: memref<2x!tpu.dma_semaphore, #tpu.memory_space<semaphore_mem>>) attributes {dimension_semantics = [], scalar_prefetch = 0 : i64, scratch_operands = 3 : i64, tpu.core_type = #tpu.core_type<tc>} {
    %c0_i32 = arith.constant 0 : i32
    %0 = tpu.memref_slice %arg26[%c0_i32] : memref<2x!tpu.dma_semaphore, #tpu.memory_space<semaphore_mem>> -> memref<1x!tpu.dma_semaphore, #tpu.memory_space<semaphore_mem>>
    %1 = tpu.memref_squeeze %0 : memref<1x!tpu.dma_semaphore, #tpu.memory_space<semaphore_mem>> -> memref<!tpu.dma_semaphore, #tpu.memory_space<semaphore_mem>>
    tpu.enqueue_dma source(%arg11 : memref<512x1024xbf16, #tpu.memory_space<any>>) target(%arg24 : memref<512x1024xbf16, #tpu.memory_space<vmem>>) target_semaphore(%1 : memref<!tpu.dma_semaphore, #tpu.memory_space<semaphore_mem>>)
    %c1_i32 = arith.constant 1 : i32
    %2 = tpu.memref_slice %arg26[%c1_i32] : memref<2x!tpu.dma_semaphore, #tpu.memory_space<semaphore_mem>> -> memref<1x!tpu.dma_semaphore, #tpu.memory_space<semaphore_mem>>
    %3 = tpu.memref_squeeze %2 : memref<1x!tpu.dma_semaphore, #tpu.memory_space<semaphore_mem>> -> memref<!tpu.dma_semaphore, #tpu.memory_space<semaphore_mem>>
    tpu.enqueue_dma source(%arg15 : memref<1024x128xbf16, #tpu.memory_space<any>>) target(%arg25 : memref<1024x128xbf16, #tpu.memory_space<vmem>>) target_semaphore(%3 : memref<!tpu.dma_semaphore, #tpu.memory_space<semaphore_mem>>)
    %c0 = arith.constant 0 : index
    %c0_0 = arith.constant 0 : index
    %4 = vector.load %arg0[%c0, %c0_0] : memref<8x100xf32, #tpu.memory_space<vmem>>, vector<8x100xf32>
    %c0_1 = arith.constant 0 : index
    %c0_2 = arith.constant 0 : index
    %5 = vector.load %arg1[%c0_1, %c0_2] : memref<100x128xf32, #tpu.memory_space<vmem>>, vector<100x128xf32>
    %cst = arith.constant dense<0.000000e+00> : vector<8x128xf32>
    %6 = tpu.matmul %4, %5, %cst {dimension_numbers = #tpu.dot_dimension_numbers<[1], [0], [0], [1], [0, 0, 1, 1], [], []>} : vector<8x100xf32>, vector<100x128xf32>, vector<8x128xf32> -> vector<8x128xf32>
    %c0_3 = arith.constant 0 : index
    %c0_4 = arith.constant 0 : index
    %7 = vector.load %arg2[%c0_3, %c0_4] : memref<1x128xf32, #tpu.memory_space<vmem>>, vector<1x128xf32>
    %8 = vector.broadcast %7 : vector<1x128xf32> to vector<8x128xf32>
    %9 = arith.addf %6, %8 : vector<8x128xf32>
    %cst_5 = arith.constant 0.000000e+00 : f32
    %10 = vector.broadcast %cst_5 : f32 to vector<8x128xf32>
    %11 = arith.cmpf ogt, %9, %10 : vector<8x128xf32>
    %cst_6 = arith.constant 2.000000e-01 : f32
    %12 = vector.broadcast %cst_6 : f32 to vector<8x128xf32>
    %13 = arith.mulf %12, %9 : vector<8x128xf32>
    %14 = arith.select %11, %9, %13 : vector<8x128xi1>, vector<8x128xf32>
    %15 = arith.truncf %14 : vector<8x128xf32> to vector<8x128xbf16>
    %c0_7 = arith.constant 0 : index
    %c0_8 = arith.constant 0 : index
    %16 = vector.load %arg3[%c0_7, %c0_8] : memref<128x256xbf16, #tpu.memory_space<vmem>>, vector<128x256xbf16>
    %cst_9 = arith.constant dense<0.000000e+00> : vector<8x256xf32>
    %17 = tpu.matmul %15, %16, %cst_9 {dimension_numbers = #tpu.dot_dimension_numbers<[1], [0], [0], [1], [0, 0, 1, 1], [], []>} : vector<8x128xbf16>, vector<128x256xbf16>, vector<8x256xf32> -> vector<8x256xf32>
    %c0_10 = arith.constant 0 : index
    %c0_11 = arith.constant 0 : index
    %18 = vector.load %arg4[%c0_10, %c0_11] : memref<1x256xf32, #tpu.memory_space<vmem>>, vector<1x256xf32>
    %19 = vector.broadcast %18 : vector<1x256xf32> to vector<8x256xf32>
    %20 = arith.addf %17, %19 : vector<8x256xf32>
    %c0_12 = arith.constant 0 : index
    %c0_13 = arith.constant 0 : index
    %21 = vector.load %arg5[%c0_12, %c0_13] : memref<1x256xf32, #tpu.memory_space<vmem>>, vector<1x256xf32>
    %c0_14 = arith.constant 0 : index
    %c0_15 = arith.constant 0 : index
    %22 = vector.load %arg6[%c0_14, %c0_15] : memref<1x256xf32, #tpu.memory_space<vmem>>, vector<1x256xf32>
    %cst_16 = arith.constant dense<0.000000e+00> : vector<256xf32>
    %23 = vector.multi_reduction <add>, %20, %cst_16 [0] : vector<8x256xf32> to vector<256xf32>
    %24 = vector.shape_cast %23 : vector<256xf32> to vector<1x256xf32>
    %cst_17 = arith.constant 8.000000e+00 : f32
    %25 = vector.broadcast %cst_17 : f32 to vector<1x256xf32>
    %26 = arith.divf %24, %25 : vector<1x256xf32>
    %27 = arith.mulf %20, %20 : vector<8x256xf32>
    %cst_18 = arith.constant dense<0.000000e+00> : vector<256xf32>
    %28 = vector.multi_reduction <add>, %27, %cst_18 [0] : vector<8x256xf32> to vector<256xf32>
    %29 = vector.shape_cast %28 : vector<256xf32> to vector<1x256xf32>
    %cst_19 = arith.constant 8.000000e+00 : f32
    %30 = vector.broadcast %cst_19 : f32 to vector<1x256xf32>
    %31 = arith.divf %29, %30 : vector<1x256xf32>
    %32 = arith.mulf %26, %26 : vector<1x256xf32>
    %33 = arith.subf %31, %32 : vector<1x256xf32>
    %34 = vector.broadcast %26 : vector<1x256xf32> to vector<8x256xf32>
    %35 = arith.subf %20, %34 : vector<8x256xf32>
    %cst_20 = arith.constant 8.000000e-01 : f32
    %36 = vector.broadcast %cst_20 : f32 to vector<1x256xf32>
    %37 = arith.addf %33, %36 : vector<1x256xf32>
    %38 = math.rsqrt %37 : vector<1x256xf32>
    %39 = vector.broadcast %38 : vector<1x256xf32> to vector<8x256xf32>
    %40 = arith.mulf %35, %39 : vector<8x256xf32>
    %41 = vector.broadcast %21 : vector<1x256xf32> to vector<8x256xf32>
    %42 = arith.mulf %40, %41 : vector<8x256xf32>
    %43 = vector.broadcast %22 : vector<1x256xf32> to vector<8x256xf32>
    %44 = arith.addf %42, %43 : vector<8x256xf32>
    %cst_21 = arith.constant 0.000000e+00 : f32
    %45 = vector.broadcast %cst_21 : f32 to vector<8x256xf32>
    %46 = arith.cmpf ogt, %44, %45 : vector<8x256xf32>
    %cst_22 = arith.constant 2.000000e-01 : f32
    %47 = vector.broadcast %cst_22 : f32 to vector<8x256xf32>
    %48 = arith.mulf %47, %44 : vector<8x256xf32>
    %49 = arith.select %46, %44, %48 : vector<8x256xi1>, vector<8x256xf32>
    %50 = arith.truncf %49 : vector<8x256xf32> to vector<8x256xbf16>
    %c0_23 = arith.constant 0 : index
    %c0_24 = arith.constant 0 : index
    %51 = vector.load %arg7[%c0_23, %c0_24] : memref<256x512xbf16, #tpu.memory_space<vmem>>, vector<256x512xbf16>
    %cst_25 = arith.constant dense<0.000000e+00> : vector<8x512xf32>
    %52 = tpu.matmul %50, %51, %cst_25 {dimension_numbers = #tpu.dot_dimension_numbers<[1], [0], [0], [1], [0, 0, 1, 1], [], []>} : vector<8x256xbf16>, vector<256x512xbf16>, vector<8x512xf32> -> vector<8x512xf32>
    %c0_26 = arith.constant 0 : index
    %c0_27 = arith.constant 0 : index
    %53 = vector.load %arg8[%c0_26, %c0_27] : memref<1x512xf32, #tpu.memory_space<vmem>>, vector<1x512xf32>
    %54 = vector.broadcast %53 : vector<1x512xf32> to vector<8x512xf32>
    %55 = arith.addf %52, %54 : vector<8x512xf32>
    %c0_28 = arith.constant 0 : index
    %c0_29 = arith.constant 0 : index
    %56 = vector.load %arg9[%c0_28, %c0_29] : memref<1x512xf32, #tpu.memory_space<vmem>>, vector<1x512xf32>
    %c0_30 = arith.constant 0 : index
    %c0_31 = arith.constant 0 : index
    %57 = vector.load %arg10[%c0_30, %c0_31] : memref<1x512xf32, #tpu.memory_space<vmem>>, vector<1x512xf32>
    %cst_32 = arith.constant dense<0.000000e+00> : vector<512xf32>
    %58 = vector.multi_reduction <add>, %55, %cst_32 [0] : vector<8x512xf32> to vector<512xf32>
    %59 = vector.shape_cast %58 : vector<512xf32> to vector<1x512xf32>
    %cst_33 = arith.constant 8.000000e+00 : f32
    %60 = vector.broadcast %cst_33 : f32 to vector<1x512xf32>
    %61 = arith.divf %59, %60 : vector<1x512xf32>
    %62 = arith.mulf %55, %55 : vector<8x512xf32>
    %cst_34 = arith.constant dense<0.000000e+00> : vector<512xf32>
    %63 = vector.multi_reduction <add>, %62, %cst_34 [0] : vector<8x512xf32> to vector<512xf32>
    %64 = vector.shape_cast %63 : vector<512xf32> to vector<1x512xf32>
    %cst_35 = arith.constant 8.000000e+00 : f32
    %65 = vector.broadcast %cst_35 : f32 to vector<1x512xf32>
    %66 = arith.divf %64, %65 : vector<1x512xf32>
    %67 = arith.mulf %61, %61 : vector<1x512xf32>
    %68 = arith.subf %66, %67 : vector<1x512xf32>
    %69 = vector.broadcast %61 : vector<1x512xf32> to vector<8x512xf32>
    %70 = arith.subf %55, %69 : vector<8x512xf32>
    %cst_36 = arith.constant 8.000000e-01 : f32
    %71 = vector.broadcast %cst_36 : f32 to vector<1x512xf32>
    %72 = arith.addf %68, %71 : vector<1x512xf32>
    %73 = math.rsqrt %72 : vector<1x512xf32>
    %74 = vector.broadcast %73 : vector<1x512xf32> to vector<8x512xf32>
    %75 = arith.mulf %70, %74 : vector<8x512xf32>
    %76 = vector.broadcast %56 : vector<1x512xf32> to vector<8x512xf32>
    %77 = arith.mulf %75, %76 : vector<8x512xf32>
    %78 = vector.broadcast %57 : vector<1x512xf32> to vector<8x512xf32>
    %79 = arith.addf %77, %78 : vector<8x512xf32>
    %cst_37 = arith.constant 0.000000e+00 : f32
    %80 = vector.broadcast %cst_37 : f32 to vector<8x512xf32>
    %81 = arith.cmpf ogt, %79, %80 : vector<8x512xf32>
    %cst_38 = arith.constant 2.000000e-01 : f32
    %82 = vector.broadcast %cst_38 : f32 to vector<8x512xf32>
    %83 = arith.mulf %82, %79 : vector<8x512xf32>
    %84 = arith.select %81, %79, %83 : vector<8x512xi1>, vector<8x512xf32>
    %c0_i32_39 = arith.constant 0 : i32
    %85 = tpu.memref_slice %arg26[%c0_i32_39] : memref<2x!tpu.dma_semaphore, #tpu.memory_space<semaphore_mem>> -> memref<1x!tpu.dma_semaphore, #tpu.memory_space<semaphore_mem>>
    %86 = tpu.memref_squeeze %85 : memref<1x!tpu.dma_semaphore, #tpu.memory_space<semaphore_mem>> -> memref<!tpu.dma_semaphore, #tpu.memory_space<semaphore_mem>>
    tpu.wait_dma2 semaphore(%86 : memref<!tpu.dma_semaphore, #tpu.memory_space<semaphore_mem>>) src(%arg11 : memref<512x1024xbf16, #tpu.memory_space<any>>) dst(%arg24 : memref<512x1024xbf16, #tpu.memory_space<vmem>>)
    %87 = arith.truncf %84 : vector<8x512xf32> to vector<8x512xbf16>
    %c0_40 = arith.constant 0 : index
    %c0_41 = arith.constant 0 : index
    %88 = vector.load %arg24[%c0_40, %c0_41] : memref<512x1024xbf16, #tpu.memory_space<vmem>>, vector<512x1024xbf16>
    %cst_42 = arith.constant dense<0.000000e+00> : vector<8x1024xf32>
    %89 = tpu.matmul %87, %88, %cst_42 {dimension_numbers = #tpu.dot_dimension_numbers<[1], [0], [0], [1], [0, 0, 1, 1], [], []>} : vector<8x512xbf16>, vector<512x1024xbf16>, vector<8x1024xf32> -> vector<8x1024xf32>
    %c0_43 = arith.constant 0 : index
    %c0_44 = arith.constant 0 : index
    %90 = vector.load %arg12[%c0_43, %c0_44] : memref<1x1024xf32, #tpu.memory_space<vmem>>, vector<1x1024xf32>
    %91 = vector.broadcast %90 : vector<1x1024xf32> to vector<8x1024xf32>
    %92 = arith.addf %89, %91 : vector<8x1024xf32>
    %c0_45 = arith.constant 0 : index
    %c0_46 = arith.constant 0 : index
    %93 = vector.load %arg13[%c0_45, %c0_46] : memref<1x1024xf32, #tpu.memory_space<vmem>>, vector<1x1024xf32>
    %c0_47 = arith.constant 0 : index
    %c0_48 = arith.constant 0 : index
    %94 = vector.load %arg14[%c0_47, %c0_48] : memref<1x1024xf32, #tpu.memory_space<vmem>>, vector<1x1024xf32>
    %cst_49 = arith.constant dense<0.000000e+00> : vector<1024xf32>
    %95 = vector.multi_reduction <add>, %92, %cst_49 [0] : vector<8x1024xf32> to vector<1024xf32>
    %96 = vector.shape_cast %95 : vector<1024xf32> to vector<1x1024xf32>
    %cst_50 = arith.constant 8.000000e+00 : f32
    %97 = vector.broadcast %cst_50 : f32 to vector<1x1024xf32>
    %98 = arith.divf %96, %97 : vector<1x1024xf32>
    %99 = arith.mulf %92, %92 : vector<8x1024xf32>
    %cst_51 = arith.constant dense<0.000000e+00> : vector<1024xf32>
    %100 = vector.multi_reduction <add>, %99, %cst_51 [0] : vector<8x1024xf32> to vector<1024xf32>
    %101 = vector.shape_cast %100 : vector<1024xf32> to vector<1x1024xf32>
    %cst_52 = arith.constant 8.000000e+00 : f32
    %102 = vector.broadcast %cst_52 : f32 to vector<1x1024xf32>
    %103 = arith.divf %101, %102 : vector<1x1024xf32>
    %104 = arith.mulf %98, %98 : vector<1x1024xf32>
    %105 = arith.subf %103, %104 : vector<1x1024xf32>
    %106 = vector.broadcast %98 : vector<1x1024xf32> to vector<8x1024xf32>
    %107 = arith.subf %92, %106 : vector<8x1024xf32>
    %cst_53 = arith.constant 8.000000e-01 : f32
    %108 = vector.broadcast %cst_53 : f32 to vector<1x1024xf32>
    %109 = arith.addf %105, %108 : vector<1x1024xf32>
    %110 = math.rsqrt %109 : vector<1x1024xf32>
    %111 = vector.broadcast %110 : vector<1x1024xf32> to vector<8x1024xf32>
    %112 = arith.mulf %107, %111 : vector<8x1024xf32>
    %113 = vector.broadcast %93 : vector<1x1024xf32> to vector<8x1024xf32>
    %114 = arith.mulf %112, %113 : vector<8x1024xf32>
    %115 = vector.broadcast %94 : vector<1x1024xf32> to vector<8x1024xf32>
    %116 = arith.addf %114, %115 : vector<8x1024xf32>
    %cst_54 = arith.constant 0.000000e+00 : f32
    %117 = vector.broadcast %cst_54 : f32 to vector<8x1024xf32>
    %118 = arith.cmpf ogt, %116, %117 : vector<8x1024xf32>
    %cst_55 = arith.constant 2.000000e-01 : f32
    %119 = vector.broadcast %cst_55 : f32 to vector<8x1024xf32>
    %120 = arith.mulf %119, %116 : vector<8x1024xf32>
    %121 = arith.select %118, %116, %120 : vector<8x1024xi1>, vector<8x1024xf32>
    %c1_i32_56 = arith.constant 1 : i32
    %122 = tpu.memref_slice %arg26[%c1_i32_56] : memref<2x!tpu.dma_semaphore, #tpu.memory_space<semaphore_mem>> -> memref<1x!tpu.dma_semaphore, #tpu.memory_space<semaphore_mem>>
    %123 = tpu.memref_squeeze %122 : memref<1x!tpu.dma_semaphore, #tpu.memory_space<semaphore_mem>> -> memref<!tpu.dma_semaphore, #tpu.memory_space<semaphore_mem>>
    tpu.wait_dma2 semaphore(%123 : memref<!tpu.dma_semaphore, #tpu.memory_space<semaphore_mem>>) src(%arg15 : memref<1024x128xbf16, #tpu.memory_space<any>>) dst(%arg25 : memref<1024x128xbf16, #tpu.memory_space<vmem>>)
    %124 = arith.truncf %121 : vector<8x1024xf32> to vector<8x1024xbf16>
    %c0_57 = arith.constant 0 : index
    %c0_58 = arith.constant 0 : index
    %125 = vector.load %arg25[%c0_57, %c0_58] : memref<1024x128xbf16, #tpu.memory_space<vmem>>, vector<1024x128xbf16>
    %cst_59 = arith.constant dense<0.000000e+00> : vector<8x128xf32>
    %126 = tpu.matmul %124, %125, %cst_59 {dimension_numbers = #tpu.dot_dimension_numbers<[1], [0], [0], [1], [0, 0, 1, 1], [], []>} : vector<8x1024xbf16>, vector<1024x128xbf16>, vector<8x128xf32> -> vector<8x128xf32>
    %c0_60 = arith.constant 0 : index
    %c0_61 = arith.constant 0 : index
    %127 = vector.load %arg16[%c0_60, %c0_61] : memref<1x128xf32, #tpu.memory_space<vmem>>, vector<1x128xf32>
    %128 = vector.broadcast %127 : vector<1x128xf32> to vector<8x128xf32>
    %129 = arith.addf %126, %128 : vector<8x128xf32>
    %130 = math.tanh %129 : vector<8x128xf32>
    %c0_62 = arith.constant 0 : index
    %c0_63 = arith.constant 0 : index
    %131 = vector.load %arg17[%c0_62, %c0_63] : memref<16x9xf32, #tpu.memory_space<vmem>>, vector<16x9xf32>
    %c0_64 = arith.constant 0 : index
    %c0_65 = arith.constant 0 : index
    %132 = vector.load %arg18[%c0_64, %c0_65] : memref<16x1xf32, #tpu.memory_space<vmem>>, vector<16x1xf32>
    %c0_66 = arith.constant 0 : index
    %c0_67 = arith.constant 0 : index
    %133 = vector.load %arg19[%c0_66, %c0_67] : memref<16x144xf32, #tpu.memory_space<vmem>>, vector<16x144xf32>
    %c0_68 = arith.constant 0 : index
    %c0_69 = arith.constant 0 : index
    %134 = vector.load %arg20[%c0_68, %c0_69] : memref<16x1xf32, #tpu.memory_space<vmem>>, vector<16x1xf32>
    %c0_70 = arith.constant 0 : index
    %c0_71 = arith.constant 0 : index
    %135 = vector.load %arg21[%c0_70, %c0_71] : memref<16x9xf32, #tpu.memory_space<vmem>>, vector<16x9xf32>
    %c0_72 = arith.constant 0 : index
    %c0_73 = arith.constant 0 : index
    %136 = vector.load %arg22[%c0_72, %c0_73] : memref<1x1xf32, #tpu.memory_space<vmem>>, vector<1x1xf32>
    %cst_74 = arith.constant 0.000000e+00 : f32
    %137 = vector.broadcast %cst_74 : f32 to vector<1x128xf32>
    %138 = vector.extract_strided_slice %130 {offsets = [0, 0], sizes = [1, 128], strides = [1, 1]} : vector<8x128xf32> to vector<1x128xf32>
    %139 = vector.extract_strided_slice %130 {offsets = [1, 0], sizes = [1, 128], strides = [1, 1]} : vector<8x128xf32> to vector<1x128xf32>
    %140 = vector.extract_strided_slice %130 {offsets = [2, 0], sizes = [1, 128], strides = [1, 1]} : vector<8x128xf32> to vector<1x128xf32>
    %141 = vector.extract_strided_slice %130 {offsets = [3, 0], sizes = [1, 128], strides = [1, 1]} : vector<8x128xf32> to vector<1x128xf32>
    %142 = vector.extract_strided_slice %130 {offsets = [4, 0], sizes = [1, 128], strides = [1, 1]} : vector<8x128xf32> to vector<1x128xf32>
    %143 = vector.extract_strided_slice %130 {offsets = [5, 0], sizes = [1, 128], strides = [1, 1]} : vector<8x128xf32> to vector<1x128xf32>
    %144 = vector.extract_strided_slice %130 {offsets = [6, 0], sizes = [1, 128], strides = [1, 1]} : vector<8x128xf32> to vector<1x128xf32>
    %145 = vector.extract_strided_slice %130 {offsets = [7, 0], sizes = [1, 128], strides = [1, 1]} : vector<8x128xf32> to vector<1x128xf32>
    %146 = tpu.concatenate %138, %137, %139, %137, %140, %137, %141, %137, %142, %137, %143, %137, %144, %137, %145, %137 in 1 : vector<1x128xf32>, vector<1x128xf32>, vector<1x128xf32>, vector<1x128xf32>, vector<1x128xf32>, vector<1x128xf32>, vector<1x128xf32>, vector<1x128xf32>, vector<1x128xf32>, vector<1x128xf32>, vector<1x128xf32>, vector<1x128xf32>, vector<1x128xf32>, vector<1x128xf32>, vector<1x128xf32>, vector<1x128xf32> -> vector<1x2048xf32>
    %cst_75 = arith.constant 1.000000e+00 : f32
    %147 = vector.broadcast %cst_75 : f32 to vector<1x128xf32>
    %cst_76 = arith.constant 0.000000e+00 : f32
    %148 = vector.broadcast %cst_76 : f32 to vector<1x128xf32>
    %149 = tpu.concatenate %147, %148, %147, %148, %147, %148, %147, %148, %147, %148, %147, %148, %147, %148, %147, %148 in 1 : vector<1x128xf32>, vector<1x128xf32>, vector<1x128xf32>, vector<1x128xf32>, vector<1x128xf32>, vector<1x128xf32>, vector<1x128xf32>, vector<1x128xf32>, vector<1x128xf32>, vector<1x128xf32>, vector<1x128xf32>, vector<1x128xf32>, vector<1x128xf32>, vector<1x128xf32>, vector<1x128xf32>, vector<1x128xf32> -> vector<1x2048xf32>
    %cst_77 = arith.constant 0.000000e+00 : f32
    %150 = vector.broadcast %cst_77 : f32 to vector<16x2048xf32>
    %151 = vector.broadcast %132 : vector<16x1xf32> to vector<16x2048xf32>
    %152 = arith.addf %151, %150 : vector<16x2048xf32>
    %153 = vector.extract_strided_slice %131 {offsets = [0, 0], sizes = [16, 1], strides = [1, 1]} : vector<16x9xf32> to vector<16x1xf32>
    %cst_78 = arith.constant 0.000000e+00 : f32
    %154 = vector.broadcast %cst_78 : f32 to vector<1x4xf32>
    %155 = vector.extract_strided_slice %146 {offsets = [0, 0], sizes = [1, 2044], strides = [1, 1]} : vector<1x2048xf32> to vector<1x2044xf32>
    %156 = tpu.concatenate %154, %155 in 1 : vector<1x4xf32>, vector<1x2044xf32> -> vector<1x2048xf32>
    %157 = vector.broadcast %153 : vector<16x1xf32> to vector<16x2048xf32>
    %158 = vector.broadcast %156 : vector<1x2048xf32> to vector<16x2048xf32>
    %159 = arith.mulf %157, %158 : vector<16x2048xf32>
    %160 = arith.addf %152, %159 : vector<16x2048xf32>
    %161 = vector.extract_strided_slice %131 {offsets = [0, 1], sizes = [16, 1], strides = [1, 1]} : vector<16x9xf32> to vector<16x1xf32>
    %cst_79 = arith.constant 0.000000e+00 : f32
    %162 = vector.broadcast %cst_79 : f32 to vector<1x3xf32>
    %163 = vector.extract_strided_slice %146 {offsets = [0, 0], sizes = [1, 2045], strides = [1, 1]} : vector<1x2048xf32> to vector<1x2045xf32>
    %164 = tpu.concatenate %162, %163 in 1 : vector<1x3xf32>, vector<1x2045xf32> -> vector<1x2048xf32>
    %165 = vector.broadcast %161 : vector<16x1xf32> to vector<16x2048xf32>
    %166 = vector.broadcast %164 : vector<1x2048xf32> to vector<16x2048xf32>
    %167 = arith.mulf %165, %166 : vector<16x2048xf32>
    %168 = arith.addf %160, %167 : vector<16x2048xf32>
    %169 = vector.extract_strided_slice %131 {offsets = [0, 2], sizes = [16, 1], strides = [1, 1]} : vector<16x9xf32> to vector<16x1xf32>
    %cst_80 = arith.constant 0.000000e+00 : f32
    %170 = vector.broadcast %cst_80 : f32 to vector<1x2xf32>
    %171 = vector.extract_strided_slice %146 {offsets = [0, 0], sizes = [1, 2046], strides = [1, 1]} : vector<1x2048xf32> to vector<1x2046xf32>
    %172 = tpu.concatenate %170, %171 in 1 : vector<1x2xf32>, vector<1x2046xf32> -> vector<1x2048xf32>
    %173 = vector.broadcast %169 : vector<16x1xf32> to vector<16x2048xf32>
    %174 = vector.broadcast %172 : vector<1x2048xf32> to vector<16x2048xf32>
    %175 = arith.mulf %173, %174 : vector<16x2048xf32>
    %176 = arith.addf %168, %175 : vector<16x2048xf32>
    %177 = vector.extract_strided_slice %131 {offsets = [0, 3], sizes = [16, 1], strides = [1, 1]} : vector<16x9xf32> to vector<16x1xf32>
    %cst_81 = arith.constant 0.000000e+00 : f32
    %178 = vector.broadcast %cst_81 : f32 to vector<1x1xf32>
    %179 = vector.extract_strided_slice %146 {offsets = [0, 0], sizes = [1, 2047], strides = [1, 1]} : vector<1x2048xf32> to vector<1x2047xf32>
    %180 = tpu.concatenate %178, %179 in 1 : vector<1x1xf32>, vector<1x2047xf32> -> vector<1x2048xf32>
    %181 = vector.broadcast %177 : vector<16x1xf32> to vector<16x2048xf32>
    %182 = vector.broadcast %180 : vector<1x2048xf32> to vector<16x2048xf32>
    %183 = arith.mulf %181, %182 : vector<16x2048xf32>
    %184 = arith.addf %176, %183 : vector<16x2048xf32>
    %185 = vector.extract_strided_slice %131 {offsets = [0, 4], sizes = [16, 1], strides = [1, 1]} : vector<16x9xf32> to vector<16x1xf32>
    %186 = vector.broadcast %185 : vector<16x1xf32> to vector<16x2048xf32>
    %187 = vector.broadcast %146 : vector<1x2048xf32> to vector<16x2048xf32>
    %188 = arith.mulf %186, %187 : vector<16x2048xf32>
    %189 = arith.addf %184, %188 : vector<16x2048xf32>
    %190 = vector.extract_strided_slice %131 {offsets = [0, 5], sizes = [16, 1], strides = [1, 1]} : vector<16x9xf32> to vector<16x1xf32>
    %cst_82 = arith.constant 0.000000e+00 : f32
    %191 = vector.broadcast %cst_82 : f32 to vector<1x1xf32>
    %192 = vector.extract_strided_slice %146 {offsets = [0, 1], sizes = [1, 2047], strides = [1, 1]} : vector<1x2048xf32> to vector<1x2047xf32>
    %193 = tpu.concatenate %192, %191 in 1 : vector<1x2047xf32>, vector<1x1xf32> -> vector<1x2048xf32>
    %194 = vector.broadcast %190 : vector<16x1xf32> to vector<16x2048xf32>
    %195 = vector.broadcast %193 : vector<1x2048xf32> to vector<16x2048xf32>
    %196 = arith.mulf %194, %195 : vector<16x2048xf32>
    %197 = arith.addf %189, %196 : vector<16x2048xf32>
    %198 = vector.extract_strided_slice %131 {offsets = [0, 6], sizes = [16, 1], strides = [1, 1]} : vector<16x9xf32> to vector<16x1xf32>
    %cst_83 = arith.constant 0.000000e+00 : f32
    %199 = vector.broadcast %cst_83 : f32 to vector<1x2xf32>
    %200 = vector.extract_strided_slice %146 {offsets = [0, 2], sizes = [1, 2046], strides = [1, 1]} : vector<1x2048xf32> to vector<1x2046xf32>
    %201 = tpu.concatenate %200, %199 in 1 : vector<1x2046xf32>, vector<1x2xf32> -> vector<1x2048xf32>
    %202 = vector.broadcast %198 : vector<16x1xf32> to vector<16x2048xf32>
    %203 = vector.broadcast %201 : vector<1x2048xf32> to vector<16x2048xf32>
    %204 = arith.mulf %202, %203 : vector<16x2048xf32>
    %205 = arith.addf %197, %204 : vector<16x2048xf32>
    %206 = vector.extract_strided_slice %131 {offsets = [0, 7], sizes = [16, 1], strides = [1, 1]} : vector<16x9xf32> to vector<16x1xf32>
    %cst_84 = arith.constant 0.000000e+00 : f32
    %207 = vector.broadcast %cst_84 : f32 to vector<1x3xf32>
    %208 = vector.extract_strided_slice %146 {offsets = [0, 3], sizes = [1, 2045], strides = [1, 1]} : vector<1x2048xf32> to vector<1x2045xf32>
    %209 = tpu.concatenate %208, %207 in 1 : vector<1x2045xf32>, vector<1x3xf32> -> vector<1x2048xf32>
    %210 = vector.broadcast %206 : vector<16x1xf32> to vector<16x2048xf32>
    %211 = vector.broadcast %209 : vector<1x2048xf32> to vector<16x2048xf32>
    %212 = arith.mulf %210, %211 : vector<16x2048xf32>
    %213 = arith.addf %205, %212 : vector<16x2048xf32>
    %214 = vector.extract_strided_slice %131 {offsets = [0, 8], sizes = [16, 1], strides = [1, 1]} : vector<16x9xf32> to vector<16x1xf32>
    %cst_85 = arith.constant 0.000000e+00 : f32
    %215 = vector.broadcast %cst_85 : f32 to vector<1x4xf32>
    %216 = vector.extract_strided_slice %146 {offsets = [0, 4], sizes = [1, 2044], strides = [1, 1]} : vector<1x2048xf32> to vector<1x2044xf32>
    %217 = tpu.concatenate %216, %215 in 1 : vector<1x2044xf32>, vector<1x4xf32> -> vector<1x2048xf32>
    %218 = vector.broadcast %214 : vector<16x1xf32> to vector<16x2048xf32>
    %219 = vector.broadcast %217 : vector<1x2048xf32> to vector<16x2048xf32>
    %220 = arith.mulf %218, %219 : vector<16x2048xf32>
    %221 = arith.addf %213, %220 : vector<16x2048xf32>
    %222 = math.tanh %221 : vector<16x2048xf32>
    %223 = vector.broadcast %149 : vector<1x2048xf32> to vector<16x2048xf32>
    %224 = arith.mulf %222, %223 : vector<16x2048xf32>
    %cst_86 = arith.constant 0.000000e+00 : f32
    %225 = vector.broadcast %cst_86 : f32 to vector<16x4xf32>
    %226 = vector.extract_strided_slice %224 {offsets = [0, 0], sizes = [16, 2044], strides = [1, 1]} : vector<16x2048xf32> to vector<16x2044xf32>
    %227 = tpu.concatenate %225, %226 in 1 : vector<16x4xf32>, vector<16x2044xf32> -> vector<16x2048xf32>
    %cst_87 = arith.constant 0.000000e+00 : f32
    %228 = vector.broadcast %cst_87 : f32 to vector<16x3xf32>
    %229 = vector.extract_strided_slice %224 {offsets = [0, 0], sizes = [16, 2045], strides = [1, 1]} : vector<16x2048xf32> to vector<16x2045xf32>
    %230 = tpu.concatenate %228, %229 in 1 : vector<16x3xf32>, vector<16x2045xf32> -> vector<16x2048xf32>
    %cst_88 = arith.constant 0.000000e+00 : f32
    %231 = vector.broadcast %cst_88 : f32 to vector<16x2xf32>
    %232 = vector.extract_strided_slice %224 {offsets = [0, 0], sizes = [16, 2046], strides = [1, 1]} : vector<16x2048xf32> to vector<16x2046xf32>
    %233 = tpu.concatenate %231, %232 in 1 : vector<16x2xf32>, vector<16x2046xf32> -> vector<16x2048xf32>
    %cst_89 = arith.constant 0.000000e+00 : f32
    %234 = vector.broadcast %cst_89 : f32 to vector<16x1xf32>
    %235 = vector.extract_strided_slice %224 {offsets = [0, 0], sizes = [16, 2047], strides = [1, 1]} : vector<16x2048xf32> to vector<16x2047xf32>
    %236 = tpu.concatenate %234, %235 in 1 : vector<16x1xf32>, vector<16x2047xf32> -> vector<16x2048xf32>
    %cst_90 = arith.constant 0.000000e+00 : f32
    %237 = vector.broadcast %cst_90 : f32 to vector<16x1xf32>
    %238 = vector.extract_strided_slice %224 {offsets = [0, 1], sizes = [16, 2047], strides = [1, 1]} : vector<16x2048xf32> to vector<16x2047xf32>
    %239 = tpu.concatenate %238, %237 in 1 : vector<16x2047xf32>, vector<16x1xf32> -> vector<16x2048xf32>
    %cst_91 = arith.constant 0.000000e+00 : f32
    %240 = vector.broadcast %cst_91 : f32 to vector<16x2xf32>
    %241 = vector.extract_strided_slice %224 {offsets = [0, 2], sizes = [16, 2046], strides = [1, 1]} : vector<16x2048xf32> to vector<16x2046xf32>
    %242 = tpu.concatenate %241, %240 in 1 : vector<16x2046xf32>, vector<16x2xf32> -> vector<16x2048xf32>
    %cst_92 = arith.constant 0.000000e+00 : f32
    %243 = vector.broadcast %cst_92 : f32 to vector<16x3xf32>
    %244 = vector.extract_strided_slice %224 {offsets = [0, 3], sizes = [16, 2045], strides = [1, 1]} : vector<16x2048xf32> to vector<16x2045xf32>
    %245 = tpu.concatenate %244, %243 in 1 : vector<16x2045xf32>, vector<16x3xf32> -> vector<16x2048xf32>
    %cst_93 = arith.constant 0.000000e+00 : f32
    %246 = vector.broadcast %cst_93 : f32 to vector<16x4xf32>
    %247 = vector.extract_strided_slice %224 {offsets = [0, 4], sizes = [16, 2044], strides = [1, 1]} : vector<16x2048xf32> to vector<16x2044xf32>
    %248 = tpu.concatenate %247, %246 in 1 : vector<16x2044xf32>, vector<16x4xf32> -> vector<16x2048xf32>
    %249 = tpu.concatenate %227, %230, %233, %236, %224, %239, %242, %245, %248 in 0 : vector<16x2048xf32>, vector<16x2048xf32>, vector<16x2048xf32>, vector<16x2048xf32>, vector<16x2048xf32>, vector<16x2048xf32>, vector<16x2048xf32>, vector<16x2048xf32>, vector<16x2048xf32> -> vector<144x2048xf32>
    %cst_94 = arith.constant dense<0.000000e+00> : vector<16x2048xf32>
    %250 = tpu.matmul %133, %249, %cst_94 {dimension_numbers = #tpu.dot_dimension_numbers<[1], [0], [0], [1], [0, 0, 1, 1], [], []>} : vector<16x144xf32>, vector<144x2048xf32>, vector<16x2048xf32> -> vector<16x2048xf32>
    %251 = vector.broadcast %134 : vector<16x1xf32> to vector<16x2048xf32>
    %252 = arith.addf %250, %251 : vector<16x2048xf32>
    %253 = math.tanh %252 : vector<16x2048xf32>
    %254 = vector.broadcast %149 : vector<1x2048xf32> to vector<16x2048xf32>
    %255 = arith.mulf %253, %254 : vector<16x2048xf32>
    %cst_95 = arith.constant 0.000000e+00 : f32
    %256 = vector.broadcast %cst_95 : f32 to vector<16x2048xf32>
    %257 = vector.extract_strided_slice %135 {offsets = [0, 0], sizes = [16, 1], strides = [1, 1]} : vector<16x9xf32> to vector<16x1xf32>
    %cst_96 = arith.constant 0.000000e+00 : f32
    %258 = vector.broadcast %cst_96 : f32 to vector<16x4xf32>
    %259 = vector.extract_strided_slice %255 {offsets = [0, 0], sizes = [16, 2044], strides = [1, 1]} : vector<16x2048xf32> to vector<16x2044xf32>
    %260 = tpu.concatenate %258, %259 in 1 : vector<16x4xf32>, vector<16x2044xf32> -> vector<16x2048xf32>
    %261 = vector.broadcast %257 : vector<16x1xf32> to vector<16x2048xf32>
    %262 = arith.mulf %261, %260 : vector<16x2048xf32>
    %263 = arith.addf %256, %262 : vector<16x2048xf32>
    %264 = vector.extract_strided_slice %135 {offsets = [0, 1], sizes = [16, 1], strides = [1, 1]} : vector<16x9xf32> to vector<16x1xf32>
    %cst_97 = arith.constant 0.000000e+00 : f32
    %265 = vector.broadcast %cst_97 : f32 to vector<16x3xf32>
    %266 = vector.extract_strided_slice %255 {offsets = [0, 0], sizes = [16, 2045], strides = [1, 1]} : vector<16x2048xf32> to vector<16x2045xf32>
    %267 = tpu.concatenate %265, %266 in 1 : vector<16x3xf32>, vector<16x2045xf32> -> vector<16x2048xf32>
    %268 = vector.broadcast %264 : vector<16x1xf32> to vector<16x2048xf32>
    %269 = arith.mulf %268, %267 : vector<16x2048xf32>
    %270 = arith.addf %263, %269 : vector<16x2048xf32>
    %271 = vector.extract_strided_slice %135 {offsets = [0, 2], sizes = [16, 1], strides = [1, 1]} : vector<16x9xf32> to vector<16x1xf32>
    %cst_98 = arith.constant 0.000000e+00 : f32
    %272 = vector.broadcast %cst_98 : f32 to vector<16x2xf32>
    %273 = vector.extract_strided_slice %255 {offsets = [0, 0], sizes = [16, 2046], strides = [1, 1]} : vector<16x2048xf32> to vector<16x2046xf32>
    %274 = tpu.concatenate %272, %273 in 1 : vector<16x2xf32>, vector<16x2046xf32> -> vector<16x2048xf32>
    %275 = vector.broadcast %271 : vector<16x1xf32> to vector<16x2048xf32>
    %276 = arith.mulf %275, %274 : vector<16x2048xf32>
    %277 = arith.addf %270, %276 : vector<16x2048xf32>
    %278 = vector.extract_strided_slice %135 {offsets = [0, 3], sizes = [16, 1], strides = [1, 1]} : vector<16x9xf32> to vector<16x1xf32>
    %cst_99 = arith.constant 0.000000e+00 : f32
    %279 = vector.broadcast %cst_99 : f32 to vector<16x1xf32>
    %280 = vector.extract_strided_slice %255 {offsets = [0, 0], sizes = [16, 2047], strides = [1, 1]} : vector<16x2048xf32> to vector<16x2047xf32>
    %281 = tpu.concatenate %279, %280 in 1 : vector<16x1xf32>, vector<16x2047xf32> -> vector<16x2048xf32>
    %282 = vector.broadcast %278 : vector<16x1xf32> to vector<16x2048xf32>
    %283 = arith.mulf %282, %281 : vector<16x2048xf32>
    %284 = arith.addf %277, %283 : vector<16x2048xf32>
    %285 = vector.extract_strided_slice %135 {offsets = [0, 4], sizes = [16, 1], strides = [1, 1]} : vector<16x9xf32> to vector<16x1xf32>
    %286 = vector.broadcast %285 : vector<16x1xf32> to vector<16x2048xf32>
    %287 = arith.mulf %286, %255 : vector<16x2048xf32>
    %288 = arith.addf %284, %287 : vector<16x2048xf32>
    %289 = vector.extract_strided_slice %135 {offsets = [0, 5], sizes = [16, 1], strides = [1, 1]} : vector<16x9xf32> to vector<16x1xf32>
    %cst_100 = arith.constant 0.000000e+00 : f32
    %290 = vector.broadcast %cst_100 : f32 to vector<16x1xf32>
    %291 = vector.extract_strided_slice %255 {offsets = [0, 1], sizes = [16, 2047], strides = [1, 1]} : vector<16x2048xf32> to vector<16x2047xf32>
    %292 = tpu.concatenate %291, %290 in 1 : vector<16x2047xf32>, vector<16x1xf32> -> vector<16x2048xf32>
    %293 = vector.broadcast %289 : vector<16x1xf32> to vector<16x2048xf32>
    %294 = arith.mulf %293, %292 : vector<16x2048xf32>
    %295 = arith.addf %288, %294 : vector<16x2048xf32>
    %296 = vector.extract_strided_slice %135 {offsets = [0, 6], sizes = [16, 1], strides = [1, 1]} : vector<16x9xf32> to vector<16x1xf32>
    %cst_101 = arith.constant 0.000000e+00 : f32
    %297 = vector.broadcast %cst_101 : f32 to vector<16x2xf32>
    %298 = vector.extract_strided_slice %255 {offsets = [0, 2], sizes = [16, 2046], strides = [1, 1]} : vector<16x2048xf32> to vector<16x2046xf32>
    %299 = tpu.concatenate %298, %297 in 1 : vector<16x2046xf32>, vector<16x2xf32> -> vector<16x2048xf32>
    %300 = vector.broadcast %296 : vector<16x1xf32> to vector<16x2048xf32>
    %301 = arith.mulf %300, %299 : vector<16x2048xf32>
    %302 = arith.addf %295, %301 : vector<16x2048xf32>
    %303 = vector.extract_strided_slice %135 {offsets = [0, 7], sizes = [16, 1], strides = [1, 1]} : vector<16x9xf32> to vector<16x1xf32>
    %cst_102 = arith.constant 0.000000e+00 : f32
    %304 = vector.broadcast %cst_102 : f32 to vector<16x3xf32>
    %305 = vector.extract_strided_slice %255 {offsets = [0, 3], sizes = [16, 2045], strides = [1, 1]} : vector<16x2048xf32> to vector<16x2045xf32>
    %306 = tpu.concatenate %305, %304 in 1 : vector<16x2045xf32>, vector<16x3xf32> -> vector<16x2048xf32>
    %307 = vector.broadcast %303 : vector<16x1xf32> to vector<16x2048xf32>
    %308 = arith.mulf %307, %306 : vector<16x2048xf32>
    %309 = arith.addf %302, %308 : vector<16x2048xf32>
    %310 = vector.extract_strided_slice %135 {offsets = [0, 8], sizes = [16, 1], strides = [1, 1]} : vector<16x9xf32> to vector<16x1xf32>
    %cst_103 = arith.constant 0.000000e+00 : f32
    %311 = vector.broadcast %cst_103 : f32 to vector<16x4xf32>
    %312 = vector.extract_strided_slice %255 {offsets = [0, 4], sizes = [16, 2044], strides = [1, 1]} : vector<16x2048xf32> to vector<16x2044xf32>
    %313 = tpu.concatenate %312, %311 in 1 : vector<16x2044xf32>, vector<16x4xf32> -> vector<16x2048xf32>
    %314 = vector.broadcast %310 : vector<16x1xf32> to vector<16x2048xf32>
    %315 = arith.mulf %314, %313 : vector<16x2048xf32>
    %316 = arith.addf %309, %315 : vector<16x2048xf32>
    %cst_104 = arith.constant dense<0.000000e+00> : vector<2048xf32>
    %317 = vector.multi_reduction <add>, %316, %cst_104 [0] : vector<16x2048xf32> to vector<2048xf32>
    %318 = vector.shape_cast %317 : vector<2048xf32> to vector<1x2048xf32>
    %319 = vector.broadcast %136 : vector<1x1xf32> to vector<1x2048xf32>
    %320 = arith.addf %318, %319 : vector<1x2048xf32>
    %321 = vector.extract_strided_slice %320 {offsets = [0, 0], sizes = [1, 128], strides = [1, 1]} : vector<1x2048xf32> to vector<1x128xf32>
    %322 = vector.extract_strided_slice %320 {offsets = [0, 256], sizes = [1, 128], strides = [1, 1]} : vector<1x2048xf32> to vector<1x128xf32>
    %323 = vector.extract_strided_slice %320 {offsets = [0, 512], sizes = [1, 128], strides = [1, 1]} : vector<1x2048xf32> to vector<1x128xf32>
    %324 = vector.extract_strided_slice %320 {offsets = [0, 768], sizes = [1, 128], strides = [1, 1]} : vector<1x2048xf32> to vector<1x128xf32>
    %325 = vector.extract_strided_slice %320 {offsets = [0, 1024], sizes = [1, 128], strides = [1, 1]} : vector<1x2048xf32> to vector<1x128xf32>
    %326 = vector.extract_strided_slice %320 {offsets = [0, 1280], sizes = [1, 128], strides = [1, 1]} : vector<1x2048xf32> to vector<1x128xf32>
    %327 = vector.extract_strided_slice %320 {offsets = [0, 1536], sizes = [1, 128], strides = [1, 1]} : vector<1x2048xf32> to vector<1x128xf32>
    %328 = vector.extract_strided_slice %320 {offsets = [0, 1792], sizes = [1, 128], strides = [1, 1]} : vector<1x2048xf32> to vector<1x128xf32>
    %329 = tpu.concatenate %321, %322, %323, %324, %325, %326, %327, %328 in 0 : vector<1x128xf32>, vector<1x128xf32>, vector<1x128xf32>, vector<1x128xf32>, vector<1x128xf32>, vector<1x128xf32>, vector<1x128xf32>, vector<1x128xf32> -> vector<8x128xf32>
    %c0_105 = arith.constant 0 : index
    %c0_106 = arith.constant 0 : index
    %330 = vector.load %arg23[%c0_105, %c0_106] : memref<8x128xf32, #tpu.memory_space<vmem>>, vector<8x128xf32>
    tpu.vector_store %arg23[%c0_105, %c0_106], %329 {strides = array<i32>} : memref<8x128xf32, #tpu.memory_space<vmem>>, vector<8x128xf32>,
    return
  }
}

</mosaic_0001>

<llo_original>
// kernel: denoised_generator_forward.1
$region0: #{denoised_generator_forward.1}
  #allocation0 [shape = 'u32[]', space=smem, size = 0x4, offset = 0x4, fixed_abs, tag = 'smem constant byte address 0x4 - core index']
  #allocation1 [shape = 'u32[72,128]{1,0:T(1,128)}', space=vmem, size = 0x9000, scoped, tag = 'internal scratch']
  #allocation2 [shape = 'bf16[512,1024]{1,0:T(8,128)(2,1)}', space=vmem, size = 0x100000, scoped, tag = 'scratch operand']
  #allocation3 [shape = 'bf16[1024,128]{1,0:T(8,128)(2,1)}', space=vmem, size = 0x40000, scoped, tag = 'scratch operand']
  #allocation4 [shape = 's32[2]{0}', space=sflag, size = 0x8, scoped, tag = 'scratch operand']
  #allocation5 [shape = 'f32[1,1]{1,0:T(1,128)S(1)}', space=vmem, size = 0x200, scoped, tag = 'scoped memory for denoised_generator_forward.1']
  #allocation28 [shape = 's32[]', space=sflag, size = 0x4, offset = 0, fixed_abs, tag = 'sflag constant byte address 0x0 - dummy sync flag']
  #allocation29 [shape = 's32[]', space=sflag, size = 0x4, offset = 0, fixed_abs, tag = 'sflag constant byte address 0x0 - dummy sync flag']
  #allocation30 [shape = 'u32[]', space=smem, size = 0x4, offset = 0x44, fixed_abs, tag = 'smem constant byte address 0x44 - assertion arg 0']
  #allocation31 [shape = 'u32[]', space=smem, size = 0x4, offset = 0x48, fixed_abs, tag = 'smem constant byte address 0x48 - assertion arg 1']
  #allocation32 [shape = 's32[]', space=sflag, size = 0x4, offset = 0, fixed_abs, tag = 'sflag constant byte address 0x0 - dummy sync flag']
  #allocation33 [shape = 's32[]', space=sflag, size = 0x4, offset = 0, fixed_abs, tag = 'sflag constant byte address 0x0 - dummy sync flag']
  %s0 = inlined_call_operand.hbm [shape: f32[8,100], index: 0, kind: input, shape index: {}]
  %s1 = inlined_call_operand.hbm [shape: f32[100,128], index: 1, kind: input, shape index: {}]
  %s2 = inlined_call_operand.vmem [shape: f32[1,128], index: 2, kind: input, shape index: {}]
  %s3 = inlined_call_operand.hbm [shape: bf16[128,256], index: 3, kind: input, shape index: {}]
  %s4 = inlined_call_operand.hbm [shape: f32[1,256], index: 4, kind: input, shape index: {}]
  %s5 = inlined_call_operand.vmem [shape: f32[1,256], index: 5, kind: input, shape index: {}]
  %s6 = inlined_call_operand.hbm [shape: f32[1,256], index: 6, kind: input, shape index: {}]
  %s7 = inlined_call_operand.hbm [shape: bf16[256,512], index: 7, kind: input, shape index: {}]
  %s8 = inlined_call_operand.hbm [shape: f32[1,512], index: 8, kind: input, shape index: {}]
  %s9 = inlined_call_operand.vmem [shape: f32[1,512], index: 9, kind: input, shape index: {}]
  %s10 = inlined_call_operand.hbm [shape: f32[1,512], index: 10, kind: input, shape index: {}]
  %s11 = inlined_call_operand.hbm [shape: bf16[512,1024], index: 11, kind: input, shape index: {}]
  %s12 = inlined_call_operand.hbm [shape: f32[1,1024], index: 12, kind: input, shape index: {}]
  %s13 = inlined_call_operand.vmem [shape: f32[1,1024], index: 13, kind: input, shape index: {}]
  %s14 = inlined_call_operand.hbm [shape: f32[1,1024], index: 14, kind: input, shape index: {}]
  %s15 = inlined_call_operand.hbm [shape: bf16[1024,128], index: 15, kind: input, shape index: {}]
  %s16 = inlined_call_operand.hbm [shape: f32[1,128], index: 16, kind: input, shape index: {}]
  %s17 = inlined_call_operand.hbm [shape: f32[16,9], index: 17, kind: input, shape index: {}]
  %s18 = inlined_call_operand.vmem [shape: f32[16,1], index: 18, kind: input, shape index: {}]
  %s19 = inlined_call_operand.vmem [shape: f32[16,144], index: 19, kind: input, shape index: {}]
  %s20 = inlined_call_operand.vmem [shape: f32[16,1], index: 20, kind: input, shape index: {}]
  %s21 = inlined_call_operand.hbm [shape: f32[16,9], index: 21, kind: input, shape index: {}]
  %s22 = inlined_call_operand.<no memory space> [shape: f32[1,1], index: 22, kind: input, shape index: {}]
  %s23 = inlined_call_operand.hbm [shape: f32[8,128], index: 23, kind: output, shape index: {}]
  %s24 = sld [smem:[#allocation0]]
  $region154: #{denoised_generator_forward.1} parent=0
    _
  %s26 = ssub.s32 1, %s24
  %s27 = scalar_select 0, %s26, %s24
  %v28 = vstv %s22
  %29 = vst [vmem:[#allocation5] sm:$0x1] %v28
  $region1: #{denoised_generator_forward.1} parent=0
    #allocation6 [shape = 'u8[4096]{0}', space=vmem, size = 0x1000, scoped, tag = 'input window, operand 0, single buffered']
    #allocation7 [shape = 's32[1]{0}', space=sflag, size = 0x4, scoped, tag = 'scoped memory for denoised_generator_forward.1']
    #allocation8 [shape = 's32[1]{0}', space=sflag, size = 0x4, scoped, tag = 'scoped memory for denoised_generator_forward.1']
    #allocation9 [shape = 'u8[53248]{0}', space=vmem, size = 0xd000, scoped, tag = 'input window, operand 1, single buffered']
    #allocation10 [shape = 's32[1]{0}', space=sflag, size = 0x4, scoped, tag = 'scoped memory for denoised_generator_forward.1']
    #allocation11 [shape = 'u8[65536]{0}', space=vmem, size = 0x10000, scoped, tag = 'input window, operand 3, single buffered']
    #allocation12 [shape = 'u8[1024]{0}', space=vmem, size = 0x400, scoped, tag = 'input window, operand 4, single buffered']
    #allocation13 [shape = 's32[1]{0}', space=sflag, size = 0x4, scoped, tag = 'scoped memory for denoised_generator_forward.1']
    #allocation14 [shape = 'u8[1024]{0}', space=vmem, size = 0x400, scoped, tag = 'input window, operand 6, single buffered']
    #allocation15 [shape = 'u8[262144]{0}', space=vmem, size = 0x40000, scoped, tag = 'input window, operand 7, single buffered']
    #allocation16 [shape = 's32[1]{0}', space=sflag, size = 0x4, scoped, tag = 'scoped memory for denoised_generator_forward.1']
    #allocation17 [shape = 'u8[2048]{0}', space=vmem, size = 0x800, scoped, tag = 'input window, operand 8, single buffered']
    #allocation18 [shape = 'u8[2048]{0}', space=vmem, size = 0x800, scoped, tag = 'input window, operand 10, single buffered']
    #allocation19 [shape = 's32[1]{0}', space=sflag, size = 0x4, scoped, tag = 'scoped memory for denoised_generator_forward.1']
    #allocation20 [shape = 'u8[4096]{0}', space=vmem, size = 0x1000, scoped, tag = 'input window, operand 12, single buffered']
    #allocation21 [shape = 'u8[4096]{0}', space=vmem, size = 0x1000, scoped, tag = 'input window, operand 14, single buffered']
    #allocation22 [shape = 's32[1]{0}', space=sflag, size = 0x4, scoped, tag = 'scoped memory for denoised_generator_forward.1']
    #allocation23 [shape = 'u8[512]{0}', space=vmem, size = 0x400, scoped, tag = 'input window, operand 16, single buffered']
    #allocation24 [shape = 'u8[8192]{0}', space=vmem, size = 0x2000, scoped, tag = 'input window, operand 17, single buffered']
    #allocation25 [shape = 's32[1]{0}', space=sflag, size = 0x4, scoped, tag = 'scoped memory for denoised_generator_forward.1']
    #allocation26 [shape = 'u8[8192]{0}', space=vmem, size = 0x2000, scoped, tag = 'input window, operand 21, single buffered']
    #allocation27 [shape = 'u8[4096]{0}', space=vmem, size = 0x1000, scoped, tag = 'output window, operand 0, single buffered']
    %30 = vsyncpa [#allocation7], 0
    %31 = vsyncpa [#allocation10], 0
    %32 = vsyncpa [#allocation13], 0
    %33 = vsyncpa [#allocation16], 0
    %34 = vsyncpa [#allocation19], 0
    %35 = vsyncpa [#allocation22], 0
    %36 = vsyncpa [#allocation25], 0
    %37 = vsyncpa [#allocation8], 0
    // Predicated region
    $region2: #{denoised_generator_forward.1} parent=1 // pred_check
      _
    $region3: #{denoised_generator_forward.1} parent=1 // pred_check_branch
      %39 = sbr.rel (0) target = $region5
    $region4: #{denoised_generator_forward.1} parent=1 // pred_region
      %41 = vsyncadd [#allocation7], 0
      %s43 = sshll.u32 %s0, 4
      %s44 = int_to_ptr.hbm [resolvable:$true] %s43
      %s45 = sshll.u32 [#allocation6], 4
      %s46 = int_to_ptr.vmem [resolvable:$true] %s45
      %48 = dma.hbm_to_vmem [thread:$0]  %s44, 128, %s46, [#allocation7]
    $region5: #{denoised_generator_forward.1} parent=1 // pred_fallthru
      _
    // Predicated region
    $region6: #{denoised_generator_forward.1} parent=1 // pred_check
      _
    $region7: #{denoised_generator_forward.1} parent=1 // pred_check_branch
      %50 = sbr.rel (0) target = $region9
    $region8: #{denoised_generator_forward.1} parent=1 // pred_region
      %52 = vsyncadd [#allocation10], 0
      %s53 = sshll.u32 %s1, 4
      %s54 = int_to_ptr.hbm [resolvable:$true] %s53
      %s55 = sshll.u32 [#allocation9], 4
      %s56 = int_to_ptr.vmem [resolvable:$true] %s55
      %61 = dma.hbm_to_vmem [thread:$0]  %s54, 1664, %s56, [#allocation10], 128, 128, 8
    $region9: #{denoised_generator_forward.1} parent=1 // pred_fallthru
      _
    // Predicated region
    $region10: #{denoised_generator_forward.1} parent=1 // pred_check
      _
    $region11: #{denoised_generator_forward.1} parent=1 // pred_check_branch
      %63 = sbr.rel (0) target = $region13
    $region12: #{denoised_generator_forward.1} parent=1 // pred_region
      _
    $region13: #{denoised_generator_forward.1} parent=1 // pred_fallthru
      _
    // Predicated region
    $region14: #{denoised_generator_forward.1} parent=1 // pred_check
      _
    $region15: #{denoised_generator_forward.1} parent=1 // pred_check_branch
      %65 = sbr.rel (0) target = $region17
    $region16: #{denoised_generator_forward.1} parent=1 // pred_region
      %67 = vsyncadd [#allocation10], 0
      %s68 = sshll.u32 %s3, 4
      %s69 = int_to_ptr.hbm [resolvable:$true] %s68
      %s70 = sshll.u32 [#allocation11], 4
      %s71 = int_to_ptr.vmem [resolvable:$true] %s70
      %76 = dma.hbm_to_vmem [thread:$0]  %s69, 2048, %s71, [#allocation10], 128, 128, 8
    $region17: #{denoised_generator_forward.1} parent=1 // pred_fallthru
      _
    // Predicated region
    $region18: #{denoised_generator_forward.1} parent=1 // pred_check
      _
    $region19: #{denoised_generator_forward.1} parent=1 // pred_check_branch
      %78 = sbr.rel (0) target = $region21
    $region20: #{denoised_generator_forward.1} parent=1 // pred_region
      %80 = vsyncadd [#allocation13], 0
      %s82 = sshll.u32 %s4, 4
      %s83 = int_to_ptr.hbm [resolvable:$true] %s82
      %s84 = sshll.u32 [#allocation12], 4
      %s85 = int_to_ptr.vmem [resolvable:$true] %s84
      %87 = dma.hbm_to_vmem [thread:$0]  %s83, 32, %s85, [#allocation13]
    $region21: #{denoised_generator_forward.1} parent=1 // pred_fallthru
      _
    // Predicated region
    $region22: #{denoised_generator_forward.1} parent=1 // pred_check
      _
    $region23: #{denoised_generator_forward.1} parent=1 // pred_check_branch
      %89 = sbr.rel (0) target = $region25
    $region24: #{denoised_generator_forward.1} parent=1 // pred_region
      _
    $region25: #{denoised_generator_forward.1} parent=1 // pred_fallthru
      _
    // Predicated region
    $region26: #{denoised_generator_forward.1} parent=1 // pred_check
      _
    $region27: #{denoised_generator_forward.1} parent=1 // pred_check_branch
      %91 = sbr.rel (0) target = $region29
    $region28: #{denoised_generator_forward.1} parent=1 // pred_region
      %93 = vsyncadd [#allocation13], 0
      %s95 = sshll.u32 %s6, 4
      %s96 = int_to_ptr.hbm [resolvable:$true] %s95
      %s97 = sshll.u32 [#allocation14], 4
      %s98 = int_to_ptr.vmem [resolvable:$true] %s97
      %100 = dma.hbm_to_vmem [thread:$0]  %s96, 32, %s98, [#allocation13]
    $region29: #{denoised_generator_forward.1} parent=1 // pred_fallthru
      _
    // Predicated region
    $region30: #{denoised_generator_forward.1} parent=1 // pred_check
      _
    $region31: #{denoised_generator_forward.1} parent=1 // pred_check_branch
      %102 = sbr.rel (0) target = $region33
    $region32: #{denoised_generator_forward.1} parent=1 // pred_region
      %104 = vsyncadd [#allocation16], 0
      %s105 = sshll.u32 %s7, 4
      %s106 = int_to_ptr.hbm [resolvable:$true] %s105
      %s107 = sshll.u32 [#allocation15], 4
      %s108 = int_to_ptr.vmem [resolvable:$true] %s107
      %113 = dma.hbm_to_vmem [thread:$0]  %s106, 8192, %s108, [#allocation16], 256, 256, 16
    $region33: #{denoised_generator_forward.1} parent=1 // pred_fallthru
      _
    // Predicated region
    $region34: #{denoised_generator_forward.1} parent=1 // pred_check
      _
    $region35: #{denoised_generator_forward.1} parent=1 // pred_check_branch
      %115 = sbr.rel (0) target = $region37
    $region36: #{denoised_generator_forward.1} parent=1 // pred_region
      %117 = vsyncadd [#allocation16], 0
      %s119 = sshll.u32 %s8, 4
      %s120 = int_to_ptr.hbm [resolvable:$true] %s119
      %s121 = sshll.u32 [#allocation17], 4
      %s122 = int_to_ptr.vmem [resolvable:$true] %s121
      %124 = dma.hbm_to_vmem [thread:$0]  %s120, 64, %s122, [#allocation16]
    $region37: #{denoised_generator_forward.1} parent=1 // pred_fallthru
      _
    // Predicated region
    $region38: #{denoised_generator_forward.1} parent=1 // pred_check
      _
    $region39: #{denoised_generator_forward.1} parent=1 // pred_check_branch
      %126 = sbr.rel (0) target = $region41
    $region40: #{denoised_generator_forward.1} parent=1 // pred_region
      _
    $region41: #{denoised_generator_forward.1} parent=1 // pred_fallthru
      _
    // Predicated region
    $region42: #{denoised_generator_forward.1} parent=1 // pred_check
      _
    $region43: #{denoised_generator_forward.1} parent=1 // pred_check_branch
      %128 = sbr.rel (0) target = $region45
    $region44: #{denoised_generator_forward.1} parent=1 // pred_region
      %130 = vsyncadd [#allocation19], 0
      %s132 = sshll.u32 %s10, 4
      %s133 = int_to_ptr.hbm [resolvable:$true] %s132
      %s134 = sshll.u32 [#allocation18], 4
      %s135 = int_to_ptr.vmem [resolvable:$true] %s134
      %137 = dma.hbm_to_vmem [thread:$0]  %s133, 64, %s135, [#allocation19]
    $region45: #{denoised_generator_forward.1} parent=1 // pred_fallthru
      _
    // Predicated region
    $region46: #{denoised_generator_forward.1} parent=1 // pred_check
      _
    $region47: #{denoised_generator_forward.1} parent=1 // pred_check_branch
      %139 = sbr.rel (0) target = $region49
    $region48: #{denoised_generator_forward.1} parent=1 // pred_region
      %141 = vsyncadd [#allocation19], 0
      %s143 = sshll.u32 %s12, 4
      %s144 = int_to_ptr.hbm [resolvable:$true] %s143
      %s145 = sshll.u32 [#allocation20], 4
      %s146 = int_to_ptr.vmem [resolvable:$true] %s145
      %148 = dma.hbm_to_vmem [thread:$0]  %s144, 128, %s146, [#allocation19]
    $region49: #{denoised_generator_forward.1} parent=1 // pred_fallthru
      _
    // Predicated region
    $region50: #{denoised_generator_forward.1} parent=1 // pred_check
      _
    $region51: #{denoised_generator_forward.1} parent=1 // pred_check_branch
      %150 = sbr.rel (0) target = $region53
    $region52: #{denoised_generator_forward.1} parent=1 // pred_region
      _
    $region53: #{denoised_generator_forward.1} parent=1 // pred_fallthru
      _
    // Predicated region
    $region54: #{denoised_generator_forward.1} parent=1 // pred_check
      _
    $region55: #{denoised_generator_forward.1} parent=1 // pred_check_branch
      %152 = sbr.rel (0) target = $region57
    $region56: #{denoised_generator_forward.1} parent=1 // pred_region
      %154 = vsyncadd [#allocation22], 0
      %s156 = sshll.u32 %s14, 4
      %s157 = int_to_ptr.hbm [resolvable:$true] %s156
      %s158 = sshll.u32 [#allocation21], 4
      %s159 = int_to_ptr.vmem [resolvable:$true] %s158
      %161 = dma.hbm_to_vmem [thread:$0]  %s157, 128, %s159, [#allocation22]
    $region57: #{denoised_generator_forward.1} parent=1 // pred_fallthru
      _
    // Predicated region
    $region58: #{denoised_generator_forward.1} parent=1 // pred_check
      _
    $region59: #{denoised_generator_forward.1} parent=1 // pred_check_branch
      %163 = sbr.rel (0) target = $region61
    $region60: #{denoised_generator_forward.1} parent=1 // pred_region
      %165 = vsyncadd [#allocation22], 0
      %s167 = sshll.u32 %s16, 4
      %s168 = int_to_ptr.hbm [resolvable:$true] %s167
      %s169 = sshll.u32 [#allocation23], 4
      %s170 = int_to_ptr.vmem [resolvable:$true] %s169
      %172 = dma.hbm_to_vmem [thread:$0]  %s168, 16, %s170, [#allocation22]
    $region61: #{denoised_generator_forward.1} parent=1 // pred_fallthru
      _
    // Predicated region
    $region62: #{denoised_generator_forward.1} parent=1 // pred_check
      _
    $region63: #{denoised_generator_forward.1} parent=1 // pred_check_branch
      %174 = sbr.rel (0) target = $region65
    $region64: #{denoised_generator_forward.1} parent=1 // pred_region
      %176 = vsyncadd [#allocation25], 0
      %s177 = sshll.u32 %s17, 4
      %s178 = int_to_ptr.hbm [resolvable:$true] %s177
      %s179 = sshll.u32 [#allocation24], 4
      %s180 = int_to_ptr.vmem [resolvable:$true] %s179
      %185 = dma.hbm_to_vmem [thread:$0]  %s178, 256, %s180, [#allocation25], 128, 128, 8
    $region65: #{denoised_generator_forward.1} parent=1 // pred_fallthru
      _
    // Predicated region
    $region66: #{denoised_generator_forward.1} parent=1 // pred_check
      _
    $region67: #{denoised_generator_forward.1} parent=1 // pred_check_branch
      %187 = sbr.rel (0) target = $region69
    $region68: #{denoised_generator_forward.1} parent=1 // pred_region
      _
    $region69: #{denoised_generator_forward.1} parent=1 // pred_fallthru
      _
    // Predicated region
    $region70: #{denoised_generator_forward.1} parent=1 // pred_check
      _
    $region71: #{denoised_generator_forward.1} parent=1 // pred_check_branch
      %189 = sbr.rel (0) target = $region73
    $region72: #{denoised_generator_forward.1} parent=1 // pred_region
      _
    $region73: #{denoised_generator_forward.1} parent=1 // pred_fallthru
      _
    // Predicated region
    $region74: #{denoised_generator_forward.1} parent=1 // pred_check
      _
    $region75: #{denoised_generator_forward.1} parent=1 // pred_check_branch
      %191 = sbr.rel (0) target = $region77
    $region76: #{denoised_generator_forward.1} parent=1 // pred_region
      _
    $region77: #{denoised_generator_forward.1} parent=1 // pred_fallthru
      _
    // Predicated region
    $region78: #{denoised_generator_forward.1} parent=1 // pred_check
      _
    $region79: #{denoised_generator_forward.1} parent=1 // pred_check_branch
      %193 = sbr.rel (0) target = $region81
    $region80: #{denoised_generator_forward.1} parent=1 // pred_region
      %195 = vsyncadd [#allocation25], 0
      %s196 = sshll.u32 %s21, 4
      %s197 = int_to_ptr.hbm [resolvable:$true] %s196
      %s198 = sshll.u32 [#allocation26], 4
      %s199 = int_to_ptr.vmem [resolvable:$true] %s198
      %204 = dma.hbm_to_vmem [thread:$0]  %s197, 256, %s199, [#allocation25], 128, 128, 8
    $region81: #{denoised_generator_forward.1} parent=1 // pred_fallthru
      _
    // Predicated region
    $region82: #{denoised_generator_forward.1} parent=1 // pred_check
      _
    $region83: #{denoised_generator_forward.1} parent=1 // pred_check_branch
      %206 = sbr.rel (0) target = $region85
    $region84: #{denoised_generator_forward.1} parent=1 // pred_region
      _
    $region85: #{denoised_generator_forward.1} parent=1 // pred_fallthru
      _
    // Predicated region
    $region86: #{denoised_generator_forward.1} parent=1 // pred_check
      _
    $region87: #{denoised_generator_forward.1} parent=1 // pred_check_branch
      %208 = sbr.rel (0) target = $region89
    $region88: #{denoised_generator_forward.1} parent=1 // pred_region
      %210 = dma.done [#allocation7], 128
    $region89: #{denoised_generator_forward.1} parent=1 // pred_fallthru
      _
    // Predicated region
    $region90: #{denoised_generator_forward.1} parent=1 // pred_check
      _
    $region91: #{denoised_generator_forward.1} parent=1 // pred_check_branch
      %212 = sbr.rel (0) target = $region93
    $region92: #{denoised_generator_forward.1} parent=1 // pred_region
      %214 = dma.done [#allocation10], 1664
    $region93: #{denoised_generator_forward.1} parent=1 // pred_fallthru
      _
    // Predicated region
    $region94: #{denoised_generator_forward.1} parent=1 // pred_check
      _
    $region95: #{denoised_generator_forward.1} parent=1 // pred_check_branch
      %216 = sbr.rel (0) target = $region97
    $region96: #{denoised_generator_forward.1} parent=1 // pred_region
      %218 = dma.done [#allocation10], 2048
    $region97: #{denoised_generator_forward.1} parent=1 // pred_fallthru
      _
    // Predicated region
    $region98: #{denoised_generator_forward.1} parent=1 // pred_check
      _
    $region99: #{denoised_generator_forward.1} parent=1 // pred_check_branch
      %220 = sbr.rel (0) target = $region101
    $region100: #{denoised_generator_forward.1} parent=1 // pred_region
      %222 = dma.done [#allocation13], 32
    $region101: #{denoised_generator_forward.1} parent=1 // pred_fallthru
      _
    // Predicated region
    $region102: #{denoised_generator_forward.1} parent=1 // pred_check
      _
    $region103: #{denoised_generator_forward.1} parent=1 // pred_check_branch
      %224 = sbr.rel (0) target = $region105
    $region104: #{denoised_generator_forward.1} parent=1 // pred_region
      %226 = dma.done [#allocation13], 32
    $region105: #{denoised_generator_forward.1} parent=1 // pred_fallthru
      _
    // Predicated region
    $region106: #{denoised_generator_forward.1} parent=1 // pred_check
      _
    $region107: #{denoised_generator_forward.1} parent=1 // pred_check_branch
      %228 = sbr.rel (0) target = $region109
    $region108: #{denoised_generator_forward.1} parent=1 // pred_region
      %230 = dma.done [#allocation16], 8192
    $region109: #{denoised_generator_forward.1} parent=1 // pred_fallthru
      _
    // Predicated region
    $region110: #{denoised_generator_forward.1} parent=1 // pred_check
      _
    $region111: #{denoised_generator_forward.1} parent=1 // pred_check_branch
      %232 = sbr.rel (0) target = $region113
    $region112: #{denoised_generator_forward.1} parent=1 // pred_region
      %234 = dma.done [#allocation16], 64
    $region113: #{denoised_generator_forward.1} parent=1 // pred_fallthru
      _
    // Predicated region
    $region114: #{denoised_generator_forward.1} parent=1 // pred_check
      _
    $region115: #{denoised_generator_forward.1} parent=1 // pred_check_branch
      %236 = sbr.rel (0) target = $region117
    $region116: #{denoised_generator_forward.1} parent=1 // pred_region
      %238 = dma.done [#allocation19], 64
    $region117: #{denoised_generator_forward.1} parent=1 // pred_fallthru
      _
    // Predicated region
    $region118: #{denoised_generator_forward.1} parent=1 // pred_check
      _
    $region119: #{denoised_generator_forward.1} parent=1 // pred_check_branch
      %240 = sbr.rel (0) target = $region121
    $region120: #{denoised_generator_forward.1} parent=1 // pred_region
      %242 = dma.done [#allocation19], 128
    $region121: #{denoised_generator_forward.1} parent=1 // pred_fallthru
      _
    // Predicated region
    $region122: #{denoised_generator_forward.1} parent=1 // pred_check
      _
    $region123: #{denoised_generator_forward.1} parent=1 // pred_check_branch
      %244 = sbr.rel (0) target = $region125
    $region124: #{denoised_generator_forward.1} parent=1 // pred_region
      %246 = dma.done [#allocation22], 128
    $region125: #{denoised_generator_forward.1} parent=1 // pred_fallthru
      _
    // Predicated region
    $region126: #{denoised_generator_forward.1} parent=1 // pred_check
      _
    $region127: #{denoised_generator_forward.1} parent=1 // pred_check_branch
      %248 = sbr.rel (0) target = $region129
    $region128: #{denoised_generator_forward.1} parent=1 // pred_region
      %250 = dma.done [#allocation22], 16
    $region129: #{denoised_generator_forward.1} parent=1 // pred_fallthru
      _
    // Predicated region
    $region130: #{denoised_generator_forward.1} parent=1 // pred_check
      _
    $region131: #{denoised_generator_forward.1} parent=1 // pred_check_branch
      %252 = sbr.rel (0) target = $region133
    $region132: #{denoised_generator_forward.1} parent=1 // pred_region
      %254 = dma.done [#allocation25], 256
    $region133: #{denoised_generator_forward.1} parent=1 // pred_fallthru
      _
    // Predicated region
    $region134: #{denoised_generator_forward.1} parent=1 // pred_check
      _
    $region135: #{denoised_generator_forward.1} parent=1 // pred_check_branch
      %256 = sbr.rel (0) target = $region137
    $region136: #{denoised_generator_forward.1} parent=1 // pred_region
      %258 = dma.done [#allocation25], 256
    $region137: #{denoised_generator_forward.1} parent=1 // pred_fallthru
      _
    // Predicated region
    $region138: #{denoised_generator_forward.1} parent=1 // pred_check
      _
    $region139: #{denoised_generator_forward.1} parent=1 // pred_check_branch
      %260 = sbr.rel target = $region141
    $region140: #{denoised_generator_forward.1} parent=1 // pred_region
      %261 = sst [smem:[#allocation30]] [#allocation29]
      %262 = sst [smem:[#allocation31]] [#allocation28]
    $region141: #{denoised_generator_forward.1} parent=1 // pred_fallthru
      _
    %264 = shalt.err (0)
    %s266 = sshll.u32 %s11, 4
    %s267 = int_to_ptr.hbm [resolvable:$true] %s266
    %s268 = sshll.u32 [#allocation2], 4
    %s269 = int_to_ptr.vmem [resolvable:$true] %s268
    %271 = dma.hbm_to_vmem [thread:$0]  %s267, 32768, %s269, [#allocation4]
    %s272 = scalar_lea.sflag [#allocation4], 1
    // Predicated region
    $region142: #{denoised_generator_forward.1} parent=1 // pred_check
      _
    $region143: #{denoised_generator_forward.1} parent=1 // pred_check_branch
      %274 = sbr.rel target = $region145
    $region144: #{denoised_generator_forward.1} parent=1 // pred_region
      %275 = sst [smem:[#allocation30]] [#allocation33]
      %276 = sst [smem:[#allocation31]] [#allocation32]
    $region145: #{denoised_generator_forward.1} parent=1 // pred_fallthru
      _
    %278 = shalt.err (0)
    %s280 = sshll.u32 %s15, 4
    %s281 = int_to_ptr.hbm [resolvable:$true] %s280
    %s282 = sshll.u32 [#allocation3], 4
    %s283 = int_to_ptr.vmem [resolvable:$true] %s282
    %285 = dma.hbm_to_vmem [thread:$0]  %s281, 8192, %s283, %s272
    %v286 = vld [vmem:[#allocation6] sm:$0xff]
    %v287 = vld [vmem:[#allocation9] sm:$0xff]
    %v288 = vld [vmem:[#allocation9 + $0x8] sm:$0xff]
    %v289 = vld [vmem:[#allocation9 + $0x10] sm:$0xff]
    %v290 = vld [vmem:[#allocation9 + $0x18] sm:$0xff]
    %v291 = vld [vmem:[#allocation9 + $0x20] sm:$0xff]
    %v292 = vld [vmem:[#allocation9 + $0x28] sm:$0xff]
    %v293 = vld [vmem:[#allocation9 + $0x30] sm:$0xff]
    %v294 = vld [vmem:[#allocation9 + $0x38] sm:$0xff]
    %v295 = vld [vmem:[#allocation9 + $0x40] sm:$0xff]
    %v296 = vld [vmem:[#allocation9 + $0x48] sm:$0xff]
    %v297 = vld [vmem:[#allocation9 + $0x50] sm:$0xff]
    %v298 = vld [vmem:[#allocation9 + $0x58] sm:$0xff]
    %v299 = vld [vmem:[#allocation9 + $0x60] sm:$0xf]
    %v300 = vld [vmem:[%s2] sm:$0x1]
    %v302 = vperm.slane %v300, 0
    %vm304 = vcmask 818176
    %v306 = vsel %vm304, %v286, 0
    %vm308 = vcmask 1043456
    %v310 = vsel %vm308, %v299, 0
    %312 = vmatpush.msra.mxu0 0.0
    %313 = vmatpush.msra.mxu0 0.0
    %314 = vmatpush.msra.mxu0 0.0
    %315 = vmatpush.msra.mxu0 %v310
    %316 = vmatpush.msra.mxu0 %v298
    %317 = vmatpush.msra.mxu0 %v297
    %318 = vmatpush.msra.mxu0 %v296
    %319 = vmatpush.msra.mxu0 %v295
    %320 = vmatpush.msra.mxu0 %v294
    %321 = vmatpush.msra.mxu0 %v293
    %322 = vmatpush.msra.mxu0 %v292
    %323 = vmatpush.msra.mxu0 %v291
    %324 = vmatpush.msra.mxu0 %v290
    %325 = vmatpush.msra.mxu0 %v289
    %326 = vmatpush.msra.mxu0 %v288
    %327 = vmatpush.msra.mxu0 %v287
    %328 = vmatmul.f32.gmra.mxu0 %v306
    %v329 = vpop.f32.mrf.mxu0
    %v330 = vadd.f32 %v302, %v329
    %331 = vdwg.mxu0
    %vm332 = vcmp.gt.f32.partialorder %v330, 0.0
    %v333 = vmul.f32 %v330, 0.2
    %v334 = vsel %vm332, %v330, %v333
    %v335 = vpack.c.bf16 %v334, %v334
    %v336 = vld [vmem:[#allocation11] sm:$0xff]
    %v337 = vld [vmem:[#allocation11 + $0x8] sm:$0xff]
    %v338 = vld [vmem:[#allocation11 + $0x10] sm:$0xff]
    %v339 = vld [vmem:[#allocation11 + $0x18] sm:$0xff]
    %v340 = vld [vmem:[#allocation11 + $0x20] sm:$0xff]
    %v341 = vld [vmem:[#allocation11 + $0x28] sm:$0xff]
    %v342 = vld [vmem:[#allocation11 + $0x30] sm:$0xff]
    %v343 = vld [vmem:[#allocation11 + $0x38] sm:$0xff]
    %v344 = vld [vmem:[#allocation11 + $0x40] sm:$0xff]
    %v345 = vld [vmem:[#allocation11 + $0x48] sm:$0xff]
    %v346 = vld [vmem:[#allocation11 + $0x50] sm:$0xff]
    %v347 = vld [vmem:[#allocation11 + $0x58] sm:$0xff]
    %v348 = vld [vmem:[#allocation11 + $0x60] sm:$0xff]
    %v349 = vld [vmem:[#allocation11 + $0x68] sm:$0xff]
    %v350 = vld [vmem:[#allocation11 + $0x70] sm:$0xff]
    %v351 = vld [vmem:[#allocation11 + $0x78] sm:$0xff]
    %v352 = vld [vmem:[#allocation12] sm:$0x3]
    %v354 = vperm.slane %v352, 0
    %v355 = vperm.slane %v352, 1
    %v374 = vunpack.c.l.b16 %v336
    %v375 = vunpack.c.h.b16 %v336
    %v376 = vunpack.c.l.b16 %v337
    %v377 = vunpack.c.h.b16 %v337
    %v378 = vunpack.c.l.b16 %v338
    %v379 = vunpack.c.h.b16 %v338
    %v380 = vunpack.c.l.b16 %v339
    %v381 = vunpack.c.h.b16 %v339
    %v382 = vunpack.c.l.b16 %v340
    %v383 = vunpack.c.h.b16 %v340
    %v384 = vunpack.c.l.b16 %v341
    %v385 = vunpack.c.h.b16 %v341
    %v386 = vunpack.c.l.b16 %v342
    %v387 = vunpack.c.h.b16 %v342
    %v388 = vunpack.c.l.b16 %v343
    %v389 = vunpack.c.h.b16 %v343
    %v390 = vunpack.c.l.b16 %v344
    %v391 = vunpack.c.h.b16 %v344
    %v392 = vunpack.c.l.b16 %v345
    %v393 = vunpack.c.h.b16 %v345
    %v394 = vunpack.c.l.b16 %v346
    %v395 = vunpack.c.h.b16 %v346
    %v396 = vunpack.c.l.b16 %v347
    %v397 = vunpack.c.h.b16 %v347
    %v398 = vunpack.c.l.b16 %v348
    %v399 = vunpack.c.h.b16 %v348
    %v400 = vunpack.c.l.b16 %v349
    %v401 = vunpack.c.h.b16 %v349
    %v402 = vunpack.c.l.b16 %v350
    %v403 = vunpack.c.h.b16 %v350
    %v404 = vunpack.c.l.b16 %v351
    %v405 = vunpack.c.h.b16 %v351
    %v406 = vpack.c.b16 %v376, %v374
    %v407 = vpack.c.b16 %v377, %v375
    %v408 = vpack.c.b16 %v380, %v378
    %v409 = vpack.c.b16 %v381, %v379
    %v410 = vpack.c.b16 %v384, %v382
    %v411 = vpack.c.b16 %v385, %v383
    %v412 = vpack.c.b16 %v388, %v386
    %v413 = vpack.c.b16 %v389, %v387
    %v414 = vpack.c.b16 %v392, %v390
    %v415 = vpack.c.b16 %v393, %v391
    %v416 = vpack.c.b16 %v396, %v394
    %v417 = vpack.c.b16 %v397, %v395
    %v418 = vpack.c.b16 %v400, %v398
    %v419 = vpack.c.b16 %v401, %v399
    %v420 = vpack.c.b16 %v404, %v402
    %v421 = vpack.c.b16 %v405, %v403
    %438 = vmatpush.bf16.msra.mxu0 %v420
    %439 = vmatpush.bf16.msra.mxu0 %v418
    %440 = vmatpush.bf16.msra.mxu0 %v416
    %441 = vmatpush.bf16.msra.mxu0 %v414
    %442 = vmatpush.bf16.msra.mxu0 %v412
    %443 = vmatpush.bf16.msra.mxu0 %v410
    %444 = vmatpush.bf16.msra.mxu0 %v408
    %445 = vmatpush.bf16.msra.mxu0 %v406
    %446 = vmatmul.bf16.gmra.mxu0 %v335
    %v447 = vpop.f32.mrf.mxu0
    %v448 = vadd.f32 %v354, %v447
    %v449 = vpop.f32.mrf.mxu0
    %450 = vdwg.mxu0
    %451 = vmatpush.bf16.msra.mxu0 %v421
    %452 = vmatpush.bf16.msra.mxu0 %v419
    %453 = vmatpush.bf16.msra.mxu0 %v417
    %454 = vmatpush.bf16.msra.mxu0 %v415
    %455 = vmatpush.bf16.msra.mxu0 %v413
    %456 = vmatpush.bf16.msra.mxu0 %v411
    %457 = vmatpush.bf16.msra.mxu0 %v409
    %458 = vmatpush.bf16.msra.mxu0 %v407
    %459 = vmatmul.bf16.gmra.mxu0 %v335
    %v460 = vpop.f32.mrf.mxu0
    %v461 = vadd.f32 %v355, %v460
    %v462 = vpop.f32.mrf.mxu0
    %463 = vdwg.mxu0
    %v464 = vld [vmem:[%s5] sm:$0x3]
    %v465 = vld [vmem:[#allocation14] sm:$0x3]
    %v466 = vrot.slane %v448, 4
    %v467 = vadd.f32 %v448, %v466
    %v468 = vrot.slane %v467, 2
    %v469 = vadd.f32 %v467, %v468
    %v470 = vrot.slane %v469, 1
    %v471 = vadd.f32 %v469, %v470
    %v472 = vrot.slane %v461, 4
    %v473 = vadd.f32 %v461, %v472
    %v474 = vrot.slane %v473, 2
    %v475 = vadd.f32 %v473, %v474
    %v476 = vrot.slane %v475, 1
    %v477 = vadd.f32 %v475, %v476
    %v478 = vrcp.pop 8.0
    %v479 = vmul.f32 8.0, %v478
    %v480 = vsub.f32 1.0, %v479
    %v481 = vmul.f32 %v478, %v480
    %v482 = vadd.f32 %v478, %v481
    %vm483 = vweird.f32 %v478
    %v484 = vsel %vm483, %v478, %v482
    %v485 = vmul.f32 %v471, %v484
    %v486 = vmul.f32 %v477, %v484
    %v487 = vmul.f32 %v448, %v448
    %v488 = vmul.f32 %v461, %v461
    %v489 = vrot.slane %v487, 4
    %v490 = vadd.f32 %v487, %v489
    %v491 = vrot.slane %v490, 2
    %v492 = vadd.f32 %v490, %v491
    %v493 = vrot.slane %v492, 1
    %v494 = vadd.f32 %v492, %v493
    %v495 = vrot.slane %v488, 4
    %v496 = vadd.f32 %v488, %v495
    %v497 = vrot.slane %v496, 2
    %v498 = vadd.f32 %v496, %v497
    %v499 = vrot.slane %v498, 1
    %v500 = vadd.f32 %v498, %v499
    %v501 = vmul.f32 %v494, %v484
    %v502 = vmul.f32 %v500, %v484
    %v503 = vmul.f32 %v485, %v485
    %v504 = vmul.f32 %v486, %v486
    %v505 = vsub.f32 %v501, %v503
    %v506 = vsub.f32 %v502, %v504
    %v507 = vsub.f32 %v448, %v485
    %v508 = vsub.f32 %v461, %v486
    %v509 = vadd.f32 %v505, 0.8
    %v510 = vadd.f32 %v506, 0.8
    %v511 = vrsqrt.pop %v509
    %v512 = vmul.f32 %v511, %v509
    %v513 = vmul.f32 %v512, %v511
    %v514 = vmul.f32 0.5, %v513
    %v515 = vsub.f32 1.5, %v514
    %v516 = vmul.f32 %v511, %v515
    %vm517 = vweird.f32 %v509
    %vm518 = vweird.f32 %v511
    %vm519 = vmor %vm517, %vm518
    %v520 = vsel %vm519, %v511, %v516
    %v521 = vrsqrt.pop %v510
    %v522 = vmul.f32 %v521, %v510
    %v523 = vmul.f32 %v522, %v521
    %v524 = vmul.f32 0.5, %v523
    %v525 = vsub.f32 1.5, %v524
    %v526 = vmul.f32 %v521, %v525
    %vm527 = vweird.f32 %v510
    %vm528 = vweird.f32 %v521
    %vm529 = vmor %vm527, %vm528
    %v530 = vsel %vm529, %v521, %v526
    %v531 = vmul.f32 %v507, %v520
    %v532 = vmul.f32 %v508, %v530
    %v534 = vperm.slane %v464, 0
    %v535 = vperm.slane %v464, 1
    %v538 = vmul.f32 %v531, %v534
    %v539 = vmul.f32 %v532, %v535
    %v541 = vperm.slane %v465, 0
    %v542 = vperm.slane %v465, 1
    %v545 = vadd.f32 %v538, %v541
    %v546 = vadd.f32 %v539, %v542
    %vm547 = vcmp.gt.f32.partialorder %v545, 0.0
    %vm548 = vcmp.gt.f32.partialorder %v546, 0.0
    %v549 = vmul.f32 %v545, 0.2
    %v550 = vmul.f32 %v546, 0.2
    %v551 = vsel %vm547, %v545, %v549
    %v552 = vsel %vm548, %v546, %v550
    %v553 = vpack.c.bf16 %v551, %v551
    %v554 = vpack.c.bf16 %v552, %v552
    %v555 = vld [vmem:[#allocation15] sm:$0xff]
    %v556 = vld [vmem:[#allocation15 + $0x8] sm:$0xff]
    %v557 = vld [vmem:[#allocation15 + $0x10] sm:$0xff]
    %v558 = vld [vmem:[#allocation15 + $0x18] sm:$0xff]
    %v559 = vld [vmem:[#allocation15 + $0x20] sm:$0xff]
    %v560 = vld [vmem:[#allocation15 + $0x28] sm:$0xff]
    %v561 = vld [vmem:[#allocation15 + $0x30] sm:$0xff]
    %v562 = vld [vmem:[#allocation15 + $0x38] sm:$0xff]
    %v563 = vld [vmem:[#allocation15 + $0x40] sm:$0xff]
    %v564 = vld [vmem:[#allocation15 + $0x48] sm:$0xff]
    %v565 = vld [vmem:[#allocation15 + $0x50] sm:$0xff]
    %v566 = vld [vmem:[#allocation15 + $0x58] sm:$0xff]
    %v567 = vld [vmem:[#allocation15 + $0x60] sm:$0xff]
    %v568 = vld [vmem:[#allocation15 + $0x68] sm:$0xff]
    %v569 = vld [vmem:[#allocation15 + $0x70] sm:$0xff]
    %v570 = vld [vmem:[#allocation15 + $0x78] sm:$0xff]
    %v571 = vld [vmem:[#allocation15 + $0x80] sm:$0xff]
    %v572 = vld [vmem:[#allocation15 + $0x88] sm:$0xff]
    %v573 = vld [vmem:[#allocation15 + $0x90] sm:$0xff]
    %v574 = vld [vmem:[#allocation15 + $0x98] sm:$0xff]
    %v575 = vld [vmem:[#allocation15 + $0xa0] sm:$0xff]
    %v576 = vld [vmem:[#allocation15 + $0xa8] sm:$0xff]
    %v577 = vld [vmem:[#allocation15 + $0xb0] sm:$0xff]
    %v578 = vld [vmem:[#allocation15 + $0xb8] sm:$0xff]
    %v579 = vld [vmem:[#allocation15 + $0xc0] sm:$0xff]
    %v580 = vld [vmem:[#allocation15 + $0xc8] sm:$0xff]
    %v581 = vld [vmem:[#allocation15 + $0xd0] sm:$0xff]
    %v582 = vld [vmem:[#allocation15 + $0xd8] sm:$0xff]
    %v583 = vld [vmem:[#allocation15 + $0xe0] sm:$0xff]
    %v584 = vld [vmem:[#allocation15 + $0xe8] sm:$0xff]
    %v585 = vld [vmem:[#allocation15 + $0xf0] sm:$0xff]
    %v586 = vld [vmem:[#allocation15 + $0xf8] sm:$0xff]
    %v587 = vld [vmem:[#allocation15 + $0x100] sm:$0xff]
    %v588 = vld [vmem:[#allocation15 + $0x108] sm:$0xff]
    %v589 = vld [vmem:[#allocation15 + $0x110] sm:$0xff]
    %v590 = vld [vmem:[#allocation15 + $0x118] sm:$0xff]
    %v591 = vld [vmem:[#allocation15 + $0x120] sm:$0xff]
    %v592 = vld [vmem:[#allocation15 + $0x128] sm:$0xff]
    %v593 = vld [vmem:[#allocation15 + $0x130] sm:$0xff]
    %v594 = vld [vmem:[#allocation15 + $0x138] sm:$0xff]
    %v595 = vld [vmem:[#allocation15 + $0x140] sm:$0xff]
    %v596 = vld [vmem:[#allocation15 + $0x148] sm:$0xff]
    %v597 = vld [vmem:[#allocation15 + $0x150] sm:$0xff]
    %v598 = vld [vmem:[#allocation15 + $0x158] sm:$0xff]
    %v599 = vld [vmem:[#allocation15 + $0x160] sm:$0xff]
    %v600 = vld [vmem:[#allocation15 + $0x168] sm:$0xff]
    %v601 = vld [vmem:[#allocation15 + $0x170] sm:$0xff]
    %v602 = vld [vmem:[#allocation15 + $0x178] sm:$0xff]
    %v603 = vld [vmem:[#allocation15 + $0x180] sm:$0xff]
    %v604 = vld [vmem:[#allocation15 + $0x188] sm:$0xff]
    %v605 = vld [vmem:[#allocation15 + $0x190] sm:$0xff]
    %v606 = vld [vmem:[#allocation15 + $0x198] sm:$0xff]
    %v607 = vld [vmem:[#allocation15 + $0x1a0] sm:$0xff]
    %v608 = vld [vmem:[#allocation15 + $0x1a8] sm:$0xff]
    %v609 = vld [vmem:[#allocation15 + $0x1b0] sm:$0xff]
    %v610 = vld [vmem:[#allocation15 + $0x1b8] sm:$0xff]
    %v611 = vld [vmem:[#allocation15 + $0x1c0] sm:$0xff]
    %v612 = vld [vmem:[#allocation15 + $0x1c8] sm:$0xff]
    %v613 = vld [vmem:[#allocation15 + $0x1d0] sm:$0xff]
    %v614 = vld [vmem:[#allocation15 + $0x1d8] sm:$0xff]
    %v615 = vld [vmem:[#allocation15 + $0x1e0] sm:$0xff]
    %v616 = vld [vmem:[#allocation15 + $0x1e8] sm:$0xff]
    %v617 = vld [vmem:[#allocation15 + $0x1f0] sm:$0xff]
    %v618 = vld [vmem:[#allocation15 + $0x1f8] sm:$0xff]
    %v619 = vld [vmem:[#allocation17] sm:$0xf]
    %v621 = vperm.slane %v619, 0
    %v622 = vperm.slane %v619, 1
    %v623 = vperm.slane %v619, 2
    %v624 = vperm.slane %v619, 3
    %v693 = vunpack.c.l.b16 %v555
    %v694 = vunpack.c.h.b16 %v555
    %v695 = vunpack.c.l.b16 %v556
    %v696 = vunpack.c.h.b16 %v556
    %v697 = vunpack.c.l.b16 %v557
    %v698 = vunpack.c.h.b16 %v557
    %v699 = vunpack.c.l.b16 %v558
    %v700 = vunpack.c.h.b16 %v558
    %v701 = vunpack.c.l.b16 %v559
    %v702 = vunpack.c.h.b16 %v559
    %v703 = vunpack.c.l.b16 %v560
    %v704 = vunpack.c.h.b16 %v560
    %v705 = vunpack.c.l.b16 %v561
    %v706 = vunpack.c.h.b16 %v561
    %v707 = vunpack.c.l.b16 %v562
    %v708 = vunpack.c.h.b16 %v562
    %v709 = vunpack.c.l.b16 %v563
    %v710 = vunpack.c.h.b16 %v563
    %v711 = vunpack.c.l.b16 %v564
    %v712 = vunpack.c.h.b16 %v564
    %v713 = vunpack.c.l.b16 %v565
    %v714 = vunpack.c.h.b16 %v565
    %v715 = vunpack.c.l.b16 %v566
    %v716 = vunpack.c.h.b16 %v566
    %v717 = vunpack.c.l.b16 %v567
    %v718 = vunpack.c.h.b16 %v567
    %v719 = vunpack.c.l.b16 %v568
    %v720 = vunpack.c.h.b16 %v568
    %v721 = vunpack.c.l.b16 %v569
    %v722 = vunpack.c.h.b16 %v569
    %v723 = vunpack.c.l.b16 %v570
    %v724 = vunpack.c.h.b16 %v570
    %v725 = vunpack.c.l.b16 %v571
    %v726 = vunpack.c.h.b16 %v571
    %v727 = vunpack.c.l.b16 %v572
    %v728 = vunpack.c.h.b16 %v572
    %v729 = vunpack.c.l.b16 %v573
    %v730 = vunpack.c.h.b16 %v573
    %v731 = vunpack.c.l.b16 %v574
    %v732 = vunpack.c.h.b16 %v574
    %v733 = vunpack.c.l.b16 %v575
    %v734 = vunpack.c.h.b16 %v575
    %v735 = vunpack.c.l.b16 %v576
    %v736 = vunpack.c.h.b16 %v576
    %v737 = vunpack.c.l.b16 %v577
    %v738 = vunpack.c.h.b16 %v577
    %v739 = vunpack.c.l.b16 %v578
    %v740 = vunpack.c.h.b16 %v578
    %v741 = vunpack.c.l.b16 %v579
    %v742 = vunpack.c.h.b16 %v579
    %v743 = vunpack.c.l.b16 %v580
    %v744 = vunpack.c.h.b16 %v580
    %v745 = vunpack.c.l.b16 %v581
    %v746 = vunpack.c.h.b16 %v581
    %v747 = vunpack.c.l.b16 %v582
    %v748 = vunpack.c.h.b16 %v582
    %v749 = vunpack.c.l.b16 %v583
    %v750 = vunpack.c.h.b16 %v583
    %v751 = vunpack.c.l.b16 %v584
    %v752 = vunpack.c.h.b16 %v584
    %v753 = vunpack.c.l.b16 %v585
    %v754 = vunpack.c.h.b16 %v585
    %v755 = vunpack.c.l.b16 %v586
    %v756 = vunpack.c.h.b16 %v586
    %v757 = vunpack.c.l.b16 %v587
    %v758 = vunpack.c.h.b16 %v587
    %v759 = vunpack.c.l.b16 %v588
    %v760 = vunpack.c.h.b16 %v588
    %v761 = vunpack.c.l.b16 %v589
    %v762 = vunpack.c.h.b16 %v589
    %v763 = vunpack.c.l.b16 %v590
    %v764 = vunpack.c.h.b16 %v590
    %v765 = vunpack.c.l.b16 %v591
    %v766 = vunpack.c.h.b16 %v591
    %v767 = vunpack.c.l.b16 %v592
    %v768 = vunpack.c.h.b16 %v592
    %v769 = vunpack.c.l.b16 %v593
    %v770 = vunpack.c.h.b16 %v593
    %v771 = vunpack.c.l.b16 %v594
    %v772 = vunpack.c.h.b16 %v594
    %v773 = vunpack.c.l.b16 %v595
    %v774 = vunpack.c.h.b16 %v595
    %v775 = vunpack.c.l.b16 %v596
    %v776 = vunpack.c.h.b16 %v596
    %v777 = vunpack.c.l.b16 %v597
    %v778 = vunpack.c.h.b16 %v597
    %v779 = vunpack.c.l.b16 %v598
    %v780 = vunpack.c.h.b16 %v598
    %v781 = vunpack.c.l.b16 %v599
    %v782 = vunpack.c.h.b16 %v599
    %v783 = vunpack.c.l.b16 %v600
    %v784 = vunpack.c.h.b16 %v600
    %v785 = vunpack.c.l.b16 %v601
    %v786 = vunpack.c.h.b16 %v601
    %v787 = vunpack.c.l.b16 %v602
    %v788 = vunpack.c.h.b16 %v602
    %v789 = vunpack.c.l.b16 %v603
    %v790 = vunpack.c.h.b16 %v603
    %v791 = vunpack.c.l.b16 %v604
    %v792 = vunpack.c.h.b16 %v604
    %v793 = vunpack.c.l.b16 %v605
    %v794 = vunpack.c.h.b16 %v605
    %v795 = vunpack.c.l.b16 %v606
    %v796 = vunpack.c.h.b16 %v606
    %v797 = vunpack.c.l.b16 %v607
    %v798 = vunpack.c.h.b16 %v607
    %v799 = vunpack.c.l.b16 %v608
    %v800 = vunpack.c.h.b16 %v608
    %v801 = vunpack.c.l.b16 %v609
    %v802 = vunpack.c.h.b16 %v609
    %v803 = vunpack.c.l.b16 %v610
    %v804 = vunpack.c.h.b16 %v610
    %v805 = vunpack.c.l.b16 %v611
    %v806 = vunpack.c.h.b16 %v611
    %v807 = vunpack.c.l.b16 %v612
    %v808 = vunpack.c.h.b16 %v612
    %v809 = vunpack.c.l.b16 %v613
    %v810 = vunpack.c.h.b16 %v613
    %v811 = vunpack.c.l.b16 %v614
    %v812 = vunpack.c.h.b16 %v614
    %v813 = vunpack.c.l.b16 %v615
    %v814 = vunpack.c.h.b16 %v615
    %v815 = vunpack.c.l.b16 %v616
    %v816 = vunpack.c.h.b16 %v616
    %v817 = vunpack.c.l.b16 %v617
    %v818 = vunpack.c.h.b16 %v617
    %v819 = vunpack.c.l.b16 %v618
    %v820 = vunpack.c.h.b16 %v618
    %v821 = vpack.c.b16 %v697, %v693
    %v822 = vpack.c.b16 %v698, %v694
    %v823 = vpack.c.b16 %v699, %v695
    %v824 = vpack.c.b16 %v700, %v696
    %v825 = vpack.c.b16 %v705, %v701
    %v826 = vpack.c.b16 %v706, %v702
    %v827 = vpack.c.b16 %v707, %v703
    %v828 = vpack.c.b16 %v708, %v704
    %v829 = vpack.c.b16 %v713, %v709
    %v830 = vpack.c.b16 %v714, %v710
    %v831 = vpack.c.b16 %v715, %v711
    %v832 = vpack.c.b16 %v716, %v712
    %v833 = vpack.c.b16 %v721, %v717
    %v834 = vpack.c.b16 %v722, %v718
    %v835 = vpack.c.b16 %v723, %v719
    %v836 = vpack.c.b16 %v724, %v720
    %v837 = vpack.c.b16 %v729, %v725
    %v838 = vpack.c.b16 %v730, %v726
    %v839 = vpack.c.b16 %v731, %v727
    %v840 = vpack.c.b16 %v732, %v728
    %v841 = vpack.c.b16 %v737, %v733
    %v842 = vpack.c.b16 %v738, %v734
    %v843 = vpack.c.b16 %v739, %v735
    %v844 = vpack.c.b16 %v740, %v736
    %v845 = vpack.c.b16 %v745, %v741
    %v846 = vpack.c.b16 %v746, %v742
    %v847 = vpack.c.b16 %v747, %v743
    %v848 = vpack.c.b16 %v748, %v744
    %v849 = vpack.c.b16 %v753, %v749
    %v850 = vpack.c.b16 %v754, %v750
    %v851 = vpack.c.b16 %v755, %v751
    %v852 = vpack.c.b16 %v756, %v752
    %v853 = vpack.c.b16 %v761, %v757
    %v854 = vpack.c.b16 %v762, %v758
    %v855 = vpack.c.b16 %v763, %v759
    %v856 = vpack.c.b16 %v764, %v760
    %v857 = vpack.c.b16 %v769, %v765
    %v858 = vpack.c.b16 %v770, %v766
    %v859 = vpack.c.b16 %v771, %v767
    %v860 = vpack.c.b16 %v772, %v768
    %v861 = vpack.c.b16 %v777, %v773
    %v862 = vpack.c.b16 %v778, %v774
    %v863 = vpack.c.b16 %v779, %v775
    %v864 = vpack.c.b16 %v780, %v776
    %v865 = vpack.c.b16 %v785, %v781
    %v866 = vpack.c.b16 %v786, %v782
    %v867 = vpack.c.b16 %v787, %v783
    %v868 = vpack.c.b16 %v788, %v784
    %v869 = vpack.c.b16 %v793, %v789
    %v870 = vpack.c.b16 %v794, %v790
    %v871 = vpack.c.b16 %v795, %v791
    %v872 = vpack.c.b16 %v796, %v792
    %v873 = vpack.c.b16 %v801, %v797
    %v874 = vpack.c.b16 %v802, %v798
    %v875 = vpack.c.b16 %v803, %v799
    %v876 = vpack.c.b16 %v804, %v800
    %v877 = vpack.c.b16 %v809, %v805
    %v878 = vpack.c.b16 %v810, %v806
    %v879 = vpack.c.b16 %v811, %v807
    %v880 = vpack.c.b16 %v812, %v808
    %v881 = vpack.c.b16 %v817, %v813
    %v882 = vpack.c.b16 %v818, %v814
    %v883 = vpack.c.b16 %v819, %v815
    %v884 = vpack.c.b16 %v820, %v816
    %949 = vmatpush.bf16.msra.mxu0 %v849
    %950 = vmatpush.bf16.msra.mxu0 %v845
    %951 = vmatpush.bf16.msra.mxu0 %v841
    %952 = vmatpush.bf16.msra.mxu0 %v837
    %953 = vmatpush.bf16.msra.mxu0 %v833
    %954 = vmatpush.bf16.msra.mxu0 %v829
    %955 = vmatpush.bf16.msra.mxu0 %v825
    %956 = vmatpush.bf16.msra.mxu0 %v821
    %957 = vmatmul.bf16.gmra.mxu0 %v553
    %v958 = vpop.f32.mrf.mxu0
    %v959 = vadd.f32 %v621, %v958
    %v960 = vpop.f32.mrf.mxu0
    %961 = vdwg.mxu0
    %962 = vmatpush.bf16.msra.mxu0 %v881
    %963 = vmatpush.bf16.msra.mxu0 %v877
    %964 = vmatpush.bf16.msra.mxu0 %v873
    %965 = vmatpush.bf16.msra.mxu0 %v869
    %966 = vmatpush.bf16.msra.mxu0 %v865
    %967 = vmatpush.bf16.msra.mxu0 %v861
    %968 = vmatpush.bf16.msra.mxu0 %v857
    %969 = vmatpush.bf16.msra.mxu0 %v853
    %970 = vmatmul.bf16.gmra.mxu0 %v554
    %v971 = vpop.f32.mrf.mxu0
    %v972 = vadd.f32 %v959, %v971
    %v973 = vpop.f32.mrf.mxu0
    %974 = vdwg.mxu0
    %975 = vmatpush.bf16.msra.mxu0 %v850
    %976 = vmatpush.bf16.msra.mxu0 %v846
    %977 = vmatpush.bf16.msra.mxu0 %v842
    %978 = vmatpush.bf16.msra.mxu0 %v838
    %979 = vmatpush.bf16.msra.mxu0 %v834
    %980 = vmatpush.bf16.msra.mxu0 %v830
    %981 = vmatpush.bf16.msra.mxu0 %v826
    %982 = vmatpush.bf16.msra.mxu0 %v822
    %983 = vmatmul.bf16.gmra.mxu0 %v553
    %v984 = vpop.f32.mrf.mxu0
    %v985 = vadd.f32 %v622, %v984
    %v986 = vpop.f32.mrf.mxu0
    %987 = vdwg.mxu0
    %988 = vmatpush.bf16.msra.mxu0 %v882
    %989 = vmatpush.bf16.msra.mxu0 %v878
    %990 = vmatpush.bf16.msra.mxu0 %v874
    %991 = vmatpush.bf16.msra.mxu0 %v870
    %992 = vmatpush.bf16.msra.mxu0 %v866
    %993 = vmatpush.bf16.msra.mxu0 %v862
    %994 = vmatpush.bf16.msra.mxu0 %v858
    %995 = vmatpush.bf16.msra.mxu0 %v854
    %996 = vmatmul.bf16.gmra.mxu0 %v554
    %v997 = vpop.f32.mrf.mxu0
    %v998 = vadd.f32 %v985, %v997
    %v999 = vpop.f32.mrf.mxu0
    %1000 = vdwg.mxu0
    %1001 = vmatpush.bf16.msra.mxu0 %v851
    %1002 = vmatpush.bf16.msra.mxu0 %v847
    %1003 = vmatpush.bf16.msra.mxu0 %v843
    %1004 = vmatpush.bf16.msra.mxu0 %v839
    %1005 = vmatpush.bf16.msra.mxu0 %v835
    %1006 = vmatpush.bf16.msra.mxu0 %v831
    %1007 = vmatpush.bf16.msra.mxu0 %v827
    %1008 = vmatpush.bf16.msra.mxu0 %v823
    %1009 = vmatmul.bf16.gmra.mxu0 %v553
    %v1010 = vpop.f32.mrf.mxu0
    %v1011 = vadd.f32 %v623, %v1010
    %v1012 = vpop.f32.mrf.mxu0
    %1013 = vdwg.mxu0
    %1014 = vmatpush.bf16.msra.mxu0 %v883
    %1015 = vmatpush.bf16.msra.mxu0 %v879
    %1016 = vmatpush.bf16.msra.mxu0 %v875
    %1017 = vmatpush.bf16.msra.mxu0 %v871
    %1018 = vmatpush.bf16.msra.mxu0 %v867
    %1019 = vmatpush.bf16.msra.mxu0 %v863
    %1020 = vmatpush.bf16.msra.mxu0 %v859
    %1021 = vmatpush.bf16.msra.mxu0 %v855
    %1022 = vmatmul.bf16.gmra.mxu0 %v554
    %v1023 = vpop.f32.mrf.mxu0
    %v1024 = vadd.f32 %v1011, %v1023
    %v1025 = vpop.f32.mrf.mxu0
    %1026 = vdwg.mxu0
    %1027 = vmatpush.bf16.msra.mxu0 %v852
    %1028 = vmatpush.bf16.msra.mxu0 %v848
    %1029 = vmatpush.bf16.msra.mxu0 %v844
    %1030 = vmatpush.bf16.msra.mxu0 %v840
    %1031 = vmatpush.bf16.msra.mxu0 %v836
    %1032 = vmatpush.bf16.msra.mxu0 %v832
    %1033 = vmatpush.bf16.msra.mxu0 %v828
    %1034 = vmatpush.bf16.msra.mxu0 %v824
    %1035 = vmatmul.bf16.gmra.mxu0 %v553
    %v1036 = vpop.f32.mrf.mxu0
    %v1037 = vadd.f32 %v624, %v1036
    %v1038 = vpop.f32.mrf.mxu0
    %1039 = vdwg.mxu0
    %1040 = vmatpush.bf16.msra.mxu0 %v884
    %1041 = vmatpush.bf16.msra.mxu0 %v880
    %1042 = vmatpush.bf16.msra.mxu0 %v876
    %1043 = vmatpush.bf16.msra.mxu0 %v872
    %1044 = vmatpush.bf16.msra.mxu0 %v868
    %1045 = vmatpush.bf16.msra.mxu0 %v864
    %1046 = vmatpush.bf16.msra.mxu0 %v860
    %1047 = vmatpush.bf16.msra.mxu0 %v856
    %1048 = vmatmul.bf16.gmra.mxu0 %v554
    %v1049 = vpop.f32.mrf.mxu0
    %v1050 = vadd.f32 %v1037, %v1049
    %v1051 = vpop.f32.mrf.mxu0
    %1052 = vdwg.mxu0
    %v1053 = vld [vmem:[%s9] sm:$0xf]
    %v1054 = vld [vmem:[#allocation18] sm:$0xf]
    %v1055 = vrot.slane %v972, 4
    %v1056 = vadd.f32 %v972, %v1055
    %v1057 = vrot.slane %v1056, 2
    %v1058 = vadd.f32 %v1056, %v1057
    %v1059 = vrot.slane %v1058, 1
    %v1060 = vadd.f32 %v1058, %v1059
    %v1061 = vrot.slane %v998, 4
    %v1062 = vadd.f32 %v998, %v1061
    %v1063 = vrot.slane %v1062, 2
    %v1064 = vadd.f32 %v1062, %v1063
    %v1065 = vrot.slane %v1064, 1
    %v1066 = vadd.f32 %v1064, %v1065
    %v1067 = vrot.slane %v1024, 4
    %v1068 = vadd.f32 %v1024, %v1067
    %v1069 = vrot.slane %v1068, 2
    %v1070 = vadd.f32 %v1068, %v1069
    %v1071 = vrot.slane %v1070, 1
    %v1072 = vadd.f32 %v1070, %v1071
    %v1073 = vrot.slane %v1050, 4
    %v1074 = vadd.f32 %v1050, %v1073
    %v1075 = vrot.slane %v1074, 2
    %v1076 = vadd.f32 %v1074, %v1075
    %v1077 = vrot.slane %v1076, 1
    %v1078 = vadd.f32 %v1076, %v1077
    %v1079 = vmul.f32 %v1060, %v484
    %v1080 = vmul.f32 %v1066, %v484
    %v1081 = vmul.f32 %v1072, %v484
    %v1082 = vmul.f32 %v1078, %v484
    %v1083 = vmul.f32 %v972, %v972
    %v1084 = vmul.f32 %v998, %v998
    %v1085 = vmul.f32 %v1024, %v1024
    %v1086 = vmul.f32 %v1050, %v1050
    %v1087 = vrot.slane %v1083, 4
    %v1088 = vadd.f32 %v1083, %v1087
    %v1089 = vrot.slane %v1088, 2
    %v1090 = vadd.f32 %v1088, %v1089
    %v1091 = vrot.slane %v1090, 1
    %v1092 = vadd.f32 %v1090, %v1091
    %v1093 = vrot.slane %v1084, 4
    %v1094 = vadd.f32 %v1084, %v1093
    %v1095 = vrot.slane %v1094, 2
    %v1096 = vadd.f32 %v1094, %v1095
    %v1097 = vrot.slane %v1096, 1
    %v1098 = vadd.f32 %v1096, %v1097
    %v1099 = vrot.slane %v1085, 4
    %v1100 = vadd.f32 %v1085, %v1099
    %v1101 = vrot.slane %v1100, 2
    %v1102 = vadd.f32 %v1100, %v1101
    %v1103 = vrot.slane %v1102, 1
    %v1104 = vadd.f32 %v1102, %v1103
    %v1105 = vrot.slane %v1086, 4
    %v1106 = vadd.f32 %v1086, %v1105
    %v1107 = vrot.slane %v1106, 2
    %v1108 = vadd.f32 %v1106, %v1107
    %v1109 = vrot.slane %v1108, 1
    %v1110 = vadd.f32 %v1108, %v1109
    %v1111 = vmul.f32 %v1092, %v484
    %v1112 = vmul.f32 %v1098, %v484
    %v1113 = vmul.f32 %v1104, %v484
    %v1114 = vmul.f32 %v1110, %v484
    %v1115 = vmul.f32 %v1079, %v1079
    %v1116 = vmul.f32 %v1080, %v1080
    %v1117 = vmul.f32 %v1081, %v1081
    %v1118 = vmul.f32 %v1082, %v1082
    %v1119 = vsub.f32 %v1111, %v1115
    %v1120 = vsub.f32 %v1112, %v1116
    %v1121 = vsub.f32 %v1113, %v1117
    %v1122 = vsub.f32 %v1114, %v1118
    %v1123 = vsub.f32 %v972, %v1079
    %v1124 = vsub.f32 %v998, %v1080
    %v1125 = vsub.f32 %v1024, %v1081
    %v1126 = vsub.f32 %v1050, %v1082
    %v1127 = vadd.f32 %v1119, 0.8
    %v1128 = vadd.f32 %v1120, 0.8
    %v1129 = vadd.f32 %v1121, 0.8
    %v1130 = vadd.f32 %v1122, 0.8
    %v1131 = vrsqrt.pop %v1127
    %v1132 = vmul.f32 %v1131, %v1127
    %v1133 = vmul.f32 %v1132, %v1131
    %v1134 = vmul.f32 0.5, %v1133
    %v1135 = vsub.f32 1.5, %v1134
    %v1136 = vmul.f32 %v1131, %v1135
    %vm1137 = vweird.f32 %v1127
    %vm1138 = vweird.f32 %v1131
    %vm1139 = vmor %vm1137, %vm1138
    %v1140 = vsel %vm1139, %v1131, %v1136
    %v1141 = vrsqrt.pop %v1128
    %v1142 = vmul.f32 %v1141, %v1128
    %v1143 = vmul.f32 %v1142, %v1141
    %v1144 = vmul.f32 0.5, %v1143
    %v1145 = vsub.f32 1.5, %v1144
    %v1146 = vmul.f32 %v1141, %v1145
    %vm1147 = vweird.f32 %v1128
    %vm1148 = vweird.f32 %v1141
    %vm1149 = vmor %vm1147, %vm1148
    %v1150 = vsel %vm1149, %v1141, %v1146
    %v1151 = vrsqrt.pop %v1129
    %v1152 = vmul.f32 %v1151, %v1129
    %v1153 = vmul.f32 %v1152, %v1151
    %v1154 = vmul.f32 0.5, %v1153
    %v1155 = vsub.f32 1.5, %v1154
    %v1156 = vmul.f32 %v1151, %v1155
    %vm1157 = vweird.f32 %v1129
    %vm1158 = vweird.f32 %v1151
    %vm1159 = vmor %vm1157, %vm1158
    %v1160 = vsel %vm1159, %v1151, %v1156
    %v1161 = vrsqrt.pop %v1130
    %v1162 = vmul.f32 %v1161, %v1130
    %v1163 = vmul.f32 %v1162, %v1161
    %v1164 = vmul.f32 0.5, %v1163
    %v1165 = vsub.f32 1.5, %v1164
    %v1166 = vmul.f32 %v1161, %v1165
    %vm1167 = vweird.f32 %v1130
    %vm1168 = vweird.f32 %v1161
    %vm1169 = vmor %vm1167, %vm1168
    %v1170 = vsel %vm1169, %v1161, %v1166
    %v1171 = vmul.f32 %v1123, %v1140
    %v1172 = vmul.f32 %v1124, %v1150
    %v1173 = vmul.f32 %v1125, %v1160
    %v1174 = vmul.f32 %v1126, %v1170
    %v1176 = vperm.slane %v1053, 0
    %v1177 = vperm.slane %v1053, 1
    %v1178 = vperm.slane %v1053, 2
    %v1179 = vperm.slane %v1053, 3
    %v1184 = vmul.f32 %v1171, %v1176
    %v1185 = vmul.f32 %v1172, %v1177
    %v1186 = vmul.f32 %v1173, %v1178
    %v1187 = vmul.f32 %v1174, %v1179
    %v1189 = vperm.slane %v1054, 0
    %v1190 = vperm.slane %v1054, 1
    %v1191 = vperm.slane %v1054, 2
    %v1192 = vperm.slane %v1054, 3
    %v1197 = vadd.f32 %v1184, %v1189
    %v1198 = vadd.f32 %v1185, %v1190
    %v1199 = vadd.f32 %v1186, %v1191
    %v1200 = vadd.f32 %v1187, %v1192
    %vm1201 = vcmp.gt.f32.partialorder %v1197, 0.0
    %vm1202 = vcmp.gt.f32.partialorder %v1198, 0.0
    %vm1203 = vcmp.gt.f32.partialorder %v1199, 0.0
    %vm1204 = vcmp.gt.f32.partialorder %v1200, 0.0
    %v1205 = vmul.f32 %v1197, 0.2
    %v1206 = vmul.f32 %v1198, 0.2
    %v1207 = vmul.f32 %v1199, 0.2
    %v1208 = vmul.f32 %v1200, 0.2
    %v1209 = vsel %vm1201, %v1197, %v1205
    %v1210 = vsel %vm1202, %v1198, %v1206
    %v1211 = vsel %vm1203, %v1199, %v1207
    %v1212 = vsel %vm1204, %v1200, %v1208
    %s1213 = smul.u32 4, 64
    %s1214 = smul.u32 %s1213, 8
    %s1215 = sshll.u32 %s1214, 4
    %1216 = dma.done [#allocation4], %s1215
    %v1217 = vpack.c.bf16 %v1209, %v1209
    %v1218 = vpack.c.bf16 %v1210, %v1210
    %v1219 = vpack.c.bf16 %v1211, %v1211
    %v1220 = vpack.c.bf16 %v1212, %v1212
    %v1221 = vld [vmem:[#allocation2] sm:$0xff]
    %v1222 = vld [vmem:[#allocation2 + $0x8] sm:$0xff]
    %v1223 = vld [vmem:[#allocation2 + $0x10] sm:$0xff]
    %v1224 = vld [vmem:[#allocation2 + $0x18] sm:$0xff]
    %v1225 = vld [vmem:[#allocation2 + $0x20] sm:$0xff]
    %v1226 = vld [vmem:[#allocation2 + $0x28] sm:$0xff]
    %v1227 = vld [vmem:[#allocation2 + $0x30] sm:$0xff]
    %v1228 = vld [vmem:[#allocation2 + $0x38] sm:$0xff]
    %v1229 = vld [vmem:[#allocation2 + $0x40] sm:$0xff]
    %v1230 = vld [vmem:[#allocation2 + $0x48] sm:$0xff]
    %v1231 = vld [vmem:[#allocation2 + $0x50] sm:$0xff]
    %v1232 = vld [vmem:[#allocation2 + $0x58] sm:$0xff]
    %v1233 = vld [vmem:[#allocation2 + $0x60] sm:$0xff]
    %v1234 = vld [vmem:[#allocation2 + $0x68] sm:$0xff]
    %v1235 = vld [vmem:[#allocation2 + $0x70] sm:$0xff]
    %v1236 = vld [vmem:[#allocation2 + $0x78] sm:$0xff]
    %v1237 = vld [vmem:[#allocation2 + $0x80] sm:$0xff]
    %v1238 = vld [vmem:[#allocation2 + $0x88] sm:$0xff]
    %v1239 = vld [vmem:[#allocation2 + $0x90] sm:$0xff]
    %v1240 = vld [vmem:[#allocation2 + $0x98] sm:$0xff]
    %v1241 = vld [vmem:[#allocation2 + $0xa0] sm:$0xff]
    %v1242 = vld [vmem:[#allocation2 + $0xa8] sm:$0xff]
    %v1243 = vld [vmem:[#allocation2 + $0xb0] sm:$0xff]
    %v1244 = vld [vmem:[#allocation2 + $0xb8] sm:$0xff]
    %v1245 = vld [vmem:[#allocation2 + $0xc0] sm:$0xff]
    %v1246 = vld [vmem:[#allocation2 + $0xc8] sm:$0xff]
    %v1247 = vld [vmem:[#allocation2 + $0xd0] sm:$0xff]
    %v1248 = vld [vmem:[#allocation2 + $0xd8] sm:$0xff]
    %v1249 = vld [vmem:[#allocation2 + $0xe0] sm:$0xff]
    %v1250 = vld [vmem:[#allocation2 + $0xe8] sm:$0xff]
    %v1251 = vld [vmem:[#allocation2 + $0xf0] sm:$0xff]
    %v1252 = vld [vmem:[#allocation2 + $0xf8] sm:$0xff]
    %v1253 = vld [vmem:[#allocation2 + $0x100] sm:$0xff]
    %v1254 = vld [vmem:[#allocation2 + $0x108] sm:$0xff]
    %v1255 = vld [vmem:[#allocation2 + $0x110] sm:$0xff]
    %v1256 = vld [vmem:[#allocation2 + $0x118] sm:$0xff]
    %v1257 = vld [vmem:[#allocation2 + $0x120] sm:$0xff]
    %v1258 = vld [vmem:[#allocation2 + $0x128] sm:$0xff]
    %v1259 = vld [vmem:[#allocation2 + $0x130] sm:$0xff]
    %v1260 = vld [vmem:[#allocation2 + $0x138] sm:$0xff]
    %v1261 = vld [vmem:[#allocation2 + $0x140] sm:$0xff]
    %v1262 = vld [vmem:[#allocation2 + $0x148] sm:$0xff]
    %v1263 = vld [vmem:[#allocation2 + $0x150] sm:$0xff]
    %v1264 = vld [vmem:[#allocation2 + $0x158] sm:$0xff]
    %v1265 = vld [vmem:[#allocation2 + $0x160] sm:$0xff]
    %v1266 = vld [vmem:[#allocation2 + $0x168] sm:$0xff]
    %v1267 = vld [vmem:[#allocation2 + $0x170] sm:$0xff]
    %v1268 = vld [vmem:[#allocation2 + $0x178] sm:$0xff]
    %v1269 = vld [vmem:[#allocation2 + $0x180] sm:$0xff]
    %v1270 = vld [vmem:[#allocation2 + $0x188] sm:$0xff]
    %v1271 = vld [vmem:[#allocation2 + $0x190] sm:$0xff]
    %v1272 = vld [vmem:[#allocation2 + $0x198] sm:$0xff]
    %v1273 = vld [vmem:[#allocation2 + $0x1a0] sm:$0xff]
    %v1274 = vld [vmem:[#allocation2 + $0x1a8] sm:$0xff]
    %v1275 = vld [vmem:[#allocation2 + $0x1b0] sm:$0xff]
    %v1276 = vld [vmem:[#allocation2 + $0x1b8] sm:$0xff]
    %v1277 = vld [vmem:[#allocation2 + $0x1c0] sm:$0xff]
    %v1278 = vld [vmem:[#allocation2 + $0x1c8] sm:$0xff]
    %v1279 = vld [vmem:[#allocation2 + $0x1d0] sm:$0xff]
    %v1280 = vld [vmem:[#allocation2 + $0x1d8] sm:$0xff]
    %v1281 = vld [vmem:[#allocation2 + $0x1e0] sm:$0xff]
    %v1282 = vld [vmem:[#allocation2 + $0x1e8] sm:$0xff]
    %v1283 = vld [vmem:[#allocation2 + $0x1f0] sm:$0xff]
    %v1284 = vld [vmem:[#allocation2 + $0x1f8] sm:$0xff]
    %v1285 = vld [vmem:[#allocation2 + $0x200] sm:$0xff]
    %v1286 = vld [vmem:[#allocation2 + $0x208] sm:$0xff]
    %v1287 = vld [vmem:[#allocation2 + $0x210] sm:$0xff]
    %v1288 = vld [vmem:[#allocation2 + $0x218] sm:$0xff]
    %v1289 = vld [vmem:[#allocation2 + $0x220] sm:$0xff]
    %v1290 = vld [vmem:[#allocation2 + $0x228] sm:$0xff]
    %v1291 = vld [vmem:[#allocation2 + $0x230] sm:$0xff]
    %v1292 = vld [vmem:[#allocation2 + $0x238] sm:$0xff]
    %v1293 = vld [vmem:[#allocation2 + $0x240] sm:$0xff]
    %v1294 = vld [vmem:[#allocation2 + $0x248] sm:$0xff]
    %v1295 = vld [vmem:[#allocation2 + $0x250] sm:$0xff]
    %v1296 = vld [vmem:[#allocation2 + $0x258] sm:$0xff]
    %v1297 = vld [vmem:[#allocation2 + $0x260] sm:$0xff]
    %v1298 = vld [vmem:[#allocation2 + $0x268] sm:$0xff]
    %v1299 = vld [vmem:[#allocation2 + $0x270] sm:$0xff]
    %v1300 = vld [vmem:[#allocation2 + $0x278] sm:$0xff]
    %v1301 = vld [vmem:[#allocation2 + $0x280] sm:$0xff]
    %v1302 = vld [vmem:[#allocation2 + $0x288] sm:$0xff]
    %v1303 = vld [vmem:[#allocation2 + $0x290] sm:$0xff]
    %v1304 = vld [vmem:[#allocation2 + $0x298] sm:$0xff]
    %v1305 = vld [vmem:[#allocation2 + $0x2a0] sm:$0xff]
    %v1306 = vld [vmem:[#allocation2 + $0x2a8] sm:$0xff]
    %v1307 = vld [vmem:[#allocation2 + $0x2b0] sm:$0xff]
    %v1308 = vld [vmem:[#allocation2 + $0x2b8] sm:$0xff]
    %v1309 = vld [vmem:[#allocation2 + $0x2c0] sm:$0xff]
    %v1310 = vld [vmem:[#allocation2 + $0x2c8] sm:$0xff]
    %v1311 = vld [vmem:[#allocation2 + $0x2d0] sm:$0xff]
    %v1312 = vld [vmem:[#allocation2 + $0x2d8] sm:$0xff]
    %v1313 = vld [vmem:[#allocation2 + $0x2e0] sm:$0xff]
    %v1314 = vld [vmem:[#allocation2 + $0x2e8] sm:$0xff]
    %v1315 = vld [vmem:[#allocation2 + $0x2f0] sm:$0xff]
    %v1316 = vld [vmem:[#allocation2 + $0x2f8] sm:$0xff]
    %v1317 = vld [vmem:[#allocation2 + $0x300] sm:$0xff]
    %v1318 = vld [vmem:[#allocation2 + $0x308] sm:$0xff]
    %v1319 = vld [vmem:[#allocation2 + $0x310] sm:$0xff]
    %v1320 = vld [vmem:[#allocation2 + $0x318] sm:$0xff]
    %v1321 = vld [vmem:[#allocation2 + $0x320] sm:$0xff]
    %v1322 = vld [vmem:[#allocation2 + $0x328] sm:$0xff]
    %v1323 = vld [vmem:[#allocation2 + $0x330] sm:$0xff]
    %v1324 = vld [vmem:[#allocation2 + $0x338] sm:$0xff]
    %v1325 = vld [vmem:[#allocation2 + $0x340] sm:$0xff]
    %v1326 = vld [vmem:[#allocation2 + $0x348] sm:$0xff]
    %v1327 = vld [vmem:[#allocation2 + $0x350] sm:$0xff]
    %v1328 = vld [vmem:[#allocation2 + $0x358] sm:$0xff]
    %v1329 = vld [vmem:[#allocation2 + $0x360] sm:$0xff]
    %v1330 = vld [vmem:[#allocation2 + $0x368] sm:$0xff]
    %v1331 = vld [vmem:[#allocation2 + $0x370] sm:$0xff]
    %v1332 = vld [vmem:[#allocation2 + $0x378] sm:$0xff]
    %v1333 = vld [vmem:[#allocation2 + $0x380] sm:$0xff]
    %v1334 = vld [vmem:[#allocation2 + $0x388] sm:$0xff]
    %v1335 = vld [vmem:[#allocation2 + $0x390] sm:$0xff]
    %v1336 = vld [vmem:[#allocation2 + $0x398] sm:$0xff]
    %v1337 = vld [vmem:[#allocation2 + $0x3a0] sm:$0xff]
    %v1338 = vld [vmem:[#allocation2 + $0x3a8] sm:$0xff]
    %v1339 = vld [vmem:[#allocation2 + $0x3b0] sm:$0xff]
    %v1340 = vld [vmem:[#allocation2 + $0x3b8] sm:$0xff]
    %v1341 = vld [vmem:[#allocation2 + $0x3c0] sm:$0xff]
    %v1342 = vld [vmem:[#allocation2 + $0x3c8] sm:$0xff]
    %v1343 = vld [vmem:[#allocation2 + $0x3d0] sm:$0xff]
    %v1344 = vld [vmem:[#allocation2 + $0x3d8] sm:$0xff]
    %v1345 = vld [vmem:[#allocation2 + $0x3e0] sm:$0xff]
    %v1346 = vld [vmem:[#allocation2 + $0x3e8] sm:$0xff]
    %v1347 = vld [vmem:[#allocation2 + $0x3f0] sm:$0xff]
    %v1348 = vld [vmem:[#allocation2 + $0x3f8] sm:$0xff]
    %v1349 = vld [vmem:[#allocation2 + $0x400] sm:$0xff]
    %v1350 = vld [vmem:[#allocation2 + $0x408] sm:$0xff]
    %v1351 = vld [vmem:[#allocation2 + $0x410] sm:$0xff]
    %v1352 = vld [vmem:[#allocation2 + $0x418] sm:$0xff]
    %v1353 = vld [vmem:[#allocation2 + $0x420] sm:$0xff]
    %v1354 = vld [vmem:[#allocation2 + $0x428] sm:$0xff]
    %v1355 = vld [vmem:[#allocation2 + $0x430] sm:$0xff]
    %v1356 = vld [vmem:[#allocation2 + $0x438] sm:$0xff]
    %v1357 = vld [vmem:[#allocation2 + $0x440] sm:$0xff]
    %v1358 = vld [vmem:[#allocation2 + $0x448] sm:$0xff]
    %v1359 = vld [vmem:[#allocation2 + $0x450] sm:$0xff]
    %v1360 = vld [vmem:[#allocation2 + $0x458] sm:$0xff]
    %v1361 = vld [vmem:[#allocation2 + $0x460] sm:$0xff]
    %v1362 = vld [vmem:[#allocation2 + $0x468] sm:$0xff]
    %v1363 = vld [vmem:[#allocation2 + $0x470] sm:$0xff]
    %v1364 = vld [vmem:[#allocation2 + $0x478] sm:$0xff]
    %v1365 = vld [vmem:[#allocation2 + $0x480] sm:$0xff]
    %v1366 = vld [vmem:[#allocation2 + $0x488] sm:$0xff]
    %v1367 = vld [vmem:[#allocation2 + $0x490] sm:$0xff]
    %v1368 = vld [vmem:[#allocation2 + $0x498] sm:$0xff]
    %v1369 = vld [vmem:[#allocation2 + $0x4a0] sm:$0xff]
    %v1370 = vld [vmem:[#allocation2 + $0x4a8] sm:$0xff]
    %v1371 = vld [vmem:[#allocation2 + $0x4b0] sm:$0xff]
    %v1372 = vld [vmem:[#allocation2 + $0x4b8] sm:$0xff]
    %v1373 = vld [vmem:[#allocation2 + $0x4c0] sm:$0xff]
    %v1374 = vld [vmem:[#allocation2 + $0x4c8] sm:$0xff]
    %v1375 = vld [vmem:[#allocation2 + $0x4d0] sm:$0xff]
    %v1376 = vld [vmem:[#allocation2 + $0x4d8] sm:$0xff]
    %v1377 = vld [vmem:[#allocation2 + $0x4e0] sm:$0xff]
    %v1378 = vld [vmem:[#allocation2 + $0x4e8] sm:$0xff]
    %v1379 = vld [vmem:[#allocation2 + $0x4f0] sm:$0xff]
    %v1380 = vld [vmem:[#allocation2 + $0x4f8] sm:$0xff]
    %v1381 = vld [vmem:[#allocation2 + $0x500] sm:$0xff]
    %v1382 = vld [vmem:[#allocation2 + $0x508] sm:$0xff]
    %v1383 = vld [vmem:[#allocation2 + $0x510] sm:$0xff]
    %v1384 = vld [vmem:[#allocation2 + $0x518] sm:$0xff]
    %v1385 = vld [vmem:[#allocation2 + $0x520] sm:$0xff]
    %v1386 = vld [vmem:[#allocation2 + $0x528] sm:$0xff]
    %v1387 = vld [vmem:[#allocation2 + $0x530] sm:$0xff]
    %v1388 = vld [vmem:[#allocation2 + $0x538] sm:$0xff]
    %v1389 = vld [vmem:[#allocation2 + $0x540] sm:$0xff]
    %v1390 = vld [vmem:[#allocation2 + $0x548] sm:$0xff]
    %v1391 = vld [vmem:[#allocation2 + $0x550] sm:$0xff]
    %v1392 = vld [vmem:[#allocation2 + $0x558] sm:$0xff]
    %v1393 = vld [vmem:[#allocation2 + $0x560] sm:$0xff]
    %v1394 = vld [vmem:[#allocation2 + $0x568] sm:$0xff]
    %v1395 = vld [vmem:[#allocation2 + $0x570] sm:$0xff]
    %v1396 = vld [vmem:[#allocation2 + $0x578] sm:$0xff]
    %v1397 = vld [vmem:[#allocation2 + $0x580] sm:$0xff]
    %v1398 = vld [vmem:[#allocation2 + $0x588] sm:$0xff]
    %v1399 = vld [vmem:[#allocation2 + $0x590] sm:$0xff]
    %v1400 = vld [vmem:[#allocation2 + $0x598] sm:$0xff]
    %v1401 = vld [vmem:[#allocation2 + $0x5a0] sm:$0xff]
    %v1402 = vld [vmem:[#allocation2 + $0x5a8] sm:$0xff]
    %v1403 = vld [vmem:[#allocation2 + $0x5b0] sm:$0xff]
    %v1404 = vld [vmem:[#allocation2 + $0x5b8] sm:$0xff]
    %v1405 = vld [vmem:[#allocation2 + $0x5c0] sm:$0xff]
    %v1406 = vld [vmem:[#allocation2 + $0x5c8] sm:$0xff]
    %v1407 = vld [vmem:[#allocation2 + $0x5d0] sm:$0xff]
    %v1408 = vld [vmem:[#allocation2 + $0x5d8] sm:$0xff]
    %v1409 = vld [vmem:[#allocation2 + $0x5e0] sm:$0xff]
    %v1410 = vld [vmem:[#allocation2 + $0x5e8] sm:$0xff]
    %v1411 = vld [vmem:[#allocation2 + $0x5f0] sm:$0xff]
    %v1412 = vld [vmem:[#allocation2 + $0x5f8] sm:$0xff]
    %v1413 = vld [vmem:[#allocation2 + $0x600] sm:$0xff]
    %v1414 = vld [vmem:[#allocation2 + $0x608] sm:$0xff]
    %v1415 = vld [vmem:[#allocation2 + $0x610] sm:$0xff]
    %v1416 = vld [vmem:[#allocation2 + $0x618] sm:$0xff]
    %v1417 = vld [vmem:[#allocation2 + $0x620] sm:$0xff]
    %v1418 = vld [vmem:[#allocation2 + $0x628] sm:$0xff]
    %v1419 = vld [vmem:[#allocation2 + $0x630] sm:$0xff]
    %v1420 = vld [vmem:[#allocation2 + $0x638] sm:$0xff]
    %v1421 = vld [vmem:[#allocation2 + $0x640] sm:$0xff]
    %v1422 = vld [vmem:[#allocation2 + $0x648] sm:$0xff]
    %v1423 = vld [vmem:[#allocation2 + $0x650] sm:$0xff]
    %v1424 = vld [vmem:[#allocation2 + $0x658] sm:$0xff]
    %v1425 = vld [vmem:[#allocation2 + $0x660] sm:$0xff]
    %v1426 = vld [vmem:[#allocation2 + $0x668] sm:$0xff]
    %v1427 = vld [vmem:[#allocation2 + $0x670] sm:$0xff]
    %v1428 = vld [vmem:[#allocation2 + $0x678] sm:$0xff]
    %v1429 = vld [vmem:[#allocation2 + $0x680] sm:$0xff]
    %v1430 = vld [vmem:[#allocation2 + $0x688] sm:$0xff]
    %v1431 = vld [vmem:[#allocation2 + $0x690] sm:$0xff]
    %v1432 = vld [vmem:[#allocation2 + $0x698] sm:$0xff]
    %v1433 = vld [vmem:[#allocation2 + $0x6a0] sm:$0xff]
    %v1434 = vld [vmem:[#allocation2 + $0x6a8] sm:$0xff]
    %v1435 = vld [vmem:[#allocation2 + $0x6b0] sm:$0xff]
    %v1436 = vld [vmem:[#allocation2 + $0x6b8] sm:$0xff]
    %v1437 = vld [vmem:[#allocation2 + $0x6c0] sm:$0xff]
    %v1438 = vld [vmem:[#allocation2 + $0x6c8] sm:$0xff]
    %v1439 = vld [vmem:[#allocation2 + $0x6d0] sm:$0xff]
    %v1440 = vld [vmem:[#allocation2 + $0x6d8] sm:$0xff]
    %v1441 = vld [vmem:[#allocation2 + $0x6e0] sm:$0xff]
    %v1442 = vld [vmem:[#allocation2 + $0x6e8] sm:$0xff]
    %v1443 = vld [vmem:[#allocation2 + $0x6f0] sm:$0xff]
    %v1444 = vld [vmem:[#allocation2 + $0x6f8] sm:$0xff]
    %v1445 = vld [vmem:[#allocation2 + $0x700] sm:$0xff]
    %v1446 = vld [vmem:[#allocation2 + $0x708] sm:$0xff]
    %v1447 = vld [vmem:[#allocation2 + $0x710] sm:$0xff]
    %v1448 = vld [vmem:[#allocation2 + $0x718] sm:$0xff]
    %v1449 = vld [vmem:[#allocation2 + $0x720] sm:$0xff]
    %v1450 = vld [vmem:[#allocation2 + $0x728] sm:$0xff]
    %v1451 = vld [vmem:[#allocation2 + $0x730] sm:$0xff]
    %v1452 = vld [vmem:[#allocation2 + $0x738] sm:$0xff]
    %v1453 = vld [vmem:[#allocation2 + $0x740] sm:$0xff]
    %v1454 = vld [vmem:[#allocation2 + $0x748] sm:$0xff]
    %v1455 = vld [vmem:[#allocation2 + $0x750] sm:$0xff]
    %v1456 = vld [vmem:[#allocation2 + $0x758] sm:$0xff]
    %v1457 = vld [vmem:[#allocation2 + $0x760] sm:$0xff]
    %v1458 = vld [vmem:[#allocation2 + $0x768] sm:$0xff]
    %v1459 = vld [vmem:[#allocation2 + $0x770] sm:$0xff]
    %v1460 = vld [vmem:[#allocation2 + $0x778] sm:$0xff]
    %v1461 = vld [vmem:[#allocation2 + $0x780] sm:$0xff]
    %v1462 = vld [vmem:[#allocation2 + $0x788] sm:$0xff]
    %v1463 = vld [vmem:[#allocation2 + $0x790] sm:$0xff]
    %v1464 = vld [vmem:[#allocation2 + $0x798] sm:$0xff]
    %v1465 = vld [vmem:[#allocation2 + $0x7a0] sm:$0xff]
    %v1466 = vld [vmem:[#allocation2 + $0x7a8] sm:$0xff]
    %v1467 = vld [vmem:[#allocation2 + $0x7b0] sm:$0xff]
    %v1468 = vld [vmem:[#allocation2 + $0x7b8] sm:$0xff]
    %v1469 = vld [vmem:[#allocation2 + $0x7c0] sm:$0xff]
    %v1470 = vld [vmem:[#allocation2 + $0x7c8] sm:$0xff]
    %v1471 = vld [vmem:[#allocation2 + $0x7d0] sm:$0xff]
    %v1472 = vld [vmem:[#allocation2 + $0x7d8] sm:$0xff]
    %v1473 = vld [vmem:[#allocation2 + $0x7e0] sm:$0xff]
    %v1474 = vld [vmem:[#allocation2 + $0x7e8] sm:$0xff]
    %v1475 = vld [vmem:[#allocation2 + $0x7f0] sm:$0xff]
    %v1476 = vld [vmem:[#allocation2 + $0x7f8] sm:$0xff]
    %v1477 = vld [vmem:[#allocation20] sm:$0xff]
    %v1479 = vperm.slane %v1477, 0
    %v1480 = vperm.slane %v1477, 1
    %v1481 = vperm.slane %v1477, 2
    %v1482 = vperm.slane %v1477, 3
    %v1483 = vperm.slane %v1477, 4
    %v1484 = vperm.slane %v1477, 5
    %v1485 = vperm.slane %v1477, 6
    %v1486 = vperm.slane %v1477, 7
    %v1751 = vunpack.c.l.b16 %v1221
    %v1752 = vunpack.c.h.b16 %v1221
    %v1753 = vunpack.c.l.b16 %v1222
    %v1754 = vunpack.c.h.b16 %v1222
    %v1755 = vunpack.c.l.b16 %v1223
    %v1756 = vunpack.c.h.b16 %v1223
    %v1757 = vunpack.c.l.b16 %v1224
    %v1758 = vunpack.c.h.b16 %v1224
    %v1759 = vunpack.c.l.b16 %v1225
    %v1760 = vunpack.c.h.b16 %v1225
    %v1761 = vunpack.c.l.b16 %v1226
    %v1762 = vunpack.c.h.b16 %v1226
    %v1763 = vunpack.c.l.b16 %v1227
    %v1764 = vunpack.c.h.b16 %v1227
    %v1765 = vunpack.c.l.b16 %v1228
    %v1766 = vunpack.c.h.b16 %v1228
    %v1767 = vunpack.c.l.b16 %v1229
    %v1768 = vunpack.c.h.b16 %v1229
    %v1769 = vunpack.c.l.b16 %v1230
    %v1770 = vunpack.c.h.b16 %v1230
    %v1771 = vunpack.c.l.b16 %v1231
    %v1772 = vunpack.c.h.b16 %v1231
    %v1773 = vunpack.c.l.b16 %v1232
    %v1774 = vunpack.c.h.b16 %v1232
    %v1775 = vunpack.c.l.b16 %v1233
    %v1776 = vunpack.c.h.b16 %v1233
    %v1777 = vunpack.c.l.b16 %v1234
    %v1778 = vunpack.c.h.b16 %v1234
    %v1779 = vunpack.c.l.b16 %v1235
    %v1780 = vunpack.c.h.b16 %v1235
    %v1781 = vunpack.c.l.b16 %v1236
    %v1782 = vunpack.c.h.b16 %v1236
    %v1783 = vunpack.c.l.b16 %v1237
    %v1784 = vunpack.c.h.b16 %v1237
    %v1785 = vunpack.c.l.b16 %v1238
    %v1786 = vunpack.c.h.b16 %v1238
    %v1787 = vunpack.c.l.b16 %v1239
    %v1788 = vunpack.c.h.b16 %v1239
    %v1789 = vunpack.c.l.b16 %v1240
    %v1790 = vunpack.c.h.b16 %v1240
    %v1791 = vunpack.c.l.b16 %v1241
    %v1792 = vunpack.c.h.b16 %v1241
    %v1793 = vunpack.c.l.b16 %v1242
    %v1794 = vunpack.c.h.b16 %v1242
    %v1795 = vunpack.c.l.b16 %v1243
    %v1796 = vunpack.c.h.b16 %v1243
    %v1797 = vunpack.c.l.b16 %v1244
    %v1798 = vunpack.c.h.b16 %v1244
    %v1799 = vunpack.c.l.b16 %v1245
    %v1800 = vunpack.c.h.b16 %v1245
    %v1801 = vunpack.c.l.b16 %v1246
    %v1802 = vunpack.c.h.b16 %v1246
    %v1803 = vunpack.c.l.b16 %v1247
    %v1804 = vunpack.c.h.b16 %v1247
    %v1805 = vunpack.c.l.b16 %v1248
    %v1806 = vunpack.c.h.b16 %v1248
    %v1807 = vunpack.c.l.b16 %v1249
    %v1808 = vunpack.c.h.b16 %v1249
    %v1809 = vunpack.c.l.b16 %v1250
    %v1810 = vunpack.c.h.b16 %v1250
    %v1811 = vunpack.c.l.b16 %v1251
    %v1812 = vunpack.c.h.b16 %v1251
    %v1813 = vunpack.c.l.b16 %v1252
    %v1814 = vunpack.c.h.b16 %v1252
    %v1815 = vunpack.c.l.b16 %v1253
    %v1816 = vunpack.c.h.b16 %v1253
    %v1817 = vunpack.c.l.b16 %v1254
    %v1818 = vunpack.c.h.b16 %v1254
    %v1819 = vunpack.c.l.b16 %v1255
    %v1820 = vunpack.c.h.b16 %v1255
    %v1821 = vunpack.c.l.b16 %v1256
    %v1822 = vunpack.c.h.b16 %v1256
    %v1823 = vunpack.c.l.b16 %v1257
    %v1824 = vunpack.c.h.b16 %v1257
    %v1825 = vunpack.c.l.b16 %v1258
    %v1826 = vunpack.c.h.b16 %v1258
    %v1827 = vunpack.c.l.b16 %v1259
    %v1828 = vunpack.c.h.b16 %v1259
    %v1829 = vunpack.c.l.b16 %v1260
    %v1830 = vunpack.c.h.b16 %v1260
    %v1831 = vunpack.c.l.b16 %v1261
    %v1832 = vunpack.c.h.b16 %v1261
    %v1833 = vunpack.c.l.b16 %v1262
    %v1834 = vunpack.c.h.b16 %v1262
    %v1835 = vunpack.c.l.b16 %v1263
    %v1836 = vunpack.c.h.b16 %v1263
    %v1837 = vunpack.c.l.b16 %v1264
    %v1838 = vunpack.c.h.b16 %v1264
    %v1839 = vunpack.c.l.b16 %v1265
    %v1840 = vunpack.c.h.b16 %v1265
    %v1841 = vunpack.c.l.b16 %v1266
    %v1842 = vunpack.c.h.b16 %v1266
    %v1843 = vunpack.c.l.b16 %v1267
    %v1844 = vunpack.c.h.b16 %v1267
    %v1845 = vunpack.c.l.b16 %v1268
    %v1846 = vunpack.c.h.b16 %v1268
    %v1847 = vunpack.c.l.b16 %v1269
    %v1848 = vunpack.c.h.b16 %v1269
    %v1849 = vunpack.c.l.b16 %v1270
    %v1850 = vunpack.c.h.b16 %v1270
    %v1851 = vunpack.c.l.b16 %v1271
    %v1852 = vunpack.c.h.b16 %v1271
    %v1853 = vunpack.c.l.b16 %v1272
    %v1854 = vunpack.c.h.b16 %v1272
    %v1855 = vunpack.c.l.b16 %v1273
    %v1856 = vunpack.c.h.b16 %v1273
    %v1857 = vunpack.c.l.b16 %v1274
    %v1858 = vunpack.c.h.b16 %v1274
    %v1859 = vunpack.c.l.b16 %v1275
    %v1860 = vunpack.c.h.b16 %v1275
    %v1861 = vunpack.c.l.b16 %v1276
    %v1862 = vunpack.c.h.b16 %v1276
    %v1863 = vunpack.c.l.b16 %v1277
    %v1864 = vunpack.c.h.b16 %v1277
    %v1865 = vunpack.c.l.b16 %v1278
    %v1866 = vunpack.c.h.b16 %v1278
    %v1867 = vunpack.c.l.b16 %v1279
    %v1868 = vunpack.c.h.b16 %v1279
    %v1869 = vunpack.c.l.b16 %v1280
    %v1870 = vunpack.c.h.b16 %v1280
    %v1871 = vunpack.c.l.b16 %v1281
    %v1872 = vunpack.c.h.b16 %v1281
    %v1873 = vunpack.c.l.b16 %v1282
    %v1874 = vunpack.c.h.b16 %v1282
    %v1875 = vunpack.c.l.b16 %v1283
    %v1876 = vunpack.c.h.b16 %v1283
    %v1877 = vunpack.c.l.b16 %v1284
    %v1878 = vunpack.c.h.b16 %v1284
    %v1879 = vunpack.c.l.b16 %v1285
    %v1880 = vunpack.c.h.b16 %v1285
    %v1881 = vunpack.c.l.b16 %v1286
    %v1882 = vunpack.c.h.b16 %v1286
    %v1883 = vunpack.c.l.b16 %v1287
    %v1884 = vunpack.c.h.b16 %v1287
    %v1885 = vunpack.c.l.b16 %v1288
    %v1886 = vunpack.c.h.b16 %v1288
    %v1887 = vunpack.c.l.b16 %v1289
    %v1888 = vunpack.c.h.b16 %v1289
    %v1889 = vunpack.c.l.b16 %v1290
    %v1890 = vunpack.c.h.b16 %v1290
    %v1891 = vunpack.c.l.b16 %v1291
    %v1892 = vunpack.c.h.b16 %v1291
    %v1893 = vunpack.c.l.b16 %v1292
    %v1894 = vunpack.c.h.b16 %v1292
    %v1895 = vunpack.c.l.b16 %v1293
    %v1896 = vunpack.c.h.b16 %v1293
    %v1897 = vunpack.c.l.b16 %v1294
    %v1898 = vunpack.c.h.b16 %v1294
    %v1899 = vunpack.c.l.b16 %v1295
    %v1900 = vunpack.c.h.b16 %v1295
    %v1901 = vunpack.c.l.b16 %v1296
    %v1902 = vunpack.c.h.b16 %v1296
    %v1903 = vunpack.c.l.b16 %v1297
    %v1904 = vunpack.c.h.b16 %v1297
    %v1905 = vunpack.c.l.b16 %v1298
    %v1906 = vunpack.c.h.b16 %v1298
    %v1907 = vunpack.c.l.b16 %v1299
    %v1908 = vunpack.c.h.b16 %v1299
    %v1909 = vunpack.c.l.b16 %v1300
    %v1910 = vunpack.c.h.b16 %v1300
    %v1911 = vunpack.c.l.b16 %v1301
    %v1912 = vunpack.c.h.b16 %v1301
    %v1913 = vunpack.c.l.b16 %v1302
    %v1914 = vunpack.c.h.b16 %v1302
    %v1915 = vunpack.c.l.b16 %v1303
    %v1916 = vunpack.c.h.b16 %v1303
    %v1917 = vunpack.c.l.b16 %v1304
    %v1918 = vunpack.c.h.b16 %v1304
    %v1919 = vunpack.c.l.b16 %v1305
    %v1920 = vunpack.c.h.b16 %v1305
    %v1921 = vunpack.c.l.b16 %v1306
    %v1922 = vunpack.c.h.b16 %v1306
    %v1923 = vunpack.c.l.b16 %v1307
    %v1924 = vunpack.c.h.b16 %v1307
    %v1925 = vunpack.c.l.b16 %v1308
    %v1926 = vunpack.c.h.b16 %v1308
    %v1927 = vunpack.c.l.b16 %v1309
    %v1928 = vunpack.c.h.b16 %v1309
    %v1929 = vunpack.c.l.b16 %v1310
    %v1930 = vunpack.c.h.b16 %v1310
    %v1931 = vunpack.c.l.b16 %v1311
    %v1932 = vunpack.c.h.b16 %v1311
    %v1933 = vunpack.c.l.b16 %v1312
    %v1934 = vunpack.c.h.b16 %v1312
    %v1935 = vunpack.c.l.b16 %v1313
    %v1936 = vunpack.c.h.b16 %v1313
    %v1937 = vunpack.c.l.b16 %v1314
    %v1938 = vunpack.c.h.b16 %v1314
    %v1939 = vunpack.c.l.b16 %v1315
    %v1940 = vunpack.c.h.b16 %v1315
    %v1941 = vunpack.c.l.b16 %v1316
    %v1942 = vunpack.c.h.b16 %v1316
    %v1943 = vunpack.c.l.b16 %v1317
    %v1944 = vunpack.c.h.b16 %v1317
    %v1945 = vunpack.c.l.b16 %v1318
    %v1946 = vunpack.c.h.b16 %v1318
    %v1947 = vunpack.c.l.b16 %v1319
    %v1948 = vunpack.c.h.b16 %v1319
    %v1949 = vunpack.c.l.b16 %v1320
    %v1950 = vunpack.c.h.b16 %v1320
    %v1951 = vunpack.c.l.b16 %v1321
    %v1952 = vunpack.c.h.b16 %v1321
    %v1953 = vunpack.c.l.b16 %v1322
    %v1954 = vunpack.c.h.b16 %v1322
    %v1955 = vunpack.c.l.b16 %v1323
    %v1956 = vunpack.c.h.b16 %v1323
    %v1957 = vunpack.c.l.b16 %v1324
    %v1958 = vunpack.c.h.b16 %v1324
    %v1959 = vunpack.c.l.b16 %v1325
    %v1960 = vunpack.c.h.b16 %v1325
    %v1961 = vunpack.c.l.b16 %v1326
    %v1962 = vunpack.c.h.b16 %v1326
    %v1963 = vunpack.c.l.b16 %v1327
    %v1964 = vunpack.c.h.b16 %v1327
    %v1965 = vunpack.c.l.b16 %v1328
    %v1966 = vunpack.c.h.b16 %v1328
    %v1967 = vunpack.c.l.b16 %v1329
    %v1968 = vunpack.c.h.b16 %v1329
    %v1969 = vunpack.c.l.b16 %v1330
    %v1970 = vunpack.c.h.b16 %v1330
    %v1971 = vunpack.c.l.b16 %v1331
    %v1972 = vunpack.c.h.b16 %v1331
    %v1973 = vunpack.c.l.b16 %v1332
    %v1974 = vunpack.c.h.b16 %v1332
    %v1975 = vunpack.c.l.b16 %v1333
    %v1976 = vunpack.c.h.b16 %v1333
    %v1977 = vunpack.c.l.b16 %v1334
    %v1978 = vunpack.c.h.b16 %v1334
    %v1979 = vunpack.c.l.b16 %v1335
    %v1980 = vunpack.c.h.b16 %v1335
    %v1981 = vunpack.c.l.b16 %v1336
    %v1982 = vunpack.c.h.b16 %v1336
    %v1983 = vunpack.c.l.b16 %v1337
    %v1984 = vunpack.c.h.b16 %v1337
    %v1985 = vunpack.c.l.b16 %v1338
    %v1986 = vunpack.c.h.b16 %v1338
    %v1987 = vunpack.c.l.b16 %v1339
    %v1988 = vunpack.c.h.b16 %v1339
    %v1989 = vunpack.c.l.b16 %v1340
    %v1990 = vunpack.c.h.b16 %v1340
    %v1991 = vunpack.c.l.b16 %v1341
    %v1992 = vunpack.c.h.b16 %v1341
    %v1993 = vunpack.c.l.b16 %v1342
    %v1994 = vunpack.c.h.b16 %v1342
    %v1995 = vunpack.c.l.b16 %v1343
    %v1996 = vunpack.c.h.b16 %v1343
    %v1997 = vunpack.c.l.b16 %v1344
    %v1998 = vunpack.c.h.b16 %v1344
    %v1999 = vunpack.c.l.b16 %v1345
    %v2000 = vunpack.c.h.b16 %v1345
    %v2001 = vunpack.c.l.b16 %v1346
    %v2002 = vunpack.c.h.b16 %v1346
    %v2003 = vunpack.c.l.b16 %v1347
    %v2004 = vunpack.c.h.b16 %v1347
    %v2005 = vunpack.c.l.b16 %v1348
    %v2006 = vunpack.c.h.b16 %v1348
    %v2007 = vunpack.c.l.b16 %v1349
    %v2008 = vunpack.c.h.b16 %v1349
    %v2009 = vunpack.c.l.b16 %v1350
    %v2010 = vunpack.c.h.b16 %v1350
    %v2011 = vunpack.c.l.b16 %v1351
    %v2012 = vunpack.c.h.b16 %v1351
    %v2013 = vunpack.c.l.b16 %v1352
    %v2014 = vunpack.c.h.b16 %v1352
    %v2015 = vunpack.c.l.b16 %v1353
    %v2016 = vunpack.c.h.b16 %v1353
    %v2017 = vunpack.c.l.b16 %v1354
    %v2018 = vunpack.c.h.b16 %v1354
    %v2019 = vunpack.c.l.b16 %v1355
    %v2020 = vunpack.c.h.b16 %v1355
    %v2021 = vunpack.c.l.b16 %v1356
    %v2022 = vunpack.c.h.b16 %v1356
    %v2023 = vunpack.c.l.b16 %v1357
    %v2024 = vunpack.c.h.b16 %v1357
    %v2025 = vunpack.c.l.b16 %v1358
    %v2026 = vunpack.c.h.b16 %v1358
    %v2027 = vunpack.c.l.b16 %v1359
    %v2028 = vunpack.c.h.b16 %v1359
    %v2029 = vunpack.c.l.b16 %v1360
    %v2030 = vunpack.c.h.b16 %v1360
    %v2031 = vunpack.c.l.b16 %v1361
    %v2032 = vunpack.c.h.b16 %v1361
    %v2033 = vunpack.c.l.b16 %v1362
    %v2034 = vunpack.c.h.b16 %v1362
    %v2035 = vunpack.c.l.b16 %v1363
    %v2036 = vunpack.c.h.b16 %v1363
    %v2037 = vunpack.c.l.b16 %v1364
    %v2038 = vunpack.c.h.b16 %v1364
    %v2039 = vunpack.c.l.b16 %v1365
    %v2040 = vunpack.c.h.b16 %v1365
    %v2041 = vunpack.c.l.b16 %v1366
    %v2042 = vunpack.c.h.b16 %v1366
    %v2043 = vunpack.c.l.b16 %v1367
    %v2044 = vunpack.c.h.b16 %v1367
    %v2045 = vunpack.c.l.b16 %v1368
    %v2046 = vunpack.c.h.b16 %v1368
    %v2047 = vunpack.c.l.b16 %v1369
    %v2048 = vunpack.c.h.b16 %v1369
    %v2049 = vunpack.c.l.b16 %v1370
    %v2050 = vunpack.c.h.b16 %v1370
    %v2051 = vunpack.c.l.b16 %v1371
    %v2052 = vunpack.c.h.b16 %v1371
    %v2053 = vunpack.c.l.b16 %v1372
    %v2054 = vunpack.c.h.b16 %v1372
    %v2055 = vunpack.c.l.b16 %v1373
    %v2056 = vunpack.c.h.b16 %v1373
    %v2057 = vunpack.c.l.b16 %v1374
    %v2058 = vunpack.c.h.b16 %v1374
    %v2059 = vunpack.c.l.b16 %v1375
    %v2060 = vunpack.c.h.b16 %v1375
    %v2061 = vunpack.c.l.b16 %v1376
    %v2062 = vunpack.c.h.b16 %v1376
    %v2063 = vunpack.c.l.b16 %v1377
    %v2064 = vunpack.c.h.b16 %v1377
    %v2065 = vunpack.c.l.b16 %v1378
    %v2066 = vunpack.c.h.b16 %v1378
    %v2067 = vunpack.c.l.b16 %v1379
    %v2068 = vunpack.c.h.b16 %v1379
    %v2069 = vunpack.c.l.b16 %v1380
    %v2070 = vunpack.c.h.b16 %v1380
    %v2071 = vunpack.c.l.b16 %v1381
    %v2072 = vunpack.c.h.b16 %v1381
    %v2073 = vunpack.c.l.b16 %v1382
    %v2074 = vunpack.c.h.b16 %v1382
    %v2075 = vunpack.c.l.b16 %v1383
    %v2076 = vunpack.c.h.b16 %v1383
    %v2077 = vunpack.c.l.b16 %v1384
    %v2078 = vunpack.c.h.b16 %v1384
    %v2079 = vunpack.c.l.b16 %v1385
    %v2080 = vunpack.c.h.b16 %v1385
    %v2081 = vunpack.c.l.b16 %v1386
    %v2082 = vunpack.c.h.b16 %v1386
    %v2083 = vunpack.c.l.b16 %v1387
    %v2084 = vunpack.c.h.b16 %v1387
    %v2085 = vunpack.c.l.b16 %v1388
    %v2086 = vunpack.c.h.b16 %v1388
    %v2087 = vunpack.c.l.b16 %v1389
    %v2088 = vunpack.c.h.b16 %v1389
    %v2089 = vunpack.c.l.b16 %v1390
    %v2090 = vunpack.c.h.b16 %v1390
    %v2091 = vunpack.c.l.b16 %v1391
    %v2092 = vunpack.c.h.b16 %v1391
    %v2093 = vunpack.c.l.b16 %v1392
    %v2094 = vunpack.c.h.b16 %v1392
    %v2095 = vunpack.c.l.b16 %v1393
    %v2096 = vunpack.c.h.b16 %v1393
    %v2097 = vunpack.c.l.b16 %v1394
    %v2098 = vunpack.c.h.b16 %v1394
    %v2099 = vunpack.c.l.b16 %v1395
    %v2100 = vunpack.c.h.b16 %v1395
    %v2101 = vunpack.c.l.b16 %v1396
    %v2102 = vunpack.c.h.b16 %v1396
    %v2103 = vunpack.c.l.b16 %v1397
    %v2104 = vunpack.c.h.b16 %v1397
    %v2105 = vunpack.c.l.b16 %v1398
    %v2106 = vunpack.c.h.b16 %v1398
    %v2107 = vunpack.c.l.b16 %v1399
    %v2108 = vunpack.c.h.b16 %v1399
    %v2109 = vunpack.c.l.b16 %v1400
    %v2110 = vunpack.c.h.b16 %v1400
    %v2111 = vunpack.c.l.b16 %v1401
    %v2112 = vunpack.c.h.b16 %v1401
    %v2113 = vunpack.c.l.b16 %v1402
    %v2114 = vunpack.c.h.b16 %v1402
    %v2115 = vunpack.c.l.b16 %v1403
    %v2116 = vunpack.c.h.b16 %v1403
    %v2117 = vunpack.c.l.b16 %v1404
    %v2118 = vunpack.c.h.b16 %v1404
    %v2119 = vunpack.c.l.b16 %v1405
    %v2120 = vunpack.c.h.b16 %v1405
    %v2121 = vunpack.c.l.b16 %v1406
    %v2122 = vunpack.c.h.b16 %v1406
    %v2123 = vunpack.c.l.b16 %v1407
    %v2124 = vunpack.c.h.b16 %v1407
    %v2125 = vunpack.c.l.b16 %v1408
    %v2126 = vunpack.c.h.b16 %v1408
    %v2127 = vunpack.c.l.b16 %v1409
    %v2128 = vunpack.c.h.b16 %v1409
    %v2129 = vunpack.c.l.b16 %v1410
    %v2130 = vunpack.c.h.b16 %v1410
    %v2131 = vunpack.c.l.b16 %v1411
    %v2132 = vunpack.c.h.b16 %v1411
    %v2133 = vunpack.c.l.b16 %v1412
    %v2134 = vunpack.c.h.b16 %v1412
    %v2135 = vunpack.c.l.b16 %v1413
    %v2136 = vunpack.c.h.b16 %v1413
    %v2137 = vunpack.c.l.b16 %v1414
    %v2138 = vunpack.c.h.b16 %v1414
    %v2139 = vunpack.c.l.b16 %v1415
    %v2140 = vunpack.c.h.b16 %v1415
    %v2141 = vunpack.c.l.b16 %v1416
    %v2142 = vunpack.c.h.b16 %v1416
    %v2143 = vunpack.c.l.b16 %v1417
    %v2144 = vunpack.c.h.b16 %v1417
    %v2145 = vunpack.c.l.b16 %v1418
    %v2146 = vunpack.c.h.b16 %v1418
    %v2147 = vunpack.c.l.b16 %v1419
    %v2148 = vunpack.c.h.b16 %v1419
    %v2149 = vunpack.c.l.b16 %v1420
    %v2150 = vunpack.c.h.b16 %v1420
    %v2151 = vunpack.c.l.b16 %v1421
    %v2152 = vunpack.c.h.b16 %v1421
    %v2153 = vunpack.c.l.b16 %v1422
    %v2154 = vunpack.c.h.b16 %v1422
    %v2155 = vunpack.c.l.b16 %v1423
    %v2156 = vunpack.c.h.b16 %v1423
    %v2157 = vunpack.c.l.b16 %v1424
    %v2158 = vunpack.c.h.b16 %v1424
    %v2159 = vunpack.c.l.b16 %v1425
    %v2160 = vunpack.c.h.b16 %v1425
    %v2161 = vunpack.c.l.b16 %v1426
    %v2162 = vunpack.c.h.b16 %v1426
    %v2163 = vunpack.c.l.b16 %v1427
    %v2164 = vunpack.c.h.b16 %v1427
    %v2165 = vunpack.c.l.b16 %v1428
    %v2166 = vunpack.c.h.b16 %v1428
    %v2167 = vunpack.c.l.b16 %v1429
    %v2168 = vunpack.c.h.b16 %v1429
    %v2169 = vunpack.c.l.b16 %v1430
    %v2170 = vunpack.c.h.b16 %v1430
    %v2171 = vunpack.c.l.b16 %v1431
    %v2172 = vunpack.c.h.b16 %v1431
    %v2173 = vunpack.c.l.b16 %v1432
    %v2174 = vunpack.c.h.b16 %v1432
    %v2175 = vunpack.c.l.b16 %v1433
    %v2176 = vunpack.c.h.b16 %v1433
    %v2177 = vunpack.c.l.b16 %v1434
    %v2178 = vunpack.c.h.b16 %v1434
    %v2179 = vunpack.c.l.b16 %v1435
    %v2180 = vunpack.c.h.b16 %v1435
    %v2181 = vunpack.c.l.b16 %v1436
    %v2182 = vunpack.c.h.b16 %v1436
    %v2183 = vunpack.c.l.b16 %v1437
    %v2184 = vunpack.c.h.b16 %v1437
    %v2185 = vunpack.c.l.b16 %v1438
    %v2186 = vunpack.c.h.b16 %v1438
    %v2187 = vunpack.c.l.b16 %v1439
    %v2188 = vunpack.c.h.b16 %v1439
    %v2189 = vunpack.c.l.b16 %v1440
    %v2190 = vunpack.c.h.b16 %v1440
    %v2191 = vunpack.c.l.b16 %v1441
    %v2192 = vunpack.c.h.b16 %v1441
    %v2193 = vunpack.c.l.b16 %v1442
    %v2194 = vunpack.c.h.b16 %v1442
    %v2195 = vunpack.c.l.b16 %v1443
    %v2196 = vunpack.c.h.b16 %v1443
    %v2197 = vunpack.c.l.b16 %v1444
    %v2198 = vunpack.c.h.b16 %v1444
    %v2199 = vunpack.c.l.b16 %v1445
    %v2200 = vunpack.c.h.b16 %v1445
    %v2201 = vunpack.c.l.b16 %v1446
    %v2202 = vunpack.c.h.b16 %v1446
    %v2203 = vunpack.c.l.b16 %v1447
    %v2204 = vunpack.c.h.b16 %v1447
    %v2205 = vunpack.c.l.b16 %v1448
    %v2206 = vunpack.c.h.b16 %v1448
    %v2207 = vunpack.c.l.b16 %v1449
    %v2208 = vunpack.c.h.b16 %v1449
    %v2209 = vunpack.c.l.b16 %v1450
    %v2210 = vunpack.c.h.b16 %v1450
    %v2211 = vunpack.c.l.b16 %v1451
    %v2212 = vunpack.c.h.b16 %v1451
    %v2213 = vunpack.c.l.b16 %v1452
    %v2214 = vunpack.c.h.b16 %v1452
    %v2215 = vunpack.c.l.b16 %v1453
    %v2216 = vunpack.c.h.b16 %v1453
    %v2217 = vunpack.c.l.b16 %v1454
    %v2218 = vunpack.c.h.b16 %v1454
    %v2219 = vunpack.c.l.b16 %v1455
    %v2220 = vunpack.c.h.b16 %v1455
    %v2221 = vunpack.c.l.b16 %v1456
    %v2222 = vunpack.c.h.b16 %v1456
    %v2223 = vunpack.c.l.b16 %v1457
    %v2224 = vunpack.c.h.b16 %v1457
    %v2225 = vunpack.c.l.b16 %v1458
    %v2226 = vunpack.c.h.b16 %v1458
    %v2227 = vunpack.c.l.b16 %v1459
    %v2228 = vunpack.c.h.b16 %v1459
    %v2229 = vunpack.c.l.b16 %v1460
    %v2230 = vunpack.c.h.b16 %v1460
    %v2231 = vunpack.c.l.b16 %v1461
    %v2232 = vunpack.c.h.b16 %v1461
    %v2233 = vunpack.c.l.b16 %v1462
    %v2234 = vunpack.c.h.b16 %v1462
    %v2235 = vunpack.c.l.b16 %v1463
    %v2236 = vunpack.c.h.b16 %v1463
    %v2237 = vunpack.c.l.b16 %v1464
    %v2238 = vunpack.c.h.b16 %v1464
    %v2239 = vunpack.c.l.b16 %v1465
    %v2240 = vunpack.c.h.b16 %v1465
    %v2241 = vunpack.c.l.b16 %v1466
    %v2242 = vunpack.c.h.b16 %v1466
    %v2243 = vunpack.c.l.b16 %v1467
    %v2244 = vunpack.c.h.b16 %v1467
    %v2245 = vunpack.c.l.b16 %v1468
    %v2246 = vunpack.c.h.b16 %v1468
    %v2247 = vunpack.c.l.b16 %v1469
    %v2248 = vunpack.c.h.b16 %v1469
    %v2249 = vunpack.c.l.b16 %v1470
    %v2250 = vunpack.c.h.b16 %v1470
    %v2251 = vunpack.c.l.b16 %v1471
    %v2252 = vunpack.c.h.b16 %v1471
    %v2253 = vunpack.c.l.b16 %v1472
    %v2254 = vunpack.c.h.b16 %v1472
    %v2255 = vunpack.c.l.b16 %v1473
    %v2256 = vunpack.c.h.b16 %v1473
    %v2257 = vunpack.c.l.b16 %v1474
    %v2258 = vunpack.c.h.b16 %v1474
    %v2259 = vunpack.c.l.b16 %v1475
    %v2260 = vunpack.c.h.b16 %v1475
    %v2261 = vunpack.c.l.b16 %v1476
    %v2262 = vunpack.c.h.b16 %v1476
    %v2263 = vpack.c.b16 %v1759, %v1751
    %v2264 = vpack.c.b16 %v1760, %v1752
    %v2265 = vpack.c.b16 %v1761, %v1753
    %v2266 = vpack.c.b16 %v1762, %v1754
    %v2267 = vpack.c.b16 %v1763, %v1755
    %v2268 = vpack.c.b16 %v1764, %v1756
    %v2269 = vpack.c.b16 %v1765, %v1757
    %v2270 = vpack.c.b16 %v1766, %v1758
    %v2271 = vpack.c.b16 %v1775, %v1767
    %v2272 = vpack.c.b16 %v1776, %v1768
    %v2273 = vpack.c.b16 %v1777, %v1769
    %v2274 = vpack.c.b16 %v1778, %v1770
    %v2275 = vpack.c.b16 %v1779, %v1771
    %v2276 = vpack.c.b16 %v1780, %v1772
    %v2277 = vpack.c.b16 %v1781, %v1773
    %v2278 = vpack.c.b16 %v1782, %v1774
    %v2279 = vpack.c.b16 %v1791, %v1783
    %v2280 = vpack.c.b16 %v1792, %v1784
    %v2281 = vpack.c.b16 %v1793, %v1785
    %v2282 = vpack.c.b16 %v1794, %v1786
    %v2283 = vpack.c.b16 %v1795, %v1787
    %v2284 = vpack.c.b16 %v1796, %v1788
    %v2285 = vpack.c.b16 %v1797, %v1789
    %v2286 = vpack.c.b16 %v1798, %v1790
    %v2287 = vpack.c.b16 %v1807, %v1799
    %v2288 = vpack.c.b16 %v1808, %v1800
    %v2289 = vpack.c.b16 %v1809, %v1801
    %v2290 = vpack.c.b16 %v1810, %v1802
    %v2291 = vpack.c.b16 %v1811, %v1803
    %v2292 = vpack.c.b16 %v1812, %v1804
    %v2293 = vpack.c.b16 %v1813, %v1805
    %v2294 = vpack.c.b16 %v1814, %v1806
    %v2295 = vpack.c.b16 %v1823, %v1815
    %v2296 = vpack.c.b16 %v1824, %v1816
    %v2297 = vpack.c.b16 %v1825, %v1817
    %v2298 = vpack.c.b16 %v1826, %v1818
    %v2299 = vpack.c.b16 %v1827, %v1819
    %v2300 = vpack.c.b16 %v1828, %v1820
    %v2301 = vpack.c.b16 %v1829, %v1821
    %v2302 = vpack.c.b16 %v1830, %v1822
    %v2303 = vpack.c.b16 %v1839, %v1831
    %v2304 = vpack.c.b16 %v1840, %v1832
    %v2305 = vpack.c.b16 %v1841, %v1833
    %v2306 = vpack.c.b16 %v1842, %v1834
    %v2307 = vpack.c.b16 %v1843, %v1835
    %v2308 = vpack.c.b16 %v1844, %v1836
    %v2309 = vpack.c.b16 %v1845, %v1837
    %v2310 = vpack.c.b16 %v1846, %v1838
    %v2311 = vpack.c.b16 %v1855, %v1847
    %v2312 = vpack.c.b16 %v1856, %v1848
    %v2313 = vpack.c.b16 %v1857, %v1849
    %v2314 = vpack.c.b16 %v1858, %v1850
    %v2315 = vpack.c.b16 %v1859, %v1851
    %v2316 = vpack.c.b16 %v1860, %v1852
    %v2317 = vpack.c.b16 %v1861, %v1853
    %v2318 = vpack.c.b16 %v1862, %v1854
    %v2319 = vpack.c.b16 %v1871, %v1863
    %v2320 = vpack.c.b16 %v1872, %v1864
    %v2321 = vpack.c.b16 %v1873, %v1865
    %v2322 = vpack.c.b16 %v1874, %v1866
    %v2323 = vpack.c.b16 %v1875, %v1867
    %v2324 = vpack.c.b16 %v1876, %v1868
    %v2325 = vpack.c.b16 %v1877, %v1869
    %v2326 = vpack.c.b16 %v1878, %v1870
    %v2327 = vpack.c.b16 %v1887, %v1879
    %v2328 = vpack.c.b16 %v1888, %v1880
    %v2329 = vpack.c.b16 %v1889, %v1881
    %v2330 = vpack.c.b16 %v1890, %v1882
    %v2331 = vpack.c.b16 %v1891, %v1883
    %v2332 = vpack.c.b16 %v1892, %v1884
    %v2333 = vpack.c.b16 %v1893, %v1885
    %v2334 = vpack.c.b16 %v1894, %v1886
    %v2335 = vpack.c.b16 %v1903, %v1895
    %v2336 = vpack.c.b16 %v1904, %v1896
    %v2337 = vpack.c.b16 %v1905, %v1897
    %v2338 = vpack.c.b16 %v1906, %v1898
    %v2339 = vpack.c.b16 %v1907, %v1899
    %v2340 = vpack.c.b16 %v1908, %v1900
    %v2341 = vpack.c.b16 %v1909, %v1901
    %v2342 = vpack.c.b16 %v1910, %v1902
    %v2343 = vpack.c.b16 %v1919, %v1911
    %v2344 = vpack.c.b16 %v1920, %v1912
    %v2345 = vpack.c.b16 %v1921, %v1913
    %v2346 = vpack.c.b16 %v1922, %v1914
    %v2347 = vpack.c.b16 %v1923, %v1915
    %v2348 = vpack.c.b16 %v1924, %v1916
    %v2349 = vpack.c.b16 %v1925, %v1917
    %v2350 = vpack.c.b16 %v1926, %v1918
    %v2351 = vpack.c.b16 %v1935, %v1927
    %v2352 = vpack.c.b16 %v1936, %v1928
    %v2353 = vpack.c.b16 %v1937, %v1929
    %v2354 = vpack.c.b16 %v1938, %v1930
    %v2355 = vpack.c.b16 %v1939, %v1931
    %v2356 = vpack.c.b16 %v1940, %v1932
    %v2357 = vpack.c.b16 %v1941, %v1933
    %v2358 = vpack.c.b16 %v1942, %v1934
    %v2359 = vpack.c.b16 %v1951, %v1943
    %v2360 = vpack.c.b16 %v1952, %v1944
    %v2361 = vpack.c.b16 %v1953, %v1945
    %v2362 = vpack.c.b16 %v1954, %v1946
    %v2363 = vpack.c.b16 %v1955, %v1947
    %v2364 = vpack.c.b16 %v1956, %v1948
    %v2365 = vpack.c.b16 %v1957, %v1949
    %v2366 = vpack.c.b16 %v1958, %v1950
    %v2367 = vpack.c.b16 %v1967, %v1959
    %v2368 = vpack.c.b16 %v1968, %v1960
    %v2369 = vpack.c.b16 %v1969, %v1961
    %v2370 = vpack.c.b16 %v1970, %v1962
    %v2371 = vpack.c.b16 %v1971, %v1963
    %v2372 = vpack.c.b16 %v1972, %v1964
    %v2373 = vpack.c.b16 %v1973, %v1965
    %v2374 = vpack.c.b16 %v1974, %v1966
    %v2375 = vpack.c.b16 %v1983, %v1975
    %v2376 = vpack.c.b16 %v1984, %v1976
    %v2377 = vpack.c.b16 %v1985, %v1977
    %v2378 = vpack.c.b16 %v1986, %v1978
    %v2379 = vpack.c.b16 %v1987, %v1979
    %v2380 = vpack.c.b16 %v1988, %v1980
    %v2381 = vpack.c.b16 %v1989, %v1981
    %v2382 = vpack.c.b16 %v1990, %v1982
    %v2383 = vpack.c.b16 %v1999, %v1991
    %v2384 = vpack.c.b16 %v2000, %v1992
    %v2385 = vpack.c.b16 %v2001, %v1993
    %v2386 = vpack.c.b16 %v2002, %v1994
    %v2387 = vpack.c.b16 %v2003, %v1995
    %v2388 = vpack.c.b16 %v2004, %v1996
    %v2389 = vpack.c.b16 %v2005, %v1997
    %v2390 = vpack.c.b16 %v2006, %v1998
    %v2391 = vpack.c.b16 %v2015, %v2007
    %v2392 = vpack.c.b16 %v2016, %v2008
    %v2393 = vpack.c.b16 %v2017, %v2009
    %v2394 = vpack.c.b16 %v2018, %v2010
    %v2395 = vpack.c.b16 %v2019, %v2011
    %v2396 = vpack.c.b16 %v2020, %v2012
    %v2397 = vpack.c.b16 %v2021, %v2013
    %v2398 = vpack.c.b16 %v2022, %v2014
    %v2399 = vpack.c.b16 %v2031, %v2023
    %v2400 = vpack.c.b16 %v2032, %v2024
    %v2401 = vpack.c.b16 %v2033, %v2025
    %v2402 = vpack.c.b16 %v2034, %v2026
    %v2403 = vpack.c.b16 %v2035, %v2027
    %v2404 = vpack.c.b16 %v2036, %v2028
    %v2405 = vpack.c.b16 %v2037, %v2029
    %v2406 = vpack.c.b16 %v2038, %v2030
    %v2407 = vpack.c.b16 %v2047, %v2039
    %v2408 = vpack.c.b16 %v2048, %v2040
    %v2409 = vpack.c.b16 %v2049, %v2041
    %v2410 = vpack.c.b16 %v2050, %v2042
    %v2411 = vpack.c.b16 %v2051, %v2043
    %v2412 = vpack.c.b16 %v2052, %v2044
    %v2413 = vpack.c.b16 %v2053, %v2045
    %v2414 = vpack.c.b16 %v2054, %v2046
    %v2415 = vpack.c.b16 %v2063, %v2055
    %v2416 = vpack.c.b16 %v2064, %v2056
    %v2417 = vpack.c.b16 %v2065, %v2057
    %v2418 = vpack.c.b16 %v2066, %v2058
    %v2419 = vpack.c.b16 %v2067, %v2059
    %v2420 = vpack.c.b16 %v2068, %v2060
    %v2421 = vpack.c.b16 %v2069, %v2061
    %v2422 = vpack.c.b16 %v2070, %v2062
    %v2423 = vpack.c.b16 %v2079, %v2071
    %v2424 = vpack.c.b16 %v2080, %v2072
    %v2425 = vpack.c.b16 %v2081, %v2073
    %v2426 = vpack.c.b16 %v2082, %v2074
    %v2427 = vpack.c.b16 %v2083, %v2075
    %v2428 = vpack.c.b16 %v2084, %v2076
    %v2429 = vpack.c.b16 %v2085, %v2077
    %v2430 = vpack.c.b16 %v2086, %v2078
    %v2431 = vpack.c.b16 %v2095, %v2087
    %v2432 = vpack.c.b16 %v2096, %v2088
    %v2433 = vpack.c.b16 %v2097, %v2089
    %v2434 = vpack.c.b16 %v2098, %v2090
    %v2435 = vpack.c.b16 %v2099, %v2091
    %v2436 = vpack.c.b16 %v2100, %v2092
    %v2437 = vpack.c.b16 %v2101, %v2093
    %v2438 = vpack.c.b16 %v2102, %v2094
    %v2439 = vpack.c.b16 %v2111, %v2103
    %v2440 = vpack.c.b16 %v2112, %v2104
    %v2441 = vpack.c.b16 %v2113, %v2105
    %v2442 = vpack.c.b16 %v2114, %v2106
    %v2443 = vpack.c.b16 %v2115, %v2107
    %v2444 = vpack.c.b16 %v2116, %v2108
    %v2445 = vpack.c.b16 %v2117, %v2109
    %v2446 = vpack.c.b16 %v2118, %v2110
    %v2447 = vpack.c.b16 %v2127, %v2119
    %v2448 = vpack.c.b16 %v2128, %v2120
    %v2449 = vpack.c.b16 %v2129, %v2121
    %v2450 = vpack.c.b16 %v2130, %v2122
    %v2451 = vpack.c.b16 %v2131, %v2123
    %v2452 = vpack.c.b16 %v2132, %v2124
    %v2453 = vpack.c.b16 %v2133, %v2125
    %v2454 = vpack.c.b16 %v2134, %v2126
    %v2455 = vpack.c.b16 %v2143, %v2135
    %v2456 = vpack.c.b16 %v2144, %v2136
    %v2457 = vpack.c.b16 %v2145, %v2137
    %v2458 = vpack.c.b16 %v2146, %v2138
    %v2459 = vpack.c.b16 %v2147, %v2139
    %v2460 = vpack.c.b16 %v2148, %v2140
    %v2461 = vpack.c.b16 %v2149, %v2141
    %v2462 = vpack.c.b16 %v2150, %v2142
    %v2463 = vpack.c.b16 %v2159, %v2151
    %v2464 = vpack.c.b16 %v2160, %v2152
    %v2465 = vpack.c.b16 %v2161, %v2153
    %v2466 = vpack.c.b16 %v2162, %v2154
    %v2467 = vpack.c.b16 %v2163, %v2155
    %v2468 = vpack.c.b16 %v2164, %v2156
    %v2469 = vpack.c.b16 %v2165, %v2157
    %v2470 = vpack.c.b16 %v2166, %v2158
    %v2471 = vpack.c.b16 %v2175, %v2167
    %v2472 = vpack.c.b16 %v2176, %v2168
    %v2473 = vpack.c.b16 %v2177, %v2169
    %v2474 = vpack.c.b16 %v2178, %v2170
    %v2475 = vpack.c.b16 %v2179, %v2171
    %v2476 = vpack.c.b16 %v2180, %v2172
    %v2477 = vpack.c.b16 %v2181, %v2173
    %v2478 = vpack.c.b16 %v2182, %v2174
    %v2479 = vpack.c.b16 %v2191, %v2183
    %v2480 = vpack.c.b16 %v2192, %v2184
    %v2481 = vpack.c.b16 %v2193, %v2185
    %v2482 = vpack.c.b16 %v2194, %v2186
    %v2483 = vpack.c.b16 %v2195, %v2187
    %v2484 = vpack.c.b16 %v2196, %v2188
    %v2485 = vpack.c.b16 %v2197, %v2189
    %v2486 = vpack.c.b16 %v2198, %v2190
    %v2487 = vpack.c.b16 %v2207, %v2199
    %v2488 = vpack.c.b16 %v2208, %v2200
    %v2489 = vpack.c.b16 %v2209, %v2201
    %v2490 = vpack.c.b16 %v2210, %v2202
    %v2491 = vpack.c.b16 %v2211, %v2203
    %v2492 = vpack.c.b16 %v2212, %v2204
    %v2493 = vpack.c.b16 %v2213, %v2205
    %v2494 = vpack.c.b16 %v2214, %v2206
    %v2495 = vpack.c.b16 %v2223, %v2215
    %v2496 = vpack.c.b16 %v2224, %v2216
    %v2497 = vpack.c.b16 %v2225, %v2217
    %v2498 = vpack.c.b16 %v2226, %v2218
    %v2499 = vpack.c.b16 %v2227, %v2219
    %v2500 = vpack.c.b16 %v2228, %v2220
    %v2501 = vpack.c.b16 %v2229, %v2221
    %v2502 = vpack.c.b16 %v2230, %v2222
    %v2503 = vpack.c.b16 %v2239, %v2231
    %v2504 = vpack.c.b16 %v2240, %v2232
    %v2505 = vpack.c.b16 %v2241, %v2233
    %v2506 = vpack.c.b16 %v2242, %v2234
    %v2507 = vpack.c.b16 %v2243, %v2235
    %v2508 = vpack.c.b16 %v2244, %v2236
    %v2509 = vpack.c.b16 %v2245, %v2237
    %v2510 = vpack.c.b16 %v2246, %v2238
    %v2511 = vpack.c.b16 %v2255, %v2247
    %v2512 = vpack.c.b16 %v2256, %v2248
    %v2513 = vpack.c.b16 %v2257, %v2249
    %v2514 = vpack.c.b16 %v2258, %v2250
    %v2515 = vpack.c.b16 %v2259, %v2251
    %v2516 = vpack.c.b16 %v2260, %v2252
    %v2517 = vpack.c.b16 %v2261, %v2253
    %v2518 = vpack.c.b16 %v2262, %v2254
    %2775 = vmatpush.bf16.msra.mxu0 %v2319
    %2776 = vmatpush.bf16.msra.mxu0 %v2311
    %2777 = vmatpush.bf16.msra.mxu0 %v2303
    %2778 = vmatpush.bf16.msra.mxu0 %v2295
    %2779 = vmatpush.bf16.msra.mxu0 %v2287
    %2780 = vmatpush.bf16.msra.mxu0 %v2279
    %2781 = vmatpush.bf16.msra.mxu0 %v2271
    %2782 = vmatpush.bf16.msra.mxu0 %v2263
    %2783 = vmatmul.bf16.gmra.mxu0 %v1217
    %v2784 = vpop.f32.mrf.mxu0
    %v2785 = vadd.f32 %v1479, %v2784
    %v2786 = vpop.f32.mrf.mxu0
    %2787 = vdwg.mxu0
    %2788 = vmatpush.bf16.msra.mxu0 %v2383
    %2789 = vmatpush.bf16.msra.mxu0 %v2375
    %2790 = vmatpush.bf16.msra.mxu0 %v2367
    %2791 = vmatpush.bf16.msra.mxu0 %v2359
    %2792 = vmatpush.bf16.msra.mxu0 %v2351
    %2793 = vmatpush.bf16.msra.mxu0 %v2343
    %2794 = vmatpush.bf16.msra.mxu0 %v2335
    %2795 = vmatpush.bf16.msra.mxu0 %v2327
    %2796 = vmatmul.bf16.gmra.mxu0 %v1218
    %v2797 = vpop.f32.mrf.mxu0
    %v2798 = vadd.f32 %v2785, %v2797
    %v2799 = vpop.f32.mrf.mxu0
    %2800 = vdwg.mxu0
    %2801 = vmatpush.bf16.msra.mxu0 %v2447
    %2802 = vmatpush.bf16.msra.mxu0 %v2439
    %2803 = vmatpush.bf16.msra.mxu0 %v2431
    %2804 = vmatpush.bf16.msra.mxu0 %v2423
    %2805 = vmatpush.bf16.msra.mxu0 %v2415
    %2806 = vmatpush.bf16.msra.mxu0 %v2407
    %2807 = vmatpush.bf16.msra.mxu0 %v2399
    %2808 = vmatpush.bf16.msra.mxu0 %v2391
    %2809 = vmatmul.bf16.gmra.mxu0 %v1219
    %v2810 = vpop.f32.mrf.mxu0
    %v2811 = vadd.f32 %v2798, %v2810
    %v2812 = vpop.f32.mrf.mxu0
    %2813 = vdwg.mxu0
    %2814 = vmatpush.bf16.msra.mxu0 %v2511
    %2815 = vmatpush.bf16.msra.mxu0 %v2503
    %2816 = vmatpush.bf16.msra.mxu0 %v2495
    %2817 = vmatpush.bf16.msra.mxu0 %v2487
    %2818 = vmatpush.bf16.msra.mxu0 %v2479
    %2819 = vmatpush.bf16.msra.mxu0 %v2471
    %2820 = vmatpush.bf16.msra.mxu0 %v2463
    %2821 = vmatpush.bf16.msra.mxu0 %v2455
    %2822 = vmatmul.bf16.gmra.mxu0 %v1220
    %v2823 = vpop.f32.mrf.mxu0
    %v2824 = vadd.f32 %v2811, %v2823
    %v2825 = vpop.f32.mrf.mxu0
    %2826 = vdwg.mxu0
    %2827 = vmatpush.bf16.msra.mxu0 %v2320
    %2828 = vmatpush.bf16.msra.mxu0 %v2312
    %2829 = vmatpush.bf16.msra.mxu0 %v2304
    %2830 = vmatpush.bf16.msra.mxu0 %v2296
    %2831 = vmatpush.bf16.msra.mxu0 %v2288
    %2832 = vmatpush.bf16.msra.mxu0 %v2280
    %2833 = vmatpush.bf16.msra.mxu0 %v2272
    %2834 = vmatpush.bf16.msra.mxu0 %v2264
    %2835 = vmatmul.bf16.gmra.mxu0 %v1217
    %v2836 = vpop.f32.mrf.mxu0
    %v2837 = vadd.f32 %v1480, %v2836
    %v2838 = vpop.f32.mrf.mxu0
    %2839 = vdwg.mxu0
    %2840 = vmatpush.bf16.msra.mxu0 %v2384
    %2841 = vmatpush.bf16.msra.mxu0 %v2376
    %2842 = vmatpush.bf16.msra.mxu0 %v2368
    %2843 = vmatpush.bf16.msra.mxu0 %v2360
    %2844 = vmatpush.bf16.msra.mxu0 %v2352
    %2845 = vmatpush.bf16.msra.mxu0 %v2344
    %2846 = vmatpush.bf16.msra.mxu0 %v2336
    %2847 = vmatpush.bf16.msra.mxu0 %v2328
    %2848 = vmatmul.bf16.gmra.mxu0 %v1218
    %v2849 = vpop.f32.mrf.mxu0
    %v2850 = vadd.f32 %v2837, %v2849
    %v2851 = vpop.f32.mrf.mxu0
    %2852 = vdwg.mxu0
    %2853 = vmatpush.bf16.msra.mxu0 %v2448
    %2854 = vmatpush.bf16.msra.mxu0 %v2440
    %2855 = vmatpush.bf16.msra.mxu0 %v2432
    %2856 = vmatpush.bf16.msra.mxu0 %v2424
    %2857 = vmatpush.bf16.msra.mxu0 %v2416
    %2858 = vmatpush.bf16.msra.mxu0 %v2408
    %2859 = vmatpush.bf16.msra.mxu0 %v2400
    %2860 = vmatpush.bf16.msra.mxu0 %v2392
    %2861 = vmatmul.bf16.gmra.mxu0 %v1219
    %v2862 = vpop.f32.mrf.mxu0
    %v2863 = vadd.f32 %v2850, %v2862
    %v2864 = vpop.f32.mrf.mxu0
    %2865 = vdwg.mxu0
    %2866 = vmatpush.bf16.msra.mxu0 %v2512
    %2867 = vmatpush.bf16.msra.mxu0 %v2504
    %2868 = vmatpush.bf16.msra.mxu0 %v2496
    %2869 = vmatpush.bf16.msra.mxu0 %v2488
    %2870 = vmatpush.bf16.msra.mxu0 %v2480
    %2871 = vmatpush.bf16.msra.mxu0 %v2472
    %2872 = vmatpush.bf16.msra.mxu0 %v2464
    %2873 = vmatpush.bf16.msra.mxu0 %v2456
    %2874 = vmatmul.bf16.gmra.mxu0 %v1220
    %v2875 = vpop.f32.mrf.mxu0
    %v2876 = vadd.f32 %v2863, %v2875
    %v2877 = vpop.f32.mrf.mxu0
    %2878 = vdwg.mxu0
    %2879 = vmatpush.bf16.msra.mxu0 %v2321
    %2880 = vmatpush.bf16.msra.mxu0 %v2313
    %2881 = vmatpush.bf16.msra.mxu0 %v2305
    %2882 = vmatpush.bf16.msra.mxu0 %v2297
    %2883 = vmatpush.bf16.msra.mxu0 %v2289
    %2884 = vmatpush.bf16.msra.mxu0 %v2281
    %2885 = vmatpush.bf16.msra.mxu0 %v2273
    %2886 = vmatpush.bf16.msra.mxu0 %v2265
    %2887 = vmatmul.bf16.gmra.mxu0 %v1217
    %v2888 = vpop.f32.mrf.mxu0
    %v2889 = vadd.f32 %v1481, %v2888
    %v2890 = vpop.f32.mrf.mxu0
    %2891 = vdwg.mxu0
    %2892 = vmatpush.bf16.msra.mxu0 %v2385
    %2893 = vmatpush.bf16.msra.mxu0 %v2377
    %2894 = vmatpush.bf16.msra.mxu0 %v2369
    %2895 = vmatpush.bf16.msra.mxu0 %v2361
    %2896 = vmatpush.bf16.msra.mxu0 %v2353
    %2897 = vmatpush.bf16.msra.mxu0 %v2345
    %2898 = vmatpush.bf16.msra.mxu0 %v2337
    %2899 = vmatpush.bf16.msra.mxu0 %v2329
    %2900 = vmatmul.bf16.gmra.mxu0 %v1218
    %v2901 = vpop.f32.mrf.mxu0
    %v2902 = vadd.f32 %v2889, %v2901
    %v2903 = vpop.f32.mrf.mxu0
    %2904 = vdwg.mxu0
    %2905 = vmatpush.bf16.msra.mxu0 %v2449
    %2906 = vmatpush.bf16.msra.mxu0 %v2441
    %2907 = vmatpush.bf16.msra.mxu0 %v2433
    %2908 = vmatpush.bf16.msra.mxu0 %v2425
    %2909 = vmatpush.bf16.msra.mxu0 %v2417
    %2910 = vmatpush.bf16.msra.mxu0 %v2409
    %2911 = vmatpush.bf16.msra.mxu0 %v2401
    %2912 = vmatpush.bf16.msra.mxu0 %v2393
    %2913 = vmatmul.bf16.gmra.mxu0 %v1219
    %v2914 = vpop.f32.mrf.mxu0
    %v2915 = vadd.f32 %v2902, %v2914
    %v2916 = vpop.f32.mrf.mxu0
    %2917 = vdwg.mxu0
    %2918 = vmatpush.bf16.msra.mxu0 %v2513
    %2919 = vmatpush.bf16.msra.mxu0 %v2505
    %2920 = vmatpush.bf16.msra.mxu0 %v2497
    %2921 = vmatpush.bf16.msra.mxu0 %v2489
    %2922 = vmatpush.bf16.msra.mxu0 %v2481
    %2923 = vmatpush.bf16.msra.mxu0 %v2473
    %2924 = vmatpush.bf16.msra.mxu0 %v2465
    %2925 = vmatpush.bf16.msra.mxu0 %v2457
    %2926 = vmatmul.bf16.gmra.mxu0 %v1220
    %v2927 = vpop.f32.mrf.mxu0
    %v2928 = vadd.f32 %v2915, %v2927
    %v2929 = vpop.f32.mrf.mxu0
    %2930 = vdwg.mxu0
    %2931 = vmatpush.bf16.msra.mxu0 %v2322
    %2932 = vmatpush.bf16.msra.mxu0 %v2314
    %2933 = vmatpush.bf16.msra.mxu0 %v2306
    %2934 = vmatpush.bf16.msra.mxu0 %v2298
    %2935 = vmatpush.bf16.msra.mxu0 %v2290
    %2936 = vmatpush.bf16.msra.mxu0 %v2282
    %2937 = vmatpush.bf16.msra.mxu0 %v2274
    %2938 = vmatpush.bf16.msra.mxu0 %v2266
    %2939 = vmatmul.bf16.gmra.mxu0 %v1217
    %v2940 = vpop.f32.mrf.mxu0
    %v2941 = vadd.f32 %v1482, %v2940
    %v2942 = vpop.f32.mrf.mxu0
    %2943 = vdwg.mxu0
    %2944 = vmatpush.bf16.msra.mxu0 %v2386
    %2945 = vmatpush.bf16.msra.mxu0 %v2378
    %2946 = vmatpush.bf16.msra.mxu0 %v2370
    %2947 = vmatpush.bf16.msra.mxu0 %v2362
    %2948 = vmatpush.bf16.msra.mxu0 %v2354
    %2949 = vmatpush.bf16.msra.mxu0 %v2346
    %2950 = vmatpush.bf16.msra.mxu0 %v2338
    %2951 = vmatpush.bf16.msra.mxu0 %v2330
    %2952 = vmatmul.bf16.gmra.mxu0 %v1218
    %v2953 = vpop.f32.mrf.mxu0
    %v2954 = vadd.f32 %v2941, %v2953
    %v2955 = vpop.f32.mrf.mxu0
    %2956 = vdwg.mxu0
    %2957 = vmatpush.bf16.msra.mxu0 %v2450
    %2958 = vmatpush.bf16.msra.mxu0 %v2442
    %2959 = vmatpush.bf16.msra.mxu0 %v2434
    %2960 = vmatpush.bf16.msra.mxu0 %v2426
    %2961 = vmatpush.bf16.msra.mxu0 %v2418
    %2962 = vmatpush.bf16.msra.mxu0 %v2410
    %2963 = vmatpush.bf16.msra.mxu0 %v2402
    %2964 = vmatpush.bf16.msra.mxu0 %v2394
    %2965 = vmatmul.bf16.gmra.mxu0 %v1219
    %v2966 = vpop.f32.mrf.mxu0
    %v2967 = vadd.f32 %v2954, %v2966
    %v2968 = vpop.f32.mrf.mxu0
    %2969 = vdwg.mxu0
    %2970 = vmatpush.bf16.msra.mxu0 %v2514
    %2971 = vmatpush.bf16.msra.mxu0 %v2506
    %2972 = vmatpush.bf16.msra.mxu0 %v2498
    %2973 = vmatpush.bf16.msra.mxu0 %v2490
    %2974 = vmatpush.bf16.msra.mxu0 %v2482
    %2975 = vmatpush.bf16.msra.mxu0 %v2474
    %2976 = vmatpush.bf16.msra.mxu0 %v2466
    %2977 = vmatpush.bf16.msra.mxu0 %v2458
    %2978 = vmatmul.bf16.gmra.mxu0 %v1220
    %v2979 = vpop.f32.mrf.mxu0
    %v2980 = vadd.f32 %v2967, %v2979
    %v2981 = vpop.f32.mrf.mxu0
    %2982 = vdwg.mxu0
    %2983 = vmatpush.bf16.msra.mxu0 %v2323
    %2984 = vmatpush.bf16.msra.mxu0 %v2315
    %2985 = vmatpush.bf16.msra.mxu0 %v2307
    %2986 = vmatpush.bf16.msra.mxu0 %v2299
    %2987 = vmatpush.bf16.msra.mxu0 %v2291
    %2988 = vmatpush.bf16.msra.mxu0 %v2283
    %2989 = vmatpush.bf16.msra.mxu0 %v2275
    %2990 = vmatpush.bf16.msra.mxu0 %v2267
    %2991 = vmatmul.bf16.gmra.mxu0 %v1217
    %v2992 = vpop.f32.mrf.mxu0
    %v2993 = vadd.f32 %v1483, %v2992
    %v2994 = vpop.f32.mrf.mxu0
    %2995 = vdwg.mxu0
    %2996 = vmatpush.bf16.msra.mxu0 %v2387
    %2997 = vmatpush.bf16.msra.mxu0 %v2379
    %2998 = vmatpush.bf16.msra.mxu0 %v2371
    %2999 = vmatpush.bf16.msra.mxu0 %v2363
    %3000 = vmatpush.bf16.msra.mxu0 %v2355
    %3001 = vmatpush.bf16.msra.mxu0 %v2347
    %3002 = vmatpush.bf16.msra.mxu0 %v2339
    %3003 = vmatpush.bf16.msra.mxu0 %v2331
    %3004 = vmatmul.bf16.gmra.mxu0 %v1218
    %v3005 = vpop.f32.mrf.mxu0
    %v3006 = vadd.f32 %v2993, %v3005
    %v3007 = vpop.f32.mrf.mxu0
    %3008 = vdwg.mxu0
    %3009 = vmatpush.bf16.msra.mxu0 %v2451
    %3010 = vmatpush.bf16.msra.mxu0 %v2443
    %3011 = vmatpush.bf16.msra.mxu0 %v2435
    %3012 = vmatpush.bf16.msra.mxu0 %v2427
    %3013 = vmatpush.bf16.msra.mxu0 %v2419
    %3014 = vmatpush.bf16.msra.mxu0 %v2411
    %3015 = vmatpush.bf16.msra.mxu0 %v2403
    %3016 = vmatpush.bf16.msra.mxu0 %v2395
    %3017 = vmatmul.bf16.gmra.mxu0 %v1219
    %v3018 = vpop.f32.mrf.mxu0
    %v3019 = vadd.f32 %v3006, %v3018
    %v3020 = vpop.f32.mrf.mxu0
    %3021 = vdwg.mxu0
    %3022 = vmatpush.bf16.msra.mxu0 %v2515
    %3023 = vmatpush.bf16.msra.mxu0 %v2507
    %3024 = vmatpush.bf16.msra.mxu0 %v2499
    %3025 = vmatpush.bf16.msra.mxu0 %v2491
    %3026 = vmatpush.bf16.msra.mxu0 %v2483
    %3027 = vmatpush.bf16.msra.mxu0 %v2475
    %3028 = vmatpush.bf16.msra.mxu0 %v2467
    %3029 = vmatpush.bf16.msra.mxu0 %v2459
    %3030 = vmatmul.bf16.gmra.mxu0 %v1220
    %v3031 = vpop.f32.mrf.mxu0
    %v3032 = vadd.f32 %v3019, %v3031
    %v3033 = vpop.f32.mrf.mxu0
    %3034 = vdwg.mxu0
    %3035 = vmatpush.bf16.msra.mxu0 %v2324
    %3036 = vmatpush.bf16.msra.mxu0 %v2316
    %3037 = vmatpush.bf16.msra.mxu0 %v2308
    %3038 = vmatpush.bf16.msra.mxu0 %v2300
    %3039 = vmatpush.bf16.msra.mxu0 %v2292
    %3040 = vmatpush.bf16.msra.mxu0 %v2284
    %3041 = vmatpush.bf16.msra.mxu0 %v2276
    %3042 = vmatpush.bf16.msra.mxu0 %v2268
    %3043 = vmatmul.bf16.gmra.mxu0 %v1217
    %v3044 = vpop.f32.mrf.mxu0
    %v3045 = vadd.f32 %v1484, %v3044
    %v3046 = vpop.f32.mrf.mxu0
    %3047 = vdwg.mxu0
    %3048 = vmatpush.bf16.msra.mxu0 %v2388
    %3049 = vmatpush.bf16.msra.mxu0 %v2380
    %3050 = vmatpush.bf16.msra.mxu0 %v2372
    %3051 = vmatpush.bf16.msra.mxu0 %v2364
    %3052 = vmatpush.bf16.msra.mxu0 %v2356
    %3053 = vmatpush.bf16.msra.mxu0 %v2348
    %3054 = vmatpush.bf16.msra.mxu0 %v2340
    %3055 = vmatpush.bf16.msra.mxu0 %v2332
    %3056 = vmatmul.bf16.gmra.mxu0 %v1218
    %v3057 = vpop.f32.mrf.mxu0
    %v3058 = vadd.f32 %v3045, %v3057
    %v3059 = vpop.f32.mrf.mxu0
    %3060 = vdwg.mxu0
    %3061 = vmatpush.bf16.msra.mxu0 %v2452
    %3062 = vmatpush.bf16.msra.mxu0 %v2444
    %3063 = vmatpush.bf16.msra.mxu0 %v2436
    %3064 = vmatpush.bf16.msra.mxu0 %v2428
    %3065 = vmatpush.bf16.msra.mxu0 %v2420
    %3066 = vmatpush.bf16.msra.mxu0 %v2412
    %3067 = vmatpush.bf16.msra.mxu0 %v2404
    %3068 = vmatpush.bf16.msra.mxu0 %v2396
    %3069 = vmatmul.bf16.gmra.mxu0 %v1219
    %v3070 = vpop.f32.mrf.mxu0
    %v3071 = vadd.f32 %v3058, %v3070
    %v3072 = vpop.f32.mrf.mxu0
    %3073 = vdwg.mxu0
    %3074 = vmatpush.bf16.msra.mxu0 %v2516
    %3075 = vmatpush.bf16.msra.mxu0 %v2508
    %3076 = vmatpush.bf16.msra.mxu0 %v2500
    %3077 = vmatpush.bf16.msra.mxu0 %v2492
    %3078 = vmatpush.bf16.msra.mxu0 %v2484
    %3079 = vmatpush.bf16.msra.mxu0 %v2476
    %3080 = vmatpush.bf16.msra.mxu0 %v2468
    %3081 = vmatpush.bf16.msra.mxu0 %v2460
    %3082 = vmatmul.bf16.gmra.mxu0 %v1220
    %v3083 = vpop.f32.mrf.mxu0
    %v3084 = vadd.f32 %v3071, %v3083
    %v3085 = vpop.f32.mrf.mxu0
    %3086 = vdwg.mxu0
    %3087 = vmatpush.bf16.msra.mxu0 %v2325
    %3088 = vmatpush.bf16.msra.mxu0 %v2317
    %3089 = vmatpush.bf16.msra.mxu0 %v2309
    %3090 = vmatpush.bf16.msra.mxu0 %v2301
    %3091 = vmatpush.bf16.msra.mxu0 %v2293
    %3092 = vmatpush.bf16.msra.mxu0 %v2285
    %3093 = vmatpush.bf16.msra.mxu0 %v2277
    %3094 = vmatpush.bf16.msra.mxu0 %v2269
    %3095 = vmatmul.bf16.gmra.mxu0 %v1217
    %v3096 = vpop.f32.mrf.mxu0
    %v3097 = vadd.f32 %v1485, %v3096
    %v3098 = vpop.f32.mrf.mxu0
    %3099 = vdwg.mxu0
    %3100 = vmatpush.bf16.msra.mxu0 %v2389
    %3101 = vmatpush.bf16.msra.mxu0 %v2381
    %3102 = vmatpush.bf16.msra.mxu0 %v2373
    %3103 = vmatpush.bf16.msra.mxu0 %v2365
    %3104 = vmatpush.bf16.msra.mxu0 %v2357
    %3105 = vmatpush.bf16.msra.mxu0 %v2349
    %3106 = vmatpush.bf16.msra.mxu0 %v2341
    %3107 = vmatpush.bf16.msra.mxu0 %v2333
    %3108 = vmatmul.bf16.gmra.mxu0 %v1218
    %v3109 = vpop.f32.mrf.mxu0
    %v3110 = vadd.f32 %v3097, %v3109
    %v3111 = vpop.f32.mrf.mxu0
    %3112 = vdwg.mxu0
    %3113 = vmatpush.bf16.msra.mxu0 %v2453
    %3114 = vmatpush.bf16.msra.mxu0 %v2445
    %3115 = vmatpush.bf16.msra.mxu0 %v2437
    %3116 = vmatpush.bf16.msra.mxu0 %v2429
    %3117 = vmatpush.bf16.msra.mxu0 %v2421
    %3118 = vmatpush.bf16.msra.mxu0 %v2413
    %3119 = vmatpush.bf16.msra.mxu0 %v2405
    %3120 = vmatpush.bf16.msra.mxu0 %v2397
    %3121 = vmatmul.bf16.gmra.mxu0 %v1219
    %v3122 = vpop.f32.mrf.mxu0
    %v3123 = vadd.f32 %v3110, %v3122
    %v3124 = vpop.f32.mrf.mxu0
    %3125 = vdwg.mxu0
    %3126 = vmatpush.bf16.msra.mxu0 %v2517
    %3127 = vmatpush.bf16.msra.mxu0 %v2509
    %3128 = vmatpush.bf16.msra.mxu0 %v2501
    %3129 = vmatpush.bf16.msra.mxu0 %v2493
    %3130 = vmatpush.bf16.msra.mxu0 %v2485
    %3131 = vmatpush.bf16.msra.mxu0 %v2477
    %3132 = vmatpush.bf16.msra.mxu0 %v2469
    %3133 = vmatpush.bf16.msra.mxu0 %v2461
    %3134 = vmatmul.bf16.gmra.mxu0 %v1220
    %v3135 = vpop.f32.mrf.mxu0
    %v3136 = vadd.f32 %v3123, %v3135
    %v3137 = vpop.f32.mrf.mxu0
    %3138 = vdwg.mxu0
    %3139 = vmatpush.bf16.msra.mxu0 %v2326
    %3140 = vmatpush.bf16.msra.mxu0 %v2318
    %3141 = vmatpush.bf16.msra.mxu0 %v2310
    %3142 = vmatpush.bf16.msra.mxu0 %v2302
    %3143 = vmatpush.bf16.msra.mxu0 %v2294
    %3144 = vmatpush.bf16.msra.mxu0 %v2286
    %3145 = vmatpush.bf16.msra.mxu0 %v2278
    %3146 = vmatpush.bf16.msra.mxu0 %v2270
    %3147 = vmatmul.bf16.gmra.mxu0 %v1217
    %v3148 = vpop.f32.mrf.mxu0
    %v3149 = vadd.f32 %v1486, %v3148
    %v3150 = vpop.f32.mrf.mxu0
    %3151 = vdwg.mxu0
    %3152 = vmatpush.bf16.msra.mxu0 %v2390
    %3153 = vmatpush.bf16.msra.mxu0 %v2382
    %3154 = vmatpush.bf16.msra.mxu0 %v2374
    %3155 = vmatpush.bf16.msra.mxu0 %v2366
    %3156 = vmatpush.bf16.msra.mxu0 %v2358
    %3157 = vmatpush.bf16.msra.mxu0 %v2350
    %3158 = vmatpush.bf16.msra.mxu0 %v2342
    %3159 = vmatpush.bf16.msra.mxu0 %v2334
    %3160 = vmatmul.bf16.gmra.mxu0 %v1218
    %v3161 = vpop.f32.mrf.mxu0
    %v3162 = vadd.f32 %v3149, %v3161
    %v3163 = vpop.f32.mrf.mxu0
    %3164 = vdwg.mxu0
    %3165 = vmatpush.bf16.msra.mxu0 %v2454
    %3166 = vmatpush.bf16.msra.mxu0 %v2446
    %3167 = vmatpush.bf16.msra.mxu0 %v2438
    %3168 = vmatpush.bf16.msra.mxu0 %v2430
    %3169 = vmatpush.bf16.msra.mxu0 %v2422
    %3170 = vmatpush.bf16.msra.mxu0 %v2414
    %3171 = vmatpush.bf16.msra.mxu0 %v2406
    %3172 = vmatpush.bf16.msra.mxu0 %v2398
    %3173 = vmatmul.bf16.gmra.mxu0 %v1219
    %v3174 = vpop.f32.mrf.mxu0
    %v3175 = vadd.f32 %v3162, %v3174
    %v3176 = vpop.f32.mrf.mxu0
    %3177 = vdwg.mxu0
    %3178 = vmatpush.bf16.msra.mxu0 %v2518
    %3179 = vmatpush.bf16.msra.mxu0 %v2510
    %3180 = vmatpush.bf16.msra.mxu0 %v2502
    %3181 = vmatpush.bf16.msra.mxu0 %v2494
    %3182 = vmatpush.bf16.msra.mxu0 %v2486
    %3183 = vmatpush.bf16.msra.mxu0 %v2478
    %3184 = vmatpush.bf16.msra.mxu0 %v2470
    %3185 = vmatpush.bf16.msra.mxu0 %v2462
    %3186 = vmatmul.bf16.gmra.mxu0 %v1220
    %v3187 = vpop.f32.mrf.mxu0
    %v3188 = vadd.f32 %v3175, %v3187
    %v3189 = vpop.f32.mrf.mxu0
    %3190 = vdwg.mxu0
    %v3191 = vld [vmem:[%s13] sm:$0xff]
    %v3192 = vld [vmem:[#allocation21] sm:$0xff]
    %v3193 = vrot.slane %v2824, 4
    %v3194 = vadd.f32 %v2824, %v3193
    %v3195 = vrot.slane %v3194, 2
    %v3196 = vadd.f32 %v3194, %v3195
    %v3197 = vrot.slane %v3196, 1
    %v3198 = vadd.f32 %v3196, %v3197
    %v3199 = vrot.slane %v2876, 4
    %v3200 = vadd.f32 %v2876, %v3199
    %v3201 = vrot.slane %v3200, 2
    %v3202 = vadd.f32 %v3200, %v3201
    %v3203 = vrot.slane %v3202, 1
    %v3204 = vadd.f32 %v3202, %v3203
    %v3205 = vrot.slane %v2928, 4
    %v3206 = vadd.f32 %v2928, %v3205
    %v3207 = vrot.slane %v3206, 2
    %v3208 = vadd.f32 %v3206, %v3207
    %v3209 = vrot.slane %v3208, 1
    %v3210 = vadd.f32 %v3208, %v3209
    %v3211 = vrot.slane %v2980, 4
    %v3212 = vadd.f32 %v2980, %v3211
    %v3213 = vrot.slane %v3212, 2
    %v3214 = vadd.f32 %v3212, %v3213
    %v3215 = vrot.slane %v3214, 1
    %v3216 = vadd.f32 %v3214, %v3215
    %v3217 = vrot.slane %v3032, 4
    %v3218 = vadd.f32 %v3032, %v3217
    %v3219 = vrot.slane %v3218, 2
    %v3220 = vadd.f32 %v3218, %v3219
    %v3221 = vrot.slane %v3220, 1
    %v3222 = vadd.f32 %v3220, %v3221
    %v3223 = vrot.slane %v3084, 4
    %v3224 = vadd.f32 %v3084, %v3223
    %v3225 = vrot.slane %v3224, 2
    %v3226 = vadd.f32 %v3224, %v3225
    %v3227 = vrot.slane %v3226, 1
    %v3228 = vadd.f32 %v3226, %v3227
    %v3229 = vrot.slane %v3136, 4
    %v3230 = vadd.f32 %v3136, %v3229
    %v3231 = vrot.slane %v3230, 2
    %v3232 = vadd.f32 %v3230, %v3231
    %v3233 = vrot.slane %v3232, 1
    %v3234 = vadd.f32 %v3232, %v3233
    %v3235 = vrot.slane %v3188, 4
    %v3236 = vadd.f32 %v3188, %v3235
    %v3237 = vrot.slane %v3236, 2
    %v3238 = vadd.f32 %v3236, %v3237
    %v3239 = vrot.slane %v3238, 1
    %v3240 = vadd.f32 %v3238, %v3239
    %v3241 = vmul.f32 %v3198, %v484
    %v3242 = vmul.f32 %v3204, %v484
    %v3243 = vmul.f32 %v3210, %v484
    %v3244 = vmul.f32 %v3216, %v484
    %v3245 = vmul.f32 %v3222, %v484
    %v3246 = vmul.f32 %v3228, %v484
    %v3247 = vmul.f32 %v3234, %v484
    %v3248 = vmul.f32 %v3240, %v484
    %v3249 = vmul.f32 %v2824, %v2824
    %v3250 = vmul.f32 %v2876, %v2876
    %v3251 = vmul.f32 %v2928, %v2928
    %v3252 = vmul.f32 %v2980, %v2980
    %v3253 = vmul.f32 %v3032, %v3032
    %v3254 = vmul.f32 %v3084, %v3084
    %v3255 = vmul.f32 %v3136, %v3136
    %v3256 = vmul.f32 %v3188, %v3188
    %v3257 = vrot.slane %v3249, 4
    %v3258 = vadd.f32 %v3249, %v3257
    %v3259 = vrot.slane %v3258, 2
    %v3260 = vadd.f32 %v3258, %v3259
    %v3261 = vrot.slane %v3260, 1
    %v3262 = vadd.f32 %v3260, %v3261
    %v3263 = vrot.slane %v3250, 4
    %v3264 = vadd.f32 %v3250, %v3263
    %v3265 = vrot.slane %v3264, 2
    %v3266 = vadd.f32 %v3264, %v3265
    %v3267 = vrot.slane %v3266, 1
    %v3268 = vadd.f32 %v3266, %v3267
    %v3269 = vrot.slane %v3251, 4
    %v3270 = vadd.f32 %v3251, %v3269
    %v3271 = vrot.slane %v3270, 2
    %v3272 = vadd.f32 %v3270, %v3271
    %v3273 = vrot.slane %v3272, 1
    %v3274 = vadd.f32 %v3272, %v3273
    %v3275 = vrot.slane %v3252, 4
    %v3276 = vadd.f32 %v3252, %v3275
    %v3277 = vrot.slane %v3276, 2
    %v3278 = vadd.f32 %v3276, %v3277
    %v3279 = vrot.slane %v3278, 1
    %v3280 = vadd.f32 %v3278, %v3279
    %v3281 = vrot.slane %v3253, 4
    %v3282 = vadd.f32 %v3253, %v3281
    %v3283 = vrot.slane %v3282, 2
    %v3284 = vadd.f32 %v3282, %v3283
    %v3285 = vrot.slane %v3284, 1
    %v3286 = vadd.f32 %v3284, %v3285
    %v3287 = vrot.slane %v3254, 4
    %v3288 = vadd.f32 %v3254, %v3287
    %v3289 = vrot.slane %v3288, 2
    %v3290 = vadd.f32 %v3288, %v3289
    %v3291 = vrot.slane %v3290, 1
    %v3292 = vadd.f32 %v3290, %v3291
    %v3293 = vrot.slane %v3255, 4
    %v3294 = vadd.f32 %v3255, %v3293
    %v3295 = vrot.slane %v3294, 2
    %v3296 = vadd.f32 %v3294, %v3295
    %v3297 = vrot.slane %v3296, 1
    %v3298 = vadd.f32 %v3296, %v3297
    %v3299 = vrot.slane %v3256, 4
    %v3300 = vadd.f32 %v3256, %v3299
    %v3301 = vrot.slane %v3300, 2
    %v3302 = vadd.f32 %v3300, %v3301
    %v3303 = vrot.slane %v3302, 1
    %v3304 = vadd.f32 %v3302, %v3303
    %v3305 = vmul.f32 %v3262, %v484
    %v3306 = vmul.f32 %v3268, %v484
    %v3307 = vmul.f32 %v3274, %v484
    %v3308 = vmul.f32 %v3280, %v484
    %v3309 = vmul.f32 %v3286, %v484
    %v3310 = vmul.f32 %v3292, %v484
    %v3311 = vmul.f32 %v3298, %v484
    %v3312 = vmul.f32 %v3304, %v484
    %v3313 = vmul.f32 %v3241, %v3241
    %v3314 = vmul.f32 %v3242, %v3242
    %v3315 = vmul.f32 %v3243, %v3243
    %v3316 = vmul.f32 %v3244, %v3244
    %v3317 = vmul.f32 %v3245, %v3245
    %v3318 = vmul.f32 %v3246, %v3246
    %v3319 = vmul.f32 %v3247, %v3247
    %v3320 = vmul.f32 %v3248, %v3248
    %v3321 = vsub.f32 %v3305, %v3313
    %v3322 = vsub.f32 %v3306, %v3314
    %v3323 = vsub.f32 %v3307, %v3315
    %v3324 = vsub.f32 %v3308, %v3316
    %v3325 = vsub.f32 %v3309, %v3317
    %v3326 = vsub.f32 %v3310, %v3318
    %v3327 = vsub.f32 %v3311, %v3319
    %v3328 = vsub.f32 %v3312, %v3320
    %v3329 = vsub.f32 %v2824, %v3241
    %v3330 = vsub.f32 %v2876, %v3242
    %v3331 = vsub.f32 %v2928, %v3243
    %v3332 = vsub.f32 %v2980, %v3244
    %v3333 = vsub.f32 %v3032, %v3245
    %v3334 = vsub.f32 %v3084, %v3246
    %v3335 = vsub.f32 %v3136, %v3247
    %v3336 = vsub.f32 %v3188, %v3248
    %v3337 = vadd.f32 %v3321, 0.8
    %v3338 = vadd.f32 %v3322, 0.8
    %v3339 = vadd.f32 %v3323, 0.8
    %v3340 = vadd.f32 %v3324, 0.8
    %v3341 = vadd.f32 %v3325, 0.8
    %v3342 = vadd.f32 %v3326, 0.8
    %v3343 = vadd.f32 %v3327, 0.8
    %v3344 = vadd.f32 %v3328, 0.8
    %v3345 = vrsqrt.pop %v3337
    %v3346 = vmul.f32 %v3345, %v3337
    %v3347 = vmul.f32 %v3346, %v3345
    %v3348 = vmul.f32 0.5, %v3347
    %v3349 = vsub.f32 1.5, %v3348
    %v3350 = vmul.f32 %v3345, %v3349
    %vm3351 = vweird.f32 %v3337
    %vm3352 = vweird.f32 %v3345
    %vm3353 = vmor %vm3351, %vm3352
    %v3354 = vsel %vm3353, %v3345, %v3350
    %v3355 = vrsqrt.pop %v3338
    %v3356 = vmul.f32 %v3355, %v3338
    %v3357 = vmul.f32 %v3356, %v3355
    %v3358 = vmul.f32 0.5, %v3357
    %v3359 = vsub.f32 1.5, %v3358
    %v3360 = vmul.f32 %v3355, %v3359
    %vm3361 = vweird.f32 %v3338
    %vm3362 = vweird.f32 %v3355
    %vm3363 = vmor %vm3361, %vm3362
    %v3364 = vsel %vm3363, %v3355, %v3360
    %v3365 = vrsqrt.pop %v3339
    %v3366 = vmul.f32 %v3365, %v3339
    %v3367 = vmul.f32 %v3366, %v3365
    %v3368 = vmul.f32 0.5, %v3367
    %v3369 = vsub.f32 1.5, %v3368
    %v3370 = vmul.f32 %v3365, %v3369
    %vm3371 = vweird.f32 %v3339
    %vm3372 = vweird.f32 %v3365
    %vm3373 = vmor %vm3371, %vm3372
    %v3374 = vsel %vm3373, %v3365, %v3370
    %v3375 = vrsqrt.pop %v3340
    %v3376 = vmul.f32 %v3375, %v3340
    %v3377 = vmul.f32 %v3376, %v3375
    %v3378 = vmul.f32 0.5, %v3377
    %v3379 = vsub.f32 1.5, %v3378
    %v3380 = vmul.f32 %v3375, %v3379
    %vm3381 = vweird.f32 %v3340
    %vm3382 = vweird.f32 %v3375
    %vm3383 = vmor %vm3381, %vm3382
    %v3384 = vsel %vm3383, %v3375, %v3380
    %v3385 = vrsqrt.pop %v3341
    %v3386 = vmul.f32 %v3385, %v3341
    %v3387 = vmul.f32 %v3386, %v3385
    %v3388 = vmul.f32 0.5, %v3387
    %v3389 = vsub.f32 1.5, %v3388
    %v3390 = vmul.f32 %v3385, %v3389
    %vm3391 = vweird.f32 %v3341
    %vm3392 = vweird.f32 %v3385
    %vm3393 = vmor %vm3391, %vm3392
    %v3394 = vsel %vm3393, %v3385, %v3390
    %v3395 = vrsqrt.pop %v3342
    %v3396 = vmul.f32 %v3395, %v3342
    %v3397 = vmul.f32 %v3396, %v3395
    %v3398 = vmul.f32 0.5, %v3397
    %v3399 = vsub.f32 1.5, %v3398
    %v3400 = vmul.f32 %v3395, %v3399
    %vm3401 = vweird.f32 %v3342
    %vm3402 = vweird.f32 %v3395
    %vm3403 = vmor %vm3401, %vm3402
    %v3404 = vsel %vm3403, %v3395, %v3400
    %v3405 = vrsqrt.pop %v3343
    %v3406 = vmul.f32 %v3405, %v3343
    %v3407 = vmul.f32 %v3406, %v3405
    %v3408 = vmul.f32 0.5, %v3407
    %v3409 = vsub.f32 1.5, %v3408
    %v3410 = vmul.f32 %v3405, %v3409
    %vm3411 = vweird.f32 %v3343
    %vm3412 = vweird.f32 %v3405
    %vm3413 = vmor %vm3411, %vm3412
    %v3414 = vsel %vm3413, %v3405, %v3410
    %v3415 = vrsqrt.pop %v3344
    %v3416 = vmul.f32 %v3415, %v3344
    %v3417 = vmul.f32 %v3416, %v3415
    %v3418 = vmul.f32 0.5, %v3417
    %v3419 = vsub.f32 1.5, %v3418
    %v3420 = vmul.f32 %v3415, %v3419
    %vm3421 = vweird.f32 %v3344
    %vm3422 = vweird.f32 %v3415
    %vm3423 = vmor %vm3421, %vm3422
    %v3424 = vsel %vm3423, %v3415, %v3420
    %v3425 = vmul.f32 %v3329, %v3354
    %v3426 = vmul.f32 %v3330, %v3364
    %v3427 = vmul.f32 %v3331, %v3374
    %v3428 = vmul.f32 %v3332, %v3384
    %v3429 = vmul.f32 %v3333, %v3394
    %v3430 = vmul.f32 %v3334, %v3404
    %v3431 = vmul.f32 %v3335, %v3414
    %v3432 = vmul.f32 %v3336, %v3424
    %v3434 = vperm.slane %v3191, 0
    %v3435 = vperm.slane %v3191, 1
    %v3436 = vperm.slane %v3191, 2
    %v3437 = vperm.slane %v3191, 3
    %v3438 = vperm.slane %v3191, 4
    %v3439 = vperm.slane %v3191, 5
    %v3440 = vperm.slane %v3191, 6
    %v3441 = vperm.slane %v3191, 7
    %v3450 = vmul.f32 %v3425, %v3434
    %v3451 = vmul.f32 %v3426, %v3435
    %v3452 = vmul.f32 %v3427, %v3436
    %v3453 = vmul.f32 %v3428, %v3437
    %v3454 = vmul.f32 %v3429, %v3438
    %v3455 = vmul.f32 %v3430, %v3439
    %v3456 = vmul.f32 %v3431, %v3440
    %v3457 = vmul.f32 %v3432, %v3441
    %v3459 = vperm.slane %v3192, 0
    %v3460 = vperm.slane %v3192, 1
    %v3461 = vperm.slane %v3192, 2
    %v3462 = vperm.slane %v3192, 3
    %v3463 = vperm.slane %v3192, 4
    %v3464 = vperm.slane %v3192, 5
    %v3465 = vperm.slane %v3192, 6
    %v3466 = vperm.slane %v3192, 7
    %v3475 = vadd.f32 %v3450, %v3459
    %v3476 = vadd.f32 %v3451, %v3460
    %v3477 = vadd.f32 %v3452, %v3461
    %v3478 = vadd.f32 %v3453, %v3462
    %v3479 = vadd.f32 %v3454, %v3463
    %v3480 = vadd.f32 %v3455, %v3464
    %v3481 = vadd.f32 %v3456, %v3465
    %v3482 = vadd.f32 %v3457, %v3466
    %vm3483 = vcmp.gt.f32.partialorder %v3475, 0.0
    %vm3484 = vcmp.gt.f32.partialorder %v3476, 0.0
    %vm3485 = vcmp.gt.f32.partialorder %v3477, 0.0
    %vm3486 = vcmp.gt.f32.partialorder %v3478, 0.0
    %vm3487 = vcmp.gt.f32.partialorder %v3479, 0.0
    %vm3488 = vcmp.gt.f32.partialorder %v3480, 0.0
    %vm3489 = vcmp.gt.f32.partialorder %v3481, 0.0
    %vm3490 = vcmp.gt.f32.partialorder %v3482, 0.0
    %v3491 = vmul.f32 %v3475, 0.2
    %v3492 = vmul.f32 %v3476, 0.2
    %v3493 = vmul.f32 %v3477, 0.2
    %v3494 = vmul.f32 %v3478, 0.2
    %v3495 = vmul.f32 %v3479, 0.2
    %v3496 = vmul.f32 %v3480, 0.2
    %v3497 = vmul.f32 %v3481, 0.2
    %v3498 = vmul.f32 %v3482, 0.2
    %v3499 = vsel %vm3483, %v3475, %v3491
    %v3500 = vsel %vm3484, %v3476, %v3492
    %v3501 = vsel %vm3485, %v3477, %v3493
    %v3502 = vsel %vm3486, %v3478, %v3494
    %v3503 = vsel %vm3487, %v3479, %v3495
    %v3504 = vsel %vm3488, %v3480, %v3496
    %v3505 = vsel %vm3489, %v3481, %v3497
    %v3506 = vsel %vm3490, %v3482, %v3498
    %s3507 = smul.u32 4, 128
    %s3508 = smul.u32 %s3507, 1
    %s3509 = sshll.u32 %s3508, 4
    %3510 = dma.done %s272, %s3509
    %v3511 = vpack.c.bf16 %v3499, %v3499
    %v3512 = vpack.c.bf16 %v3500, %v3500
    %v3513 = vpack.c.bf16 %v3501, %v3501
    %v3514 = vpack.c.bf16 %v3502, %v3502
    %v3515 = vpack.c.bf16 %v3503, %v3503
    %v3516 = vpack.c.bf16 %v3504, %v3504
    %v3517 = vpack.c.bf16 %v3505, %v3505
    %v3518 = vpack.c.bf16 %v3506, %v3506
    %v3519 = vld [vmem:[#allocation3] sm:$0xf]
    %v3520 = vld [vmem:[#allocation3 + $0x4] sm:$0xf]
    %v3521 = vld [vmem:[#allocation3 + $0x8] sm:$0xf]
    %v3522 = vld [vmem:[#allocation3 + $0xc] sm:$0xf]
    %v3523 = vld [vmem:[#allocation3 + $0x10] sm:$0xf]
    %v3524 = vld [vmem:[#allocation3 + $0x14] sm:$0xf]
    %v3525 = vld [vmem:[#allocation3 + $0x18] sm:$0xf]
    %v3526 = vld [vmem:[#allocation3 + $0x1c] sm:$0xf]
    %v3527 = vld [vmem:[#allocation3 + $0x20] sm:$0xf]
    %v3528 = vld [vmem:[#allocation3 + $0x24] sm:$0xf]
    %v3529 = vld [vmem:[#allocation3 + $0x28] sm:$0xf]
    %v3530 = vld [vmem:[#allocation3 + $0x2c] sm:$0xf]
    %v3531 = vld [vmem:[#allocation3 + $0x30] sm:$0xf]
    %v3532 = vld [vmem:[#allocation3 + $0x34] sm:$0xf]
    %v3533 = vld [vmem:[#allocation3 + $0x38] sm:$0xf]
    %v3534 = vld [vmem:[#allocation3 + $0x3c] sm:$0xf]
    %v3535 = vld [vmem:[#allocation3 + $0x40] sm:$0xf]
    %v3536 = vld [vmem:[#allocation3 + $0x44] sm:$0xf]
    %v3537 = vld [vmem:[#allocation3 + $0x48] sm:$0xf]
    %v3538 = vld [vmem:[#allocation3 + $0x4c] sm:$0xf]
    %v3539 = vld [vmem:[#allocation3 + $0x50] sm:$0xf]
    %v3540 = vld [vmem:[#allocation3 + $0x54] sm:$0xf]
    %v3541 = vld [vmem:[#allocation3 + $0x58] sm:$0xf]
    %v3542 = vld [vmem:[#allocation3 + $0x5c] sm:$0xf]
    %v3543 = vld [vmem:[#allocation3 + $0x60] sm:$0xf]
    %v3544 = vld [vmem:[#allocation3 + $0x64] sm:$0xf]
    %v3545 = vld [vmem:[#allocation3 + $0x68] sm:$0xf]
    %v3546 = vld [vmem:[#allocation3 + $0x6c] sm:$0xf]
    %v3547 = vld [vmem:[#allocation3 + $0x70] sm:$0xf]
    %v3548 = vld [vmem:[#allocation3 + $0x74] sm:$0xf]
    %v3549 = vld [vmem:[#allocation3 + $0x78] sm:$0xf]
    %v3550 = vld [vmem:[#allocation3 + $0x7c] sm:$0xf]
    %v3551 = vld [vmem:[#allocation3 + $0x80] sm:$0xf]
    %v3552 = vld [vmem:[#allocation3 + $0x84] sm:$0xf]
    %v3553 = vld [vmem:[#allocation3 + $0x88] sm:$0xf]
    %v3554 = vld [vmem:[#allocation3 + $0x8c] sm:$0xf]
    %v3555 = vld [vmem:[#allocation3 + $0x90] sm:$0xf]
    %v3556 = vld [vmem:[#allocation3 + $0x94] sm:$0xf]
    %v3557 = vld [vmem:[#allocation3 + $0x98] sm:$0xf]
    %v3558 = vld [vmem:[#allocation3 + $0x9c] sm:$0xf]
    %v3559 = vld [vmem:[#allocation3 + $0xa0] sm:$0xf]
    %v3560 = vld [vmem:[#allocation3 + $0xa4] sm:$0xf]
    %v3561 = vld [vmem:[#allocation3 + $0xa8] sm:$0xf]
    %v3562 = vld [vmem:[#allocation3 + $0xac] sm:$0xf]
    %v3563 = vld [vmem:[#allocation3 + $0xb0] sm:$0xf]
    %v3564 = vld [vmem:[#allocation3 + $0xb4] sm:$0xf]
    %v3565 = vld [vmem:[#allocation3 + $0xb8] sm:$0xf]
    %v3566 = vld [vmem:[#allocation3 + $0xbc] sm:$0xf]
    %v3567 = vld [vmem:[#allocation3 + $0xc0] sm:$0xf]
    %v3568 = vld [vmem:[#allocation3 + $0xc4] sm:$0xf]
    %v3569 = vld [vmem:[#allocation3 + $0xc8] sm:$0xf]
    %v3570 = vld [vmem:[#allocation3 + $0xcc] sm:$0xf]
    %v3571 = vld [vmem:[#allocation3 + $0xd0] sm:$0xf]
    %v3572 = vld [vmem:[#allocation3 + $0xd4] sm:$0xf]
    %v3573 = vld [vmem:[#allocation3 + $0xd8] sm:$0xf]
    %v3574 = vld [vmem:[#allocation3 + $0xdc] sm:$0xf]
    %v3575 = vld [vmem:[#allocation3 + $0xe0] sm:$0xf]
    %v3576 = vld [vmem:[#allocation3 + $0xe4] sm:$0xf]
    %v3577 = vld [vmem:[#allocation3 + $0xe8] sm:$0xf]
    %v3578 = vld [vmem:[#allocation3 + $0xec] sm:$0xf]
    %v3579 = vld [vmem:[#allocation3 + $0xf0] sm:$0xf]
    %v3580 = vld [vmem:[#allocation3 + $0xf4] sm:$0xf]
    %v3581 = vld [vmem:[#allocation3 + $0xf8] sm:$0xf]
    %v3582 = vld [vmem:[#allocation3 + $0xfc] sm:$0xf]
    %v3583 = vld [vmem:[#allocation3 + $0x100] sm:$0xf]
    %v3584 = vld [vmem:[#allocation3 + $0x104] sm:$0xf]
    %v3585 = vld [vmem:[#allocation3 + $0x108] sm:$0xf]
    %v3586 = vld [vmem:[#allocation3 + $0x10c] sm:$0xf]
    %v3587 = vld [vmem:[#allocation3 + $0x110] sm:$0xf]
    %v3588 = vld [vmem:[#allocation3 + $0x114] sm:$0xf]
    %v3589 = vld [vmem:[#allocation3 + $0x118] sm:$0xf]
    %v3590 = vld [vmem:[#allocation3 + $0x11c] sm:$0xf]
    %v3591 = vld [vmem:[#allocation3 + $0x120] sm:$0xf]
    %v3592 = vld [vmem:[#allocation3 + $0x124] sm:$0xf]
    %v3593 = vld [vmem:[#allocation3 + $0x128] sm:$0xf]
    %v3594 = vld [vmem:[#allocation3 + $0x12c] sm:$0xf]
    %v3595 = vld [vmem:[#allocation3 + $0x130] sm:$0xf]
    %v3596 = vld [vmem:[#allocation3 + $0x134] sm:$0xf]
    %v3597 = vld [vmem:[#allocation3 + $0x138] sm:$0xf]
    %v3598 = vld [vmem:[#allocation3 + $0x13c] sm:$0xf]
    %v3599 = vld [vmem:[#allocation3 + $0x140] sm:$0xf]
    %v3600 = vld [vmem:[#allocation3 + $0x144] sm:$0xf]
    %v3601 = vld [vmem:[#allocation3 + $0x148] sm:$0xf]
    %v3602 = vld [vmem:[#allocation3 + $0x14c] sm:$0xf]
    %v3603 = vld [vmem:[#allocation3 + $0x150] sm:$0xf]
    %v3604 = vld [vmem:[#allocation3 + $0x154] sm:$0xf]
    %v3605 = vld [vmem:[#allocation3 + $0x158] sm:$0xf]
    %v3606 = vld [vmem:[#allocation3 + $0x15c] sm:$0xf]
    %v3607 = vld [vmem:[#allocation3 + $0x160] sm:$0xf]
    %v3608 = vld [vmem:[#allocation3 + $0x164] sm:$0xf]
    %v3609 = vld [vmem:[#allocation3 + $0x168] sm:$0xf]
    %v3610 = vld [vmem:[#allocation3 + $0x16c] sm:$0xf]
    %v3611 = vld [vmem:[#allocation3 + $0x170] sm:$0xf]
    %v3612 = vld [vmem:[#allocation3 + $0x174] sm:$0xf]
    %v3613 = vld [vmem:[#allocation3 + $0x178] sm:$0xf]
    %v3614 = vld [vmem:[#allocation3 + $0x17c] sm:$0xf]
    %v3615 = vld [vmem:[#allocation3 + $0x180] sm:$0xf]
    %v3616 = vld [vmem:[#allocation3 + $0x184] sm:$0xf]
    %v3617 = vld [vmem:[#allocation3 + $0x188] sm:$0xf]
    %v3618 = vld [vmem:[#allocation3 + $0x18c] sm:$0xf]
    %v3619 = vld [vmem:[#allocation3 + $0x190] sm:$0xf]
    %v3620 = vld [vmem:[#allocation3 + $0x194] sm:$0xf]
    %v3621 = vld [vmem:[#allocation3 + $0x198] sm:$0xf]
    %v3622 = vld [vmem:[#allocation3 + $0x19c] sm:$0xf]
    %v3623 = vld [vmem:[#allocation3 + $0x1a0] sm:$0xf]
    %v3624 = vld [vmem:[#allocation3 + $0x1a4] sm:$0xf]
    %v3625 = vld [vmem:[#allocation3 + $0x1a8] sm:$0xf]
    %v3626 = vld [vmem:[#allocation3 + $0x1ac] sm:$0xf]
    %v3627 = vld [vmem:[#allocation3 + $0x1b0] sm:$0xf]
    %v3628 = vld [vmem:[#allocation3 + $0x1b4] sm:$0xf]
    %v3629 = vld [vmem:[#allocation3 + $0x1b8] sm:$0xf]
    %v3630 = vld [vmem:[#allocation3 + $0x1bc] sm:$0xf]
    %v3631 = vld [vmem:[#allocation3 + $0x1c0] sm:$0xf]
    %v3632 = vld [vmem:[#allocation3 + $0x1c4] sm:$0xf]
    %v3633 = vld [vmem:[#allocation3 + $0x1c8] sm:$0xf]
    %v3634 = vld [vmem:[#allocation3 + $0x1cc] sm:$0xf]
    %v3635 = vld [vmem:[#allocation3 + $0x1d0] sm:$0xf]
    %v3636 = vld [vmem:[#allocation3 + $0x1d4] sm:$0xf]
    %v3637 = vld [vmem:[#allocation3 + $0x1d8] sm:$0xf]
    %v3638 = vld [vmem:[#allocation3 + $0x1dc] sm:$0xf]
    %v3639 = vld [vmem:[#allocation3 + $0x1e0] sm:$0xf]
    %v3640 = vld [vmem:[#allocation3 + $0x1e4] sm:$0xf]
    %v3641 = vld [vmem:[#allocation3 + $0x1e8] sm:$0xf]
    %v3642 = vld [vmem:[#allocation3 + $0x1ec] sm:$0xf]
    %v3643 = vld [vmem:[#allocation3 + $0x1f0] sm:$0xf]
    %v3644 = vld [vmem:[#allocation3 + $0x1f4] sm:$0xf]
    %v3645 = vld [vmem:[#allocation3 + $0x1f8] sm:$0xf]
    %v3646 = vld [vmem:[#allocation3 + $0x1fc] sm:$0xf]
    %v3647 = vld [vmem:[#allocation23] sm:$0x1]
    %v3649 = vperm.slane %v3647, 0
    %v3779 = vunpack.c.l.b16 %v3519
    %v3780 = vunpack.c.l.b16 %v3520
    %v3781 = vunpack.c.l.b16 %v3521
    %v3782 = vunpack.c.l.b16 %v3522
    %v3783 = vunpack.c.l.b16 %v3523
    %v3784 = vunpack.c.l.b16 %v3524
    %v3785 = vunpack.c.l.b16 %v3525
    %v3786 = vunpack.c.l.b16 %v3526
    %v3787 = vunpack.c.l.b16 %v3527
    %v3788 = vunpack.c.l.b16 %v3528
    %v3789 = vunpack.c.l.b16 %v3529
    %v3790 = vunpack.c.l.b16 %v3530
    %v3791 = vunpack.c.l.b16 %v3531
    %v3792 = vunpack.c.l.b16 %v3532
    %v3793 = vunpack.c.l.b16 %v3533
    %v3794 = vunpack.c.l.b16 %v3534
    %v3795 = vunpack.c.l.b16 %v3535
    %v3796 = vunpack.c.l.b16 %v3536
    %v3797 = vunpack.c.l.b16 %v3537
    %v3798 = vunpack.c.l.b16 %v3538
    %v3799 = vunpack.c.l.b16 %v3539
    %v3800 = vunpack.c.l.b16 %v3540
    %v3801 = vunpack.c.l.b16 %v3541
    %v3802 = vunpack.c.l.b16 %v3542
    %v3803 = vunpack.c.l.b16 %v3543
    %v3804 = vunpack.c.l.b16 %v3544
    %v3805 = vunpack.c.l.b16 %v3545
    %v3806 = vunpack.c.l.b16 %v3546
    %v3807 = vunpack.c.l.b16 %v3547
    %v3808 = vunpack.c.l.b16 %v3548
    %v3809 = vunpack.c.l.b16 %v3549
    %v3810 = vunpack.c.l.b16 %v3550
    %v3811 = vunpack.c.l.b16 %v3551
    %v3812 = vunpack.c.l.b16 %v3552
    %v3813 = vunpack.c.l.b16 %v3553
    %v3814 = vunpack.c.l.b16 %v3554
    %v3815 = vunpack.c.l.b16 %v3555
    %v3816 = vunpack.c.l.b16 %v3556
    %v3817 = vunpack.c.l.b16 %v3557
    %v3818 = vunpack.c.l.b16 %v3558
    %v3819 = vunpack.c.l.b16 %v3559
    %v3820 = vunpack.c.l.b16 %v3560
    %v3821 = vunpack.c.l.b16 %v3561
    %v3822 = vunpack.c.l.b16 %v3562
    %v3823 = vunpack.c.l.b16 %v3563
    %v3824 = vunpack.c.l.b16 %v3564
    %v3825 = vunpack.c.l.b16 %v3565
    %v3826 = vunpack.c.l.b16 %v3566
    %v3827 = vunpack.c.l.b16 %v3567
    %v3828 = vunpack.c.l.b16 %v3568
    %v3829 = vunpack.c.l.b16 %v3569
    %v3830 = vunpack.c.l.b16 %v3570
    %v3831 = vunpack.c.l.b16 %v3571
    %v3832 = vunpack.c.l.b16 %v3572
    %v3833 = vunpack.c.l.b16 %v3573
    %v3834 = vunpack.c.l.b16 %v3574
    %v3835 = vunpack.c.l.b16 %v3575
    %v3836 = vunpack.c.l.b16 %v3576
    %v3837 = vunpack.c.l.b16 %v3577
    %v3838 = vunpack.c.l.b16 %v3578
    %v3839 = vunpack.c.l.b16 %v3579
    %v3840 = vunpack.c.l.b16 %v3580
    %v3841 = vunpack.c.l.b16 %v3581
    %v3842 = vunpack.c.l.b16 %v3582
    %v3843 = vunpack.c.l.b16 %v3583
    %v3844 = vunpack.c.l.b16 %v3584
    %v3845 = vunpack.c.l.b16 %v3585
    %v3846 = vunpack.c.l.b16 %v3586
    %v3847 = vunpack.c.l.b16 %v3587
    %v3848 = vunpack.c.l.b16 %v3588
    %v3849 = vunpack.c.l.b16 %v3589
    %v3850 = vunpack.c.l.b16 %v3590
    %v3851 = vunpack.c.l.b16 %v3591
    %v3852 = vunpack.c.l.b16 %v3592
    %v3853 = vunpack.c.l.b16 %v3593
    %v3854 = vunpack.c.l.b16 %v3594
    %v3855 = vunpack.c.l.b16 %v3595
    %v3856 = vunpack.c.l.b16 %v3596
    %v3857 = vunpack.c.l.b16 %v3597
    %v3858 = vunpack.c.l.b16 %v3598
    %v3859 = vunpack.c.l.b16 %v3599
    %v3860 = vunpack.c.l.b16 %v3600
    %v3861 = vunpack.c.l.b16 %v3601
    %v3862 = vunpack.c.l.b16 %v3602
    %v3863 = vunpack.c.l.b16 %v3603
    %v3864 = vunpack.c.l.b16 %v3604
    %v3865 = vunpack.c.l.b16 %v3605
    %v3866 = vunpack.c.l.b16 %v3606
    %v3867 = vunpack.c.l.b16 %v3607
    %v3868 = vunpack.c.l.b16 %v3608
    %v3869 = vunpack.c.l.b16 %v3609
    %v3870 = vunpack.c.l.b16 %v3610
    %v3871 = vunpack.c.l.b16 %v3611
    %v3872 = vunpack.c.l.b16 %v3612
    %v3873 = vunpack.c.l.b16 %v3613
    %v3874 = vunpack.c.l.b16 %v3614
    %v3875 = vunpack.c.l.b16 %v3615
    %v3876 = vunpack.c.l.b16 %v3616
    %v3877 = vunpack.c.l.b16 %v3617
    %v3878 = vunpack.c.l.b16 %v3618
    %v3879 = vunpack.c.l.b16 %v3619
    %v3880 = vunpack.c.l.b16 %v3620
    %v3881 = vunpack.c.l.b16 %v3621
    %v3882 = vunpack.c.l.b16 %v3622
    %v3883 = vunpack.c.l.b16 %v3623
    %v3884 = vunpack.c.l.b16 %v3624
    %v3885 = vunpack.c.l.b16 %v3625
    %v3886 = vunpack.c.l.b16 %v3626
    %v3887 = vunpack.c.l.b16 %v3627
    %v3888 = vunpack.c.l.b16 %v3628
    %v3889 = vunpack.c.l.b16 %v3629
    %v3890 = vunpack.c.l.b16 %v3630
    %v3891 = vunpack.c.l.b16 %v3631
    %v3892 = vunpack.c.l.b16 %v3632
    %v3893 = vunpack.c.l.b16 %v3633
    %v3894 = vunpack.c.l.b16 %v3634
    %v3895 = vunpack.c.l.b16 %v3635
    %v3896 = vunpack.c.l.b16 %v3636
    %v3897 = vunpack.c.l.b16 %v3637
    %v3898 = vunpack.c.l.b16 %v3638
    %v3899 = vunpack.c.l.b16 %v3639
    %v3900 = vunpack.c.l.b16 %v3640
    %v3901 = vunpack.c.l.b16 %v3641
    %v3902 = vunpack.c.l.b16 %v3642
    %v3903 = vunpack.c.l.b16 %v3643
    %v3904 = vunpack.c.l.b16 %v3644
    %v3905 = vunpack.c.l.b16 %v3645
    %v3906 = vunpack.c.l.b16 %v3646
    %v3907 = vpack.c.b16 %v3780, %v3779
    %v3908 = vpack.c.b16 %v3782, %v3781
    %v3909 = vpack.c.b16 %v3784, %v3783
    %v3910 = vpack.c.b16 %v3786, %v3785
    %v3911 = vpack.c.b16 %v3788, %v3787
    %v3912 = vpack.c.b16 %v3790, %v3789
    %v3913 = vpack.c.b16 %v3792, %v3791
    %v3914 = vpack.c.b16 %v3794, %v3793
    %v3915 = vpack.c.b16 %v3796, %v3795
    %v3916 = vpack.c.b16 %v3798, %v3797
    %v3917 = vpack.c.b16 %v3800, %v3799
    %v3918 = vpack.c.b16 %v3802, %v3801
    %v3919 = vpack.c.b16 %v3804, %v3803
    %v3920 = vpack.c.b16 %v3806, %v3805
    %v3921 = vpack.c.b16 %v3808, %v3807
    %v3922 = vpack.c.b16 %v3810, %v3809
    %v3923 = vpack.c.b16 %v3812, %v3811
    %v3924 = vpack.c.b16 %v3814, %v3813
    %v3925 = vpack.c.b16 %v3816, %v3815
    %v3926 = vpack.c.b16 %v3818, %v3817
    %v3927 = vpack.c.b16 %v3820, %v3819
    %v3928 = vpack.c.b16 %v3822, %v3821
    %v3929 = vpack.c.b16 %v3824, %v3823
    %v3930 = vpack.c.b16 %v3826, %v3825
    %v3931 = vpack.c.b16 %v3828, %v3827
    %v3932 = vpack.c.b16 %v3830, %v3829
    %v3933 = vpack.c.b16 %v3832, %v3831
    %v3934 = vpack.c.b16 %v3834, %v3833
    %v3935 = vpack.c.b16 %v3836, %v3835
    %v3936 = vpack.c.b16 %v3838, %v3837
    %v3937 = vpack.c.b16 %v3840, %v3839
    %v3938 = vpack.c.b16 %v3842, %v3841
    %v3939 = vpack.c.b16 %v3844, %v3843
    %v3940 = vpack.c.b16 %v3846, %v3845
    %v3941 = vpack.c.b16 %v3848, %v3847
    %v3942 = vpack.c.b16 %v3850, %v3849
    %v3943 = vpack.c.b16 %v3852, %v3851
    %v3944 = vpack.c.b16 %v3854, %v3853
    %v3945 = vpack.c.b16 %v3856, %v3855
    %v3946 = vpack.c.b16 %v3858, %v3857
    %v3947 = vpack.c.b16 %v3860, %v3859
    %v3948 = vpack.c.b16 %v3862, %v3861
    %v3949 = vpack.c.b16 %v3864, %v3863
    %v3950 = vpack.c.b16 %v3866, %v3865
    %v3951 = vpack.c.b16 %v3868, %v3867
    %v3952 = vpack.c.b16 %v3870, %v3869
    %v3953 = vpack.c.b16 %v3872, %v3871
    %v3954 = vpack.c.b16 %v3874, %v3873
    %v3955 = vpack.c.b16 %v3876, %v3875
    %v3956 = vpack.c.b16 %v3878, %v3877
    %v3957 = vpack.c.b16 %v3880, %v3879
    %v3958 = vpack.c.b16 %v3882, %v3881
    %v3959 = vpack.c.b16 %v3884, %v3883
    %v3960 = vpack.c.b16 %v3886, %v3885
    %v3961 = vpack.c.b16 %v3888, %v3887
    %v3962 = vpack.c.b16 %v3890, %v3889
    %v3963 = vpack.c.b16 %v3892, %v3891
    %v3964 = vpack.c.b16 %v3894, %v3893
    %v3965 = vpack.c.b16 %v3896, %v3895
    %v3966 = vpack.c.b16 %v3898, %v3897
    %v3967 = vpack.c.b16 %v3900, %v3899
    %v3968 = vpack.c.b16 %v3902, %v3901
    %v3969 = vpack.c.b16 %v3904, %v3903
    %v3970 = vpack.c.b16 %v3906, %v3905
    %4035 = vmatpush.bf16.msra.mxu0 %v3914
    %4036 = vmatpush.bf16.msra.mxu0 %v3913
    %4037 = vmatpush.bf16.msra.mxu0 %v3912
    %4038 = vmatpush.bf16.msra.mxu0 %v3911
    %4039 = vmatpush.bf16.msra.mxu0 %v3910
    %4040 = vmatpush.bf16.msra.mxu0 %v3909
    %4041 = vmatpush.bf16.msra.mxu0 %v3908
    %4042 = vmatpush.bf16.msra.mxu0 %v3907
    %4043 = vmatmul.bf16.gmra.mxu0 %v3511
    %v4044 = vpop.f32.mrf.mxu0
    %v4045 = vadd.f32 %v3649, %v4044
    %v4046 = vpop.f32.mrf.mxu0
    %4047 = vdwg.mxu0
    %4048 = vmatpush.bf16.msra.mxu0 %v3922
    %4049 = vmatpush.bf16.msra.mxu0 %v3921
    %4050 = vmatpush.bf16.msra.mxu0 %v3920
    %4051 = vmatpush.bf16.msra.mxu0 %v3919
    %4052 = vmatpush.bf16.msra.mxu0 %v3918
    %4053 = vmatpush.bf16.msra.mxu0 %v3917
    %4054 = vmatpush.bf16.msra.mxu0 %v3916
    %4055 = vmatpush.bf16.msra.mxu0 %v3915
    %4056 = vmatmul.bf16.gmra.mxu0 %v3512
    %v4057 = vpop.f32.mrf.mxu0
    %v4058 = vadd.f32 %v4045, %v4057
    %v4059 = vpop.f32.mrf.mxu0
    %4060 = vdwg.mxu0
    %4061 = vmatpush.bf16.msra.mxu0 %v3930
    %4062 = vmatpush.bf16.msra.mxu0 %v3929
    %4063 = vmatpush.bf16.msra.mxu0 %v3928
    %4064 = vmatpush.bf16.msra.mxu0 %v3927
    %4065 = vmatpush.bf16.msra.mxu0 %v3926
    %4066 = vmatpush.bf16.msra.mxu0 %v3925
    %4067 = vmatpush.bf16.msra.mxu0 %v3924
    %4068 = vmatpush.bf16.msra.mxu0 %v3923
    %4069 = vmatmul.bf16.gmra.mxu0 %v3513
    %v4070 = vpop.f32.mrf.mxu0
    %v4071 = vadd.f32 %v4058, %v4070
    %v4072 = vpop.f32.mrf.mxu0
    %4073 = vdwg.mxu0
    %4074 = vmatpush.bf16.msra.mxu0 %v3938
    %4075 = vmatpush.bf16.msra.mxu0 %v3937
    %4076 = vmatpush.bf16.msra.mxu0 %v3936
    %4077 = vmatpush.bf16.msra.mxu0 %v3935
    %4078 = vmatpush.bf16.msra.mxu0 %v3934
    %4079 = vmatpush.bf16.msra.mxu0 %v3933
    %4080 = vmatpush.bf16.msra.mxu0 %v3932
    %4081 = vmatpush.bf16.msra.mxu0 %v3931
    %4082 = vmatmul.bf16.gmra.mxu0 %v3514
    %v4083 = vpop.f32.mrf.mxu0
    %v4084 = vadd.f32 %v4071, %v4083
    %v4085 = vpop.f32.mrf.mxu0
    %4086 = vdwg.mxu0
    %4087 = vmatpush.bf16.msra.mxu0 %v3946
    %4088 = vmatpush.bf16.msra.mxu0 %v3945
    %4089 = vmatpush.bf16.msra.mxu0 %v3944
    %4090 = vmatpush.bf16.msra.mxu0 %v3943
    %4091 = vmatpush.bf16.msra.mxu0 %v3942
    %4092 = vmatpush.bf16.msra.mxu0 %v3941
    %4093 = vmatpush.bf16.msra.mxu0 %v3940
    %4094 = vmatpush.bf16.msra.mxu0 %v3939
    %4095 = vmatmul.bf16.gmra.mxu0 %v3515
    %v4096 = vpop.f32.mrf.mxu0
    %v4097 = vadd.f32 %v4084, %v4096
    %v4098 = vpop.f32.mrf.mxu0
    %4099 = vdwg.mxu0
    %4100 = vmatpush.bf16.msra.mxu0 %v3954
    %4101 = vmatpush.bf16.msra.mxu0 %v3953
    %4102 = vmatpush.bf16.msra.mxu0 %v3952
    %4103 = vmatpush.bf16.msra.mxu0 %v3951
    %4104 = vmatpush.bf16.msra.mxu0 %v3950
    %4105 = vmatpush.bf16.msra.mxu0 %v3949
    %4106 = vmatpush.bf16.msra.mxu0 %v3948
    %4107 = vmatpush.bf16.msra.mxu0 %v3947
    %4108 = vmatmul.bf16.gmra.mxu0 %v3516
    %v4109 = vpop.f32.mrf.mxu0
    %v4110 = vadd.f32 %v4097, %v4109
    %v4111 = vpop.f32.mrf.mxu0
    %4112 = vdwg.mxu0
    %4113 = vmatpush.bf16.msra.mxu0 %v3962
    %4114 = vmatpush.bf16.msra.mxu0 %v3961
    %4115 = vmatpush.bf16.msra.mxu0 %v3960
    %4116 = vmatpush.bf16.msra.mxu0 %v3959
    %4117 = vmatpush.bf16.msra.mxu0 %v3958
    %4118 = vmatpush.bf16.msra.mxu0 %v3957
    %4119 = vmatpush.bf16.msra.mxu0 %v3956
    %4120 = vmatpush.bf16.msra.mxu0 %v3955
    %4121 = vmatmul.bf16.gmra.mxu0 %v3517
    %v4122 = vpop.f32.mrf.mxu0
    %v4123 = vadd.f32 %v4110, %v4122
    %v4124 = vpop.f32.mrf.mxu0
    %4125 = vdwg.mxu0
    %4126 = vmatpush.bf16.msra.mxu0 %v3970
    %4127 = vmatpush.bf16.msra.mxu0 %v3969
    %4128 = vmatpush.bf16.msra.mxu0 %v3968
    %4129 = vmatpush.bf16.msra.mxu0 %v3967
    %4130 = vmatpush.bf16.msra.mxu0 %v3966
    %4131 = vmatpush.bf16.msra.mxu0 %v3965
    %4132 = vmatpush.bf16.msra.mxu0 %v3964
    %4133 = vmatpush.bf16.msra.mxu0 %v3963
    %4134 = vmatmul.bf16.gmra.mxu0 %v3518
    %v4135 = vpop.f32.mrf.mxu0
    %v4136 = vadd.f32 %v4123, %v4135
    %v4137 = vpop.f32.mrf.mxu0
    %4138 = vdwg.mxu0
    %v4139 = vtanh.pop %v4136
    %v4140 = vld [vmem:[#allocation24] sm:$0xff]
    %v4141 = vld [vmem:[#allocation24 + $0x8] sm:$0xff]
    %v4142 = vld [vmem:[%s18] sm:$0xff]
    %v4143 = vld [vmem:[%s18 + $0x8] sm:$0xff]
    %v4144 = vld [vmem:[%s19] sm:$0xff]
    %v4145 = vld [vmem:[%s19 + $0x8] sm:$0xff]
    %v4146 = vld [vmem:[%s19 + $0x10] sm:$0xff]
    %v4147 = vld [vmem:[%s19 + $0x18] sm:$0xff]
    %v4148 = vld [vmem:[%s20] sm:$0xff]
    %v4149 = vld [vmem:[%s20 + $0x8] sm:$0xff]
    %v4150 = vld [vmem:[#allocation26] sm:$0xff]
    %v4151 = vld [vmem:[#allocation26 + $0x8] sm:$0xff]
    %v4152 = vld [vmem:[#allocation5] sm:$0x1]
    %v4154 = vrot.slane %v4139, 1
    %v4156 = vrot.slane %v4139, 2
    %v4158 = vrot.slane %v4139, 3
    %v4160 = vrot.slane %v4139, 4
    %v4162 = vrot.slane %v4139, 5
    %v4164 = vrot.slane %v4139, 6
    %v4166 = vrot.slane %v4139, 7
    %4169 = vset.pattern.permute.xlu0 0
    %4170 = vperm.xlu0 %4169, %v4142
    %v4171 = vpop.permute.xlu0 %4170
    %4174 = vset.pattern.permute.xlu0 0
    %4175 = vperm.xlu0 %4174, %v4143
    %v4176 = vpop.permute.xlu0 %4175
    %v4178 = vadd.f32 %v4171, 0.0
    %v4179 = vadd.f32 %v4176, 0.0
    %4181 = vrot.lane.b32.xlu0 %v4139, 4
    %v4182 = vpop.permute.xlu0 %4181
    %4183 = vrot.lane.b32.xlu0 0.0, 4
    %v4184 = vpop.permute.xlu0 %4183
    %4185 = vrot.lane.b32.xlu0 %v4154, 4
    %v4186 = vpop.permute.xlu0 %4185
    %4187 = vrot.lane.b32.xlu0 %v4156, 4
    %v4188 = vpop.permute.xlu0 %4187
    %4189 = vrot.lane.b32.xlu0 %v4158, 4
    %v4190 = vpop.permute.xlu0 %4189
    %4191 = vrot.lane.b32.xlu0 %v4160, 4
    %v4192 = vpop.permute.xlu0 %4191
    %4193 = vrot.lane.b32.xlu0 %v4162, 4
    %v4194 = vpop.permute.xlu0 %4193
    %4195 = vrot.lane.b32.xlu0 %v4164, 4
    %v4196 = vpop.permute.xlu0 %4195
    %4197 = vrot.lane.b32.xlu0 %v4166, 4
    %v4198 = vpop.permute.xlu0 %4197
    %vm4199 = vcmask 31744
    %v4200 = vsel %vm4199, %v4182, %v4184
    %v4201 = vsel %vm4199, %v4184, %v4186
    %v4202 = vsel %vm4199, %v4186, %v4184
    %v4203 = vsel %vm4199, %v4184, %v4188
    %v4204 = vsel %vm4199, %v4188, %v4184
    %v4205 = vsel %vm4199, %v4184, %v4190
    %v4206 = vsel %vm4199, %v4190, %v4184
    %v4207 = vsel %vm4199, %v4184, %v4192
    %v4208 = vsel %vm4199, %v4192, %v4184
    %v4209 = vsel %vm4199, %v4184, %v4194
    %v4210 = vsel %vm4199, %v4194, %v4184
    %v4211 = vsel %vm4199, %v4184, %v4196
    %v4212 = vsel %vm4199, %v4196, %v4184
    %v4213 = vsel %vm4199, %v4184, %v4198
    %v4214 = vsel %vm4199, %v4198, %v4184
    %v4231 = vsel %vm4199, 0.0, %v4182
    %4233 = vset.pattern.permute.xlu0 0
    %4234 = vperm.xlu0 %4233, %v4140
    %v4235 = vpop.permute.xlu0 %4234
    %4238 = vset.pattern.permute.xlu0 0
    %4239 = vperm.xlu0 %4238, %v4141
    %v4240 = vpop.permute.xlu0 %4239
    %v4242 = vperm.slane %v4231, 0
    %v4243 = vperm.slane %v4200, 0
    %v4244 = vperm.slane %v4201, 0
    %v4245 = vperm.slane %v4202, 0
    %v4246 = vperm.slane %v4203, 0
    %v4247 = vperm.slane %v4204, 0
    %v4248 = vperm.slane %v4205, 0
    %v4249 = vperm.slane %v4206, 0
    %v4250 = vperm.slane %v4207, 0
    %v4251 = vperm.slane %v4208, 0
    %v4252 = vperm.slane %v4209, 0
    %v4253 = vperm.slane %v4210, 0
    %v4254 = vperm.slane %v4211, 0
    %v4255 = vperm.slane %v4212, 0
    %v4256 = vperm.slane %v4213, 0
    %v4257 = vperm.slane %v4214, 0
    %v4258 = vmul.f32 %v4235, %v4242
    %v4259 = vmul.f32 %v4235, %v4243
    %v4260 = vmul.f32 %v4235, %v4244
    %v4261 = vmul.f32 %v4235, %v4245
    %v4262 = vmul.f32 %v4235, %v4246
    %v4263 = vmul.f32 %v4235, %v4247
    %v4264 = vmul.f32 %v4235, %v4248
    %v4265 = vmul.f32 %v4235, %v4249
    %v4266 = vmul.f32 %v4235, %v4250
    %v4267 = vmul.f32 %v4235, %v4251
    %v4268 = vmul.f32 %v4235, %v4252
    %v4269 = vmul.f32 %v4235, %v4253
    %v4270 = vmul.f32 %v4235, %v4254
    %v4271 = vmul.f32 %v4235, %v4255
    %v4272 = vmul.f32 %v4235, %v4256
    %v4273 = vmul.f32 %v4235, %v4257
    %v4274 = vmul.f32 %v4240, %v4242
    %v4275 = vmul.f32 %v4240, %v4243
    %v4276 = vmul.f32 %v4240, %v4244
    %v4277 = vmul.f32 %v4240, %v4245
    %v4278 = vmul.f32 %v4240, %v4246
    %v4279 = vmul.f32 %v4240, %v4247
    %v4280 = vmul.f32 %v4240, %v4248
    %v4281 = vmul.f32 %v4240, %v4249
    %v4282 = vmul.f32 %v4240, %v4250
    %v4283 = vmul.f32 %v4240, %v4251
    %v4284 = vmul.f32 %v4240, %v4252
    %v4285 = vmul.f32 %v4240, %v4253
    %v4286 = vmul.f32 %v4240, %v4254
    %v4287 = vmul.f32 %v4240, %v4255
    %v4288 = vmul.f32 %v4240, %v4256
    %v4289 = vmul.f32 %v4240, %v4257
    %v4290 = vadd.f32 %v4178, %v4258
    %v4291 = vadd.f32 %v4178, %v4259
    %v4292 = vadd.f32 %v4178, %v4260
    %v4293 = vadd.f32 %v4178, %v4261
    %v4294 = vadd.f32 %v4178, %v4262
    %v4295 = vadd.f32 %v4178, %v4263
    %v4296 = vadd.f32 %v4178, %v4264
    %v4297 = vadd.f32 %v4178, %v4265
    %v4298 = vadd.f32 %v4178, %v4266
    %v4299 = vadd.f32 %v4178, %v4267
    %v4300 = vadd.f32 %v4178, %v4268
    %v4301 = vadd.f32 %v4178, %v4269
    %v4302 = vadd.f32 %v4178, %v4270
    %v4303 = vadd.f32 %v4178, %v4271
    %v4304 = vadd.f32 %v4178, %v4272
    %v4305 = vadd.f32 %v4178, %v4273
    %v4306 = vadd.f32 %v4179, %v4274
    %v4307 = vadd.f32 %v4179, %v4275
    %v4308 = vadd.f32 %v4179, %v4276
    %v4309 = vadd.f32 %v4179, %v4277
    %v4310 = vadd.f32 %v4179, %v4278
    %v4311 = vadd.f32 %v4179, %v4279
    %v4312 = vadd.f32 %v4179, %v4280
    %v4313 = vadd.f32 %v4179, %v4281
    %v4314 = vadd.f32 %v4179, %v4282
    %v4315 = vadd.f32 %v4179, %v4283
    %v4316 = vadd.f32 %v4179, %v4284
    %v4317 = vadd.f32 %v4179, %v4285
    %v4318 = vadd.f32 %v4179, %v4286
    %v4319 = vadd.f32 %v4179, %v4287
    %v4320 = vadd.f32 %v4179, %v4288
    %v4321 = vadd.f32 %v4179, %v4289
    %4322 = vrot.lane.b32.xlu0 %v4139, 3
    %v4323 = vpop.permute.xlu0 %4322
    %4324 = vrot.lane.b32.xlu0 0.0, 3
    %v4325 = vpop.permute.xlu0 %4324
    %4326 = vrot.lane.b32.xlu0 %v4154, 3
    %v4327 = vpop.permute.xlu0 %4326
    %4328 = vrot.lane.b32.xlu0 %v4156, 3
    %v4329 = vpop.permute.xlu0 %4328
    %4330 = vrot.lane.b32.xlu0 %v4158, 3
    %v4331 = vpop.permute.xlu0 %4330
    %4332 = vrot.lane.b32.xlu0 %v4160, 3
    %v4333 = vpop.permute.xlu0 %4332
    %4334 = vrot.lane.b32.xlu0 %v4162, 3
    %v4335 = vpop.permute.xlu0 %4334
    %4336 = vrot.lane.b32.xlu0 %v4164, 3
    %v4337 = vpop.permute.xlu0 %4336
    %4338 = vrot.lane.b32.xlu0 %v4166, 3
    %v4339 = vpop.permute.xlu0 %4338
    %vm4340 = vcmask 23552
    %v4341 = vsel %vm4340, %v4323, %v4325
    %v4342 = vsel %vm4340, %v4325, %v4327
    %v4343 = vsel %vm4340, %v4327, %v4325
    %v4344 = vsel %vm4340, %v4325, %v4329
    %v4345 = vsel %vm4340, %v4329, %v4325
    %v4346 = vsel %vm4340, %v4325, %v4331
    %v4347 = vsel %vm4340, %v4331, %v4325
    %v4348 = vsel %vm4340, %v4325, %v4333
    %v4349 = vsel %vm4340, %v4333, %v4325
    %v4350 = vsel %vm4340, %v4325, %v4335
    %v4351 = vsel %vm4340, %v4335, %v4325
    %v4352 = vsel %vm4340, %v4325, %v4337
    %v4353 = vsel %vm4340, %v4337, %v4325
    %v4354 = vsel %vm4340, %v4325, %v4339
    %v4355 = vsel %vm4340, %v4339, %v4325
    %v4372 = vsel %vm4340, 0.0, %v4323
    %4373 = vset.pattern.permute.xlu0 1
    %4374 = vperm.xlu0 %4373, %v4140
    %v4375 = vpop.permute.xlu0 %4374
    %4377 = vset.pattern.permute.xlu0 1
    %4378 = vperm.xlu0 %4377, %v4141
    %v4379 = vpop.permute.xlu0 %4378
    %v4381 = vperm.slane %v4372, 0
    %v4382 = vperm.slane %v4341, 0
    %v4383 = vperm.slane %v4342, 0
    %v4384 = vperm.slane %v4343, 0
    %v4385 = vperm.slane %v4344, 0
    %v4386 = vperm.slane %v4345, 0
    %v4387 = vperm.slane %v4346, 0
    %v4388 = vperm.slane %v4347, 0
    %v4389 = vperm.slane %v4348, 0
    %v4390 = vperm.slane %v4349, 0
    %v4391 = vperm.slane %v4350, 0
    %v4392 = vperm.slane %v4351, 0
    %v4393 = vperm.slane %v4352, 0
    %v4394 = vperm.slane %v4353, 0
    %v4395 = vperm.slane %v4354, 0
    %v4396 = vperm.slane %v4355, 0
    %v4397 = vmul.f32 %v4375, %v4381
    %v4398 = vmul.f32 %v4375, %v4382
    %v4399 = vmul.f32 %v4375, %v4383
    %v4400 = vmul.f32 %v4375, %v4384
    %v4401 = vmul.f32 %v4375, %v4385
    %v4402 = vmul.f32 %v4375, %v4386
    %v4403 = vmul.f32 %v4375, %v4387
    %v4404 = vmul.f32 %v4375, %v4388
    %v4405 = vmul.f32 %v4375, %v4389
    %v4406 = vmul.f32 %v4375, %v4390
    %v4407 = vmul.f32 %v4375, %v4391
    %v4408 = vmul.f32 %v4375, %v4392
    %v4409 = vmul.f32 %v4375, %v4393
    %v4410 = vmul.f32 %v4375, %v4394
    %v4411 = vmul.f32 %v4375, %v4395
    %v4412 = vmul.f32 %v4375, %v4396
    %v4413 = vmul.f32 %v4379, %v4381
    %v4414 = vmul.f32 %v4379, %v4382
    %v4415 = vmul.f32 %v4379, %v4383
    %v4416 = vmul.f32 %v4379, %v4384
    %v4417 = vmul.f32 %v4379, %v4385
    %v4418 = vmul.f32 %v4379, %v4386
    %v4419 = vmul.f32 %v4379, %v4387
    %v4420 = vmul.f32 %v4379, %v4388
    %v4421 = vmul.f32 %v4379, %v4389
    %v4422 = vmul.f32 %v4379, %v4390
    %v4423 = vmul.f32 %v4379, %v4391
    %v4424 = vmul.f32 %v4379, %v4392
    %v4425 = vmul.f32 %v4379, %v4393
    %v4426 = vmul.f32 %v4379, %v4394
    %v4427 = vmul.f32 %v4379, %v4395
    %v4428 = vmul.f32 %v4379, %v4396
    %v4429 = vadd.f32 %v4290, %v4397
    %v4430 = vadd.f32 %v4291, %v4398
    %v4431 = vadd.f32 %v4292, %v4399
    %v4432 = vadd.f32 %v4293, %v4400
    %v4433 = vadd.f32 %v4294, %v4401
    %v4434 = vadd.f32 %v4295, %v4402
    %v4435 = vadd.f32 %v4296, %v4403
    %v4436 = vadd.f32 %v4297, %v4404
    %v4437 = vadd.f32 %v4298, %v4405
    %v4438 = vadd.f32 %v4299, %v4406
    %v4439 = vadd.f32 %v4300, %v4407
    %v4440 = vadd.f32 %v4301, %v4408
    %v4441 = vadd.f32 %v4302, %v4409
    %v4442 = vadd.f32 %v4303, %v4410
    %v4443 = vadd.f32 %v4304, %v4411
    %v4444 = vadd.f32 %v4305, %v4412
    %v4445 = vadd.f32 %v4306, %v4413
    %v4446 = vadd.f32 %v4307, %v4414
    %v4447 = vadd.f32 %v4308, %v4415
    %v4448 = vadd.f32 %v4309, %v4416
    %v4449 = vadd.f32 %v4310, %v4417
    %v4450 = vadd.f32 %v4311, %v4418
    %v4451 = vadd.f32 %v4312, %v4419
    %v4452 = vadd.f32 %v4313, %v4420
    %v4453 = vadd.f32 %v4314, %v4421
    %v4454 = vadd.f32 %v4315, %v4422
    %v4455 = vadd.f32 %v4316, %v4423
    %v4456 = vadd.f32 %v4317, %v4424
    %v4457 = vadd.f32 %v4318, %v4425
    %v4458 = vadd.f32 %v4319, %v4426
    %v4459 = vadd.f32 %v4320, %v4427
    %v4460 = vadd.f32 %v4321, %v4428
    %4461 = vrot.lane.b32.xlu0 %v4139, 2
    %v4462 = vpop.permute.xlu0 %4461
    %4463 = vrot.lane.b32.xlu0 0.0, 2
    %v4464 = vpop.permute.xlu0 %4463
    %4465 = vrot.lane.b32.xlu0 %v4154, 2
    %v4466 = vpop.permute.xlu0 %4465
    %4467 = vrot.lane.b32.xlu0 %v4156, 2
    %v4468 = vpop.permute.xlu0 %4467
    %4469 = vrot.lane.b32.xlu0 %v4158, 2
    %v4470 = vpop.permute.xlu0 %4469
    %4471 = vrot.lane.b32.xlu0 %v4160, 2
    %v4472 = vpop.permute.xlu0 %4471
    %4473 = vrot.lane.b32.xlu0 %v4162, 2
    %v4474 = vpop.permute.xlu0 %4473
    %4475 = vrot.lane.b32.xlu0 %v4164, 2
    %v4476 = vpop.permute.xlu0 %4475
    %4477 = vrot.lane.b32.xlu0 %v4166, 2
    %v4478 = vpop.permute.xlu0 %4477
    %vm4479 = vcmask 15360
    %v4480 = vsel %vm4479, %v4462, %v4464
    %v4481 = vsel %vm4479, %v4464, %v4466
    %v4482 = vsel %vm4479, %v4466, %v4464
    %v4483 = vsel %vm4479, %v4464, %v4468
    %v4484 = vsel %vm4479, %v4468, %v4464
    %v4485 = vsel %vm4479, %v4464, %v4470
    %v4486 = vsel %vm4479, %v4470, %v4464
    %v4487 = vsel %vm4479, %v4464, %v4472
    %v4488 = vsel %vm4479, %v4472, %v4464
    %v4489 = vsel %vm4479, %v4464, %v4474
    %v4490 = vsel %vm4479, %v4474, %v4464
    %v4491 = vsel %vm4479, %v4464, %v4476
    %v4492 = vsel %vm4479, %v4476, %v4464
    %v4493 = vsel %vm4479, %v4464, %v4478
    %v4494 = vsel %vm4479, %v4478, %v4464
    %v4511 = vsel %vm4479, 0.0, %v4462
    %4512 = vset.pattern.permute.xlu0 2
    %4513 = vperm.xlu0 %4512, %v4140
    %v4514 = vpop.permute.xlu0 %4513
    %4516 = vset.pattern.permute.xlu0 2
    %4517 = vperm.xlu0 %4516, %v4141
    %v4518 = vpop.permute.xlu0 %4517
    %v4520 = vperm.slane %v4511, 0
    %v4521 = vperm.slane %v4480, 0
    %v4522 = vperm.slane %v4481, 0
    %v4523 = vperm.slane %v4482, 0
    %v4524 = vperm.slane %v4483, 0
    %v4525 = vperm.slane %v4484, 0
    %v4526 = vperm.slane %v4485, 0
    %v4527 = vperm.slane %v4486, 0
    %v4528 = vperm.slane %v4487, 0
    %v4529 = vperm.slane %v4488, 0
    %v4530 = vperm.slane %v4489, 0
    %v4531 = vperm.slane %v4490, 0
    %v4532 = vperm.slane %v4491, 0
    %v4533 = vperm.slane %v4492, 0
    %v4534 = vperm.slane %v4493, 0
    %v4535 = vperm.slane %v4494, 0
    %v4536 = vmul.f32 %v4514, %v4520
    %v4537 = vmul.f32 %v4514, %v4521
    %v4538 = vmul.f32 %v4514, %v4522
    %v4539 = vmul.f32 %v4514, %v4523
    %v4540 = vmul.f32 %v4514, %v4524
    %v4541 = vmul.f32 %v4514, %v4525
    %v4542 = vmul.f32 %v4514, %v4526
    %v4543 = vmul.f32 %v4514, %v4527
    %v4544 = vmul.f32 %v4514, %v4528
    %v4545 = vmul.f32 %v4514, %v4529
    %v4546 = vmul.f32 %v4514, %v4530
    %v4547 = vmul.f32 %v4514, %v4531
    %v4548 = vmul.f32 %v4514, %v4532
    %v4549 = vmul.f32 %v4514, %v4533
    %v4550 = vmul.f32 %v4514, %v4534
    %v4551 = vmul.f32 %v4514, %v4535
    %v4552 = vmul.f32 %v4518, %v4520
    %v4553 = vmul.f32 %v4518, %v4521
    %v4554 = vmul.f32 %v4518, %v4522
    %v4555 = vmul.f32 %v4518, %v4523
    %v4556 = vmul.f32 %v4518, %v4524
    %v4557 = vmul.f32 %v4518, %v4525
    %v4558 = vmul.f32 %v4518, %v4526
    %v4559 = vmul.f32 %v4518, %v4527
    %v4560 = vmul.f32 %v4518, %v4528
    %v4561 = vmul.f32 %v4518, %v4529
    %v4562 = vmul.f32 %v4518, %v4530
    %v4563 = vmul.f32 %v4518, %v4531
    %v4564 = vmul.f32 %v4518, %v4532
    %v4565 = vmul.f32 %v4518, %v4533
    %v4566 = vmul.f32 %v4518, %v4534
    %v4567 = vmul.f32 %v4518, %v4535
    %v4568 = vadd.f32 %v4429, %v4536
    %v4569 = vadd.f32 %v4430, %v4537
    %v4570 = vadd.f32 %v4431, %v4538
    %v4571 = vadd.f32 %v4432, %v4539
    %v4572 = vadd.f32 %v4433, %v4540
    %v4573 = vadd.f32 %v4434, %v4541
    %v4574 = vadd.f32 %v4435, %v4542
    %v4575 = vadd.f32 %v4436, %v4543
    %v4576 = vadd.f32 %v4437, %v4544
    %v4577 = vadd.f32 %v4438, %v4545
    %v4578 = vadd.f32 %v4439, %v4546
    %v4579 = vadd.f32 %v4440, %v4547
    %v4580 = vadd.f32 %v4441, %v4548
    %v4581 = vadd.f32 %v4442, %v4549
    %v4582 = vadd.f32 %v4443, %v4550
    %v4583 = vadd.f32 %v4444, %v4551
    %v4584 = vadd.f32 %v4445, %v4552
    %v4585 = vadd.f32 %v4446, %v4553
    %v4586 = vadd.f32 %v4447, %v4554
    %v4587 = vadd.f32 %v4448, %v4555
    %v4588 = vadd.f32 %v4449, %v4556
    %v4589 = vadd.f32 %v4450, %v4557
    %v4590 = vadd.f32 %v4451, %v4558
    %v4591 = vadd.f32 %v4452, %v4559
    %v4592 = vadd.f32 %v4453, %v4560
    %v4593 = vadd.f32 %v4454, %v4561
    %v4594 = vadd.f32 %v4455, %v4562
    %v4595 = vadd.f32 %v4456, %v4563
    %v4596 = vadd.f32 %v4457, %v4564
    %v4597 = vadd.f32 %v4458, %v4565
    %v4598 = vadd.f32 %v4459, %v4566
    %v4599 = vadd.f32 %v4460, %v4567
    %4600 = vrot.lane.b32.xlu0 %v4139, 1
    %v4601 = vpop.permute.xlu0 %4600
    %4602 = vrot.lane.b32.xlu0 0.0, 1
    %v4603 = vpop.permute.xlu0 %4602
    %4604 = vrot.lane.b32.xlu0 %v4154, 1
    %v4605 = vpop.permute.xlu0 %4604
    %4606 = vrot.lane.b32.xlu0 %v4156, 1
    %v4607 = vpop.permute.xlu0 %4606
    %4608 = vrot.lane.b32.xlu0 %v4158, 1
    %v4609 = vpop.permute.xlu0 %4608
    %4610 = vrot.lane.b32.xlu0 %v4160, 1
    %v4611 = vpop.permute.xlu0 %4610
    %4612 = vrot.lane.b32.xlu0 %v4162, 1
    %v4613 = vpop.permute.xlu0 %4612
    %4614 = vrot.lane.b32.xlu0 %v4164, 1
    %v4615 = vpop.permute.xlu0 %4614
    %4616 = vrot.lane.b32.xlu0 %v4166, 1
    %v4617 = vpop.permute.xlu0 %4616
    %vm4618 = vcmask 7168
    %v4619 = vsel %vm4618, %v4601, %v4603
    %v4620 = vsel %vm4618, %v4603, %v4605
    %v4621 = vsel %vm4618, %v4605, %v4603
    %v4622 = vsel %vm4618, %v4603, %v4607
    %v4623 = vsel %vm4618, %v4607, %v4603
    %v4624 = vsel %vm4618, %v4603, %v4609
    %v4625 = vsel %vm4618, %v4609, %v4603
    %v4626 = vsel %vm4618, %v4603, %v4611
    %v4627 = vsel %vm4618, %v4611, %v4603
    %v4628 = vsel %vm4618, %v4603, %v4613
    %v4629 = vsel %vm4618, %v4613, %v4603
    %v4630 = vsel %vm4618, %v4603, %v4615
    %v4631 = vsel %vm4618, %v4615, %v4603
    %v4632 = vsel %vm4618, %v4603, %v4617
    %v4633 = vsel %vm4618, %v4617, %v4603
    %v4650 = vsel %vm4618, 0.0, %v4601
    %4651 = vset.pattern.permute.xlu0 3
    %4652 = vperm.xlu0 %4651, %v4140
    %v4653 = vpop.permute.xlu0 %4652
    %4655 = vset.pattern.permute.xlu0 3
    %4656 = vperm.xlu0 %4655, %v4141
    %v4657 = vpop.permute.xlu0 %4656
    %v4659 = vperm.slane %v4650, 0
    %v4660 = vperm.slane %v4619, 0
    %v4661 = vperm.slane %v4620, 0
    %v4662 = vperm.slane %v4621, 0
    %v4663 = vperm.slane %v4622, 0
    %v4664 = vperm.slane %v4623, 0
    %v4665 = vperm.slane %v4624, 0
    %v4666 = vperm.slane %v4625, 0
    %v4667 = vperm.slane %v4626, 0
    %v4668 = vperm.slane %v4627, 0
    %v4669 = vperm.slane %v4628, 0
    %v4670 = vperm.slane %v4629, 0
    %v4671 = vperm.slane %v4630, 0
    %v4672 = vperm.slane %v4631, 0
    %v4673 = vperm.slane %v4632, 0
    %v4674 = vperm.slane %v4633, 0
    %v4675 = vmul.f32 %v4653, %v4659
    %v4676 = vmul.f32 %v4653, %v4660
    %v4677 = vmul.f32 %v4653, %v4661
    %v4678 = vmul.f32 %v4653, %v4662
    %v4679 = vmul.f32 %v4653, %v4663
    %v4680 = vmul.f32 %v4653, %v4664
    %v4681 = vmul.f32 %v4653, %v4665
    %v4682 = vmul.f32 %v4653, %v4666
    %v4683 = vmul.f32 %v4653, %v4667
    %v4684 = vmul.f32 %v4653, %v4668
    %v4685 = vmul.f32 %v4653, %v4669
    %v4686 = vmul.f32 %v4653, %v4670
    %v4687 = vmul.f32 %v4653, %v4671
    %v4688 = vmul.f32 %v4653, %v4672
    %v4689 = vmul.f32 %v4653, %v4673
    %v4690 = vmul.f32 %v4653, %v4674
    %v4691 = vmul.f32 %v4657, %v4659
    %v4692 = vmul.f32 %v4657, %v4660
    %v4693 = vmul.f32 %v4657, %v4661
    %v4694 = vmul.f32 %v4657, %v4662
    %v4695 = vmul.f32 %v4657, %v4663
    %v4696 = vmul.f32 %v4657, %v4664
    %v4697 = vmul.f32 %v4657, %v4665
    %v4698 = vmul.f32 %v4657, %v4666
    %v4699 = vmul.f32 %v4657, %v4667
    %v4700 = vmul.f32 %v4657, %v4668
    %v4701 = vmul.f32 %v4657, %v4669
    %v4702 = vmul.f32 %v4657, %v4670
    %v4703 = vmul.f32 %v4657, %v4671
    %v4704 = vmul.f32 %v4657, %v4672
    %v4705 = vmul.f32 %v4657, %v4673
    %v4706 = vmul.f32 %v4657, %v4674
    %v4707 = vadd.f32 %v4568, %v4675
    %v4708 = vadd.f32 %v4569, %v4676
    %v4709 = vadd.f32 %v4570, %v4677
    %v4710 = vadd.f32 %v4571, %v4678
    %v4711 = vadd.f32 %v4572, %v4679
    %v4712 = vadd.f32 %v4573, %v4680
    %v4713 = vadd.f32 %v4574, %v4681
    %v4714 = vadd.f32 %v4575, %v4682
    %v4715 = vadd.f32 %v4576, %v4683
    %v4716 = vadd.f32 %v4577, %v4684
    %v4717 = vadd.f32 %v4578, %v4685
    %v4718 = vadd.f32 %v4579, %v4686
    %v4719 = vadd.f32 %v4580, %v4687
    %v4720 = vadd.f32 %v4581, %v4688
    %v4721 = vadd.f32 %v4582, %v4689
    %v4722 = vadd.f32 %v4583, %v4690
    %v4723 = vadd.f32 %v4584, %v4691
    %v4724 = vadd.f32 %v4585, %v4692
    %v4725 = vadd.f32 %v4586, %v4693
    %v4726 = vadd.f32 %v4587, %v4694
    %v4727 = vadd.f32 %v4588, %v4695
    %v4728 = vadd.f32 %v4589, %v4696
    %v4729 = vadd.f32 %v4590, %v4697
    %v4730 = vadd.f32 %v4591, %v4698
    %v4731 = vadd.f32 %v4592, %v4699
    %v4732 = vadd.f32 %v4593, %v4700
    %v4733 = vadd.f32 %v4594, %v4701
    %v4734 = vadd.f32 %v4595, %v4702
    %v4735 = vadd.f32 %v4596, %v4703
    %v4736 = vadd.f32 %v4597, %v4704
    %v4737 = vadd.f32 %v4598, %v4705
    %v4738 = vadd.f32 %v4599, %v4706
    %4739 = vset.pattern.permute.xlu0 4
    %4740 = vperm.xlu0 %4739, %v4140
    %v4741 = vpop.permute.xlu0 %4740
    %4743 = vset.pattern.permute.xlu0 4
    %4744 = vperm.xlu0 %4743, %v4141
    %v4745 = vpop.permute.xlu0 %4744
    %v4747 = vperm.slane %v4139, 0
    %v4748 = vperm.slane 0.0, 0
    %v4749 = vperm.slane %v4154, 0
    %v4750 = vperm.slane %v4156, 0
    %v4751 = vperm.slane %v4158, 0
    %v4752 = vperm.slane %v4160, 0
    %v4753 = vperm.slane %v4162, 0
    %v4754 = vperm.slane %v4164, 0
    %v4755 = vperm.slane %v4166, 0
    %v4756 = vmul.f32 %v4741, %v4747
    %v4757 = vmul.f32 %v4741, %v4748
    %v4758 = vmul.f32 %v4741, %v4749
    %v4759 = vmul.f32 %v4741, %v4750
    %v4760 = vmul.f32 %v4741, %v4751
    %v4761 = vmul.f32 %v4741, %v4752
    %v4762 = vmul.f32 %v4741, %v4753
    %v4763 = vmul.f32 %v4741, %v4754
    %v4764 = vmul.f32 %v4741, %v4755
    %v4765 = vmul.f32 %v4745, %v4747
    %v4766 = vmul.f32 %v4745, %v4748
    %v4767 = vmul.f32 %v4745, %v4749
    %v4768 = vmul.f32 %v4745, %v4750
    %v4769 = vmul.f32 %v4745, %v4751
    %v4770 = vmul.f32 %v4745, %v4752
    %v4771 = vmul.f32 %v4745, %v4753
    %v4772 = vmul.f32 %v4745, %v4754
    %v4773 = vmul.f32 %v4745, %v4755
    %v4774 = vadd.f32 %v4707, %v4756
    %v4775 = vadd.f32 %v4708, %v4757
    %v4776 = vadd.f32 %v4709, %v4758
    %v4777 = vadd.f32 %v4710, %v4757
    %v4778 = vadd.f32 %v4711, %v4759
    %v4779 = vadd.f32 %v4712, %v4757
    %v4780 = vadd.f32 %v4713, %v4760
    %v4781 = vadd.f32 %v4714, %v4757
    %v4782 = vadd.f32 %v4715, %v4761
    %v4783 = vadd.f32 %v4716, %v4757
    %v4784 = vadd.f32 %v4717, %v4762
    %v4785 = vadd.f32 %v4718, %v4757
    %v4786 = vadd.f32 %v4719, %v4763
    %v4787 = vadd.f32 %v4720, %v4757
    %v4788 = vadd.f32 %v4721, %v4764
    %v4789 = vadd.f32 %v4722, %v4757
    %v4790 = vadd.f32 %v4723, %v4765
    %v4791 = vadd.f32 %v4724, %v4766
    %v4792 = vadd.f32 %v4725, %v4767
    %v4793 = vadd.f32 %v4726, %v4766
    %v4794 = vadd.f32 %v4727, %v4768
    %v4795 = vadd.f32 %v4728, %v4766
    %v4796 = vadd.f32 %v4729, %v4769
    %v4797 = vadd.f32 %v4730, %v4766
    %v4798 = vadd.f32 %v4731, %v4770
    %v4799 = vadd.f32 %v4732, %v4766
    %v4800 = vadd.f32 %v4733, %v4771
    %v4801 = vadd.f32 %v4734, %v4766
    %v4802 = vadd.f32 %v4735, %v4772
    %v4803 = vadd.f32 %v4736, %v4766
    %v4804 = vadd.f32 %v4737, %v4773
    %v4805 = vadd.f32 %v4738, %v4766
    %4806 = vrot.lane.b32.xlu0 %v4139, 127
    %v4807 = vpop.permute.xlu0 %4806
    %4808 = vrot.lane.b32.xlu0 0.0, 127
    %v4809 = vpop.permute.xlu0 %4808
    %4810 = vrot.lane.b32.xlu0 %v4154, 127
    %v4811 = vpop.permute.xlu0 %4810
    %4812 = vrot.lane.b32.xlu0 %v4156, 127
    %v4813 = vpop.permute.xlu0 %4812
    %4814 = vrot.lane.b32.xlu0 %v4158, 127
    %v4815 = vpop.permute.xlu0 %4814
    %4816 = vrot.lane.b32.xlu0 %v4160, 127
    %v4817 = vpop.permute.xlu0 %4816
    %4818 = vrot.lane.b32.xlu0 %v4162, 127
    %v4819 = vpop.permute.xlu0 %4818
    %4820 = vrot.lane.b32.xlu0 %v4164, 127
    %v4821 = vpop.permute.xlu0 %4820
    %4822 = vrot.lane.b32.xlu0 %v4166, 127
    %v4823 = vpop.permute.xlu0 %4822
    %vm4824 = vcmask 1039360
    %v4825 = vsel %vm4824, %v4807, %v4809
    %v4826 = vsel %vm4824, %v4809, %v4811
    %v4827 = vsel %vm4824, %v4811, %v4809
    %v4828 = vsel %vm4824, %v4809, %v4813
    %v4829 = vsel %vm4824, %v4813, %v4809
    %v4830 = vsel %vm4824, %v4809, %v4815
    %v4831 = vsel %vm4824, %v4815, %v4809
    %v4832 = vsel %vm4824, %v4809, %v4817
    %v4833 = vsel %vm4824, %v4817, %v4809
    %v4834 = vsel %vm4824, %v4809, %v4819
    %v4835 = vsel %vm4824, %v4819, %v4809
    %v4836 = vsel %vm4824, %v4809, %v4821
    %v4837 = vsel %vm4824, %v4821, %v4809
    %v4838 = vsel %vm4824, %v4809, %v4823
    %v4839 = vsel %vm4824, %v4823, %v4809
    %v4856 = vsel %vm4824, %v4809, 0.0
    %4857 = vset.pattern.permute.xlu0 5
    %4858 = vperm.xlu0 %4857, %v4140
    %v4859 = vpop.permute.xlu0 %4858
    %4861 = vset.pattern.permute.xlu0 5
    %4862 = vperm.xlu0 %4861, %v4141
    %v4863 = vpop.permute.xlu0 %4862
    %v4865 = vperm.slane %v4825, 0
    %v4866 = vperm.slane %v4826, 0
    %v4867 = vperm.slane %v4827, 0
    %v4868 = vperm.slane %v4828, 0
    %v4869 = vperm.slane %v4829, 0
    %v4870 = vperm.slane %v4830, 0
    %v4871 = vperm.slane %v4831, 0
    %v4872 = vperm.slane %v4832, 0
    %v4873 = vperm.slane %v4833, 0
    %v4874 = vperm.slane %v4834, 0
    %v4875 = vperm.slane %v4835, 0
    %v4876 = vperm.slane %v4836, 0
    %v4877 = vperm.slane %v4837, 0
    %v4878 = vperm.slane %v4838, 0
    %v4879 = vperm.slane %v4839, 0
    %v4880 = vperm.slane %v4856, 0
    %v4881 = vmul.f32 %v4859, %v4865
    %v4882 = vmul.f32 %v4859, %v4866
    %v4883 = vmul.f32 %v4859, %v4867
    %v4884 = vmul.f32 %v4859, %v4868
    %v4885 = vmul.f32 %v4859, %v4869
    %v4886 = vmul.f32 %v4859, %v4870
    %v4887 = vmul.f32 %v4859, %v4871
    %v4888 = vmul.f32 %v4859, %v4872
    %v4889 = vmul.f32 %v4859, %v4873
    %v4890 = vmul.f32 %v4859, %v4874
    %v4891 = vmul.f32 %v4859, %v4875
    %v4892 = vmul.f32 %v4859, %v4876
    %v4893 = vmul.f32 %v4859, %v4877
    %v4894 = vmul.f32 %v4859, %v4878
    %v4895 = vmul.f32 %v4859, %v4879
    %v4896 = vmul.f32 %v4859, %v4880
    %v4897 = vmul.f32 %v4863, %v4865
    %v4898 = vmul.f32 %v4863, %v4866
    %v4899 = vmul.f32 %v4863, %v4867
    %v4900 = vmul.f32 %v4863, %v4868
    %v4901 = vmul.f32 %v4863, %v4869
    %v4902 = vmul.f32 %v4863, %v4870
    %v4903 = vmul.f32 %v4863, %v4871
    %v4904 = vmul.f32 %v4863, %v4872
    %v4905 = vmul.f32 %v4863, %v4873
    %v4906 = vmul.f32 %v4863, %v4874
    %v4907 = vmul.f32 %v4863, %v4875
    %v4908 = vmul.f32 %v4863, %v4876
    %v4909 = vmul.f32 %v4863, %v4877
    %v4910 = vmul.f32 %v4863, %v4878
    %v4911 = vmul.f32 %v4863, %v4879
    %v4912 = vmul.f32 %v4863, %v4880
    %v4913 = vadd.f32 %v4774, %v4881
    %v4914 = vadd.f32 %v4775, %v4882
    %v4915 = vadd.f32 %v4776, %v4883
    %v4916 = vadd.f32 %v4777, %v4884
    %v4917 = vadd.f32 %v4778, %v4885
    %v4918 = vadd.f32 %v4779, %v4886
    %v4919 = vadd.f32 %v4780, %v4887
    %v4920 = vadd.f32 %v4781, %v4888
    %v4921 = vadd.f32 %v4782, %v4889
    %v4922 = vadd.f32 %v4783, %v4890
    %v4923 = vadd.f32 %v4784, %v4891
    %v4924 = vadd.f32 %v4785, %v4892
    %v4925 = vadd.f32 %v4786, %v4893
    %v4926 = vadd.f32 %v4787, %v4894
    %v4927 = vadd.f32 %v4788, %v4895
    %v4928 = vadd.f32 %v4789, %v4896
    %v4929 = vadd.f32 %v4790, %v4897
    %v4930 = vadd.f32 %v4791, %v4898
    %v4931 = vadd.f32 %v4792, %v4899
    %v4932 = vadd.f32 %v4793, %v4900
    %v4933 = vadd.f32 %v4794, %v4901
    %v4934 = vadd.f32 %v4795, %v4902
    %v4935 = vadd.f32 %v4796, %v4903
    %v4936 = vadd.f32 %v4797, %v4904
    %v4937 = vadd.f32 %v4798, %v4905
    %v4938 = vadd.f32 %v4799, %v4906
    %v4939 = vadd.f32 %v4800, %v4907
    %v4940 = vadd.f32 %v4801, %v4908
    %v4941 = vadd.f32 %v4802, %v4909
    %v4942 = vadd.f32 %v4803, %v4910
    %v4943 = vadd.f32 %v4804, %v4911
    %v4944 = vadd.f32 %v4805, %v4912
    %4945 = vrot.lane.b32.xlu0 %v4139, 126
    %v4946 = vpop.permute.xlu0 %4945
    %4947 = vrot.lane.b32.xlu0 0.0, 126
    %v4948 = vpop.permute.xlu0 %4947
    %4949 = vrot.lane.b32.xlu0 %v4154, 126
    %v4950 = vpop.permute.xlu0 %4949
    %4951 = vrot.lane.b32.xlu0 %v4156, 126
    %v4952 = vpop.permute.xlu0 %4951
    %4953 = vrot.lane.b32.xlu0 %v4158, 126
    %v4954 = vpop.permute.xlu0 %4953
    %4955 = vrot.lane.b32.xlu0 %v4160, 126
    %v4956 = vpop.permute.xlu0 %4955
    %4957 = vrot.lane.b32.xlu0 %v4162, 126
    %v4958 = vpop.permute.xlu0 %4957
    %4959 = vrot.lane.b32.xlu0 %v4164, 126
    %v4960 = vpop.permute.xlu0 %4959
    %4961 = vrot.lane.b32.xlu0 %v4166, 126
    %v4962 = vpop.permute.xlu0 %4961
    %vm4963 = vcmask 1031168
    %v4964 = vsel %vm4963, %v4946, %v4948
    %v4965 = vsel %vm4963, %v4948, %v4950
    %v4966 = vsel %vm4963, %v4950, %v4948
    %v4967 = vsel %vm4963, %v4948, %v4952
    %v4968 = vsel %vm4963, %v4952, %v4948
    %v4969 = vsel %vm4963, %v4948, %v4954
    %v4970 = vsel %vm4963, %v4954, %v4948
    %v4971 = vsel %vm4963, %v4948, %v4956
    %v4972 = vsel %vm4963, %v4956, %v4948
    %v4973 = vsel %vm4963, %v4948, %v4958
    %v4974 = vsel %vm4963, %v4958, %v4948
    %v4975 = vsel %vm4963, %v4948, %v4960
    %v4976 = vsel %vm4963, %v4960, %v4948
    %v4977 = vsel %vm4963, %v4948, %v4962
    %v4978 = vsel %vm4963, %v4962, %v4948
    %v4995 = vsel %vm4963, %v4948, 0.0
    %4996 = vset.pattern.permute.xlu0 6
    %4997 = vperm.xlu0 %4996, %v4140
    %v4998 = vpop.permute.xlu0 %4997
    %5000 = vset.pattern.permute.xlu0 6
    %5001 = vperm.xlu0 %5000, %v4141
    %v5002 = vpop.permute.xlu0 %5001
    %v5004 = vperm.slane %v4964, 0
    %v5005 = vperm.slane %v4965, 0
    %v5006 = vperm.slane %v4966, 0
    %v5007 = vperm.slane %v4967, 0
    %v5008 = vperm.slane %v4968, 0
    %v5009 = vperm.slane %v4969, 0
    %v5010 = vperm.slane %v4970, 0
    %v5011 = vperm.slane %v4971, 0
    %v5012 = vperm.slane %v4972, 0
    %v5013 = vperm.slane %v4973, 0
    %v5014 = vperm.slane %v4974, 0
    %v5015 = vperm.slane %v4975, 0
    %v5016 = vperm.slane %v4976, 0
    %v5017 = vperm.slane %v4977, 0
    %v5018 = vperm.slane %v4978, 0
    %v5019 = vperm.slane %v4995, 0
    %v5020 = vmul.f32 %v4998, %v5004
    %v5021 = vmul.f32 %v4998, %v5005
    %v5022 = vmul.f32 %v4998, %v5006
    %v5023 = vmul.f32 %v4998, %v5007
    %v5024 = vmul.f32 %v4998, %v5008
    %v5025 = vmul.f32 %v4998, %v5009
    %v5026 = vmul.f32 %v4998, %v5010
    %v5027 = vmul.f32 %v4998, %v5011
    %v5028 = vmul.f32 %v4998, %v5012
    %v5029 = vmul.f32 %v4998, %v5013
    %v5030 = vmul.f32 %v4998, %v5014
    %v5031 = vmul.f32 %v4998, %v5015
    %v5032 = vmul.f32 %v4998, %v5016
    %v5033 = vmul.f32 %v4998, %v5017
    %v5034 = vmul.f32 %v4998, %v5018
    %v5035 = vmul.f32 %v4998, %v5019
    %v5036 = vmul.f32 %v5002, %v5004
    %v5037 = vmul.f32 %v5002, %v5005
    %v5038 = vmul.f32 %v5002, %v5006
    %v5039 = vmul.f32 %v5002, %v5007
    %v5040 = vmul.f32 %v5002, %v5008
    %v5041 = vmul.f32 %v5002, %v5009
    %v5042 = vmul.f32 %v5002, %v5010
    %v5043 = vmul.f32 %v5002, %v5011
    %v5044 = vmul.f32 %v5002, %v5012
    %v5045 = vmul.f32 %v5002, %v5013
    %v5046 = vmul.f32 %v5002, %v5014
    %v5047 = vmul.f32 %v5002, %v5015
    %v5048 = vmul.f32 %v5002, %v5016
    %v5049 = vmul.f32 %v5002, %v5017
    %v5050 = vmul.f32 %v5002, %v5018
    %v5051 = vmul.f32 %v5002, %v5019
    %v5052 = vadd.f32 %v4913, %v5020
    %v5053 = vadd.f32 %v4914, %v5021
    %v5054 = vadd.f32 %v4915, %v5022
    %v5055 = vadd.f32 %v4916, %v5023
    %v5056 = vadd.f32 %v4917, %v5024
    %v5057 = vadd.f32 %v4918, %v5025
    %v5058 = vadd.f32 %v4919, %v5026
    %v5059 = vadd.f32 %v4920, %v5027
    %v5060 = vadd.f32 %v4921, %v5028
    %v5061 = vadd.f32 %v4922, %v5029
    %v5062 = vadd.f32 %v4923, %v5030
    %v5063 = vadd.f32 %v4924, %v5031
    %v5064 = vadd.f32 %v4925, %v5032
    %v5065 = vadd.f32 %v4926, %v5033
    %v5066 = vadd.f32 %v4927, %v5034
    %v5067 = vadd.f32 %v4928, %v5035
    %v5068 = vadd.f32 %v4929, %v5036
    %v5069 = vadd.f32 %v4930, %v5037
    %v5070 = vadd.f32 %v4931, %v5038
    %v5071 = vadd.f32 %v4932, %v5039
    %v5072 = vadd.f32 %v4933, %v5040
    %v5073 = vadd.f32 %v4934, %v5041
    %v5074 = vadd.f32 %v4935, %v5042
    %v5075 = vadd.f32 %v4936, %v5043
    %v5076 = vadd.f32 %v4937, %v5044
    %v5077 = vadd.f32 %v4938, %v5045
    %v5078 = vadd.f32 %v4939, %v5046
    %v5079 = vadd.f32 %v4940, %v5047
    %v5080 = vadd.f32 %v4941, %v5048
    %v5081 = vadd.f32 %v4942, %v5049
    %v5082 = vadd.f32 %v4943, %v5050
    %v5083 = vadd.f32 %v4944, %v5051
    %5084 = vrot.lane.b32.xlu0 %v4139, 125
    %v5085 = vpop.permute.xlu0 %5084
    %5086 = vrot.lane.b32.xlu0 0.0, 125
    %v5087 = vpop.permute.xlu0 %5086
    %5088 = vrot.lane.b32.xlu0 %v4154, 125
    %v5089 = vpop.permute.xlu0 %5088
    %5090 = vrot.lane.b32.xlu0 %v4156, 125
    %v5091 = vpop.permute.xlu0 %5090
    %5092 = vrot.lane.b32.xlu0 %v4158, 125
    %v5093 = vpop.permute.xlu0 %5092
    %5094 = vrot.lane.b32.xlu0 %v4160, 125
    %v5095 = vpop.permute.xlu0 %5094
    %5096 = vrot.lane.b32.xlu0 %v4162, 125
    %v5097 = vpop.permute.xlu0 %5096
    %5098 = vrot.lane.b32.xlu0 %v4164, 125
    %v5099 = vpop.permute.xlu0 %5098
    %5100 = vrot.lane.b32.xlu0 %v4166, 125
    %v5101 = vpop.permute.xlu0 %5100
    %vm5102 = vcmask 1022976
    %v5103 = vsel %vm5102, %v5085, %v5087
    %v5104 = vsel %vm5102, %v5087, %v5089
    %v5105 = vsel %vm5102, %v5089, %v5087
    %v5106 = vsel %vm5102, %v5087, %v5091
    %v5107 = vsel %vm5102, %v5091, %v5087
    %v5108 = vsel %vm5102, %v5087, %v5093
    %v5109 = vsel %vm5102, %v5093, %v5087
    %v5110 = vsel %vm5102, %v5087, %v5095
    %v5111 = vsel %vm5102, %v5095, %v5087
    %v5112 = vsel %vm5102, %v5087, %v5097
    %v5113 = vsel %vm5102, %v5097, %v5087
    %v5114 = vsel %vm5102, %v5087, %v5099
    %v5115 = vsel %vm5102, %v5099, %v5087
    %v5116 = vsel %vm5102, %v5087, %v5101
    %v5117 = vsel %vm5102, %v5101, %v5087
    %v5134 = vsel %vm5102, %v5087, 0.0
    %5135 = vset.pattern.permute.xlu0 7
    %5136 = vperm.xlu0 %5135, %v4140
    %v5137 = vpop.permute.xlu0 %5136
    %5139 = vset.pattern.permute.xlu0 7
    %5140 = vperm.xlu0 %5139, %v4141
    %v5141 = vpop.permute.xlu0 %5140
    %v5143 = vperm.slane %v5103, 0
    %v5144 = vperm.slane %v5104, 0
    %v5145 = vperm.slane %v5105, 0
    %v5146 = vperm.slane %v5106, 0
    %v5147 = vperm.slane %v5107, 0
    %v5148 = vperm.slane %v5108, 0
    %v5149 = vperm.slane %v5109, 0
    %v5150 = vperm.slane %v5110, 0
    %v5151 = vperm.slane %v5111, 0
    %v5152 = vperm.slane %v5112, 0
    %v5153 = vperm.slane %v5113, 0
    %v5154 = vperm.slane %v5114, 0
    %v5155 = vperm.slane %v5115, 0
    %v5156 = vperm.slane %v5116, 0
    %v5157 = vperm.slane %v5117, 0
    %v5158 = vperm.slane %v5134, 0
    %v5159 = vmul.f32 %v5137, %v5143
    %v5160 = vmul.f32 %v5137, %v5144
    %v5161 = vmul.f32 %v5137, %v5145
    %v5162 = vmul.f32 %v5137, %v5146
    %v5163 = vmul.f32 %v5137, %v5147
    %v5164 = vmul.f32 %v5137, %v5148
    %v5165 = vmul.f32 %v5137, %v5149
    %v5166 = vmul.f32 %v5137, %v5150
    %v5167 = vmul.f32 %v5137, %v5151
    %v5168 = vmul.f32 %v5137, %v5152
    %v5169 = vmul.f32 %v5137, %v5153
    %v5170 = vmul.f32 %v5137, %v5154
    %v5171 = vmul.f32 %v5137, %v5155
    %v5172 = vmul.f32 %v5137, %v5156
    %v5173 = vmul.f32 %v5137, %v5157
    %v5174 = vmul.f32 %v5137, %v5158
    %v5175 = vmul.f32 %v5141, %v5143
    %v5176 = vmul.f32 %v5141, %v5144
    %v5177 = vmul.f32 %v5141, %v5145
    %v5178 = vmul.f32 %v5141, %v5146
    %v5179 = vmul.f32 %v5141, %v5147
    %v5180 = vmul.f32 %v5141, %v5148
    %v5181 = vmul.f32 %v5141, %v5149
    %v5182 = vmul.f32 %v5141, %v5150
    %v5183 = vmul.f32 %v5141, %v5151
    %v5184 = vmul.f32 %v5141, %v5152
    %v5185 = vmul.f32 %v5141, %v5153
    %v5186 = vmul.f32 %v5141, %v5154
    %v5187 = vmul.f32 %v5141, %v5155
    %v5188 = vmul.f32 %v5141, %v5156
    %v5189 = vmul.f32 %v5141, %v5157
    %v5190 = vmul.f32 %v5141, %v5158
    %v5191 = vadd.f32 %v5052, %v5159
    %v5192 = vadd.f32 %v5053, %v5160
    %v5193 = vadd.f32 %v5054, %v5161
    %v5194 = vadd.f32 %v5055, %v5162
    %v5195 = vadd.f32 %v5056, %v5163
    %v5196 = vadd.f32 %v5057, %v5164
    %v5197 = vadd.f32 %v5058, %v5165
    %v5198 = vadd.f32 %v5059, %v5166
    %v5199 = vadd.f32 %v5060, %v5167
    %v5200 = vadd.f32 %v5061, %v5168
    %v5201 = vadd.f32 %v5062, %v5169
    %v5202 = vadd.f32 %v5063, %v5170
    %v5203 = vadd.f32 %v5064, %v5171
    %v5204 = vadd.f32 %v5065, %v5172
    %v5205 = vadd.f32 %v5066, %v5173
    %v5206 = vadd.f32 %v5067, %v5174
    %v5207 = vadd.f32 %v5068, %v5175
    %v5208 = vadd.f32 %v5069, %v5176
    %v5209 = vadd.f32 %v5070, %v5177
    %v5210 = vadd.f32 %v5071, %v5178
    %v5211 = vadd.f32 %v5072, %v5179
    %v5212 = vadd.f32 %v5073, %v5180
    %v5213 = vadd.f32 %v5074, %v5181
    %v5214 = vadd.f32 %v5075, %v5182
    %v5215 = vadd.f32 %v5076, %v5183
    %v5216 = vadd.f32 %v5077, %v5184
    %v5217 = vadd.f32 %v5078, %v5185
    %v5218 = vadd.f32 %v5079, %v5186
    %v5219 = vadd.f32 %v5080, %v5187
    %v5220 = vadd.f32 %v5081, %v5188
    %v5221 = vadd.f32 %v5082, %v5189
    %v5222 = vadd.f32 %v5083, %v5190
    %5223 = vrot.lane.b32.xlu0 %v4139, 124
    %v5224 = vpop.permute.xlu0 %5223
    %5225 = vrot.lane.b32.xlu0 0.0, 124
    %v5226 = vpop.permute.xlu0 %5225
    %5227 = vrot.lane.b32.xlu0 %v4154, 124
    %v5228 = vpop.permute.xlu0 %5227
    %5229 = vrot.lane.b32.xlu0 %v4156, 124
    %v5230 = vpop.permute.xlu0 %5229
    %5231 = vrot.lane.b32.xlu0 %v4158, 124
    %v5232 = vpop.permute.xlu0 %5231
    %5233 = vrot.lane.b32.xlu0 %v4160, 124
    %v5234 = vpop.permute.xlu0 %5233
    %5235 = vrot.lane.b32.xlu0 %v4162, 124
    %v5236 = vpop.permute.xlu0 %5235
    %5237 = vrot.lane.b32.xlu0 %v4164, 124
    %v5238 = vpop.permute.xlu0 %5237
    %5239 = vrot.lane.b32.xlu0 %v4166, 124
    %v5240 = vpop.permute.xlu0 %5239
    %vm5241 = vcmask 1014784
    %v5242 = vsel %vm5241, %v5224, %v5226
    %v5243 = vsel %vm5241, %v5226, %v5228
    %v5244 = vsel %vm5241, %v5228, %v5226
    %v5245 = vsel %vm5241, %v5226, %v5230
    %v5246 = vsel %vm5241, %v5230, %v5226
    %v5247 = vsel %vm5241, %v5226, %v5232
    %v5248 = vsel %vm5241, %v5232, %v5226
    %v5249 = vsel %vm5241, %v5226, %v5234
    %v5250 = vsel %vm5241, %v5234, %v5226
    %v5251 = vsel %vm5241, %v5226, %v5236
    %v5252 = vsel %vm5241, %v5236, %v5226
    %v5253 = vsel %vm5241, %v5226, %v5238
    %v5254 = vsel %vm5241, %v5238, %v5226
    %v5255 = vsel %vm5241, %v5226, %v5240
    %v5256 = vsel %vm5241, %v5240, %v5226
    %v5273 = vsel %vm5241, %v5226, 0.0
    %5274 = vset.pattern.permute.xlu0 8
    %5275 = vperm.xlu0 %5274, %v4140
    %v5276 = vpop.permute.xlu0 %5275
    %5278 = vset.pattern.permute.xlu0 8
    %5279 = vperm.xlu0 %5278, %v4141
    %v5280 = vpop.permute.xlu0 %5279
    %v5282 = vperm.slane %v5242, 0
    %v5283 = vperm.slane %v5243, 0
    %v5284 = vperm.slane %v5244, 0
    %v5285 = vperm.slane %v5245, 0
    %v5286 = vperm.slane %v5246, 0
    %v5287 = vperm.slane %v5247, 0
    %v5288 = vperm.slane %v5248, 0
    %v5289 = vperm.slane %v5249, 0
    %v5290 = vperm.slane %v5250, 0
    %v5291 = vperm.slane %v5251, 0
    %v5292 = vperm.slane %v5252, 0
    %v5293 = vperm.slane %v5253, 0
    %v5294 = vperm.slane %v5254, 0
    %v5295 = vperm.slane %v5255, 0
    %v5296 = vperm.slane %v5256, 0
    %v5297 = vperm.slane %v5273, 0
    %v5298 = vmul.f32 %v5276, %v5282
    %v5299 = vmul.f32 %v5276, %v5283
    %v5300 = vmul.f32 %v5276, %v5284
    %v5301 = vmul.f32 %v5276, %v5285
    %v5302 = vmul.f32 %v5276, %v5286
    %v5303 = vmul.f32 %v5276, %v5287
    %v5304 = vmul.f32 %v5276, %v5288
    %v5305 = vmul.f32 %v5276, %v5289
    %v5306 = vmul.f32 %v5276, %v5290
    %v5307 = vmul.f32 %v5276, %v5291
    %v5308 = vmul.f32 %v5276, %v5292
    %v5309 = vmul.f32 %v5276, %v5293
    %v5310 = vmul.f32 %v5276, %v5294
    %v5311 = vmul.f32 %v5276, %v5295
    %v5312 = vmul.f32 %v5276, %v5296
    %v5313 = vmul.f32 %v5276, %v5297
    %v5314 = vmul.f32 %v5280, %v5282
    %v5315 = vmul.f32 %v5280, %v5283
    %v5316 = vmul.f32 %v5280, %v5284
    %v5317 = vmul.f32 %v5280, %v5285
    %v5318 = vmul.f32 %v5280, %v5286
    %v5319 = vmul.f32 %v5280, %v5287
    %v5320 = vmul.f32 %v5280, %v5288
    %v5321 = vmul.f32 %v5280, %v5289
    %v5322 = vmul.f32 %v5280, %v5290
    %v5323 = vmul.f32 %v5280, %v5291
    %v5324 = vmul.f32 %v5280, %v5292
    %v5325 = vmul.f32 %v5280, %v5293
    %v5326 = vmul.f32 %v5280, %v5294
    %v5327 = vmul.f32 %v5280, %v5295
    %v5328 = vmul.f32 %v5280, %v5296
    %v5329 = vmul.f32 %v5280, %v5297
    %v5330 = vadd.f32 %v5191, %v5298
    %v5331 = vadd.f32 %v5192, %v5299
    %v5332 = vadd.f32 %v5193, %v5300
    %v5333 = vadd.f32 %v5194, %v5301
    %v5334 = vadd.f32 %v5195, %v5302
    %v5335 = vadd.f32 %v5196, %v5303
    %v5336 = vadd.f32 %v5197, %v5304
    %v5337 = vadd.f32 %v5198, %v5305
    %v5338 = vadd.f32 %v5199, %v5306
    %v5339 = vadd.f32 %v5200, %v5307
    %v5340 = vadd.f32 %v5201, %v5308
    %v5341 = vadd.f32 %v5202, %v5309
    %v5342 = vadd.f32 %v5203, %v5310
    %v5343 = vadd.f32 %v5204, %v5311
    %v5344 = vadd.f32 %v5205, %v5312
    %v5345 = vadd.f32 %v5206, %v5313
    %v5346 = vadd.f32 %v5207, %v5314
    %v5347 = vadd.f32 %v5208, %v5315
    %v5348 = vadd.f32 %v5209, %v5316
    %v5349 = vadd.f32 %v5210, %v5317
    %v5350 = vadd.f32 %v5211, %v5318
    %v5351 = vadd.f32 %v5212, %v5319
    %v5352 = vadd.f32 %v5213, %v5320
    %v5353 = vadd.f32 %v5214, %v5321
    %v5354 = vadd.f32 %v5215, %v5322
    %v5355 = vadd.f32 %v5216, %v5323
    %v5356 = vadd.f32 %v5217, %v5324
    %v5357 = vadd.f32 %v5218, %v5325
    %v5358 = vadd.f32 %v5219, %v5326
    %v5359 = vadd.f32 %v5220, %v5327
    %v5360 = vadd.f32 %v5221, %v5328
    %v5361 = vadd.f32 %v5222, %v5329
    %v5362 = vtanh.pop %v5330
    %v5363 = vtanh.pop %v5331
    %v5364 = vtanh.pop %v5332
    %v5365 = vtanh.pop %v5333
    %v5366 = vtanh.pop %v5334
    %v5367 = vtanh.pop %v5335
    %v5368 = vtanh.pop %v5336
    %v5369 = vtanh.pop %v5337
    %v5370 = vtanh.pop %v5338
    %v5371 = vtanh.pop %v5339
    %v5372 = vtanh.pop %v5340
    %v5373 = vtanh.pop %v5341
    %v5374 = vtanh.pop %v5342
    %v5375 = vtanh.pop %v5343
    %v5376 = vtanh.pop %v5344
    %v5377 = vtanh.pop %v5345
    %v5378 = vtanh.pop %v5346
    %v5379 = vtanh.pop %v5347
    %v5380 = vtanh.pop %v5348
    %v5381 = vtanh.pop %v5349
    %v5382 = vtanh.pop %v5350
    %v5383 = vtanh.pop %v5351
    %v5384 = vtanh.pop %v5352
    %v5385 = vtanh.pop %v5353
    %v5386 = vtanh.pop %v5354
    %v5387 = vtanh.pop %v5355
    %v5388 = vtanh.pop %v5356
    %v5389 = vtanh.pop %v5357
    %v5390 = vtanh.pop %v5358
    %v5391 = vtanh.pop %v5359
    %v5392 = vtanh.pop %v5360
    %v5393 = vtanh.pop %v5361
    %v5394 = vperm.slane 1.0, 0
    %v5395 = vmul.f32 %v5362, %v5394
    %v5396 = vmul.f32 %v5363, %v4748
    %v5397 = vmul.f32 %v5364, %v5394
    %v5398 = vmul.f32 %v5365, %v4748
    %v5399 = vmul.f32 %v5366, %v5394
    %v5400 = vmul.f32 %v5367, %v4748
    %v5401 = vmul.f32 %v5368, %v5394
    %v5402 = vmul.f32 %v5369, %v4748
    %v5403 = vmul.f32 %v5370, %v5394
    %v5404 = vmul.f32 %v5371, %v4748
    %v5405 = vmul.f32 %v5372, %v5394
    %v5406 = vmul.f32 %v5373, %v4748
    %v5407 = vmul.f32 %v5374, %v5394
    %v5408 = vmul.f32 %v5375, %v4748
    %v5409 = vmul.f32 %v5376, %v5394
    %v5410 = vmul.f32 %v5377, %v4748
    %v5411 = vmul.f32 %v5378, %v5394
    %v5412 = vmul.f32 %v5379, %v4748
    %v5413 = vmul.f32 %v5380, %v5394
    %v5414 = vmul.f32 %v5381, %v4748
    %v5415 = vmul.f32 %v5382, %v5394
    %v5416 = vmul.f32 %v5383, %v4748
    %v5417 = vmul.f32 %v5384, %v5394
    %v5418 = vmul.f32 %v5385, %v4748
    %v5419 = vmul.f32 %v5386, %v5394
    %v5420 = vmul.f32 %v5387, %v4748
    %v5421 = vmul.f32 %v5388, %v5394
    %v5422 = vmul.f32 %v5389, %v4748
    %v5423 = vmul.f32 %v5390, %v5394
    %v5424 = vmul.f32 %v5391, %v4748
    %v5425 = vmul.f32 %v5392, %v5394
    %v5426 = vmul.f32 %v5393, %v4748
    %5459 = vrot.lane.b32.xlu0 %v5395, 4
    %v5460 = vpop.permute.xlu0 %5459
    %5461 = vrot.lane.b32.xlu0 %v5396, 4
    %v5462 = vpop.permute.xlu0 %5461
    %5463 = vrot.lane.b32.xlu0 %v5397, 4
    %v5464 = vpop.permute.xlu0 %5463
    %5465 = vrot.lane.b32.xlu0 %v5398, 4
    %v5466 = vpop.permute.xlu0 %5465
    %5467 = vrot.lane.b32.xlu0 %v5399, 4
    %v5468 = vpop.permute.xlu0 %5467
    %5469 = vrot.lane.b32.xlu0 %v5400, 4
    %v5470 = vpop.permute.xlu0 %5469
    %5471 = vrot.lane.b32.xlu0 %v5401, 4
    %v5472 = vpop.permute.xlu0 %5471
    %5473 = vrot.lane.b32.xlu0 %v5402, 4
    %v5474 = vpop.permute.xlu0 %5473
    %5475 = vrot.lane.b32.xlu0 %v5403, 4
    %v5476 = vpop.permute.xlu0 %5475
    %5477 = vrot.lane.b32.xlu0 %v5404, 4
    %v5478 = vpop.permute.xlu0 %5477
    %5479 = vrot.lane.b32.xlu0 %v5405, 4
    %v5480 = vpop.permute.xlu0 %5479
    %5481 = vrot.lane.b32.xlu0 %v5406, 4
    %v5482 = vpop.permute.xlu0 %5481
    %5483 = vrot.lane.b32.xlu0 %v5407, 4
    %v5484 = vpop.permute.xlu0 %5483
    %5485 = vrot.lane.b32.xlu0 %v5408, 4
    %v5486 = vpop.permute.xlu0 %5485
    %5487 = vrot.lane.b32.xlu0 %v5409, 4
    %v5488 = vpop.permute.xlu0 %5487
    %5489 = vrot.lane.b32.xlu0 %v5410, 4
    %v5490 = vpop.permute.xlu0 %5489
    %5491 = vrot.lane.b32.xlu0 %v5411, 4
    %v5492 = vpop.permute.xlu0 %5491
    %5493 = vrot.lane.b32.xlu0 %v5412, 4
    %v5494 = vpop.permute.xlu0 %5493
    %5495 = vrot.lane.b32.xlu0 %v5413, 4
    %v5496 = vpop.permute.xlu0 %5495
    %5497 = vrot.lane.b32.xlu0 %v5414, 4
    %v5498 = vpop.permute.xlu0 %5497
    %5499 = vrot.lane.b32.xlu0 %v5415, 4
    %v5500 = vpop.permute.xlu0 %5499
    %5501 = vrot.lane.b32.xlu0 %v5416, 4
    %v5502 = vpop.permute.xlu0 %5501
    %5503 = vrot.lane.b32.xlu0 %v5417, 4
    %v5504 = vpop.permute.xlu0 %5503
    %5505 = vrot.lane.b32.xlu0 %v5418, 4
    %v5506 = vpop.permute.xlu0 %5505
    %5507 = vrot.lane.b32.xlu0 %v5419, 4
    %v5508 = vpop.permute.xlu0 %5507
    %5509 = vrot.lane.b32.xlu0 %v5420, 4
    %v5510 = vpop.permute.xlu0 %5509
    %5511 = vrot.lane.b32.xlu0 %v5421, 4
    %v5512 = vpop.permute.xlu0 %5511
    %5513 = vrot.lane.b32.xlu0 %v5422, 4
    %v5514 = vpop.permute.xlu0 %5513
    %5515 = vrot.lane.b32.xlu0 %v5423, 4
    %v5516 = vpop.permute.xlu0 %5515
    %5517 = vrot.lane.b32.xlu0 %v5424, 4
    %v5518 = vpop.permute.xlu0 %5517
    %5519 = vrot.lane.b32.xlu0 %v5425, 4
    %v5520 = vpop.permute.xlu0 %5519
    %5521 = vrot.lane.b32.xlu0 %v5426, 4
    %v5522 = vpop.permute.xlu0 %5521
    %v5523 = vsel %vm4199, %v5460, %v5462
    %v5524 = vsel %vm4199, %v5462, %v5464
    %v5525 = vsel %vm4199, %v5464, %v5466
    %v5526 = vsel %vm4199, %v5466, %v5468
    %v5527 = vsel %vm4199, %v5468, %v5470
    %v5528 = vsel %vm4199, %v5470, %v5472
    %v5529 = vsel %vm4199, %v5472, %v5474
    %v5530 = vsel %vm4199, %v5474, %v5476
    %v5531 = vsel %vm4199, %v5476, %v5478
    %v5532 = vsel %vm4199, %v5478, %v5480
    %v5533 = vsel %vm4199, %v5480, %v5482
    %v5534 = vsel %vm4199, %v5482, %v5484
    %v5535 = vsel %vm4199, %v5484, %v5486
    %v5536 = vsel %vm4199, %v5486, %v5488
    %v5537 = vsel %vm4199, %v5488, %v5490
    %v5538 = vsel %vm4199, %v5492, %v5494
    %v5539 = vsel %vm4199, %v5494, %v5496
    %v5540 = vsel %vm4199, %v5496, %v5498
    %v5541 = vsel %vm4199, %v5498, %v5500
    %v5542 = vsel %vm4199, %v5500, %v5502
    %v5543 = vsel %vm4199, %v5502, %v5504
    %v5544 = vsel %vm4199, %v5504, %v5506
    %v5545 = vsel %vm4199, %v5506, %v5508
    %v5546 = vsel %vm4199, %v5508, %v5510
    %v5547 = vsel %vm4199, %v5510, %v5512
    %v5548 = vsel %vm4199, %v5512, %v5514
    %v5549 = vsel %vm4199, %v5514, %v5516
    %v5550 = vsel %vm4199, %v5516, %v5518
    %v5551 = vsel %vm4199, %v5518, %v5520
    %v5552 = vsel %vm4199, %v5520, %v5522
    %v5585 = vsel %vm4199, 0.0, %v5460
    %v5586 = vsel %vm4199, 0.0, %v5492
    %5587 = vrot.lane.b32.xlu0 %v5395, 3
    %v5588 = vpop.permute.xlu0 %5587
    %5589 = vrot.lane.b32.xlu0 %v5396, 3
    %v5590 = vpop.permute.xlu0 %5589
    %5591 = vrot.lane.b32.xlu0 %v5397, 3
    %v5592 = vpop.permute.xlu0 %5591
    %5593 = vrot.lane.b32.xlu0 %v5398, 3
    %v5594 = vpop.permute.xlu0 %5593
    %5595 = vrot.lane.b32.xlu0 %v5399, 3
    %v5596 = vpop.permute.xlu0 %5595
    %5597 = vrot.lane.b32.xlu0 %v5400, 3
    %v5598 = vpop.permute.xlu0 %5597
    %5599 = vrot.lane.b32.xlu0 %v5401, 3
    %v5600 = vpop.permute.xlu0 %5599
    %5601 = vrot.lane.b32.xlu0 %v5402, 3
    %v5602 = vpop.permute.xlu0 %5601
    %5603 = vrot.lane.b32.xlu0 %v5403, 3
    %v5604 = vpop.permute.xlu0 %5603
    %5605 = vrot.lane.b32.xlu0 %v5404, 3
    %v5606 = vpop.permute.xlu0 %5605
    %5607 = vrot.lane.b32.xlu0 %v5405, 3
    %v5608 = vpop.permute.xlu0 %5607
    %5609 = vrot.lane.b32.xlu0 %v5406, 3
    %v5610 = vpop.permute.xlu0 %5609
    %5611 = vrot.lane.b32.xlu0 %v5407, 3
    %v5612 = vpop.permute.xlu0 %5611
    %5613 = vrot.lane.b32.xlu0 %v5408, 3
    %v5614 = vpop.permute.xlu0 %5613
    %5615 = vrot.lane.b32.xlu0 %v5409, 3
    %v5616 = vpop.permute.xlu0 %5615
    %5617 = vrot.lane.b32.xlu0 %v5410, 3
    %v5618 = vpop.permute.xlu0 %5617
    %5619 = vrot.lane.b32.xlu0 %v5411, 3
    %v5620 = vpop.permute.xlu0 %5619
    %5621 = vrot.lane.b32.xlu0 %v5412, 3
    %v5622 = vpop.permute.xlu0 %5621
    %5623 = vrot.lane.b32.xlu0 %v5413, 3
    %v5624 = vpop.permute.xlu0 %5623
    %5625 = vrot.lane.b32.xlu0 %v5414, 3
    %v5626 = vpop.permute.xlu0 %5625
    %5627 = vrot.lane.b32.xlu0 %v5415, 3
    %v5628 = vpop.permute.xlu0 %5627
    %5629 = vrot.lane.b32.xlu0 %v5416, 3
    %v5630 = vpop.permute.xlu0 %5629
    %5631 = vrot.lane.b32.xlu0 %v5417, 3
    %v5632 = vpop.permute.xlu0 %5631
    %5633 = vrot.lane.b32.xlu0 %v5418, 3
    %v5634 = vpop.permute.xlu0 %5633
    %5635 = vrot.lane.b32.xlu0 %v5419, 3
    %v5636 = vpop.permute.xlu0 %5635
    %5637 = vrot.lane.b32.xlu0 %v5420, 3
    %v5638 = vpop.permute.xlu0 %5637
    %5639 = vrot.lane.b32.xlu0 %v5421, 3
    %v5640 = vpop.permute.xlu0 %5639
    %5641 = vrot.lane.b32.xlu0 %v5422, 3
    %v5642 = vpop.permute.xlu0 %5641
    %5643 = vrot.lane.b32.xlu0 %v5423, 3
    %v5644 = vpop.permute.xlu0 %5643
    %5645 = vrot.lane.b32.xlu0 %v5424, 3
    %v5646 = vpop.permute.xlu0 %5645
    %5647 = vrot.lane.b32.xlu0 %v5425, 3
    %v5648 = vpop.permute.xlu0 %5647
    %5649 = vrot.lane.b32.xlu0 %v5426, 3
    %v5650 = vpop.permute.xlu0 %5649
    %v5651 = vsel %vm4340, %v5588, %v5590
    %v5652 = vsel %vm4340, %v5590, %v5592
    %v5653 = vsel %vm4340, %v5592, %v5594
    %v5654 = vsel %vm4340, %v5594, %v5596
    %v5655 = vsel %vm4340, %v5596, %v5598
    %v5656 = vsel %vm4340, %v5598, %v5600
    %v5657 = vsel %vm4340, %v5600, %v5602
    %v5658 = vsel %vm4340, %v5602, %v5604
    %v5659 = vsel %vm4340, %v5604, %v5606
    %v5660 = vsel %vm4340, %v5606, %v5608
    %v5661 = vsel %vm4340, %v5608, %v5610
    %v5662 = vsel %vm4340, %v5610, %v5612
    %v5663 = vsel %vm4340, %v5612, %v5614
    %v5664 = vsel %vm4340, %v5614, %v5616
    %v5665 = vsel %vm4340, %v5616, %v5618
    %v5666 = vsel %vm4340, %v5620, %v5622
    %v5667 = vsel %vm4340, %v5622, %v5624
    %v5668 = vsel %vm4340, %v5624, %v5626
    %v5669 = vsel %vm4340, %v5626, %v5628
    %v5670 = vsel %vm4340, %v5628, %v5630
    %v5671 = vsel %vm4340, %v5630, %v5632
    %v5672 = vsel %vm4340, %v5632, %v5634
    %v5673 = vsel %vm4340, %v5634, %v5636
    %v5674 = vsel %vm4340, %v5636, %v5638
    %v5675 = vsel %vm4340, %v5638, %v5640
    %v5676 = vsel %vm4340, %v5640, %v5642
    %v5677 = vsel %vm4340, %v5642, %v5644
    %v5678 = vsel %vm4340, %v5644, %v5646
    %v5679 = vsel %vm4340, %v5646, %v5648
    %v5680 = vsel %vm4340, %v5648, %v5650
    %v5713 = vsel %vm4340, 0.0, %v5588
    %v5714 = vsel %vm4340, 0.0, %v5620
    %5715 = vrot.lane.b32.xlu0 %v5395, 2
    %v5716 = vpop.permute.xlu0 %5715
    %5717 = vrot.lane.b32.xlu0 %v5396, 2
    %v5718 = vpop.permute.xlu0 %5717
    %5719 = vrot.lane.b32.xlu0 %v5397, 2
    %v5720 = vpop.permute.xlu0 %5719
    %5721 = vrot.lane.b32.xlu0 %v5398, 2
    %v5722 = vpop.permute.xlu0 %5721
    %5723 = vrot.lane.b32.xlu0 %v5399, 2
    %v5724 = vpop.permute.xlu0 %5723
    %5725 = vrot.lane.b32.xlu0 %v5400, 2
    %v5726 = vpop.permute.xlu0 %5725
    %5727 = vrot.lane.b32.xlu0 %v5401, 2
    %v5728 = vpop.permute.xlu0 %5727
    %5729 = vrot.lane.b32.xlu0 %v5402, 2
    %v5730 = vpop.permute.xlu0 %5729
    %5731 = vrot.lane.b32.xlu0 %v5403, 2
    %v5732 = vpop.permute.xlu0 %5731
    %5733 = vrot.lane.b32.xlu0 %v5404, 2
    %v5734 = vpop.permute.xlu0 %5733
    %5735 = vrot.lane.b32.xlu0 %v5405, 2
    %v5736 = vpop.permute.xlu0 %5735
    %5737 = vrot.lane.b32.xlu0 %v5406, 2
    %v5738 = vpop.permute.xlu0 %5737
    %5739 = vrot.lane.b32.xlu0 %v5407, 2
    %v5740 = vpop.permute.xlu0 %5739
    %5741 = vrot.lane.b32.xlu0 %v5408, 2
    %v5742 = vpop.permute.xlu0 %5741
    %5743 = vrot.lane.b32.xlu0 %v5409, 2
    %v5744 = vpop.permute.xlu0 %5743
    %5745 = vrot.lane.b32.xlu0 %v5410, 2
    %v5746 = vpop.permute.xlu0 %5745
    %5747 = vrot.lane.b32.xlu0 %v5411, 2
    %v5748 = vpop.permute.xlu0 %5747
    %5749 = vrot.lane.b32.xlu0 %v5412, 2
    %v5750 = vpop.permute.xlu0 %5749
    %5751 = vrot.lane.b32.xlu0 %v5413, 2
    %v5752 = vpop.permute.xlu0 %5751
    %5753 = vrot.lane.b32.xlu0 %v5414, 2
    %v5754 = vpop.permute.xlu0 %5753
    %5755 = vrot.lane.b32.xlu0 %v5415, 2
    %v5756 = vpop.permute.xlu0 %5755
    %5757 = vrot.lane.b32.xlu0 %v5416, 2
    %v5758 = vpop.permute.xlu0 %5757
    %5759 = vrot.lane.b32.xlu0 %v5417, 2
    %v5760 = vpop.permute.xlu0 %5759
    %5761 = vrot.lane.b32.xlu0 %v5418, 2
    %v5762 = vpop.permute.xlu0 %5761
    %5763 = vrot.lane.b32.xlu0 %v5419, 2
    %v5764 = vpop.permute.xlu0 %5763
    %5765 = vrot.lane.b32.xlu0 %v5420, 2
    %v5766 = vpop.permute.xlu0 %5765
    %5767 = vrot.lane.b32.xlu0 %v5421, 2
    %v5768 = vpop.permute.xlu0 %5767
    %5769 = vrot.lane.b32.xlu0 %v5422, 2
    %v5770 = vpop.permute.xlu0 %5769
    %5771 = vrot.lane.b32.xlu0 %v5423, 2
    %v5772 = vpop.permute.xlu0 %5771
    %5773 = vrot.lane.b32.xlu0 %v5424, 2
    %v5774 = vpop.permute.xlu0 %5773
    %5775 = vrot.lane.b32.xlu0 %v5425, 2
    %v5776 = vpop.permute.xlu0 %5775
    %5777 = vrot.lane.b32.xlu0 %v5426, 2
    %v5778 = vpop.permute.xlu0 %5777
    %v5779 = vsel %vm4479, %v5716, %v5718
    %v5780 = vsel %vm4479, %v5718, %v5720
    %v5781 = vsel %vm4479, %v5720, %v5722
    %v5782 = vsel %vm4479, %v5722, %v5724
    %v5783 = vsel %vm4479, %v5724, %v5726
    %v5784 = vsel %vm4479, %v5726, %v5728
    %v5785 = vsel %vm4479, %v5728, %v5730
    %v5786 = vsel %vm4479, %v5730, %v5732
    %v5787 = vsel %vm4479, %v5732, %v5734
    %v5788 = vsel %vm4479, %v5734, %v5736
    %v5789 = vsel %vm4479, %v5736, %v5738
    %v5790 = vsel %vm4479, %v5738, %v5740
    %v5791 = vsel %vm4479, %v5740, %v5742
    %v5792 = vsel %vm4479, %v5742, %v5744
    %v5793 = vsel %vm4479, %v5744, %v5746
    %v5794 = vsel %vm4479, %v5748, %v5750
    %v5795 = vsel %vm4479, %v5750, %v5752
    %v5796 = vsel %vm4479, %v5752, %v5754
    %v5797 = vsel %vm4479, %v5754, %v5756
    %v5798 = vsel %vm4479, %v5756, %v5758
    %v5799 = vsel %vm4479, %v5758, %v5760
    %v5800 = vsel %vm4479, %v5760, %v5762
    %v5801 = vsel %vm4479, %v5762, %v5764
    %v5802 = vsel %vm4479, %v5764, %v5766
    %v5803 = vsel %vm4479, %v5766, %v5768
    %v5804 = vsel %vm4479, %v5768, %v5770
    %v5805 = vsel %vm4479, %v5770, %v5772
    %v5806 = vsel %vm4479, %v5772, %v5774
    %v5807 = vsel %vm4479, %v5774, %v5776
    %v5808 = vsel %vm4479, %v5776, %v5778
    %v5841 = vsel %vm4479, 0.0, %v5716
    %v5842 = vsel %vm4479, 0.0, %v5748
    %5843 = vrot.lane.b32.xlu0 %v5395, 1
    %v5844 = vpop.permute.xlu0 %5843
    %5845 = vrot.lane.b32.xlu0 %v5396, 1
    %v5846 = vpop.permute.xlu0 %5845
    %5847 = vrot.lane.b32.xlu0 %v5397, 1
    %v5848 = vpop.permute.xlu0 %5847
    %5849 = vrot.lane.b32.xlu0 %v5398, 1
    %v5850 = vpop.permute.xlu0 %5849
    %5851 = vrot.lane.b32.xlu0 %v5399, 1
    %v5852 = vpop.permute.xlu0 %5851
    %5853 = vrot.lane.b32.xlu0 %v5400, 1
    %v5854 = vpop.permute.xlu0 %5853
    %5855 = vrot.lane.b32.xlu0 %v5401, 1
    %v5856 = vpop.permute.xlu0 %5855
    %5857 = vrot.lane.b32.xlu0 %v5402, 1
    %v5858 = vpop.permute.xlu0 %5857
    %5859 = vrot.lane.b32.xlu0 %v5403, 1
    %v5860 = vpop.permute.xlu0 %5859
    %5861 = vrot.lane.b32.xlu0 %v5404, 1
    %v5862 = vpop.permute.xlu0 %5861
    %5863 = vrot.lane.b32.xlu0 %v5405, 1
    %v5864 = vpop.permute.xlu0 %5863
    %5865 = vrot.lane.b32.xlu0 %v5406, 1
    %v5866 = vpop.permute.xlu0 %5865
    %5867 = vrot.lane.b32.xlu0 %v5407, 1
    %v5868 = vpop.permute.xlu0 %5867
    %5869 = vrot.lane.b32.xlu0 %v5408, 1
    %v5870 = vpop.permute.xlu0 %5869
    %5871 = vrot.lane.b32.xlu0 %v5409, 1
    %v5872 = vpop.permute.xlu0 %5871
    %5873 = vrot.lane.b32.xlu0 %v5410, 1
    %v5874 = vpop.permute.xlu0 %5873
    %5875 = vrot.lane.b32.xlu0 %v5411, 1
    %v5876 = vpop.permute.xlu0 %5875
    %5877 = vrot.lane.b32.xlu0 %v5412, 1
    %v5878 = vpop.permute.xlu0 %5877
    %5879 = vrot.lane.b32.xlu0 %v5413, 1
    %v5880 = vpop.permute.xlu0 %5879
    %5881 = vrot.lane.b32.xlu0 %v5414, 1
    %v5882 = vpop.permute.xlu0 %5881
    %5883 = vrot.lane.b32.xlu0 %v5415, 1
    %v5884 = vpop.permute.xlu0 %5883
    %5885 = vrot.lane.b32.xlu0 %v5416, 1
    %v5886 = vpop.permute.xlu0 %5885
    %5887 = vrot.lane.b32.xlu0 %v5417, 1
    %v5888 = vpop.permute.xlu0 %5887
    %5889 = vrot.lane.b32.xlu0 %v5418, 1
    %v5890 = vpop.permute.xlu0 %5889
    %5891 = vrot.lane.b32.xlu0 %v5419, 1
    %v5892 = vpop.permute.xlu0 %5891
    %5893 = vrot.lane.b32.xlu0 %v5420, 1
    %v5894 = vpop.permute.xlu0 %5893
    %5895 = vrot.lane.b32.xlu0 %v5421, 1
    %v5896 = vpop.permute.xlu0 %5895
    %5897 = vrot.lane.b32.xlu0 %v5422, 1
    %v5898 = vpop.permute.xlu0 %5897
    %5899 = vrot.lane.b32.xlu0 %v5423, 1
    %v5900 = vpop.permute.xlu0 %5899
    %5901 = vrot.lane.b32.xlu0 %v5424, 1
    %v5902 = vpop.permute.xlu0 %5901
    %5903 = vrot.lane.b32.xlu0 %v5425, 1
    %v5904 = vpop.permute.xlu0 %5903
    %5905 = vrot.lane.b32.xlu0 %v5426, 1
    %v5906 = vpop.permute.xlu0 %5905
    %v5907 = vsel %vm4618, %v5844, %v5846
    %v5908 = vsel %vm4618, %v5846, %v5848
    %v5909 = vsel %vm4618, %v5848, %v5850
    %v5910 = vsel %vm4618, %v5850, %v5852
    %v5911 = vsel %vm4618, %v5852, %v5854
    %v5912 = vsel %vm4618, %v5854, %v5856
    %v5913 = vsel %vm4618, %v5856, %v5858
    %v5914 = vsel %vm4618, %v5858, %v5860
    %v5915 = vsel %vm4618, %v5860, %v5862
    %v5916 = vsel %vm4618, %v5862, %v5864
    %v5917 = vsel %vm4618, %v5864, %v5866
    %v5918 = vsel %vm4618, %v5866, %v5868
    %v5919 = vsel %vm4618, %v5868, %v5870
    %v5920 = vsel %vm4618, %v5870, %v5872
    %v5921 = vsel %vm4618, %v5872, %v5874
    %v5922 = vsel %vm4618, %v5876, %v5878
    %v5923 = vsel %vm4618, %v5878, %v5880
    %v5924 = vsel %vm4618, %v5880, %v5882
    %v5925 = vsel %vm4618, %v5882, %v5884
    %v5926 = vsel %vm4618, %v5884, %v5886
    %v5927 = vsel %vm4618, %v5886, %v5888
    %v5928 = vsel %vm4618, %v5888, %v5890
    %v5929 = vsel %vm4618, %v5890, %v5892
    %v5930 = vsel %vm4618, %v5892, %v5894
    %v5931 = vsel %vm4618, %v5894, %v5896
    %v5932 = vsel %vm4618, %v5896, %v5898
    %v5933 = vsel %vm4618, %v5898, %v5900
    %v5934 = vsel %vm4618, %v5900, %v5902
    %v5935 = vsel %vm4618, %v5902, %v5904
    %v5936 = vsel %vm4618, %v5904, %v5906
    %v5969 = vsel %vm4618, 0.0, %v5844
    %v5970 = vsel %vm4618, 0.0, %v5876
    %5971 = vrot.lane.b32.xlu0 %v5395, 127
    %v5972 = vpop.permute.xlu0 %5971
    %5973 = vrot.lane.b32.xlu0 %v5396, 127
    %v5974 = vpop.permute.xlu0 %5973
    %5975 = vrot.lane.b32.xlu0 %v5397, 127
    %v5976 = vpop.permute.xlu0 %5975
    %5977 = vrot.lane.b32.xlu0 %v5398, 127
    %v5978 = vpop.permute.xlu0 %5977
    %5979 = vrot.lane.b32.xlu0 %v5399, 127
    %v5980 = vpop.permute.xlu0 %5979
    %5981 = vrot.lane.b32.xlu0 %v5400, 127
    %v5982 = vpop.permute.xlu0 %5981
    %5983 = vrot.lane.b32.xlu0 %v5401, 127
    %v5984 = vpop.permute.xlu0 %5983
    %5985 = vrot.lane.b32.xlu0 %v5402, 127
    %v5986 = vpop.permute.xlu0 %5985
    %5987 = vrot.lane.b32.xlu0 %v5403, 127
    %v5988 = vpop.permute.xlu0 %5987
    %5989 = vrot.lane.b32.xlu0 %v5404, 127
    %v5990 = vpop.permute.xlu0 %5989
    %5991 = vrot.lane.b32.xlu0 %v5405, 127
    %v5992 = vpop.permute.xlu0 %5991
    %5993 = vrot.lane.b32.xlu0 %v5406, 127
    %v5994 = vpop.permute.xlu0 %5993
    %5995 = vrot.lane.b32.xlu0 %v5407, 127
    %v5996 = vpop.permute.xlu0 %5995
    %5997 = vrot.lane.b32.xlu0 %v5408, 127
    %v5998 = vpop.permute.xlu0 %5997
    %5999 = vrot.lane.b32.xlu0 %v5409, 127
    %v6000 = vpop.permute.xlu0 %5999
    %6001 = vrot.lane.b32.xlu0 %v5410, 127
    %v6002 = vpop.permute.xlu0 %6001
    %6003 = vrot.lane.b32.xlu0 %v5411, 127
    %v6004 = vpop.permute.xlu0 %6003
    %6005 = vrot.lane.b32.xlu0 %v5412, 127
    %v6006 = vpop.permute.xlu0 %6005
    %6007 = vrot.lane.b32.xlu0 %v5413, 127
    %v6008 = vpop.permute.xlu0 %6007
    %6009 = vrot.lane.b32.xlu0 %v5414, 127
    %v6010 = vpop.permute.xlu0 %6009
    %6011 = vrot.lane.b32.xlu0 %v5415, 127
    %v6012 = vpop.permute.xlu0 %6011
    %6013 = vrot.lane.b32.xlu0 %v5416, 127
    %v6014 = vpop.permute.xlu0 %6013
    %6015 = vrot.lane.b32.xlu0 %v5417, 127
    %v6016 = vpop.permute.xlu0 %6015
    %6017 = vrot.lane.b32.xlu0 %v5418, 127
    %v6018 = vpop.permute.xlu0 %6017
    %6019 = vrot.lane.b32.xlu0 %v5419, 127
    %v6020 = vpop.permute.xlu0 %6019
    %6021 = vrot.lane.b32.xlu0 %v5420, 127
    %v6022 = vpop.permute.xlu0 %6021
    %6023 = vrot.lane.b32.xlu0 %v5421, 127
    %v6024 = vpop.permute.xlu0 %6023
    %6025 = vrot.lane.b32.xlu0 %v5422, 127
    %v6026 = vpop.permute.xlu0 %6025
    %6027 = vrot.lane.b32.xlu0 %v5423, 127
    %v6028 = vpop.permute.xlu0 %6027
    %6029 = vrot.lane.b32.xlu0 %v5424, 127
    %v6030 = vpop.permute.xlu0 %6029
    %6031 = vrot.lane.b32.xlu0 %v5425, 127
    %v6032 = vpop.permute.xlu0 %6031
    %6033 = vrot.lane.b32.xlu0 %v5426, 127
    %v6034 = vpop.permute.xlu0 %6033
    %v6035 = vsel %vm4824, %v5972, %v5974
    %v6036 = vsel %vm4824, %v5974, %v5976
    %v6037 = vsel %vm4824, %v5976, %v5978
    %v6038 = vsel %vm4824, %v5978, %v5980
    %v6039 = vsel %vm4824, %v5980, %v5982
    %v6040 = vsel %vm4824, %v5982, %v5984
    %v6041 = vsel %vm4824, %v5984, %v5986
    %v6042 = vsel %vm4824, %v5986, %v5988
    %v6043 = vsel %vm4824, %v5988, %v5990
    %v6044 = vsel %vm4824, %v5990, %v5992
    %v6045 = vsel %vm4824, %v5992, %v5994
    %v6046 = vsel %vm4824, %v5994, %v5996
    %v6047 = vsel %vm4824, %v5996, %v5998
    %v6048 = vsel %vm4824, %v5998, %v6000
    %v6049 = vsel %vm4824, %v6000, %v6002
    %v6050 = vsel %vm4824, %v6004, %v6006
    %v6051 = vsel %vm4824, %v6006, %v6008
    %v6052 = vsel %vm4824, %v6008, %v6010
    %v6053 = vsel %vm4824, %v6010, %v6012
    %v6054 = vsel %vm4824, %v6012, %v6014
    %v6055 = vsel %vm4824, %v6014, %v6016
    %v6056 = vsel %vm4824, %v6016, %v6018
    %v6057 = vsel %vm4824, %v6018, %v6020
    %v6058 = vsel %vm4824, %v6020, %v6022
    %v6059 = vsel %vm4824, %v6022, %v6024
    %v6060 = vsel %vm4824, %v6024, %v6026
    %v6061 = vsel %vm4824, %v6026, %v6028
    %v6062 = vsel %vm4824, %v6028, %v6030
    %v6063 = vsel %vm4824, %v6030, %v6032
    %v6064 = vsel %vm4824, %v6032, %v6034
    %v6097 = vsel %vm4824, %v6002, 0.0
    %v6098 = vsel %vm4824, %v6034, 0.0
    %6099 = vrot.lane.b32.xlu0 %v5395, 126
    %v6100 = vpop.permute.xlu0 %6099
    %6101 = vrot.lane.b32.xlu0 %v5396, 126
    %v6102 = vpop.permute.xlu0 %6101
    %6103 = vrot.lane.b32.xlu0 %v5397, 126
    %v6104 = vpop.permute.xlu0 %6103
    %6105 = vrot.lane.b32.xlu0 %v5398, 126
    %v6106 = vpop.permute.xlu0 %6105
    %6107 = vrot.lane.b32.xlu0 %v5399, 126
    %v6108 = vpop.permute.xlu0 %6107
    %6109 = vrot.lane.b32.xlu0 %v5400, 126
    %v6110 = vpop.permute.xlu0 %6109
    %6111 = vrot.lane.b32.xlu0 %v5401, 126
    %v6112 = vpop.permute.xlu0 %6111
    %6113 = vrot.lane.b32.xlu0 %v5402, 126
    %v6114 = vpop.permute.xlu0 %6113
    %6115 = vrot.lane.b32.xlu0 %v5403, 126
    %v6116 = vpop.permute.xlu0 %6115
    %6117 = vrot.lane.b32.xlu0 %v5404, 126
    %v6118 = vpop.permute.xlu0 %6117
    %6119 = vrot.lane.b32.xlu0 %v5405, 126
    %v6120 = vpop.permute.xlu0 %6119
    %6121 = vrot.lane.b32.xlu0 %v5406, 126
    %v6122 = vpop.permute.xlu0 %6121
    %6123 = vrot.lane.b32.xlu0 %v5407, 126
    %v6124 = vpop.permute.xlu0 %6123
    %6125 = vrot.lane.b32.xlu0 %v5408, 126
    %v6126 = vpop.permute.xlu0 %6125
    %6127 = vrot.lane.b32.xlu0 %v5409, 126
    %v6128 = vpop.permute.xlu0 %6127
    %6129 = vrot.lane.b32.xlu0 %v5410, 126
    %v6130 = vpop.permute.xlu0 %6129
    %6131 = vrot.lane.b32.xlu0 %v5411, 126
    %v6132 = vpop.permute.xlu0 %6131
    %6133 = vrot.lane.b32.xlu0 %v5412, 126
    %v6134 = vpop.permute.xlu0 %6133
    %6135 = vrot.lane.b32.xlu0 %v5413, 126
    %v6136 = vpop.permute.xlu0 %6135
    %6137 = vrot.lane.b32.xlu0 %v5414, 126
    %v6138 = vpop.permute.xlu0 %6137
    %6139 = vrot.lane.b32.xlu0 %v5415, 126
    %v6140 = vpop.permute.xlu0 %6139
    %6141 = vrot.lane.b32.xlu0 %v5416, 126
    %v6142 = vpop.permute.xlu0 %6141
    %6143 = vrot.lane.b32.xlu0 %v5417, 126
    %v6144 = vpop.permute.xlu0 %6143
    %6145 = vrot.lane.b32.xlu0 %v5418, 126
    %v6146 = vpop.permute.xlu0 %6145
    %6147 = vrot.lane.b32.xlu0 %v5419, 126
    %v6148 = vpop.permute.xlu0 %6147
    %6149 = vrot.lane.b32.xlu0 %v5420, 126
    %v6150 = vpop.permute.xlu0 %6149
    %6151 = vrot.lane.b32.xlu0 %v5421, 126
    %v6152 = vpop.permute.xlu0 %6151
    %6153 = vrot.lane.b32.xlu0 %v5422, 126
    %v6154 = vpop.permute.xlu0 %6153
    %6155 = vrot.lane.b32.xlu0 %v5423, 126
    %v6156 = vpop.permute.xlu0 %6155
    %6157 = vrot.lane.b32.xlu0 %v5424, 126
    %v6158 = vpop.permute.xlu0 %6157
    %6159 = vrot.lane.b32.xlu0 %v5425, 126
    %v6160 = vpop.permute.xlu0 %6159
    %6161 = vrot.lane.b32.xlu0 %v5426, 126
    %v6162 = vpop.permute.xlu0 %6161
    %v6163 = vsel %vm4963, %v6100, %v6102
    %v6164 = vsel %vm4963, %v6102, %v6104
    %v6165 = vsel %vm4963, %v6104, %v6106
    %v6166 = vsel %vm4963, %v6106, %v6108
    %v6167 = vsel %vm4963, %v6108, %v6110
    %v6168 = vsel %vm4963, %v6110, %v6112
    %v6169 = vsel %vm4963, %v6112, %v6114
    %v6170 = vsel %vm4963, %v6114, %v6116
    %v6171 = vsel %vm4963, %v6116, %v6118
    %v6172 = vsel %vm4963, %v6118, %v6120
    %v6173 = vsel %vm4963, %v6120, %v6122
    %v6174 = vsel %vm4963, %v6122, %v6124
    %v6175 = vsel %vm4963, %v6124, %v6126
    %v6176 = vsel %vm4963, %v6126, %v6128
    %v6177 = vsel %vm4963, %v6128, %v6130
    %v6178 = vsel %vm4963, %v6132, %v6134
    %v6179 = vsel %vm4963, %v6134, %v6136
    %v6180 = vsel %vm4963, %v6136, %v6138
    %v6181 = vsel %vm4963, %v6138, %v6140
    %v6182 = vsel %vm4963, %v6140, %v6142
    %v6183 = vsel %vm4963, %v6142, %v6144
    %v6184 = vsel %vm4963, %v6144, %v6146
    %v6185 = vsel %vm4963, %v6146, %v6148
    %v6186 = vsel %vm4963, %v6148, %v6150
    %v6187 = vsel %vm4963, %v6150, %v6152
    %v6188 = vsel %vm4963, %v6152, %v6154
    %v6189 = vsel %vm4963, %v6154, %v6156
    %v6190 = vsel %vm4963, %v6156, %v6158
    %v6191 = vsel %vm4963, %v6158, %v6160
    %v6192 = vsel %vm4963, %v6160, %v6162
    %v6225 = vsel %vm4963, %v6130, 0.0
    %v6226 = vsel %vm4963, %v6162, 0.0
    %6227 = vrot.lane.b32.xlu0 %v5395, 125
    %v6228 = vpop.permute.xlu0 %6227
    %6229 = vrot.lane.b32.xlu0 %v5396, 125
    %v6230 = vpop.permute.xlu0 %6229
    %6231 = vrot.lane.b32.xlu0 %v5397, 125
    %v6232 = vpop.permute.xlu0 %6231
    %6233 = vrot.lane.b32.xlu0 %v5398, 125
    %v6234 = vpop.permute.xlu0 %6233
    %6235 = vrot.lane.b32.xlu0 %v5399, 125
    %v6236 = vpop.permute.xlu0 %6235
    %6237 = vrot.lane.b32.xlu0 %v5400, 125
    %v6238 = vpop.permute.xlu0 %6237
    %6239 = vrot.lane.b32.xlu0 %v5401, 125
    %v6240 = vpop.permute.xlu0 %6239
    %6241 = vrot.lane.b32.xlu0 %v5402, 125
    %v6242 = vpop.permute.xlu0 %6241
    %6243 = vrot.lane.b32.xlu0 %v5403, 125
    %v6244 = vpop.permute.xlu0 %6243
    %6245 = vrot.lane.b32.xlu0 %v5404, 125
    %v6246 = vpop.permute.xlu0 %6245
    %6247 = vrot.lane.b32.xlu0 %v5405, 125
    %v6248 = vpop.permute.xlu0 %6247
    %6249 = vrot.lane.b32.xlu0 %v5406, 125
    %v6250 = vpop.permute.xlu0 %6249
    %6251 = vrot.lane.b32.xlu0 %v5407, 125
    %v6252 = vpop.permute.xlu0 %6251
    %6253 = vrot.lane.b32.xlu0 %v5408, 125
    %v6254 = vpop.permute.xlu0 %6253
    %6255 = vrot.lane.b32.xlu0 %v5409, 125
    %v6256 = vpop.permute.xlu0 %6255
    %6257 = vrot.lane.b32.xlu0 %v5410, 125
    %v6258 = vpop.permute.xlu0 %6257
    %6259 = vrot.lane.b32.xlu0 %v5411, 125
    %v6260 = vpop.permute.xlu0 %6259
    %6261 = vrot.lane.b32.xlu0 %v5412, 125
    %v6262 = vpop.permute.xlu0 %6261
    %6263 = vrot.lane.b32.xlu0 %v5413, 125
    %v6264 = vpop.permute.xlu0 %6263
    %6265 = vrot.lane.b32.xlu0 %v5414, 125
    %v6266 = vpop.permute.xlu0 %6265
    %6267 = vrot.lane.b32.xlu0 %v5415, 125
    %v6268 = vpop.permute.xlu0 %6267
    %6269 = vrot.lane.b32.xlu0 %v5416, 125
    %v6270 = vpop.permute.xlu0 %6269
    %6271 = vrot.lane.b32.xlu0 %v5417, 125
    %v6272 = vpop.permute.xlu0 %6271
    %6273 = vrot.lane.b32.xlu0 %v5418, 125
    %v6274 = vpop.permute.xlu0 %6273
    %6275 = vrot.lane.b32.xlu0 %v5419, 125
    %v6276 = vpop.permute.xlu0 %6275
    %6277 = vrot.lane.b32.xlu0 %v5420, 125
    %v6278 = vpop.permute.xlu0 %6277
    %6279 = vrot.lane.b32.xlu0 %v5421, 125
    %v6280 = vpop.permute.xlu0 %6279
    %6281 = vrot.lane.b32.xlu0 %v5422, 125
    %v6282 = vpop.permute.xlu0 %6281
    %6283 = vrot.lane.b32.xlu0 %v5423, 125
    %v6284 = vpop.permute.xlu0 %6283
    %6285 = vrot.lane.b32.xlu0 %v5424, 125
    %v6286 = vpop.permute.xlu0 %6285
    %6287 = vrot.lane.b32.xlu0 %v5425, 125
    %v6288 = vpop.permute.xlu0 %6287
    %6289 = vrot.lane.b32.xlu0 %v5426, 125
    %v6290 = vpop.permute.xlu0 %6289
    %v6291 = vsel %vm5102, %v6228, %v6230
    %v6292 = vsel %vm5102, %v6230, %v6232
    %v6293 = vsel %vm5102, %v6232, %v6234
    %v6294 = vsel %vm5102, %v6234, %v6236
    %v6295 = vsel %vm5102, %v6236, %v6238
    %v6296 = vsel %vm5102, %v6238, %v6240
    %v6297 = vsel %vm5102, %v6240, %v6242
    %v6298 = vsel %vm5102, %v6242, %v6244
    %v6299 = vsel %vm5102, %v6244, %v6246
    %v6300 = vsel %vm5102, %v6246, %v6248
    %v6301 = vsel %vm5102, %v6248, %v6250
    %v6302 = vsel %vm5102, %v6250, %v6252
    %v6303 = vsel %vm5102, %v6252, %v6254
    %v6304 = vsel %vm5102, %v6254, %v6256
    %v6305 = vsel %vm5102, %v6256, %v6258
    %v6306 = vsel %vm5102, %v6260, %v6262
    %v6307 = vsel %vm5102, %v6262, %v6264
    %v6308 = vsel %vm5102, %v6264, %v6266
    %v6309 = vsel %vm5102, %v6266, %v6268
    %v6310 = vsel %vm5102, %v6268, %v6270
    %v6311 = vsel %vm5102, %v6270, %v6272
    %v6312 = vsel %vm5102, %v6272, %v6274
    %v6313 = vsel %vm5102, %v6274, %v6276
    %v6314 = vsel %vm5102, %v6276, %v6278
    %v6315 = vsel %vm5102, %v6278, %v6280
    %v6316 = vsel %vm5102, %v6280, %v6282
    %v6317 = vsel %vm5102, %v6282, %v6284
    %v6318 = vsel %vm5102, %v6284, %v6286
    %v6319 = vsel %vm5102, %v6286, %v6288
    %v6320 = vsel %vm5102, %v6288, %v6290
    %v6353 = vsel %vm5102, %v6258, 0.0
    %v6354 = vsel %vm5102, %v6290, 0.0
    %6355 = vrot.lane.b32.xlu0 %v5395, 124
    %v6356 = vpop.permute.xlu0 %6355
    %6357 = vrot.lane.b32.xlu0 %v5396, 124
    %v6358 = vpop.permute.xlu0 %6357
    %6359 = vrot.lane.b32.xlu0 %v5397, 124
    %v6360 = vpop.permute.xlu0 %6359
    %6361 = vrot.lane.b32.xlu0 %v5398, 124
    %v6362 = vpop.permute.xlu0 %6361
    %6363 = vrot.lane.b32.xlu0 %v5399, 124
    %v6364 = vpop.permute.xlu0 %6363
    %6365 = vrot.lane.b32.xlu0 %v5400, 124
    %v6366 = vpop.permute.xlu0 %6365
    %6367 = vrot.lane.b32.xlu0 %v5401, 124
    %v6368 = vpop.permute.xlu0 %6367
    %6369 = vrot.lane.b32.xlu0 %v5402, 124
    %v6370 = vpop.permute.xlu0 %6369
    %6371 = vrot.lane.b32.xlu0 %v5403, 124
    %v6372 = vpop.permute.xlu0 %6371
    %6373 = vrot.lane.b32.xlu0 %v5404, 124
    %v6374 = vpop.permute.xlu0 %6373
    %6375 = vrot.lane.b32.xlu0 %v5405, 124
    %v6376 = vpop.permute.xlu0 %6375
    %6377 = vrot.lane.b32.xlu0 %v5406, 124
    %v6378 = vpop.permute.xlu0 %6377
    %6379 = vrot.lane.b32.xlu0 %v5407, 124
    %v6380 = vpop.permute.xlu0 %6379
    %6381 = vrot.lane.b32.xlu0 %v5408, 124
    %v6382 = vpop.permute.xlu0 %6381
    %6383 = vrot.lane.b32.xlu0 %v5409, 124
    %v6384 = vpop.permute.xlu0 %6383
    %6385 = vrot.lane.b32.xlu0 %v5410, 124
    %v6386 = vpop.permute.xlu0 %6385
    %6387 = vrot.lane.b32.xlu0 %v5411, 124
    %v6388 = vpop.permute.xlu0 %6387
    %6389 = vrot.lane.b32.xlu0 %v5412, 124
    %v6390 = vpop.permute.xlu0 %6389
    %6391 = vrot.lane.b32.xlu0 %v5413, 124
    %v6392 = vpop.permute.xlu0 %6391
    %6393 = vrot.lane.b32.xlu0 %v5414, 124
    %v6394 = vpop.permute.xlu0 %6393
    %6395 = vrot.lane.b32.xlu0 %v5415, 124
    %v6396 = vpop.permute.xlu0 %6395
    %6397 = vrot.lane.b32.xlu0 %v5416, 124
    %v6398 = vpop.permute.xlu0 %6397
    %6399 = vrot.lane.b32.xlu0 %v5417, 124
    %v6400 = vpop.permute.xlu0 %6399
    %6401 = vrot.lane.b32.xlu0 %v5418, 124
    %v6402 = vpop.permute.xlu0 %6401
    %6403 = vrot.lane.b32.xlu0 %v5419, 124
    %v6404 = vpop.permute.xlu0 %6403
    %6405 = vrot.lane.b32.xlu0 %v5420, 124
    %v6406 = vpop.permute.xlu0 %6405
    %6407 = vrot.lane.b32.xlu0 %v5421, 124
    %v6408 = vpop.permute.xlu0 %6407
    %6409 = vrot.lane.b32.xlu0 %v5422, 124
    %v6410 = vpop.permute.xlu0 %6409
    %6411 = vrot.lane.b32.xlu0 %v5423, 124
    %v6412 = vpop.permute.xlu0 %6411
    %6413 = vrot.lane.b32.xlu0 %v5424, 124
    %v6414 = vpop.permute.xlu0 %6413
    %6415 = vrot.lane.b32.xlu0 %v5425, 124
    %v6416 = vpop.permute.xlu0 %6415
    %6417 = vrot.lane.b32.xlu0 %v5426, 124
    %v6418 = vpop.permute.xlu0 %6417
    %v6419 = vsel %vm5241, %v6356, %v6358
    %v6420 = vsel %vm5241, %v6358, %v6360
    %v6421 = vsel %vm5241, %v6360, %v6362
    %v6422 = vsel %vm5241, %v6362, %v6364
    %v6423 = vsel %vm5241, %v6364, %v6366
    %v6424 = vsel %vm5241, %v6366, %v6368
    %v6425 = vsel %vm5241, %v6368, %v6370
    %v6426 = vsel %vm5241, %v6370, %v6372
    %v6427 = vsel %vm5241, %v6372, %v6374
    %v6428 = vsel %vm5241, %v6374, %v6376
    %v6429 = vsel %vm5241, %v6376, %v6378
    %v6430 = vsel %vm5241, %v6378, %v6380
    %v6431 = vsel %vm5241, %v6380, %v6382
    %v6432 = vsel %vm5241, %v6382, %v6384
    %v6433 = vsel %vm5241, %v6384, %v6386
    %v6434 = vsel %vm5241, %v6388, %v6390
    %v6435 = vsel %vm5241, %v6390, %v6392
    %v6436 = vsel %vm5241, %v6392, %v6394
    %v6437 = vsel %vm5241, %v6394, %v6396
    %v6438 = vsel %vm5241, %v6396, %v6398
    %v6439 = vsel %vm5241, %v6398, %v6400
    %v6440 = vsel %vm5241, %v6400, %v6402
    %v6441 = vsel %vm5241, %v6402, %v6404
    %v6442 = vsel %vm5241, %v6404, %v6406
    %v6443 = vsel %vm5241, %v6406, %v6408
    %v6444 = vsel %vm5241, %v6408, %v6410
    %v6445 = vsel %vm5241, %v6410, %v6412
    %v6446 = vsel %vm5241, %v6412, %v6414
    %v6447 = vsel %vm5241, %v6414, %v6416
    %v6448 = vsel %vm5241, %v6416, %v6418
    %v6481 = vsel %vm5241, %v6386, 0.0
    %v6482 = vsel %vm5241, %v6418, 0.0
    %6484 = vset.pattern.permute.xlu0 0
    %6485 = vperm.xlu0 %6484, %v4148
    %v6486 = vpop.permute.xlu0 %6485
    %6489 = vset.pattern.permute.xlu0 0
    %6490 = vperm.xlu0 %6489, %v4149
    %v6491 = vpop.permute.xlu0 %6490
    %vm6493 = vcmask 130048
    %v6495 = vsel %vm6493, %v4145, 0
    %v6498 = vsel %vm6493, %v4147, 0
    %6500 = vmatpush.msra.mxu0 %v6306
    %6501 = vmatpush.msra.mxu0 %v6291
    %6502 = vmatpush.msra.mxu0 %v6178
    %6503 = vmatpush.msra.mxu0 %v6163
    %6504 = vmatpush.msra.mxu0 %v6050
    %6505 = vmatpush.msra.mxu0 %v6035
    %6506 = vmatpush.msra.mxu0 %v5411
    %6507 = vmatpush.msra.mxu0 %v5395
    %6508 = vmatpush.msra.mxu0 %v5970
    %6509 = vmatpush.msra.mxu0 %v5969
    %6510 = vmatpush.msra.mxu0 %v5842
    %6511 = vmatpush.msra.mxu0 %v5841
    %6512 = vmatpush.msra.mxu0 %v5714
    %6513 = vmatpush.msra.mxu0 %v5713
    %6514 = vmatpush.msra.mxu0 %v5586
    %6515 = vmatpush.msra.mxu0 %v5585
    %6516 = vmatmul.f32.gmra.mxu0 %v4144
    %v6517 = vpop.f32.mrf.mxu0
    %v6518 = vadd.f32 %v6486, %v6517
    %6519 = vmatmul.f32.gmra.mxu0 %v4146
    %v6520 = vpop.f32.mrf.mxu0
    %v6521 = vadd.f32 %v6491, %v6520
    %6522 = vdwg.mxu0
    %6523 = vmatpush.msra.mxu0 0.0
    %6524 = vmatpush.msra.mxu0 0.0
    %6525 = vmatpush.msra.mxu0 0.0
    %6526 = vmatpush.msra.mxu0 0.0
    %6527 = vmatpush.msra.mxu0 0.0
    %6528 = vmatpush.msra.mxu0 0.0
    %6529 = vmatpush.msra.mxu0 0.0
    %6530 = vmatpush.msra.mxu0 0.0
    %6531 = vmatpush.msra.mxu0 0.0
    %6532 = vmatpush.msra.mxu0 0.0
    %6533 = vmatpush.msra.mxu0 0.0
    %6534 = vmatpush.msra.mxu0 0.0
    %6535 = vmatpush.msra.mxu0 0.0
    %6536 = vmatpush.msra.mxu0 0.0
    %6537 = vmatpush.msra.mxu0 %v6434
    %6538 = vmatpush.msra.mxu0 %v6419
    %6539 = vmatmul.f32.gmra.mxu0 %v6495
    %v6540 = vpop.f32.mrf.mxu0
    %v6541 = vadd.f32 %v6518, %v6540
    %6542 = vmatmul.f32.gmra.mxu0 %v6498
    %v6543 = vpop.f32.mrf.mxu0
    %v6544 = vadd.f32 %v6521, %v6543
    %6545 = vdwg.mxu0
    %6546 = vmatpush.msra.mxu0 %v6307
    %6547 = vmatpush.msra.mxu0 %v6292
    %6548 = vmatpush.msra.mxu0 %v6179
    %6549 = vmatpush.msra.mxu0 %v6164
    %6550 = vmatpush.msra.mxu0 %v6051
    %6551 = vmatpush.msra.mxu0 %v6036
    %6552 = vmatpush.msra.mxu0 %v5412
    %6553 = vmatpush.msra.mxu0 %v5396
    %6554 = vmatpush.msra.mxu0 %v5922
    %6555 = vmatpush.msra.mxu0 %v5907
    %6556 = vmatpush.msra.mxu0 %v5794
    %6557 = vmatpush.msra.mxu0 %v5779
    %6558 = vmatpush.msra.mxu0 %v5666
    %6559 = vmatpush.msra.mxu0 %v5651
    %6560 = vmatpush.msra.mxu0 %v5538
    %6561 = vmatpush.msra.mxu0 %v5523
    %6562 = vmatmul.f32.gmra.mxu0 %v4144
    %v6563 = vpop.f32.mrf.mxu0
    %v6564 = vadd.f32 %v6486, %v6563
    %6565 = vmatmul.f32.gmra.mxu0 %v4146
    %v6566 = vpop.f32.mrf.mxu0
    %v6567 = vadd.f32 %v6491, %v6566
    %6568 = vdwg.mxu0
    %6569 = vmatpush.msra.mxu0 0.0
    %6570 = vmatpush.msra.mxu0 0.0
    %6571 = vmatpush.msra.mxu0 0.0
    %6572 = vmatpush.msra.mxu0 0.0
    %6573 = vmatpush.msra.mxu0 0.0
    %6574 = vmatpush.msra.mxu0 0.0
    %6575 = vmatpush.msra.mxu0 0.0
    %6576 = vmatpush.msra.mxu0 0.0
    %6577 = vmatpush.msra.mxu0 0.0
    %6578 = vmatpush.msra.mxu0 0.0
    %6579 = vmatpush.msra.mxu0 0.0
    %6580 = vmatpush.msra.mxu0 0.0
    %6581 = vmatpush.msra.mxu0 0.0
    %6582 = vmatpush.msra.mxu0 0.0
    %6583 = vmatpush.msra.mxu0 %v6435
    %6584 = vmatpush.msra.mxu0 %v6420
    %6585 = vmatmul.f32.gmra.mxu0 %v6495
    %v6586 = vpop.f32.mrf.mxu0
    %v6587 = vadd.f32 %v6564, %v6586
    %6588 = vmatmul.f32.gmra.mxu0 %v6498
    %v6589 = vpop.f32.mrf.mxu0
    %v6590 = vadd.f32 %v6567, %v6589
    %6591 = vdwg.mxu0
    %6592 = vmatpush.msra.mxu0 %v6308
    %6593 = vmatpush.msra.mxu0 %v6293
    %6594 = vmatpush.msra.mxu0 %v6180
    %6595 = vmatpush.msra.mxu0 %v6165
    %6596 = vmatpush.msra.mxu0 %v6052
    %6597 = vmatpush.msra.mxu0 %v6037
    %6598 = vmatpush.msra.mxu0 %v5413
    %6599 = vmatpush.msra.mxu0 %v5397
    %6600 = vmatpush.msra.mxu0 %v5923
    %6601 = vmatpush.msra.mxu0 %v5908
    %6602 = vmatpush.msra.mxu0 %v5795
    %6603 = vmatpush.msra.mxu0 %v5780
    %6604 = vmatpush.msra.mxu0 %v5667
    %6605 = vmatpush.msra.mxu0 %v5652
    %6606 = vmatpush.msra.mxu0 %v5539
    %6607 = vmatpush.msra.mxu0 %v5524
    %6608 = vmatmul.f32.gmra.mxu0 %v4144
    %v6609 = vpop.f32.mrf.mxu0
    %v6610 = vadd.f32 %v6486, %v6609
    %6611 = vmatmul.f32.gmra.mxu0 %v4146
    %v6612 = vpop.f32.mrf.mxu0
    %v6613 = vadd.f32 %v6491, %v6612
    %6614 = vdwg.mxu0
    %6615 = vmatpush.msra.mxu0 0.0
    %6616 = vmatpush.msra.mxu0 0.0
    %6617 = vmatpush.msra.mxu0 0.0
    %6618 = vmatpush.msra.mxu0 0.0
    %6619 = vmatpush.msra.mxu0 0.0
    %6620 = vmatpush.msra.mxu0 0.0
    %6621 = vmatpush.msra.mxu0 0.0
    %6622 = vmatpush.msra.mxu0 0.0
    %6623 = vmatpush.msra.mxu0 0.0
    %6624 = vmatpush.msra.mxu0 0.0
    %6625 = vmatpush.msra.mxu0 0.0
    %6626 = vmatpush.msra.mxu0 0.0
    %6627 = vmatpush.msra.mxu0 0.0
    %6628 = vmatpush.msra.mxu0 0.0
    %6629 = vmatpush.msra.mxu0 %v6436
    %6630 = vmatpush.msra.mxu0 %v6421
    %6631 = vmatmul.f32.gmra.mxu0 %v6495
    %v6632 = vpop.f32.mrf.mxu0
    %v6633 = vadd.f32 %v6610, %v6632
    %6634 = vmatmul.f32.gmra.mxu0 %v6498
    %v6635 = vpop.f32.mrf.mxu0
    %v6636 = vadd.f32 %v6613, %v6635
    %6637 = vdwg.mxu0
    %6638 = vmatpush.msra.mxu0 %v6309
    %6639 = vmatpush.msra.mxu0 %v6294
    %6640 = vmatpush.msra.mxu0 %v6181
    %6641 = vmatpush.msra.mxu0 %v6166
    %6642 = vmatpush.msra.mxu0 %v6053
    %6643 = vmatpush.msra.mxu0 %v6038
    %6644 = vmatpush.msra.mxu0 %v5414
    %6645 = vmatpush.msra.mxu0 %v5398
    %6646 = vmatpush.msra.mxu0 %v5924
    %6647 = vmatpush.msra.mxu0 %v5909
    %6648 = vmatpush.msra.mxu0 %v5796
    %6649 = vmatpush.msra.mxu0 %v5781
    %6650 = vmatpush.msra.mxu0 %v5668
    %6651 = vmatpush.msra.mxu0 %v5653
    %6652 = vmatpush.msra.mxu0 %v5540
    %6653 = vmatpush.msra.mxu0 %v5525
    %6654 = vmatmul.f32.gmra.mxu0 %v4144
    %v6655 = vpop.f32.mrf.mxu0
    %v6656 = vadd.f32 %v6486, %v6655
    %6657 = vmatmul.f32.gmra.mxu0 %v4146
    %v6658 = vpop.f32.mrf.mxu0
    %v6659 = vadd.f32 %v6491, %v6658
    %6660 = vdwg.mxu0
    %6661 = vmatpush.msra.mxu0 0.0
    %6662 = vmatpush.msra.mxu0 0.0
    %6663 = vmatpush.msra.mxu0 0.0
    %6664 = vmatpush.msra.mxu0 0.0
    %6665 = vmatpush.msra.mxu0 0.0
    %6666 = vmatpush.msra.mxu0 0.0
    %6667 = vmatpush.msra.mxu0 0.0
    %6668 = vmatpush.msra.mxu0 0.0
    %6669 = vmatpush.msra.mxu0 0.0
    %6670 = vmatpush.msra.mxu0 0.0
    %6671 = vmatpush.msra.mxu0 0.0
    %6672 = vmatpush.msra.mxu0 0.0
    %6673 = vmatpush.msra.mxu0 0.0
    %6674 = vmatpush.msra.mxu0 0.0
    %6675 = vmatpush.msra.mxu0 %v6437
    %6676 = vmatpush.msra.mxu0 %v6422
    %6677 = vmatmul.f32.gmra.mxu0 %v6495
    %v6678 = vpop.f32.mrf.mxu0
    %v6679 = vadd.f32 %v6656, %v6678
    %6680 = vmatmul.f32.gmra.mxu0 %v6498
    %v6681 = vpop.f32.mrf.mxu0
    %v6682 = vadd.f32 %v6659, %v6681
    %6683 = vdwg.mxu0
    %6684 = vmatpush.msra.mxu0 %v6310
    %6685 = vmatpush.msra.mxu0 %v6295
    %6686 = vmatpush.msra.mxu0 %v6182
    %6687 = vmatpush.msra.mxu0 %v6167
    %6688 = vmatpush.msra.mxu0 %v6054
    %6689 = vmatpush.msra.mxu0 %v6039
    %6690 = vmatpush.msra.mxu0 %v5415
    %6691 = vmatpush.msra.mxu0 %v5399
    %6692 = vmatpush.msra.mxu0 %v5925
    %6693 = vmatpush.msra.mxu0 %v5910
    %6694 = vmatpush.msra.mxu0 %v5797
    %6695 = vmatpush.msra.mxu0 %v5782
    %6696 = vmatpush.msra.mxu0 %v5669
    %6697 = vmatpush.msra.mxu0 %v5654
    %6698 = vmatpush.msra.mxu0 %v5541
    %6699 = vmatpush.msra.mxu0 %v5526
    %6700 = vmatmul.f32.gmra.mxu0 %v4144
    %v6701 = vpop.f32.mrf.mxu0
    %v6702 = vadd.f32 %v6486, %v6701
    %6703 = vmatmul.f32.gmra.mxu0 %v4146
    %v6704 = vpop.f32.mrf.mxu0
    %v6705 = vadd.f32 %v6491, %v6704
    %6706 = vdwg.mxu0
    %6707 = vmatpush.msra.mxu0 0.0
    %6708 = vmatpush.msra.mxu0 0.0
    %6709 = vmatpush.msra.mxu0 0.0
    %6710 = vmatpush.msra.mxu0 0.0
    %6711 = vmatpush.msra.mxu0 0.0
    %6712 = vmatpush.msra.mxu0 0.0
    %6713 = vmatpush.msra.mxu0 0.0
    %6714 = vmatpush.msra.mxu0 0.0
    %6715 = vmatpush.msra.mxu0 0.0
    %6716 = vmatpush.msra.mxu0 0.0
    %6717 = vmatpush.msra.mxu0 0.0
    %6718 = vmatpush.msra.mxu0 0.0
    %6719 = vmatpush.msra.mxu0 0.0
    %6720 = vmatpush.msra.mxu0 0.0
    %6721 = vmatpush.msra.mxu0 %v6438
    %6722 = vmatpush.msra.mxu0 %v6423
    %6723 = vmatmul.f32.gmra.mxu0 %v6495
    %v6724 = vpop.f32.mrf.mxu0
    %v6725 = vadd.f32 %v6702, %v6724
    %6726 = vmatmul.f32.gmra.mxu0 %v6498
    %v6727 = vpop.f32.mrf.mxu0
    %v6728 = vadd.f32 %v6705, %v6727
    %6729 = vdwg.mxu0
    %6730 = vmatpush.msra.mxu0 %v6311
    %6731 = vmatpush.msra.mxu0 %v6296
    %6732 = vmatpush.msra.mxu0 %v6183
    %6733 = vmatpush.msra.mxu0 %v6168
    %6734 = vmatpush.msra.mxu0 %v6055
    %6735 = vmatpush.msra.mxu0 %v6040
    %6736 = vmatpush.msra.mxu0 %v5416
    %6737 = vmatpush.msra.mxu0 %v5400
    %6738 = vmatpush.msra.mxu0 %v5926
    %6739 = vmatpush.msra.mxu0 %v5911
    %6740 = vmatpush.msra.mxu0 %v5798
    %6741 = vmatpush.msra.mxu0 %v5783
    %6742 = vmatpush.msra.mxu0 %v5670
    %6743 = vmatpush.msra.mxu0 %v5655
    %6744 = vmatpush.msra.mxu0 %v5542
    %6745 = vmatpush.msra.mxu0 %v5527
    %6746 = vmatmul.f32.gmra.mxu0 %v4144
    %v6747 = vpop.f32.mrf.mxu0
    %v6748 = vadd.f32 %v6486, %v6747
    %6749 = vmatmul.f32.gmra.mxu0 %v4146
    %v6750 = vpop.f32.mrf.mxu0
    %v6751 = vadd.f32 %v6491, %v6750
    %6752 = vdwg.mxu0
    %6753 = vmatpush.msra.mxu0 0.0
    %6754 = vmatpush.msra.mxu0 0.0
    %6755 = vmatpush.msra.mxu0 0.0
    %6756 = vmatpush.msra.mxu0 0.0
    %6757 = vmatpush.msra.mxu0 0.0
    %6758 = vmatpush.msra.mxu0 0.0
    %6759 = vmatpush.msra.mxu0 0.0
    %6760 = vmatpush.msra.mxu0 0.0
    %6761 = vmatpush.msra.mxu0 0.0
    %6762 = vmatpush.msra.mxu0 0.0
    %6763 = vmatpush.msra.mxu0 0.0
    %6764 = vmatpush.msra.mxu0 0.0
    %6765 = vmatpush.msra.mxu0 0.0
    %6766 = vmatpush.msra.mxu0 0.0
    %6767 = vmatpush.msra.mxu0 %v6439
    %6768 = vmatpush.msra.mxu0 %v6424
    %6769 = vmatmul.f32.gmra.mxu0 %v6495
    %v6770 = vpop.f32.mrf.mxu0
    %v6771 = vadd.f32 %v6748, %v6770
    %6772 = vmatmul.f32.gmra.mxu0 %v6498
    %v6773 = vpop.f32.mrf.mxu0
    %v6774 = vadd.f32 %v6751, %v6773
    %6775 = vdwg.mxu0
    %6776 = vmatpush.msra.mxu0 %v6312
    %6777 = vmatpush.msra.mxu0 %v6297
    %6778 = vmatpush.msra.mxu0 %v6184
    %6779 = vmatpush.msra.mxu0 %v6169
    %6780 = vmatpush.msra.mxu0 %v6056
    %6781 = vmatpush.msra.mxu0 %v6041
    %6782 = vmatpush.msra.mxu0 %v5417
    %6783 = vmatpush.msra.mxu0 %v5401
    %6784 = vmatpush.msra.mxu0 %v5927
    %6785 = vmatpush.msra.mxu0 %v5912
    %6786 = vmatpush.msra.mxu0 %v5799
    %6787 = vmatpush.msra.mxu0 %v5784
    %6788 = vmatpush.msra.mxu0 %v5671
    %6789 = vmatpush.msra.mxu0 %v5656
    %6790 = vmatpush.msra.mxu0 %v5543
    %6791 = vmatpush.msra.mxu0 %v5528
    %6792 = vmatmul.f32.gmra.mxu0 %v4144
    %v6793 = vpop.f32.mrf.mxu0
    %v6794 = vadd.f32 %v6486, %v6793
    %6795 = vmatmul.f32.gmra.mxu0 %v4146
    %v6796 = vpop.f32.mrf.mxu0
    %v6797 = vadd.f32 %v6491, %v6796
    %6798 = vdwg.mxu0
    %6799 = vmatpush.msra.mxu0 0.0
    %6800 = vmatpush.msra.mxu0 0.0
    %6801 = vmatpush.msra.mxu0 0.0
    %6802 = vmatpush.msra.mxu0 0.0
    %6803 = vmatpush.msra.mxu0 0.0
    %6804 = vmatpush.msra.mxu0 0.0
    %6805 = vmatpush.msra.mxu0 0.0
    %6806 = vmatpush.msra.mxu0 0.0
    %6807 = vmatpush.msra.mxu0 0.0
    %6808 = vmatpush.msra.mxu0 0.0
    %6809 = vmatpush.msra.mxu0 0.0
    %6810 = vmatpush.msra.mxu0 0.0
    %6811 = vmatpush.msra.mxu0 0.0
    %6812 = vmatpush.msra.mxu0 0.0
    %6813 = vmatpush.msra.mxu0 %v6440
    %6814 = vmatpush.msra.mxu0 %v6425
    %6815 = vmatmul.f32.gmra.mxu0 %v6495
    %v6816 = vpop.f32.mrf.mxu0
    %v6817 = vadd.f32 %v6794, %v6816
    %6818 = vmatmul.f32.gmra.mxu0 %v6498
    %v6819 = vpop.f32.mrf.mxu0
    %v6820 = vadd.f32 %v6797, %v6819
    %6821 = vdwg.mxu0
    %6822 = vmatpush.msra.mxu0 %v6313
    %6823 = vmatpush.msra.mxu0 %v6298
    %6824 = vmatpush.msra.mxu0 %v6185
    %6825 = vmatpush.msra.mxu0 %v6170
    %6826 = vmatpush.msra.mxu0 %v6057
    %6827 = vmatpush.msra.mxu0 %v6042
    %6828 = vmatpush.msra.mxu0 %v5418
    %6829 = vmatpush.msra.mxu0 %v5402
    %6830 = vmatpush.msra.mxu0 %v5928
    %6831 = vmatpush.msra.mxu0 %v5913
    %6832 = vmatpush.msra.mxu0 %v5800
    %6833 = vmatpush.msra.mxu0 %v5785
    %6834 = vmatpush.msra.mxu0 %v5672
    %6835 = vmatpush.msra.mxu0 %v5657
    %6836 = vmatpush.msra.mxu0 %v5544
    %6837 = vmatpush.msra.mxu0 %v5529
    %6838 = vmatmul.f32.gmra.mxu0 %v4144
    %v6839 = vpop.f32.mrf.mxu0
    %v6840 = vadd.f32 %v6486, %v6839
    %6841 = vmatmul.f32.gmra.mxu0 %v4146
    %v6842 = vpop.f32.mrf.mxu0
    %v6843 = vadd.f32 %v6491, %v6842
    %6844 = vdwg.mxu0
    %6845 = vmatpush.msra.mxu0 0.0
    %6846 = vmatpush.msra.mxu0 0.0
    %6847 = vmatpush.msra.mxu0 0.0
    %6848 = vmatpush.msra.mxu0 0.0
    %6849 = vmatpush.msra.mxu0 0.0
    %6850 = vmatpush.msra.mxu0 0.0
    %6851 = vmatpush.msra.mxu0 0.0
    %6852 = vmatpush.msra.mxu0 0.0
    %6853 = vmatpush.msra.mxu0 0.0
    %6854 = vmatpush.msra.mxu0 0.0
    %6855 = vmatpush.msra.mxu0 0.0
    %6856 = vmatpush.msra.mxu0 0.0
    %6857 = vmatpush.msra.mxu0 0.0
    %6858 = vmatpush.msra.mxu0 0.0
    %6859 = vmatpush.msra.mxu0 %v6441
    %6860 = vmatpush.msra.mxu0 %v6426
    %6861 = vmatmul.f32.gmra.mxu0 %v6495
    %v6862 = vpop.f32.mrf.mxu0
    %v6863 = vadd.f32 %v6840, %v6862
    %6864 = vmatmul.f32.gmra.mxu0 %v6498
    %v6865 = vpop.f32.mrf.mxu0
    %v6866 = vadd.f32 %v6843, %v6865
    %6867 = vdwg.mxu0
    %6868 = vmatpush.msra.mxu0 %v6314
    %6869 = vmatpush.msra.mxu0 %v6299
    %6870 = vmatpush.msra.mxu0 %v6186
    %6871 = vmatpush.msra.mxu0 %v6171
    %6872 = vmatpush.msra.mxu0 %v6058
    %6873 = vmatpush.msra.mxu0 %v6043
    %6874 = vmatpush.msra.mxu0 %v5419
    %6875 = vmatpush.msra.mxu0 %v5403
    %6876 = vmatpush.msra.mxu0 %v5929
    %6877 = vmatpush.msra.mxu0 %v5914
    %6878 = vmatpush.msra.mxu0 %v5801
    %6879 = vmatpush.msra.mxu0 %v5786
    %6880 = vmatpush.msra.mxu0 %v5673
    %6881 = vmatpush.msra.mxu0 %v5658
    %6882 = vmatpush.msra.mxu0 %v5545
    %6883 = vmatpush.msra.mxu0 %v5530
    %6884 = vmatmul.f32.gmra.mxu0 %v4144
    %v6885 = vpop.f32.mrf.mxu0
    %v6886 = vadd.f32 %v6486, %v6885
    %6887 = vmatmul.f32.gmra.mxu0 %v4146
    %v6888 = vpop.f32.mrf.mxu0
    %v6889 = vadd.f32 %v6491, %v6888
    %6890 = vdwg.mxu0
    %6891 = vmatpush.msra.mxu0 0.0
    %6892 = vmatpush.msra.mxu0 0.0
    %6893 = vmatpush.msra.mxu0 0.0
    %6894 = vmatpush.msra.mxu0 0.0
    %6895 = vmatpush.msra.mxu0 0.0
    %6896 = vmatpush.msra.mxu0 0.0
    %6897 = vmatpush.msra.mxu0 0.0
    %6898 = vmatpush.msra.mxu0 0.0
    %6899 = vmatpush.msra.mxu0 0.0
    %6900 = vmatpush.msra.mxu0 0.0
    %6901 = vmatpush.msra.mxu0 0.0
    %6902 = vmatpush.msra.mxu0 0.0
    %6903 = vmatpush.msra.mxu0 0.0
    %6904 = vmatpush.msra.mxu0 0.0
    %6905 = vmatpush.msra.mxu0 %v6442
    %6906 = vmatpush.msra.mxu0 %v6427
    %6907 = vmatmul.f32.gmra.mxu0 %v6495
    %v6908 = vpop.f32.mrf.mxu0
    %v6909 = vadd.f32 %v6886, %v6908
    %6910 = vmatmul.f32.gmra.mxu0 %v6498
    %v6911 = vpop.f32.mrf.mxu0
    %v6912 = vadd.f32 %v6889, %v6911
    %6913 = vdwg.mxu0
    %6914 = vmatpush.msra.mxu0 %v6315
    %6915 = vmatpush.msra.mxu0 %v6300
    %6916 = vmatpush.msra.mxu0 %v6187
    %6917 = vmatpush.msra.mxu0 %v6172
    %6918 = vmatpush.msra.mxu0 %v6059
    %6919 = vmatpush.msra.mxu0 %v6044
    %6920 = vmatpush.msra.mxu0 %v5420
    %6921 = vmatpush.msra.mxu0 %v5404
    %6922 = vmatpush.msra.mxu0 %v5930
    %6923 = vmatpush.msra.mxu0 %v5915
    %6924 = vmatpush.msra.mxu0 %v5802
    %6925 = vmatpush.msra.mxu0 %v5787
    %6926 = vmatpush.msra.mxu0 %v5674
    %6927 = vmatpush.msra.mxu0 %v5659
    %6928 = vmatpush.msra.mxu0 %v5546
    %6929 = vmatpush.msra.mxu0 %v5531
    %6930 = vmatmul.f32.gmra.mxu0 %v4144
    %v6931 = vpop.f32.mrf.mxu0
    %v6932 = vadd.f32 %v6486, %v6931
    %6933 = vmatmul.f32.gmra.mxu0 %v4146
    %v6934 = vpop.f32.mrf.mxu0
    %v6935 = vadd.f32 %v6491, %v6934
    %6936 = vdwg.mxu0
    %6937 = vmatpush.msra.mxu0 0.0
    %6938 = vmatpush.msra.mxu0 0.0
    %6939 = vmatpush.msra.mxu0 0.0
    %6940 = vmatpush.msra.mxu0 0.0
    %6941 = vmatpush.msra.mxu0 0.0
    %6942 = vmatpush.msra.mxu0 0.0
    %6943 = vmatpush.msra.mxu0 0.0
    %6944 = vmatpush.msra.mxu0 0.0
    %6945 = vmatpush.msra.mxu0 0.0
    %6946 = vmatpush.msra.mxu0 0.0
    %6947 = vmatpush.msra.mxu0 0.0
    %6948 = vmatpush.msra.mxu0 0.0
    %6949 = vmatpush.msra.mxu0 0.0
    %6950 = vmatpush.msra.mxu0 0.0
    %6951 = vmatpush.msra.mxu0 %v6443
    %6952 = vmatpush.msra.mxu0 %v6428
    %6953 = vmatmul.f32.gmra.mxu0 %v6495
    %v6954 = vpop.f32.mrf.mxu0
    %v6955 = vadd.f32 %v6932, %v6954
    %6956 = vmatmul.f32.gmra.mxu0 %v6498
    %v6957 = vpop.f32.mrf.mxu0
    %v6958 = vadd.f32 %v6935, %v6957
    %6959 = vdwg.mxu0
    %6960 = vmatpush.msra.mxu0 %v6316
    %6961 = vmatpush.msra.mxu0 %v6301
    %6962 = vmatpush.msra.mxu0 %v6188
    %6963 = vmatpush.msra.mxu0 %v6173
    %6964 = vmatpush.msra.mxu0 %v6060
    %6965 = vmatpush.msra.mxu0 %v6045
    %6966 = vmatpush.msra.mxu0 %v5421
    %6967 = vmatpush.msra.mxu0 %v5405
    %6968 = vmatpush.msra.mxu0 %v5931
    %6969 = vmatpush.msra.mxu0 %v5916
    %6970 = vmatpush.msra.mxu0 %v5803
    %6971 = vmatpush.msra.mxu0 %v5788
    %6972 = vmatpush.msra.mxu0 %v5675
    %6973 = vmatpush.msra.mxu0 %v5660
    %6974 = vmatpush.msra.mxu0 %v5547
    %6975 = vmatpush.msra.mxu0 %v5532
    %6976 = vmatmul.f32.gmra.mxu0 %v4144
    %v6977 = vpop.f32.mrf.mxu0
    %v6978 = vadd.f32 %v6486, %v6977
    %6979 = vmatmul.f32.gmra.mxu0 %v4146
    %v6980 = vpop.f32.mrf.mxu0
    %v6981 = vadd.f32 %v6491, %v6980
    %6982 = vdwg.mxu0
    %6983 = vmatpush.msra.mxu0 0.0
    %6984 = vmatpush.msra.mxu0 0.0
    %6985 = vmatpush.msra.mxu0 0.0
    %6986 = vmatpush.msra.mxu0 0.0
    %6987 = vmatpush.msra.mxu0 0.0
    %6988 = vmatpush.msra.mxu0 0.0
    %6989 = vmatpush.msra.mxu0 0.0
    %6990 = vmatpush.msra.mxu0 0.0
    %6991 = vmatpush.msra.mxu0 0.0
    %6992 = vmatpush.msra.mxu0 0.0
    %6993 = vmatpush.msra.mxu0 0.0
    %6994 = vmatpush.msra.mxu0 0.0
    %6995 = vmatpush.msra.mxu0 0.0
    %6996 = vmatpush.msra.mxu0 0.0
    %6997 = vmatpush.msra.mxu0 %v6444
    %6998 = vmatpush.msra.mxu0 %v6429
    %6999 = vmatmul.f32.gmra.mxu0 %v6495
    %v7000 = vpop.f32.mrf.mxu0
    %v7001 = vadd.f32 %v6978, %v7000
    %7002 = vmatmul.f32.gmra.mxu0 %v6498
    %v7003 = vpop.f32.mrf.mxu0
    %v7004 = vadd.f32 %v6981, %v7003
    %7005 = vdwg.mxu0
    %7006 = vmatpush.msra.mxu0 %v6317
    %7007 = vmatpush.msra.mxu0 %v6302
    %7008 = vmatpush.msra.mxu0 %v6189
    %7009 = vmatpush.msra.mxu0 %v6174
    %7010 = vmatpush.msra.mxu0 %v6061
    %7011 = vmatpush.msra.mxu0 %v6046
    %7012 = vmatpush.msra.mxu0 %v5422
    %7013 = vmatpush.msra.mxu0 %v5406
    %7014 = vmatpush.msra.mxu0 %v5932
    %7015 = vmatpush.msra.mxu0 %v5917
    %7016 = vmatpush.msra.mxu0 %v5804
    %7017 = vmatpush.msra.mxu0 %v5789
    %7018 = vmatpush.msra.mxu0 %v5676
    %7019 = vmatpush.msra.mxu0 %v5661
    %7020 = vmatpush.msra.mxu0 %v5548
    %7021 = vmatpush.msra.mxu0 %v5533
    %7022 = vmatmul.f32.gmra.mxu0 %v4144
    %v7023 = vpop.f32.mrf.mxu0
    %v7024 = vadd.f32 %v6486, %v7023
    %7025 = vmatmul.f32.gmra.mxu0 %v4146
    %v7026 = vpop.f32.mrf.mxu0
    %v7027 = vadd.f32 %v6491, %v7026
    %7028 = vdwg.mxu0
    %7029 = vmatpush.msra.mxu0 0.0
    %7030 = vmatpush.msra.mxu0 0.0
    %7031 = vmatpush.msra.mxu0 0.0
    %7032 = vmatpush.msra.mxu0 0.0
    %7033 = vmatpush.msra.mxu0 0.0
    %7034 = vmatpush.msra.mxu0 0.0
    %7035 = vmatpush.msra.mxu0 0.0
    %7036 = vmatpush.msra.mxu0 0.0
    %7037 = vmatpush.msra.mxu0 0.0
    %7038 = vmatpush.msra.mxu0 0.0
    %7039 = vmatpush.msra.mxu0 0.0
    %7040 = vmatpush.msra.mxu0 0.0
    %7041 = vmatpush.msra.mxu0 0.0
    %7042 = vmatpush.msra.mxu0 0.0
    %7043 = vmatpush.msra.mxu0 %v6445
    %7044 = vmatpush.msra.mxu0 %v6430
    %7045 = vmatmul.f32.gmra.mxu0 %v6495
    %v7046 = vpop.f32.mrf.mxu0
    %v7047 = vadd.f32 %v7024, %v7046
    %7048 = vmatmul.f32.gmra.mxu0 %v6498
    %v7049 = vpop.f32.mrf.mxu0
    %v7050 = vadd.f32 %v7027, %v7049
    %7051 = vdwg.mxu0
    %7052 = vmatpush.msra.mxu0 %v6318
    %7053 = vmatpush.msra.mxu0 %v6303
    %7054 = vmatpush.msra.mxu0 %v6190
    %7055 = vmatpush.msra.mxu0 %v6175
    %7056 = vmatpush.msra.mxu0 %v6062
    %7057 = vmatpush.msra.mxu0 %v6047
    %7058 = vmatpush.msra.mxu0 %v5423
    %7059 = vmatpush.msra.mxu0 %v5407
    %7060 = vmatpush.msra.mxu0 %v5933
    %7061 = vmatpush.msra.mxu0 %v5918
    %7062 = vmatpush.msra.mxu0 %v5805
    %7063 = vmatpush.msra.mxu0 %v5790
    %7064 = vmatpush.msra.mxu0 %v5677
    %7065 = vmatpush.msra.mxu0 %v5662
    %7066 = vmatpush.msra.mxu0 %v5549
    %7067 = vmatpush.msra.mxu0 %v5534
    %7068 = vmatmul.f32.gmra.mxu0 %v4144
    %v7069 = vpop.f32.mrf.mxu0
    %v7070 = vadd.f32 %v6486, %v7069
    %7071 = vmatmul.f32.gmra.mxu0 %v4146
    %v7072 = vpop.f32.mrf.mxu0
    %v7073 = vadd.f32 %v6491, %v7072
    %7074 = vdwg.mxu0
    %7075 = vmatpush.msra.mxu0 0.0
    %7076 = vmatpush.msra.mxu0 0.0
    %7077 = vmatpush.msra.mxu0 0.0
    %7078 = vmatpush.msra.mxu0 0.0
    %7079 = vmatpush.msra.mxu0 0.0
    %7080 = vmatpush.msra.mxu0 0.0
    %7081 = vmatpush.msra.mxu0 0.0
    %7082 = vmatpush.msra.mxu0 0.0
    %7083 = vmatpush.msra.mxu0 0.0
    %7084 = vmatpush.msra.mxu0 0.0
    %7085 = vmatpush.msra.mxu0 0.0
    %7086 = vmatpush.msra.mxu0 0.0
    %7087 = vmatpush.msra.mxu0 0.0
    %7088 = vmatpush.msra.mxu0 0.0
    %7089 = vmatpush.msra.mxu0 %v6446
    %7090 = vmatpush.msra.mxu0 %v6431
    %7091 = vmatmul.f32.gmra.mxu0 %v6495
    %v7092 = vpop.f32.mrf.mxu0
    %v7093 = vadd.f32 %v7070, %v7092
    %7094 = vmatmul.f32.gmra.mxu0 %v6498
    %v7095 = vpop.f32.mrf.mxu0
    %v7096 = vadd.f32 %v7073, %v7095
    %7097 = vdwg.mxu0
    %7098 = vmatpush.msra.mxu0 %v6319
    %7099 = vmatpush.msra.mxu0 %v6304
    %7100 = vmatpush.msra.mxu0 %v6191
    %7101 = vmatpush.msra.mxu0 %v6176
    %7102 = vmatpush.msra.mxu0 %v6063
    %7103 = vmatpush.msra.mxu0 %v6048
    %7104 = vmatpush.msra.mxu0 %v5424
    %7105 = vmatpush.msra.mxu0 %v5408
    %7106 = vmatpush.msra.mxu0 %v5934
    %7107 = vmatpush.msra.mxu0 %v5919
    %7108 = vmatpush.msra.mxu0 %v5806
    %7109 = vmatpush.msra.mxu0 %v5791
    %7110 = vmatpush.msra.mxu0 %v5678
    %7111 = vmatpush.msra.mxu0 %v5663
    %7112 = vmatpush.msra.mxu0 %v5550
    %7113 = vmatpush.msra.mxu0 %v5535
    %7114 = vmatmul.f32.gmra.mxu0 %v4144
    %v7115 = vpop.f32.mrf.mxu0
    %v7116 = vadd.f32 %v6486, %v7115
    %7117 = vmatmul.f32.gmra.mxu0 %v4146
    %v7118 = vpop.f32.mrf.mxu0
    %v7119 = vadd.f32 %v6491, %v7118
    %7120 = vdwg.mxu0
    %7121 = vmatpush.msra.mxu0 0.0
    %7122 = vmatpush.msra.mxu0 0.0
    %7123 = vmatpush.msra.mxu0 0.0
    %7124 = vmatpush.msra.mxu0 0.0
    %7125 = vmatpush.msra.mxu0 0.0
    %7126 = vmatpush.msra.mxu0 0.0
    %7127 = vmatpush.msra.mxu0 0.0
    %7128 = vmatpush.msra.mxu0 0.0
    %7129 = vmatpush.msra.mxu0 0.0
    %7130 = vmatpush.msra.mxu0 0.0
    %7131 = vmatpush.msra.mxu0 0.0
    %7132 = vmatpush.msra.mxu0 0.0
    %7133 = vmatpush.msra.mxu0 0.0
    %7134 = vmatpush.msra.mxu0 0.0
    %7135 = vmatpush.msra.mxu0 %v6447
    %7136 = vmatpush.msra.mxu0 %v6432
    %7137 = vmatmul.f32.gmra.mxu0 %v6495
    %v7138 = vpop.f32.mrf.mxu0
    %v7139 = vadd.f32 %v7116, %v7138
    %7140 = vmatmul.f32.gmra.mxu0 %v6498
    %v7141 = vpop.f32.mrf.mxu0
    %v7142 = vadd.f32 %v7119, %v7141
    %7143 = vdwg.mxu0
    %7144 = vmatpush.msra.mxu0 %v6320
    %7145 = vmatpush.msra.mxu0 %v6305
    %7146 = vmatpush.msra.mxu0 %v6192
    %7147 = vmatpush.msra.mxu0 %v6177
    %7148 = vmatpush.msra.mxu0 %v6064
    %7149 = vmatpush.msra.mxu0 %v6049
    %7150 = vmatpush.msra.mxu0 %v5425
    %7151 = vmatpush.msra.mxu0 %v5409
    %7152 = vmatpush.msra.mxu0 %v5935
    %7153 = vmatpush.msra.mxu0 %v5920
    %7154 = vmatpush.msra.mxu0 %v5807
    %7155 = vmatpush.msra.mxu0 %v5792
    %7156 = vmatpush.msra.mxu0 %v5679
    %7157 = vmatpush.msra.mxu0 %v5664
    %7158 = vmatpush.msra.mxu0 %v5551
    %7159 = vmatpush.msra.mxu0 %v5536
    %7160 = vmatmul.f32.gmra.mxu0 %v4144
    %v7161 = vpop.f32.mrf.mxu0
    %v7162 = vadd.f32 %v6486, %v7161
    %7163 = vmatmul.f32.gmra.mxu0 %v4146
    %v7164 = vpop.f32.mrf.mxu0
    %v7165 = vadd.f32 %v6491, %v7164
    %7166 = vdwg.mxu0
    %7167 = vmatpush.msra.mxu0 0.0
    %7168 = vmatpush.msra.mxu0 0.0
    %7169 = vmatpush.msra.mxu0 0.0
    %7170 = vmatpush.msra.mxu0 0.0
    %7171 = vmatpush.msra.mxu0 0.0
    %7172 = vmatpush.msra.mxu0 0.0
    %7173 = vmatpush.msra.mxu0 0.0
    %7174 = vmatpush.msra.mxu0 0.0
    %7175 = vmatpush.msra.mxu0 0.0
    %7176 = vmatpush.msra.mxu0 0.0
    %7177 = vmatpush.msra.mxu0 0.0
    %7178 = vmatpush.msra.mxu0 0.0
    %7179 = vmatpush.msra.mxu0 0.0
    %7180 = vmatpush.msra.mxu0 0.0
    %7181 = vmatpush.msra.mxu0 %v6448
    %7182 = vmatpush.msra.mxu0 %v6433
    %7183 = vmatmul.f32.gmra.mxu0 %v6495
    %v7184 = vpop.f32.mrf.mxu0
    %v7185 = vadd.f32 %v7162, %v7184
    %7186 = vmatmul.f32.gmra.mxu0 %v6498
    %v7187 = vpop.f32.mrf.mxu0
    %v7188 = vadd.f32 %v7165, %v7187
    %7189 = vdwg.mxu0
    %7190 = vmatpush.msra.mxu0 %v6354
    %7191 = vmatpush.msra.mxu0 %v6353
    %7192 = vmatpush.msra.mxu0 %v6226
    %7193 = vmatpush.msra.mxu0 %v6225
    %7194 = vmatpush.msra.mxu0 %v6098
    %7195 = vmatpush.msra.mxu0 %v6097
    %7196 = vmatpush.msra.mxu0 %v5426
    %7197 = vmatpush.msra.mxu0 %v5410
    %7198 = vmatpush.msra.mxu0 %v5936
    %7199 = vmatpush.msra.mxu0 %v5921
    %7200 = vmatpush.msra.mxu0 %v5808
    %7201 = vmatpush.msra.mxu0 %v5793
    %7202 = vmatpush.msra.mxu0 %v5680
    %7203 = vmatpush.msra.mxu0 %v5665
    %7204 = vmatpush.msra.mxu0 %v5552
    %7205 = vmatpush.msra.mxu0 %v5537
    %7206 = vmatmul.f32.gmra.mxu0 %v4144
    %v7207 = vpop.f32.mrf.mxu0
    %v7208 = vadd.f32 %v6486, %v7207
    %7209 = vmatmul.f32.gmra.mxu0 %v4146
    %v7210 = vpop.f32.mrf.mxu0
    %v7211 = vadd.f32 %v6491, %v7210
    %7212 = vdwg.mxu0
    %7213 = vmatpush.msra.mxu0 0.0
    %7214 = vmatpush.msra.mxu0 0.0
    %7215 = vmatpush.msra.mxu0 0.0
    %7216 = vmatpush.msra.mxu0 0.0
    %7217 = vmatpush.msra.mxu0 0.0
    %7218 = vmatpush.msra.mxu0 0.0
    %7219 = vmatpush.msra.mxu0 0.0
    %7220 = vmatpush.msra.mxu0 0.0
    %7221 = vmatpush.msra.mxu0 0.0
    %7222 = vmatpush.msra.mxu0 0.0
    %7223 = vmatpush.msra.mxu0 0.0
    %7224 = vmatpush.msra.mxu0 0.0
    %7225 = vmatpush.msra.mxu0 0.0
    %7226 = vmatpush.msra.mxu0 0.0
    %7227 = vmatpush.msra.mxu0 %v6482
    %7228 = vmatpush.msra.mxu0 %v6481
    %7229 = vmatmul.f32.gmra.mxu0 %v6495
    %v7230 = vpop.f32.mrf.mxu0
    %v7231 = vadd.f32 %v7208, %v7230
    %7232 = vmatmul.f32.gmra.mxu0 %v6498
    %v7233 = vpop.f32.mrf.mxu0
    %v7234 = vadd.f32 %v7211, %v7233
    %7235 = vdwg.mxu0
    %v7236 = vtanh.pop %v6541
    %v7237 = vtanh.pop %v6587
    %v7238 = vtanh.pop %v6633
    %v7239 = vtanh.pop %v6679
    %v7240 = vtanh.pop %v6725
    %v7241 = vtanh.pop %v6771
    %v7242 = vtanh.pop %v6817
    %v7243 = vtanh.pop %v6863
    %v7244 = vtanh.pop %v6909
    %v7245 = vtanh.pop %v6955
    %v7246 = vtanh.pop %v7001
    %v7247 = vtanh.pop %v7047
    %v7248 = vtanh.pop %v7093
    %v7249 = vtanh.pop %v7139
    %v7250 = vtanh.pop %v7185
    %v7251 = vtanh.pop %v7231
    %v7252 = vtanh.pop %v6544
    %v7253 = vtanh.pop %v6590
    %v7254 = vtanh.pop %v6636
    %v7255 = vtanh.pop %v6682
    %v7256 = vtanh.pop %v6728
    %v7257 = vtanh.pop %v6774
    %v7258 = vtanh.pop %v6820
    %v7259 = vtanh.pop %v6866
    %v7260 = vtanh.pop %v6912
    %v7261 = vtanh.pop %v6958
    %v7262 = vtanh.pop %v7004
    %v7263 = vtanh.pop %v7050
    %v7264 = vtanh.pop %v7096
    %v7265 = vtanh.pop %v7142
    %v7266 = vtanh.pop %v7188
    %v7267 = vtanh.pop %v7234
    %v7268 = vmul.f32 %v7236, %v5394
    %v7269 = vmul.f32 %v7237, %v4748
    %v7270 = vmul.f32 %v7238, %v5394
    %v7271 = vmul.f32 %v7239, %v4748
    %v7272 = vmul.f32 %v7240, %v5394
    %v7273 = vmul.f32 %v7241, %v4748
    %v7274 = vmul.f32 %v7242, %v5394
    %v7275 = vmul.f32 %v7243, %v4748
    %v7276 = vmul.f32 %v7244, %v5394
    %v7277 = vmul.f32 %v7245, %v4748
    %v7278 = vmul.f32 %v7246, %v5394
    %v7279 = vmul.f32 %v7247, %v4748
    %v7280 = vmul.f32 %v7248, %v5394
    %v7281 = vmul.f32 %v7249, %v4748
    %v7282 = vmul.f32 %v7250, %v5394
    %v7283 = vmul.f32 %v7251, %v4748
    %v7284 = vmul.f32 %v7252, %v5394
    %v7285 = vmul.f32 %v7253, %v4748
    %v7286 = vmul.f32 %v7254, %v5394
    %v7287 = vmul.f32 %v7255, %v4748
    %v7288 = vmul.f32 %v7256, %v5394
    %v7289 = vmul.f32 %v7257, %v4748
    %v7290 = vmul.f32 %v7258, %v5394
    %v7291 = vmul.f32 %v7259, %v4748
    %v7292 = vmul.f32 %v7260, %v5394
    %v7293 = vmul.f32 %v7261, %v4748
    %v7294 = vmul.f32 %v7262, %v5394
    %v7295 = vmul.f32 %v7263, %v4748
    %v7296 = vmul.f32 %v7264, %v5394
    %v7297 = vmul.f32 %v7265, %v4748
    %v7298 = vmul.f32 %v7266, %v5394
    %v7299 = vmul.f32 %v7267, %v4748
    %7330 = vrot.lane.b32.xlu0 %v7268, 4
    %v7331 = vpop.permute.xlu0 %7330
    %7332 = vrot.lane.b32.xlu0 %v7269, 4
    %v7333 = vpop.permute.xlu0 %7332
    %7334 = vrot.lane.b32.xlu0 %v7270, 4
    %v7335 = vpop.permute.xlu0 %7334
    %7336 = vrot.lane.b32.xlu0 %v7271, 4
    %v7337 = vpop.permute.xlu0 %7336
    %7338 = vrot.lane.b32.xlu0 %v7272, 4
    %v7339 = vpop.permute.xlu0 %7338
    %7340 = vrot.lane.b32.xlu0 %v7273, 4
    %v7341 = vpop.permute.xlu0 %7340
    %7342 = vrot.lane.b32.xlu0 %v7274, 4
    %v7343 = vpop.permute.xlu0 %7342
    %7344 = vrot.lane.b32.xlu0 %v7275, 4
    %v7345 = vpop.permute.xlu0 %7344
    %7346 = vrot.lane.b32.xlu0 %v7276, 4
    %v7347 = vpop.permute.xlu0 %7346
    %7348 = vrot.lane.b32.xlu0 %v7277, 4
    %v7349 = vpop.permute.xlu0 %7348
    %7350 = vrot.lane.b32.xlu0 %v7278, 4
    %v7351 = vpop.permute.xlu0 %7350
    %7352 = vrot.lane.b32.xlu0 %v7279, 4
    %v7353 = vpop.permute.xlu0 %7352
    %7354 = vrot.lane.b32.xlu0 %v7280, 4
    %v7355 = vpop.permute.xlu0 %7354
    %7356 = vrot.lane.b32.xlu0 %v7281, 4
    %v7357 = vpop.permute.xlu0 %7356
    %7358 = vrot.lane.b32.xlu0 %v7282, 4
    %v7359 = vpop.permute.xlu0 %7358
    %7360 = vrot.lane.b32.xlu0 %v7284, 4
    %v7361 = vpop.permute.xlu0 %7360
    %7362 = vrot.lane.b32.xlu0 %v7285, 4
    %v7363 = vpop.permute.xlu0 %7362
    %7364 = vrot.lane.b32.xlu0 %v7286, 4
    %v7365 = vpop.permute.xlu0 %7364
    %7366 = vrot.lane.b32.xlu0 %v7287, 4
    %v7367 = vpop.permute.xlu0 %7366
    %7368 = vrot.lane.b32.xlu0 %v7288, 4
    %v7369 = vpop.permute.xlu0 %7368
    %7370 = vrot.lane.b32.xlu0 %v7289, 4
    %v7371 = vpop.permute.xlu0 %7370
    %7372 = vrot.lane.b32.xlu0 %v7290, 4
    %v7373 = vpop.permute.xlu0 %7372
    %7374 = vrot.lane.b32.xlu0 %v7291, 4
    %v7375 = vpop.permute.xlu0 %7374
    %7376 = vrot.lane.b32.xlu0 %v7292, 4
    %v7377 = vpop.permute.xlu0 %7376
    %7378 = vrot.lane.b32.xlu0 %v7293, 4
    %v7379 = vpop.permute.xlu0 %7378
    %7380 = vrot.lane.b32.xlu0 %v7294, 4
    %v7381 = vpop.permute.xlu0 %7380
    %7382 = vrot.lane.b32.xlu0 %v7295, 4
    %v7383 = vpop.permute.xlu0 %7382
    %7384 = vrot.lane.b32.xlu0 %v7296, 4
    %v7385 = vpop.permute.xlu0 %7384
    %7386 = vrot.lane.b32.xlu0 %v7297, 4
    %v7387 = vpop.permute.xlu0 %7386
    %7388 = vrot.lane.b32.xlu0 %v7298, 4
    %v7389 = vpop.permute.xlu0 %7388
    %v7390 = vsel %vm4199, %v7333, %v7335
    %v7391 = vsel %vm4199, %v7337, %v7339
    %v7392 = vsel %vm4199, %v7341, %v7343
    %v7393 = vsel %vm4199, %v7345, %v7347
    %v7394 = vsel %vm4199, %v7349, %v7351
    %v7395 = vsel %vm4199, %v7353, %v7355
    %v7396 = vsel %vm4199, %v7357, %v7359
    %v7397 = vsel %vm4199, %v7363, %v7365
    %v7398 = vsel %vm4199, %v7367, %v7369
    %v7399 = vsel %vm4199, %v7371, %v7373
    %v7400 = vsel %vm4199, %v7375, %v7377
    %v7401 = vsel %vm4199, %v7379, %v7381
    %v7402 = vsel %vm4199, %v7383, %v7385
    %v7403 = vsel %vm4199, %v7387, %v7389
    %v7420 = vsel %vm4199, 0.0, %v7331
    %v7421 = vsel %vm4199, 0.0, %v7361
    %7423 = vset.pattern.permute.xlu0 0
    %7424 = vperm.xlu0 %7423, %v4150
    %v7425 = vpop.permute.xlu0 %7424
    %7428 = vset.pattern.permute.xlu0 0
    %7429 = vperm.xlu0 %7428, %v4151
    %v7430 = vpop.permute.xlu0 %7429
    %v7432 = vmul.f32 %v7425, %v7420
    %v7433 = vmul.f32 %v7425, %v7390
    %v7434 = vmul.f32 %v7425, %v7391
    %v7435 = vmul.f32 %v7425, %v7392
    %v7436 = vmul.f32 %v7425, %v7393
    %v7437 = vmul.f32 %v7425, %v7394
    %v7438 = vmul.f32 %v7425, %v7395
    %v7439 = vmul.f32 %v7425, %v7396
    %v7440 = vmul.f32 %v7430, %v7421
    %v7441 = vmul.f32 %v7430, %v7397
    %v7442 = vmul.f32 %v7430, %v7398
    %v7443 = vmul.f32 %v7430, %v7399
    %v7444 = vmul.f32 %v7430, %v7400
    %v7445 = vmul.f32 %v7430, %v7401
    %v7446 = vmul.f32 %v7430, %v7402
    %v7447 = vmul.f32 %v7430, %v7403
    %v7448 = vadd.f32 %v7432, 0.0
    %v7449 = vadd.f32 %v7433, 0.0
    %v7450 = vadd.f32 %v7434, 0.0
    %v7451 = vadd.f32 %v7435, 0.0
    %v7452 = vadd.f32 %v7436, 0.0
    %v7453 = vadd.f32 %v7437, 0.0
    %v7454 = vadd.f32 %v7438, 0.0
    %v7455 = vadd.f32 %v7439, 0.0
    %v7456 = vadd.f32 %v7440, 0.0
    %v7457 = vadd.f32 %v7441, 0.0
    %v7458 = vadd.f32 %v7442, 0.0
    %v7459 = vadd.f32 %v7443, 0.0
    %v7460 = vadd.f32 %v7444, 0.0
    %v7461 = vadd.f32 %v7445, 0.0
    %v7462 = vadd.f32 %v7446, 0.0
    %v7463 = vadd.f32 %v7447, 0.0
    %7464 = vrot.lane.b32.xlu0 %v7268, 3
    %v7465 = vpop.permute.xlu0 %7464
    %7466 = vrot.lane.b32.xlu0 %v7269, 3
    %v7467 = vpop.permute.xlu0 %7466
    %7468 = vrot.lane.b32.xlu0 %v7270, 3
    %v7469 = vpop.permute.xlu0 %7468
    %7470 = vrot.lane.b32.xlu0 %v7271, 3
    %v7471 = vpop.permute.xlu0 %7470
    %7472 = vrot.lane.b32.xlu0 %v7272, 3
    %v7473 = vpop.permute.xlu0 %7472
    %7474 = vrot.lane.b32.xlu0 %v7273, 3
    %v7475 = vpop.permute.xlu0 %7474
    %7476 = vrot.lane.b32.xlu0 %v7274, 3
    %v7477 = vpop.permute.xlu0 %7476
    %7478 = vrot.lane.b32.xlu0 %v7275, 3
    %v7479 = vpop.permute.xlu0 %7478
    %7480 = vrot.lane.b32.xlu0 %v7276, 3
    %v7481 = vpop.permute.xlu0 %7480
    %7482 = vrot.lane.b32.xlu0 %v7277, 3
    %v7483 = vpop.permute.xlu0 %7482
    %7484 = vrot.lane.b32.xlu0 %v7278, 3
    %v7485 = vpop.permute.xlu0 %7484
    %7486 = vrot.lane.b32.xlu0 %v7279, 3
    %v7487 = vpop.permute.xlu0 %7486
    %7488 = vrot.lane.b32.xlu0 %v7280, 3
    %v7489 = vpop.permute.xlu0 %7488
    %7490 = vrot.lane.b32.xlu0 %v7281, 3
    %v7491 = vpop.permute.xlu0 %7490
    %7492 = vrot.lane.b32.xlu0 %v7282, 3
    %v7493 = vpop.permute.xlu0 %7492
    %7494 = vrot.lane.b32.xlu0 %v7284, 3
    %v7495 = vpop.permute.xlu0 %7494
    %7496 = vrot.lane.b32.xlu0 %v7285, 3
    %v7497 = vpop.permute.xlu0 %7496
    %7498 = vrot.lane.b32.xlu0 %v7286, 3
    %v7499 = vpop.permute.xlu0 %7498
    %7500 = vrot.lane.b32.xlu0 %v7287, 3
    %v7501 = vpop.permute.xlu0 %7500
    %7502 = vrot.lane.b32.xlu0 %v7288, 3
    %v7503 = vpop.permute.xlu0 %7502
    %7504 = vrot.lane.b32.xlu0 %v7289, 3
    %v7505 = vpop.permute.xlu0 %7504
    %7506 = vrot.lane.b32.xlu0 %v7290, 3
    %v7507 = vpop.permute.xlu0 %7506
    %7508 = vrot.lane.b32.xlu0 %v7291, 3
    %v7509 = vpop.permute.xlu0 %7508
    %7510 = vrot.lane.b32.xlu0 %v7292, 3
    %v7511 = vpop.permute.xlu0 %7510
    %7512 = vrot.lane.b32.xlu0 %v7293, 3
    %v7513 = vpop.permute.xlu0 %7512
    %7514 = vrot.lane.b32.xlu0 %v7294, 3
    %v7515 = vpop.permute.xlu0 %7514
    %7516 = vrot.lane.b32.xlu0 %v7295, 3
    %v7517 = vpop.permute.xlu0 %7516
    %7518 = vrot.lane.b32.xlu0 %v7296, 3
    %v7519 = vpop.permute.xlu0 %7518
    %7520 = vrot.lane.b32.xlu0 %v7297, 3
    %v7521 = vpop.permute.xlu0 %7520
    %7522 = vrot.lane.b32.xlu0 %v7298, 3
    %v7523 = vpop.permute.xlu0 %7522
    %v7524 = vsel %vm4340, %v7467, %v7469
    %v7525 = vsel %vm4340, %v7471, %v7473
    %v7526 = vsel %vm4340, %v7475, %v7477
    %v7527 = vsel %vm4340, %v7479, %v7481
    %v7528 = vsel %vm4340, %v7483, %v7485
    %v7529 = vsel %vm4340, %v7487, %v7489
    %v7530 = vsel %vm4340, %v7491, %v7493
    %v7531 = vsel %vm4340, %v7497, %v7499
    %v7532 = vsel %vm4340, %v7501, %v7503
    %v7533 = vsel %vm4340, %v7505, %v7507
    %v7534 = vsel %vm4340, %v7509, %v7511
    %v7535 = vsel %vm4340, %v7513, %v7515
    %v7536 = vsel %vm4340, %v7517, %v7519
    %v7537 = vsel %vm4340, %v7521, %v7523
    %v7554 = vsel %vm4340, 0.0, %v7465
    %v7555 = vsel %vm4340, 0.0, %v7495
    %7556 = vset.pattern.permute.xlu0 1
    %7557 = vperm.xlu0 %7556, %v4150
    %v7558 = vpop.permute.xlu0 %7557
    %7560 = vset.pattern.permute.xlu0 1
    %7561 = vperm.xlu0 %7560, %v4151
    %v7562 = vpop.permute.xlu0 %7561
    %v7564 = vmul.f32 %v7558, %v7554
    %v7565 = vmul.f32 %v7558, %v7524
    %v7566 = vmul.f32 %v7558, %v7525
    %v7567 = vmul.f32 %v7558, %v7526
    %v7568 = vmul.f32 %v7558, %v7527
    %v7569 = vmul.f32 %v7558, %v7528
    %v7570 = vmul.f32 %v7558, %v7529
    %v7571 = vmul.f32 %v7558, %v7530
    %v7572 = vmul.f32 %v7562, %v7555
    %v7573 = vmul.f32 %v7562, %v7531
    %v7574 = vmul.f32 %v7562, %v7532
    %v7575 = vmul.f32 %v7562, %v7533
    %v7576 = vmul.f32 %v7562, %v7534
    %v7577 = vmul.f32 %v7562, %v7535
    %v7578 = vmul.f32 %v7562, %v7536
    %v7579 = vmul.f32 %v7562, %v7537
    %v7580 = vadd.f32 %v7448, %v7564
    %v7581 = vadd.f32 %v7449, %v7565
    %v7582 = vadd.f32 %v7450, %v7566
    %v7583 = vadd.f32 %v7451, %v7567
    %v7584 = vadd.f32 %v7452, %v7568
    %v7585 = vadd.f32 %v7453, %v7569
    %v7586 = vadd.f32 %v7454, %v7570
    %v7587 = vadd.f32 %v7455, %v7571
    %v7588 = vadd.f32 %v7456, %v7572
    %v7589 = vadd.f32 %v7457, %v7573
    %v7590 = vadd.f32 %v7458, %v7574
    %v7591 = vadd.f32 %v7459, %v7575
    %v7592 = vadd.f32 %v7460, %v7576
    %v7593 = vadd.f32 %v7461, %v7577
    %v7594 = vadd.f32 %v7462, %v7578
    %v7595 = vadd.f32 %v7463, %v7579
    %7596 = vrot.lane.b32.xlu0 %v7268, 2
    %v7597 = vpop.permute.xlu0 %7596
    %7598 = vrot.lane.b32.xlu0 %v7269, 2
    %v7599 = vpop.permute.xlu0 %7598
    %7600 = vrot.lane.b32.xlu0 %v7270, 2
    %v7601 = vpop.permute.xlu0 %7600
    %7602 = vrot.lane.b32.xlu0 %v7271, 2
    %v7603 = vpop.permute.xlu0 %7602
    %7604 = vrot.lane.b32.xlu0 %v7272, 2
    %v7605 = vpop.permute.xlu0 %7604
    %7606 = vrot.lane.b32.xlu0 %v7273, 2
    %v7607 = vpop.permute.xlu0 %7606
    %7608 = vrot.lane.b32.xlu0 %v7274, 2
    %v7609 = vpop.permute.xlu0 %7608
    %7610 = vrot.lane.b32.xlu0 %v7275, 2
    %v7611 = vpop.permute.xlu0 %7610
    %7612 = vrot.lane.b32.xlu0 %v7276, 2
    %v7613 = vpop.permute.xlu0 %7612
    %7614 = vrot.lane.b32.xlu0 %v7277, 2
    %v7615 = vpop.permute.xlu0 %7614
    %7616 = vrot.lane.b32.xlu0 %v7278, 2
    %v7617 = vpop.permute.xlu0 %7616
    %7618 = vrot.lane.b32.xlu0 %v7279, 2
    %v7619 = vpop.permute.xlu0 %7618
    %7620 = vrot.lane.b32.xlu0 %v7280, 2
    %v7621 = vpop.permute.xlu0 %7620
    %7622 = vrot.lane.b32.xlu0 %v7281, 2
    %v7623 = vpop.permute.xlu0 %7622
    %7624 = vrot.lane.b32.xlu0 %v7282, 2
    %v7625 = vpop.permute.xlu0 %7624
    %7626 = vrot.lane.b32.xlu0 %v7284, 2
    %v7627 = vpop.permute.xlu0 %7626
    %7628 = vrot.lane.b32.xlu0 %v7285, 2
    %v7629 = vpop.permute.xlu0 %7628
    %7630 = vrot.lane.b32.xlu0 %v7286, 2
    %v7631 = vpop.permute.xlu0 %7630
    %7632 = vrot.lane.b32.xlu0 %v7287, 2
    %v7633 = vpop.permute.xlu0 %7632
    %7634 = vrot.lane.b32.xlu0 %v7288, 2
    %v7635 = vpop.permute.xlu0 %7634
    %7636 = vrot.lane.b32.xlu0 %v7289, 2
    %v7637 = vpop.permute.xlu0 %7636
    %7638 = vrot.lane.b32.xlu0 %v7290, 2
    %v7639 = vpop.permute.xlu0 %7638
    %7640 = vrot.lane.b32.xlu0 %v7291, 2
    %v7641 = vpop.permute.xlu0 %7640
    %7642 = vrot.lane.b32.xlu0 %v7292, 2
    %v7643 = vpop.permute.xlu0 %7642
    %7644 = vrot.lane.b32.xlu0 %v7293, 2
    %v7645 = vpop.permute.xlu0 %7644
    %7646 = vrot.lane.b32.xlu0 %v7294, 2
    %v7647 = vpop.permute.xlu0 %7646
    %7648 = vrot.lane.b32.xlu0 %v7295, 2
    %v7649 = vpop.permute.xlu0 %7648
    %7650 = vrot.lane.b32.xlu0 %v7296, 2
    %v7651 = vpop.permute.xlu0 %7650
    %7652 = vrot.lane.b32.xlu0 %v7297, 2
    %v7653 = vpop.permute.xlu0 %7652
    %7654 = vrot.lane.b32.xlu0 %v7298, 2
    %v7655 = vpop.permute.xlu0 %7654
    %v7656 = vsel %vm4479, %v7599, %v7601
    %v7657 = vsel %vm4479, %v7603, %v7605
    %v7658 = vsel %vm4479, %v7607, %v7609
    %v7659 = vsel %vm4479, %v7611, %v7613
    %v7660 = vsel %vm4479, %v7615, %v7617
    %v7661 = vsel %vm4479, %v7619, %v7621
    %v7662 = vsel %vm4479, %v7623, %v7625
    %v7663 = vsel %vm4479, %v7629, %v7631
    %v7664 = vsel %vm4479, %v7633, %v7635
    %v7665 = vsel %vm4479, %v7637, %v7639
    %v7666 = vsel %vm4479, %v7641, %v7643
    %v7667 = vsel %vm4479, %v7645, %v7647
    %v7668 = vsel %vm4479, %v7649, %v7651
    %v7669 = vsel %vm4479, %v7653, %v7655
    %v7686 = vsel %vm4479, 0.0, %v7597
    %v7687 = vsel %vm4479, 0.0, %v7627
    %7688 = vset.pattern.permute.xlu0 2
    %7689 = vperm.xlu0 %7688, %v4150
    %v7690 = vpop.permute.xlu0 %7689
    %7692 = vset.pattern.permute.xlu0 2
    %7693 = vperm.xlu0 %7692, %v4151
    %v7694 = vpop.permute.xlu0 %7693
    %v7696 = vmul.f32 %v7690, %v7686
    %v7697 = vmul.f32 %v7690, %v7656
    %v7698 = vmul.f32 %v7690, %v7657
    %v7699 = vmul.f32 %v7690, %v7658
    %v7700 = vmul.f32 %v7690, %v7659
    %v7701 = vmul.f32 %v7690, %v7660
    %v7702 = vmul.f32 %v7690, %v7661
    %v7703 = vmul.f32 %v7690, %v7662
    %v7704 = vmul.f32 %v7694, %v7687
    %v7705 = vmul.f32 %v7694, %v7663
    %v7706 = vmul.f32 %v7694, %v7664
    %v7707 = vmul.f32 %v7694, %v7665
    %v7708 = vmul.f32 %v7694, %v7666
    %v7709 = vmul.f32 %v7694, %v7667
    %v7710 = vmul.f32 %v7694, %v7668
    %v7711 = vmul.f32 %v7694, %v7669
    %v7712 = vadd.f32 %v7580, %v7696
    %v7713 = vadd.f32 %v7581, %v7697
    %v7714 = vadd.f32 %v7582, %v7698
    %v7715 = vadd.f32 %v7583, %v7699
    %v7716 = vadd.f32 %v7584, %v7700
    %v7717 = vadd.f32 %v7585, %v7701
    %v7718 = vadd.f32 %v7586, %v7702
    %v7719 = vadd.f32 %v7587, %v7703
    %v7720 = vadd.f32 %v7588, %v7704
    %v7721 = vadd.f32 %v7589, %v7705
    %v7722 = vadd.f32 %v7590, %v7706
    %v7723 = vadd.f32 %v7591, %v7707
    %v7724 = vadd.f32 %v7592, %v7708
    %v7725 = vadd.f32 %v7593, %v7709
    %v7726 = vadd.f32 %v7594, %v7710
    %v7727 = vadd.f32 %v7595, %v7711
    %7728 = vrot.lane.b32.xlu0 %v7268, 1
    %v7729 = vpop.permute.xlu0 %7728
    %7730 = vrot.lane.b32.xlu0 %v7269, 1
    %v7731 = vpop.permute.xlu0 %7730
    %7732 = vrot.lane.b32.xlu0 %v7270, 1
    %v7733 = vpop.permute.xlu0 %7732
    %7734 = vrot.lane.b32.xlu0 %v7271, 1
    %v7735 = vpop.permute.xlu0 %7734
    %7736 = vrot.lane.b32.xlu0 %v7272, 1
    %v7737 = vpop.permute.xlu0 %7736
    %7738 = vrot.lane.b32.xlu0 %v7273, 1
    %v7739 = vpop.permute.xlu0 %7738
    %7740 = vrot.lane.b32.xlu0 %v7274, 1
    %v7741 = vpop.permute.xlu0 %7740
    %7742 = vrot.lane.b32.xlu0 %v7275, 1
    %v7743 = vpop.permute.xlu0 %7742
    %7744 = vrot.lane.b32.xlu0 %v7276, 1
    %v7745 = vpop.permute.xlu0 %7744
    %7746 = vrot.lane.b32.xlu0 %v7277, 1
    %v7747 = vpop.permute.xlu0 %7746
    %7748 = vrot.lane.b32.xlu0 %v7278, 1
    %v7749 = vpop.permute.xlu0 %7748
    %7750 = vrot.lane.b32.xlu0 %v7279, 1
    %v7751 = vpop.permute.xlu0 %7750
    %7752 = vrot.lane.b32.xlu0 %v7280, 1
    %v7753 = vpop.permute.xlu0 %7752
    %7754 = vrot.lane.b32.xlu0 %v7281, 1
    %v7755 = vpop.permute.xlu0 %7754
    %7756 = vrot.lane.b32.xlu0 %v7282, 1
    %v7757 = vpop.permute.xlu0 %7756
    %7758 = vrot.lane.b32.xlu0 %v7284, 1
    %v7759 = vpop.permute.xlu0 %7758
    %7760 = vrot.lane.b32.xlu0 %v7285, 1
    %v7761 = vpop.permute.xlu0 %7760
    %7762 = vrot.lane.b32.xlu0 %v7286, 1
    %v7763 = vpop.permute.xlu0 %7762
    %7764 = vrot.lane.b32.xlu0 %v7287, 1
    %v7765 = vpop.permute.xlu0 %7764
    %7766 = vrot.lane.b32.xlu0 %v7288, 1
    %v7767 = vpop.permute.xlu0 %7766
    %7768 = vrot.lane.b32.xlu0 %v7289, 1
    %v7769 = vpop.permute.xlu0 %7768
    %7770 = vrot.lane.b32.xlu0 %v7290, 1
    %v7771 = vpop.permute.xlu0 %7770
    %7772 = vrot.lane.b32.xlu0 %v7291, 1
    %v7773 = vpop.permute.xlu0 %7772
    %7774 = vrot.lane.b32.xlu0 %v7292, 1
    %v7775 = vpop.permute.xlu0 %7774
    %7776 = vrot.lane.b32.xlu0 %v7293, 1
    %v7777 = vpop.permute.xlu0 %7776
    %7778 = vrot.lane.b32.xlu0 %v7294, 1
    %v7779 = vpop.permute.xlu0 %7778
    %7780 = vrot.lane.b32.xlu0 %v7295, 1
    %v7781 = vpop.permute.xlu0 %7780
    %7782 = vrot.lane.b32.xlu0 %v7296, 1
    %v7783 = vpop.permute.xlu0 %7782
    %7784 = vrot.lane.b32.xlu0 %v7297, 1
    %v7785 = vpop.permute.xlu0 %7784
    %7786 = vrot.lane.b32.xlu0 %v7298, 1
    %v7787 = vpop.permute.xlu0 %7786
    %v7788 = vsel %vm4618, %v7731, %v7733
    %v7789 = vsel %vm4618, %v7735, %v7737
    %v7790 = vsel %vm4618, %v7739, %v7741
    %v7791 = vsel %vm4618, %v7743, %v7745
    %v7792 = vsel %vm4618, %v7747, %v7749
    %v7793 = vsel %vm4618, %v7751, %v7753
    %v7794 = vsel %vm4618, %v7755, %v7757
    %v7795 = vsel %vm4618, %v7761, %v7763
    %v7796 = vsel %vm4618, %v7765, %v7767
    %v7797 = vsel %vm4618, %v7769, %v7771
    %v7798 = vsel %vm4618, %v7773, %v7775
    %v7799 = vsel %vm4618, %v7777, %v7779
    %v7800 = vsel %vm4618, %v7781, %v7783
    %v7801 = vsel %vm4618, %v7785, %v7787
    %v7818 = vsel %vm4618, 0.0, %v7729
    %v7819 = vsel %vm4618, 0.0, %v7759
    %7820 = vset.pattern.permute.xlu0 3
    %7821 = vperm.xlu0 %7820, %v4150
    %v7822 = vpop.permute.xlu0 %7821
    %7824 = vset.pattern.permute.xlu0 3
    %7825 = vperm.xlu0 %7824, %v4151
    %v7826 = vpop.permute.xlu0 %7825
    %v7828 = vmul.f32 %v7822, %v7818
    %v7829 = vmul.f32 %v7822, %v7788
    %v7830 = vmul.f32 %v7822, %v7789
    %v7831 = vmul.f32 %v7822, %v7790
    %v7832 = vmul.f32 %v7822, %v7791
    %v7833 = vmul.f32 %v7822, %v7792
    %v7834 = vmul.f32 %v7822, %v7793
    %v7835 = vmul.f32 %v7822, %v7794
    %v7836 = vmul.f32 %v7826, %v7819
    %v7837 = vmul.f32 %v7826, %v7795
    %v7838 = vmul.f32 %v7826, %v7796
    %v7839 = vmul.f32 %v7826, %v7797
    %v7840 = vmul.f32 %v7826, %v7798
    %v7841 = vmul.f32 %v7826, %v7799
    %v7842 = vmul.f32 %v7826, %v7800
    %v7843 = vmul.f32 %v7826, %v7801
    %v7844 = vadd.f32 %v7712, %v7828
    %v7845 = vadd.f32 %v7713, %v7829
    %v7846 = vadd.f32 %v7714, %v7830
    %v7847 = vadd.f32 %v7715, %v7831
    %v7848 = vadd.f32 %v7716, %v7832
    %v7849 = vadd.f32 %v7717, %v7833
    %v7850 = vadd.f32 %v7718, %v7834
    %v7851 = vadd.f32 %v7719, %v7835
    %v7852 = vadd.f32 %v7720, %v7836
    %v7853 = vadd.f32 %v7721, %v7837
    %v7854 = vadd.f32 %v7722, %v7838
    %v7855 = vadd.f32 %v7723, %v7839
    %v7856 = vadd.f32 %v7724, %v7840
    %v7857 = vadd.f32 %v7725, %v7841
    %v7858 = vadd.f32 %v7726, %v7842
    %v7859 = vadd.f32 %v7727, %v7843
    %7860 = vset.pattern.permute.xlu0 4
    %7861 = vperm.xlu0 %7860, %v4150
    %v7862 = vpop.permute.xlu0 %7861
    %7864 = vset.pattern.permute.xlu0 4
    %7865 = vperm.xlu0 %7864, %v4151
    %v7866 = vpop.permute.xlu0 %7865
    %v7868 = vmul.f32 %v7862, %v7268
    %v7869 = vmul.f32 %v7862, %v7270
    %v7870 = vmul.f32 %v7862, %v7272
    %v7871 = vmul.f32 %v7862, %v7274
    %v7872 = vmul.f32 %v7862, %v7276
    %v7873 = vmul.f32 %v7862, %v7278
    %v7874 = vmul.f32 %v7862, %v7280
    %v7875 = vmul.f32 %v7862, %v7282
    %v7876 = vmul.f32 %v7866, %v7284
    %v7877 = vmul.f32 %v7866, %v7286
    %v7878 = vmul.f32 %v7866, %v7288
    %v7879 = vmul.f32 %v7866, %v7290
    %v7880 = vmul.f32 %v7866, %v7292
    %v7881 = vmul.f32 %v7866, %v7294
    %v7882 = vmul.f32 %v7866, %v7296
    %v7883 = vmul.f32 %v7866, %v7298
    %v7884 = vadd.f32 %v7844, %v7868
    %v7885 = vadd.f32 %v7845, %v7869
    %v7886 = vadd.f32 %v7846, %v7870
    %v7887 = vadd.f32 %v7847, %v7871
    %v7888 = vadd.f32 %v7848, %v7872
    %v7889 = vadd.f32 %v7849, %v7873
    %v7890 = vadd.f32 %v7850, %v7874
    %v7891 = vadd.f32 %v7851, %v7875
    %v7892 = vadd.f32 %v7852, %v7876
    %v7893 = vadd.f32 %v7853, %v7877
    %v7894 = vadd.f32 %v7854, %v7878
    %v7895 = vadd.f32 %v7855, %v7879
    %v7896 = vadd.f32 %v7856, %v7880
    %v7897 = vadd.f32 %v7857, %v7881
    %v7898 = vadd.f32 %v7858, %v7882
    %v7899 = vadd.f32 %v7859, %v7883
    %7902 = vrot.lane.b32.xlu0 %v7268, 127
    %v7903 = vpop.permute.xlu0 %7902
    %7904 = vrot.lane.b32.xlu0 %v7269, 127
    %v7905 = vpop.permute.xlu0 %7904
    %7906 = vrot.lane.b32.xlu0 %v7270, 127
    %v7907 = vpop.permute.xlu0 %7906
    %7908 = vrot.lane.b32.xlu0 %v7271, 127
    %v7909 = vpop.permute.xlu0 %7908
    %7910 = vrot.lane.b32.xlu0 %v7272, 127
    %v7911 = vpop.permute.xlu0 %7910
    %7912 = vrot.lane.b32.xlu0 %v7273, 127
    %v7913 = vpop.permute.xlu0 %7912
    %7914 = vrot.lane.b32.xlu0 %v7274, 127
    %v7915 = vpop.permute.xlu0 %7914
    %7916 = vrot.lane.b32.xlu0 %v7275, 127
    %v7917 = vpop.permute.xlu0 %7916
    %7918 = vrot.lane.b32.xlu0 %v7276, 127
    %v7919 = vpop.permute.xlu0 %7918
    %7920 = vrot.lane.b32.xlu0 %v7277, 127
    %v7921 = vpop.permute.xlu0 %7920
    %7922 = vrot.lane.b32.xlu0 %v7278, 127
    %v7923 = vpop.permute.xlu0 %7922
    %7924 = vrot.lane.b32.xlu0 %v7279, 127
    %v7925 = vpop.permute.xlu0 %7924
    %7926 = vrot.lane.b32.xlu0 %v7280, 127
    %v7927 = vpop.permute.xlu0 %7926
    %7928 = vrot.lane.b32.xlu0 %v7281, 127
    %v7929 = vpop.permute.xlu0 %7928
    %7930 = vrot.lane.b32.xlu0 %v7282, 127
    %v7931 = vpop.permute.xlu0 %7930
    %7932 = vrot.lane.b32.xlu0 %v7283, 127
    %v7933 = vpop.permute.xlu0 %7932
    %7934 = vrot.lane.b32.xlu0 %v7284, 127
    %v7935 = vpop.permute.xlu0 %7934
    %7936 = vrot.lane.b32.xlu0 %v7285, 127
    %v7937 = vpop.permute.xlu0 %7936
    %7938 = vrot.lane.b32.xlu0 %v7286, 127
    %v7939 = vpop.permute.xlu0 %7938
    %7940 = vrot.lane.b32.xlu0 %v7287, 127
    %v7941 = vpop.permute.xlu0 %7940
    %7942 = vrot.lane.b32.xlu0 %v7288, 127
    %v7943 = vpop.permute.xlu0 %7942
    %7944 = vrot.lane.b32.xlu0 %v7289, 127
    %v7945 = vpop.permute.xlu0 %7944
    %7946 = vrot.lane.b32.xlu0 %v7290, 127
    %v7947 = vpop.permute.xlu0 %7946
    %7948 = vrot.lane.b32.xlu0 %v7291, 127
    %v7949 = vpop.permute.xlu0 %7948
    %7950 = vrot.lane.b32.xlu0 %v7292, 127
    %v7951 = vpop.permute.xlu0 %7950
    %7952 = vrot.lane.b32.xlu0 %v7293, 127
    %v7953 = vpop.permute.xlu0 %7952
    %7954 = vrot.lane.b32.xlu0 %v7294, 127
    %v7955 = vpop.permute.xlu0 %7954
    %7956 = vrot.lane.b32.xlu0 %v7295, 127
    %v7957 = vpop.permute.xlu0 %7956
    %7958 = vrot.lane.b32.xlu0 %v7296, 127
    %v7959 = vpop.permute.xlu0 %7958
    %7960 = vrot.lane.b32.xlu0 %v7297, 127
    %v7961 = vpop.permute.xlu0 %7960
    %7962 = vrot.lane.b32.xlu0 %v7298, 127
    %v7963 = vpop.permute.xlu0 %7962
    %7964 = vrot.lane.b32.xlu0 %v7299, 127
    %v7965 = vpop.permute.xlu0 %7964
    %v7966 = vsel %vm4824, %v7903, %v7905
    %v7967 = vsel %vm4824, %v7907, %v7909
    %v7968 = vsel %vm4824, %v7911, %v7913
    %v7969 = vsel %vm4824, %v7915, %v7917
    %v7970 = vsel %vm4824, %v7919, %v7921
    %v7971 = vsel %vm4824, %v7923, %v7925
    %v7972 = vsel %vm4824, %v7927, %v7929
    %v7973 = vsel %vm4824, %v7931, %v7933
    %v7974 = vsel %vm4824, %v7935, %v7937
    %v7975 = vsel %vm4824, %v7939, %v7941
    %v7976 = vsel %vm4824, %v7943, %v7945
    %v7977 = vsel %vm4824, %v7947, %v7949
    %v7978 = vsel %vm4824, %v7951, %v7953
    %v7979 = vsel %vm4824, %v7955, %v7957
    %v7980 = vsel %vm4824, %v7959, %v7961
    %v7981 = vsel %vm4824, %v7963, %v7965
    %7998 = vset.pattern.permute.xlu0 5
    %7999 = vperm.xlu0 %7998, %v4150
    %v8000 = vpop.permute.xlu0 %7999
    %8002 = vset.pattern.permute.xlu0 5
    %8003 = vperm.xlu0 %8002, %v4151
    %v8004 = vpop.permute.xlu0 %8003
    %v8006 = vmul.f32 %v8000, %v7966
    %v8007 = vmul.f32 %v8000, %v7967
    %v8008 = vmul.f32 %v8000, %v7968
    %v8009 = vmul.f32 %v8000, %v7969
    %v8010 = vmul.f32 %v8000, %v7970
    %v8011 = vmul.f32 %v8000, %v7971
    %v8012 = vmul.f32 %v8000, %v7972
    %v8013 = vmul.f32 %v8000, %v7973
    %v8014 = vmul.f32 %v8004, %v7974
    %v8015 = vmul.f32 %v8004, %v7975
    %v8016 = vmul.f32 %v8004, %v7976
    %v8017 = vmul.f32 %v8004, %v7977
    %v8018 = vmul.f32 %v8004, %v7978
    %v8019 = vmul.f32 %v8004, %v7979
    %v8020 = vmul.f32 %v8004, %v7980
    %v8021 = vmul.f32 %v8004, %v7981
    %v8022 = vadd.f32 %v7884, %v8006
    %v8023 = vadd.f32 %v7885, %v8007
    %v8024 = vadd.f32 %v7886, %v8008
    %v8025 = vadd.f32 %v7887, %v8009
    %v8026 = vadd.f32 %v7888, %v8010
    %v8027 = vadd.f32 %v7889, %v8011
    %v8028 = vadd.f32 %v7890, %v8012
    %v8029 = vadd.f32 %v7891, %v8013
    %v8030 = vadd.f32 %v7892, %v8014
    %v8031 = vadd.f32 %v7893, %v8015
    %v8032 = vadd.f32 %v7894, %v8016
    %v8033 = vadd.f32 %v7895, %v8017
    %v8034 = vadd.f32 %v7896, %v8018
    %v8035 = vadd.f32 %v7897, %v8019
    %v8036 = vadd.f32 %v7898, %v8020
    %v8037 = vadd.f32 %v7899, %v8021
    %8038 = vrot.lane.b32.xlu0 %v7268, 126
    %v8039 = vpop.permute.xlu0 %8038
    %8040 = vrot.lane.b32.xlu0 %v7269, 126
    %v8041 = vpop.permute.xlu0 %8040
    %8042 = vrot.lane.b32.xlu0 %v7270, 126
    %v8043 = vpop.permute.xlu0 %8042
    %8044 = vrot.lane.b32.xlu0 %v7271, 126
    %v8045 = vpop.permute.xlu0 %8044
    %8046 = vrot.lane.b32.xlu0 %v7272, 126
    %v8047 = vpop.permute.xlu0 %8046
    %8048 = vrot.lane.b32.xlu0 %v7273, 126
    %v8049 = vpop.permute.xlu0 %8048
    %8050 = vrot.lane.b32.xlu0 %v7274, 126
    %v8051 = vpop.permute.xlu0 %8050
    %8052 = vrot.lane.b32.xlu0 %v7275, 126
    %v8053 = vpop.permute.xlu0 %8052
    %8054 = vrot.lane.b32.xlu0 %v7276, 126
    %v8055 = vpop.permute.xlu0 %8054
    %8056 = vrot.lane.b32.xlu0 %v7277, 126
    %v8057 = vpop.permute.xlu0 %8056
    %8058 = vrot.lane.b32.xlu0 %v7278, 126
    %v8059 = vpop.permute.xlu0 %8058
    %8060 = vrot.lane.b32.xlu0 %v7279, 126
    %v8061 = vpop.permute.xlu0 %8060
    %8062 = vrot.lane.b32.xlu0 %v7280, 126
    %v8063 = vpop.permute.xlu0 %8062
    %8064 = vrot.lane.b32.xlu0 %v7281, 126
    %v8065 = vpop.permute.xlu0 %8064
    %8066 = vrot.lane.b32.xlu0 %v7282, 126
    %v8067 = vpop.permute.xlu0 %8066
    %8068 = vrot.lane.b32.xlu0 %v7283, 126
    %v8069 = vpop.permute.xlu0 %8068
    %8070 = vrot.lane.b32.xlu0 %v7284, 126
    %v8071 = vpop.permute.xlu0 %8070
    %8072 = vrot.lane.b32.xlu0 %v7285, 126
    %v8073 = vpop.permute.xlu0 %8072
    %8074 = vrot.lane.b32.xlu0 %v7286, 126
    %v8075 = vpop.permute.xlu0 %8074
    %8076 = vrot.lane.b32.xlu0 %v7287, 126
    %v8077 = vpop.permute.xlu0 %8076
    %8078 = vrot.lane.b32.xlu0 %v7288, 126
    %v8079 = vpop.permute.xlu0 %8078
    %8080 = vrot.lane.b32.xlu0 %v7289, 126
    %v8081 = vpop.permute.xlu0 %8080
    %8082 = vrot.lane.b32.xlu0 %v7290, 126
    %v8083 = vpop.permute.xlu0 %8082
    %8084 = vrot.lane.b32.xlu0 %v7291, 126
    %v8085 = vpop.permute.xlu0 %8084
    %8086 = vrot.lane.b32.xlu0 %v7292, 126
    %v8087 = vpop.permute.xlu0 %8086
    %8088 = vrot.lane.b32.xlu0 %v7293, 126
    %v8089 = vpop.permute.xlu0 %8088
    %8090 = vrot.lane.b32.xlu0 %v7294, 126
    %v8091 = vpop.permute.xlu0 %8090
    %8092 = vrot.lane.b32.xlu0 %v7295, 126
    %v8093 = vpop.permute.xlu0 %8092
    %8094 = vrot.lane.b32.xlu0 %v7296, 126
    %v8095 = vpop.permute.xlu0 %8094
    %8096 = vrot.lane.b32.xlu0 %v7297, 126
    %v8097 = vpop.permute.xlu0 %8096
    %8098 = vrot.lane.b32.xlu0 %v7298, 126
    %v8099 = vpop.permute.xlu0 %8098
    %8100 = vrot.lane.b32.xlu0 %v7299, 126
    %v8101 = vpop.permute.xlu0 %8100
    %v8102 = vsel %vm4963, %v8039, %v8041
    %v8103 = vsel %vm4963, %v8043, %v8045
    %v8104 = vsel %vm4963, %v8047, %v8049
    %v8105 = vsel %vm4963, %v8051, %v8053
    %v8106 = vsel %vm4963, %v8055, %v8057
    %v8107 = vsel %vm4963, %v8059, %v8061
    %v8108 = vsel %vm4963, %v8063, %v8065
    %v8109 = vsel %vm4963, %v8067, %v8069
    %v8110 = vsel %vm4963, %v8071, %v8073
    %v8111 = vsel %vm4963, %v8075, %v8077
    %v8112 = vsel %vm4963, %v8079, %v8081
    %v8113 = vsel %vm4963, %v8083, %v8085
    %v8114 = vsel %vm4963, %v8087, %v8089
    %v8115 = vsel %vm4963, %v8091, %v8093
    %v8116 = vsel %vm4963, %v8095, %v8097
    %v8117 = vsel %vm4963, %v8099, %v8101
    %8134 = vset.pattern.permute.xlu0 6
    %8135 = vperm.xlu0 %8134, %v4150
    %v8136 = vpop.permute.xlu0 %8135
    %8138 = vset.pattern.permute.xlu0 6
    %8139 = vperm.xlu0 %8138, %v4151
    %v8140 = vpop.permute.xlu0 %8139
    %v8142 = vmul.f32 %v8136, %v8102
    %v8143 = vmul.f32 %v8136, %v8103
    %v8144 = vmul.f32 %v8136, %v8104
    %v8145 = vmul.f32 %v8136, %v8105
    %v8146 = vmul.f32 %v8136, %v8106
    %v8147 = vmul.f32 %v8136, %v8107
    %v8148 = vmul.f32 %v8136, %v8108
    %v8149 = vmul.f32 %v8136, %v8109
    %v8150 = vmul.f32 %v8140, %v8110
    %v8151 = vmul.f32 %v8140, %v8111
    %v8152 = vmul.f32 %v8140, %v8112
    %v8153 = vmul.f32 %v8140, %v8113
    %v8154 = vmul.f32 %v8140, %v8114
    %v8155 = vmul.f32 %v8140, %v8115
    %v8156 = vmul.f32 %v8140, %v8116
    %v8157 = vmul.f32 %v8140, %v8117
    %v8158 = vadd.f32 %v8022, %v8142
    %v8159 = vadd.f32 %v8023, %v8143
    %v8160 = vadd.f32 %v8024, %v8144
    %v8161 = vadd.f32 %v8025, %v8145
    %v8162 = vadd.f32 %v8026, %v8146
    %v8163 = vadd.f32 %v8027, %v8147
    %v8164 = vadd.f32 %v8028, %v8148
    %v8165 = vadd.f32 %v8029, %v8149
    %v8166 = vadd.f32 %v8030, %v8150
    %v8167 = vadd.f32 %v8031, %v8151
    %v8168 = vadd.f32 %v8032, %v8152
    %v8169 = vadd.f32 %v8033, %v8153
    %v8170 = vadd.f32 %v8034, %v8154
    %v8171 = vadd.f32 %v8035, %v8155
    %v8172 = vadd.f32 %v8036, %v8156
    %v8173 = vadd.f32 %v8037, %v8157
    %8174 = vrot.lane.b32.xlu0 %v7268, 125
    %v8175 = vpop.permute.xlu0 %8174
    %8176 = vrot.lane.b32.xlu0 %v7269, 125
    %v8177 = vpop.permute.xlu0 %8176
    %8178 = vrot.lane.b32.xlu0 %v7270, 125
    %v8179 = vpop.permute.xlu0 %8178
    %8180 = vrot.lane.b32.xlu0 %v7271, 125
    %v8181 = vpop.permute.xlu0 %8180
    %8182 = vrot.lane.b32.xlu0 %v7272, 125
    %v8183 = vpop.permute.xlu0 %8182
    %8184 = vrot.lane.b32.xlu0 %v7273, 125
    %v8185 = vpop.permute.xlu0 %8184
    %8186 = vrot.lane.b32.xlu0 %v7274, 125
    %v8187 = vpop.permute.xlu0 %8186
    %8188 = vrot.lane.b32.xlu0 %v7275, 125
    %v8189 = vpop.permute.xlu0 %8188
    %8190 = vrot.lane.b32.xlu0 %v7276, 125
    %v8191 = vpop.permute.xlu0 %8190
    %8192 = vrot.lane.b32.xlu0 %v7277, 125
    %v8193 = vpop.permute.xlu0 %8192
    %8194 = vrot.lane.b32.xlu0 %v7278, 125
    %v8195 = vpop.permute.xlu0 %8194
    %8196 = vrot.lane.b32.xlu0 %v7279, 125
    %v8197 = vpop.permute.xlu0 %8196
    %8198 = vrot.lane.b32.xlu0 %v7280, 125
    %v8199 = vpop.permute.xlu0 %8198
    %8200 = vrot.lane.b32.xlu0 %v7281, 125
    %v8201 = vpop.permute.xlu0 %8200
    %8202 = vrot.lane.b32.xlu0 %v7282, 125
    %v8203 = vpop.permute.xlu0 %8202
    %8204 = vrot.lane.b32.xlu0 %v7283, 125
    %v8205 = vpop.permute.xlu0 %8204
    %8206 = vrot.lane.b32.xlu0 %v7284, 125
    %v8207 = vpop.permute.xlu0 %8206
    %8208 = vrot.lane.b32.xlu0 %v7285, 125
    %v8209 = vpop.permute.xlu0 %8208
    %8210 = vrot.lane.b32.xlu0 %v7286, 125
    %v8211 = vpop.permute.xlu0 %8210
    %8212 = vrot.lane.b32.xlu0 %v7287, 125
    %v8213 = vpop.permute.xlu0 %8212
    %8214 = vrot.lane.b32.xlu0 %v7288, 125
    %v8215 = vpop.permute.xlu0 %8214
    %8216 = vrot.lane.b32.xlu0 %v7289, 125
    %v8217 = vpop.permute.xlu0 %8216
    %8218 = vrot.lane.b32.xlu0 %v7290, 125
    %v8219 = vpop.permute.xlu0 %8218
    %8220 = vrot.lane.b32.xlu0 %v7291, 125
    %v8221 = vpop.permute.xlu0 %8220
    %8222 = vrot.lane.b32.xlu0 %v7292, 125
    %v8223 = vpop.permute.xlu0 %8222
    %8224 = vrot.lane.b32.xlu0 %v7293, 125
    %v8225 = vpop.permute.xlu0 %8224
    %8226 = vrot.lane.b32.xlu0 %v7294, 125
    %v8227 = vpop.permute.xlu0 %8226
    %8228 = vrot.lane.b32.xlu0 %v7295, 125
    %v8229 = vpop.permute.xlu0 %8228
    %8230 = vrot.lane.b32.xlu0 %v7296, 125
    %v8231 = vpop.permute.xlu0 %8230
    %8232 = vrot.lane.b32.xlu0 %v7297, 125
    %v8233 = vpop.permute.xlu0 %8232
    %8234 = vrot.lane.b32.xlu0 %v7298, 125
    %v8235 = vpop.permute.xlu0 %8234
    %8236 = vrot.lane.b32.xlu0 %v7299, 125
    %v8237 = vpop.permute.xlu0 %8236
    %v8238 = vsel %vm5102, %v8175, %v8177
    %v8239 = vsel %vm5102, %v8179, %v8181
    %v8240 = vsel %vm5102, %v8183, %v8185
    %v8241 = vsel %vm5102, %v8187, %v8189
    %v8242 = vsel %vm5102, %v8191, %v8193
    %v8243 = vsel %vm5102, %v8195, %v8197
    %v8244 = vsel %vm5102, %v8199, %v8201
    %v8245 = vsel %vm5102, %v8203, %v8205
    %v8246 = vsel %vm5102, %v8207, %v8209
    %v8247 = vsel %vm5102, %v8211, %v8213
    %v8248 = vsel %vm5102, %v8215, %v8217
    %v8249 = vsel %vm5102, %v8219, %v8221
    %v8250 = vsel %vm5102, %v8223, %v8225
    %v8251 = vsel %vm5102, %v8227, %v8229
    %v8252 = vsel %vm5102, %v8231, %v8233
    %v8253 = vsel %vm5102, %v8235, %v8237
    %8270 = vset.pattern.permute.xlu0 7
    %8271 = vperm.xlu0 %8270, %v4150
    %v8272 = vpop.permute.xlu0 %8271
    %8274 = vset.pattern.permute.xlu0 7
    %8275 = vperm.xlu0 %8274, %v4151
    %v8276 = vpop.permute.xlu0 %8275
    %v8278 = vmul.f32 %v8272, %v8238
    %v8279 = vmul.f32 %v8272, %v8239
    %v8280 = vmul.f32 %v8272, %v8240
    %v8281 = vmul.f32 %v8272, %v8241
    %v8282 = vmul.f32 %v8272, %v8242
    %v8283 = vmul.f32 %v8272, %v8243
    %v8284 = vmul.f32 %v8272, %v8244
    %v8285 = vmul.f32 %v8272, %v8245
    %v8286 = vmul.f32 %v8276, %v8246
    %v8287 = vmul.f32 %v8276, %v8247
    %v8288 = vmul.f32 %v8276, %v8248
    %v8289 = vmul.f32 %v8276, %v8249
    %v8290 = vmul.f32 %v8276, %v8250
    %v8291 = vmul.f32 %v8276, %v8251
    %v8292 = vmul.f32 %v8276, %v8252
    %v8293 = vmul.f32 %v8276, %v8253
    %v8294 = vadd.f32 %v8158, %v8278
    %v8295 = vadd.f32 %v8159, %v8279
    %v8296 = vadd.f32 %v8160, %v8280
    %v8297 = vadd.f32 %v8161, %v8281
    %v8298 = vadd.f32 %v8162, %v8282
    %v8299 = vadd.f32 %v8163, %v8283
    %v8300 = vadd.f32 %v8164, %v8284
    %v8301 = vadd.f32 %v8165, %v8285
    %v8302 = vadd.f32 %v8166, %v8286
    %v8303 = vadd.f32 %v8167, %v8287
    %v8304 = vadd.f32 %v8168, %v8288
    %v8305 = vadd.f32 %v8169, %v8289
    %v8306 = vadd.f32 %v8170, %v8290
    %v8307 = vadd.f32 %v8171, %v8291
    %v8308 = vadd.f32 %v8172, %v8292
    %v8309 = vadd.f32 %v8173, %v8293
    %8310 = vrot.lane.b32.xlu0 %v7268, 124
    %v8311 = vpop.permute.xlu0 %8310
    %8312 = vrot.lane.b32.xlu0 %v7269, 124
    %v8313 = vpop.permute.xlu0 %8312
    %8314 = vrot.lane.b32.xlu0 %v7270, 124
    %v8315 = vpop.permute.xlu0 %8314
    %8316 = vrot.lane.b32.xlu0 %v7271, 124
    %v8317 = vpop.permute.xlu0 %8316
    %8318 = vrot.lane.b32.xlu0 %v7272, 124
    %v8319 = vpop.permute.xlu0 %8318
    %8320 = vrot.lane.b32.xlu0 %v7273, 124
    %v8321 = vpop.permute.xlu0 %8320
    %8322 = vrot.lane.b32.xlu0 %v7274, 124
    %v8323 = vpop.permute.xlu0 %8322
    %8324 = vrot.lane.b32.xlu0 %v7275, 124
    %v8325 = vpop.permute.xlu0 %8324
    %8326 = vrot.lane.b32.xlu0 %v7276, 124
    %v8327 = vpop.permute.xlu0 %8326
    %8328 = vrot.lane.b32.xlu0 %v7277, 124
    %v8329 = vpop.permute.xlu0 %8328
    %8330 = vrot.lane.b32.xlu0 %v7278, 124
    %v8331 = vpop.permute.xlu0 %8330
    %8332 = vrot.lane.b32.xlu0 %v7279, 124
    %v8333 = vpop.permute.xlu0 %8332
    %8334 = vrot.lane.b32.xlu0 %v7280, 124
    %v8335 = vpop.permute.xlu0 %8334
    %8336 = vrot.lane.b32.xlu0 %v7281, 124
    %v8337 = vpop.permute.xlu0 %8336
    %8338 = vrot.lane.b32.xlu0 %v7282, 124
    %v8339 = vpop.permute.xlu0 %8338
    %8340 = vrot.lane.b32.xlu0 %v7283, 124
    %v8341 = vpop.permute.xlu0 %8340
    %8342 = vrot.lane.b32.xlu0 %v7284, 124
    %v8343 = vpop.permute.xlu0 %8342
    %8344 = vrot.lane.b32.xlu0 %v7285, 124
    %v8345 = vpop.permute.xlu0 %8344
    %8346 = vrot.lane.b32.xlu0 %v7286, 124
    %v8347 = vpop.permute.xlu0 %8346
    %8348 = vrot.lane.b32.xlu0 %v7287, 124
    %v8349 = vpop.permute.xlu0 %8348
    %8350 = vrot.lane.b32.xlu0 %v7288, 124
    %v8351 = vpop.permute.xlu0 %8350
    %8352 = vrot.lane.b32.xlu0 %v7289, 124
    %v8353 = vpop.permute.xlu0 %8352
    %8354 = vrot.lane.b32.xlu0 %v7290, 124
    %v8355 = vpop.permute.xlu0 %8354
    %8356 = vrot.lane.b32.xlu0 %v7291, 124
    %v8357 = vpop.permute.xlu0 %8356
    %8358 = vrot.lane.b32.xlu0 %v7292, 124
    %v8359 = vpop.permute.xlu0 %8358
    %8360 = vrot.lane.b32.xlu0 %v7293, 124
    %v8361 = vpop.permute.xlu0 %8360
    %8362 = vrot.lane.b32.xlu0 %v7294, 124
    %v8363 = vpop.permute.xlu0 %8362
    %8364 = vrot.lane.b32.xlu0 %v7295, 124
    %v8365 = vpop.permute.xlu0 %8364
    %8366 = vrot.lane.b32.xlu0 %v7296, 124
    %v8367 = vpop.permute.xlu0 %8366
    %8368 = vrot.lane.b32.xlu0 %v7297, 124
    %v8369 = vpop.permute.xlu0 %8368
    %8370 = vrot.lane.b32.xlu0 %v7298, 124
    %v8371 = vpop.permute.xlu0 %8370
    %8372 = vrot.lane.b32.xlu0 %v7299, 124
    %v8373 = vpop.permute.xlu0 %8372
    %v8374 = vsel %vm5241, %v8311, %v8313
    %v8375 = vsel %vm5241, %v8315, %v8317
    %v8376 = vsel %vm5241, %v8319, %v8321
    %v8377 = vsel %vm5241, %v8323, %v8325
    %v8378 = vsel %vm5241, %v8327, %v8329
    %v8379 = vsel %vm5241, %v8331, %v8333
    %v8380 = vsel %vm5241, %v8335, %v8337
    %v8381 = vsel %vm5241, %v8339, %v8341
    %v8382 = vsel %vm5241, %v8343, %v8345
    %v8383 = vsel %vm5241, %v8347, %v8349
    %v8384 = vsel %vm5241, %v8351, %v8353
    %v8385 = vsel %vm5241, %v8355, %v8357
    %v8386 = vsel %vm5241, %v8359, %v8361
    %v8387 = vsel %vm5241, %v8363, %v8365
    %v8388 = vsel %vm5241, %v8367, %v8369
    %v8389 = vsel %vm5241, %v8371, %v8373
    %8406 = vset.pattern.permute.xlu0 8
    %8407 = vperm.xlu0 %8406, %v4150
    %v8408 = vpop.permute.xlu0 %8407
    %8410 = vset.pattern.permute.xlu0 8
    %8411 = vperm.xlu0 %8410, %v4151
    %v8412 = vpop.permute.xlu0 %8411
    %v8414 = vmul.f32 %v8408, %v8374
    %v8415 = vmul.f32 %v8408, %v8375
    %v8416 = vmul.f32 %v8408, %v8376
    %v8417 = vmul.f32 %v8408, %v8377
    %v8418 = vmul.f32 %v8408, %v8378
    %v8419 = vmul.f32 %v8408, %v8379
    %v8420 = vmul.f32 %v8408, %v8380
    %v8421 = vmul.f32 %v8408, %v8381
    %v8422 = vmul.f32 %v8412, %v8382
    %v8423 = vmul.f32 %v8412, %v8383
    %v8424 = vmul.f32 %v8412, %v8384
    %v8425 = vmul.f32 %v8412, %v8385
    %v8426 = vmul.f32 %v8412, %v8386
    %v8427 = vmul.f32 %v8412, %v8387
    %v8428 = vmul.f32 %v8412, %v8388
    %v8429 = vmul.f32 %v8412, %v8389
    %v8430 = vadd.f32 %v8294, %v8414
    %v8431 = vadd.f32 %v8295, %v8415
    %v8432 = vadd.f32 %v8296, %v8416
    %v8433 = vadd.f32 %v8297, %v8417
    %v8434 = vadd.f32 %v8298, %v8418
    %v8435 = vadd.f32 %v8299, %v8419
    %v8436 = vadd.f32 %v8300, %v8420
    %v8437 = vadd.f32 %v8301, %v8421
    %v8438 = vadd.f32 %v8302, %v8422
    %v8439 = vadd.f32 %v8303, %v8423
    %v8440 = vadd.f32 %v8304, %v8424
    %v8441 = vadd.f32 %v8305, %v8425
    %v8442 = vadd.f32 %v8306, %v8426
    %v8443 = vadd.f32 %v8307, %v8427
    %v8444 = vadd.f32 %v8308, %v8428
    %v8445 = vadd.f32 %v8309, %v8429
    %v8446 = vadd.f32 %v8430, %v8438
    %v8447 = vrot.slane %v8446, 4
    %v8448 = vadd.f32 %v8446, %v8447
    %v8449 = vrot.slane %v8448, 2
    %v8450 = vadd.f32 %v8448, %v8449
    %v8451 = vrot.slane %v8450, 1
    %v8452 = vadd.f32 %v8450, %v8451
    %v8453 = vadd.f32 %v8431, %v8439
    %v8454 = vrot.slane %v8453, 4
    %v8455 = vadd.f32 %v8453, %v8454
    %v8456 = vrot.slane %v8455, 2
    %v8457 = vadd.f32 %v8455, %v8456
    %v8458 = vrot.slane %v8457, 1
    %v8459 = vadd.f32 %v8457, %v8458
    %v8460 = vadd.f32 %v8432, %v8440
    %v8461 = vrot.slane %v8460, 4
    %v8462 = vadd.f32 %v8460, %v8461
    %v8463 = vrot.slane %v8462, 2
    %v8464 = vadd.f32 %v8462, %v8463
    %v8465 = vrot.slane %v8464, 1
    %v8466 = vadd.f32 %v8464, %v8465
    %v8467 = vadd.f32 %v8433, %v8441
    %v8468 = vrot.slane %v8467, 4
    %v8469 = vadd.f32 %v8467, %v8468
    %v8470 = vrot.slane %v8469, 2
    %v8471 = vadd.f32 %v8469, %v8470
    %v8472 = vrot.slane %v8471, 1
    %v8473 = vadd.f32 %v8471, %v8472
    %v8474 = vadd.f32 %v8434, %v8442
    %v8475 = vrot.slane %v8474, 4
    %v8476 = vadd.f32 %v8474, %v8475
    %v8477 = vrot.slane %v8476, 2
    %v8478 = vadd.f32 %v8476, %v8477
    %v8479 = vrot.slane %v8478, 1
    %v8480 = vadd.f32 %v8478, %v8479
    %v8481 = vadd.f32 %v8435, %v8443
    %v8482 = vrot.slane %v8481, 4
    %v8483 = vadd.f32 %v8481, %v8482
    %v8484 = vrot.slane %v8483, 2
    %v8485 = vadd.f32 %v8483, %v8484
    %v8486 = vrot.slane %v8485, 1
    %v8487 = vadd.f32 %v8485, %v8486
    %v8488 = vadd.f32 %v8436, %v8444
    %v8489 = vrot.slane %v8488, 4
    %v8490 = vadd.f32 %v8488, %v8489
    %v8491 = vrot.slane %v8490, 2
    %v8492 = vadd.f32 %v8490, %v8491
    %v8493 = vrot.slane %v8492, 1
    %v8494 = vadd.f32 %v8492, %v8493
    %v8495 = vadd.f32 %v8437, %v8445
    %v8496 = vrot.slane %v8495, 4
    %v8497 = vadd.f32 %v8495, %v8496
    %v8498 = vrot.slane %v8497, 2
    %v8499 = vadd.f32 %v8497, %v8498
    %v8500 = vrot.slane %v8499, 1
    %v8501 = vadd.f32 %v8499, %v8500
    %8503 = vset.pattern.permute.xlu0 0
    %8504 = vperm.xlu0 %8503, %v4152
    %v8505 = vpop.permute.xlu0 %8504
    %v8507 = vperm.slane %v8505, 0
    %v8508 = vadd.f32 %v8452, %v8507
    %v8509 = vadd.f32 %v8459, %v8507
    %v8510 = vadd.f32 %v8466, %v8507
    %v8511 = vadd.f32 %v8473, %v8507
    %v8512 = vadd.f32 %v8480, %v8507
    %v8513 = vadd.f32 %v8487, %v8507
    %v8514 = vadd.f32 %v8494, %v8507
    %v8515 = vadd.f32 %v8501, %v8507
    %vm8516 = vcmask 1040384
    %v8517 = vsel %vm8516, %v8508, %v8509
    %vm8518 = vcmask 1041408
    %v8519 = vsel %vm8518, %v8517, %v8510
    %vm8520 = vcmask 1042432
    %v8521 = vsel %vm8520, %v8519, %v8511
    %v8522 = vsel %vm308, %v8521, %v8512
    %vm8523 = vcmask 1044480
    %v8524 = vsel %vm8523, %v8522, %v8513
    %vm8525 = vcmask 1045504
    %v8526 = vsel %vm8525, %v8524, %v8514
    %vm8527 = vcmask 1046528
    %v8528 = vsel %vm8527, %v8526, %v8515
    %8529 = vst [vmem:[#allocation27] sm:$0xff] %v8528
    // Predicated region
    $region146: #{denoised_generator_forward.1} parent=1 // pred_check
      _
    $region147: #{denoised_generator_forward.1} parent=1 // pred_check_branch
      %8531 = sbr.rel (0) target = $region149
    $region148: #{denoised_generator_forward.1} parent=1 // pred_region
      %8533 = vsyncadd [#allocation8], 0
      %s8535 = sshll.u32 [#allocation27], 4
      %s8536 = int_to_ptr.vmem [resolvable:$true] %s8535
      %s8537 = sshll.u32 %s23, 4
      %s8538 = int_to_ptr.hbm [resolvable:$true] %s8537
      %8540 = dma.vmem_to_hbm [thread:$0]  %s8536, 128, %s8538, [#allocation8]
    $region149: #{denoised_generator_forward.1} parent=1 // pred_fallthru
      _
    // Predicated region
    $region150: #{denoised_generator_forward.1} parent=1 // pred_check
      _
    $region151: #{denoised_generator_forward.1} parent=1 // pred_check_branch
      %8542 = sbr.rel (0) target = $region153
    $region152: #{denoised_generator_forward.1} parent=1 // pred_region
      %8544 = dma.done [#allocation8], 128
    $region153: #{denoised_generator_forward.1} parent=1 // pred_fallthru
      _
    %8545 = vsyncpa [#allocation7], 1
    %8546 = vsyncpa [#allocation10], 1
    %8547 = vsyncpa [#allocation13], 1
    %8548 = vsyncpa [#allocation16], 1
    %8549 = vsyncpa [#allocation19], 1
    %8550 = vsyncpa [#allocation22], 1
    %8551 = vsyncpa [#allocation25], 1
    %8552 = vsyncpa [#allocation8], 1
  %8553 = vsyncmov [#allocation4]
  %s8554 = vpop.sfrf %8553
  %p8555 = scmp.eq.s32.totalorder %s8554, 0
  %p8556 = pneg %p8555
  %8558 = shalt.err (%p8556)
  %s8559 = scalar_lea.sflag [#allocation4], 1
  %8560 = vsyncmov %s8559
  %s8561 = vpop.sfrf %8560
  %p8562 = scmp.eq.s32.totalorder %s8561, 0
  %p8563 = pneg %p8562
  %8565 = shalt.err (%p8563)

</llo_original>
